<compile_context>
chip_gen: v6e
topology: v6e:2x2x1
jax: 0.10.0
libtpu: 0.0.40
codegen_flags: <defaults>
</compile_context>

<pallas_src>
import functools

import jax
import jax.numpy as jnp
from jax.experimental import pallas as pl
from jax.experimental.pallas import tpu as pltpu


LAYER_DIMS = [768, 1024, 1024, 512, 256, 128]   # final out dim H is appended
VMEM_LIMIT_BYTES = 40 * 1024 * 1024             # footprint ~15-20 MB; safe on v7x


def _round_up(n, m):
    return ((n + m - 1) // m) * m


# ----------------------------------------------------------------------------
# Kernel
# ----------------------------------------------------------------------------
def mlps_kernel(x_ref,
                w1, b1, w2, b2, w3, b3, w4, b4, w5, b5, w6, b6,
                o_ref):
    """Fused 6-layer MLP: h = relu(h @ W + b) for every layer."""
    layers = ((w1, b1), (w2, b2), (w3, b3), (w4, b4), (w5, b5), (w6, b6))
    h = x_ref[...]                                          # bf16 input tile
    for idx, (w_ref, b_ref) in enumerate(layers):
        acc = jnp.dot(h, w_ref[...], preferred_element_type=jnp.float32)
        acc = jnp.maximum(acc + b_ref[...], 0.0)            # f32 bias + ReLU (VPU)
        h = acc if idx == len(layers) - 1 else acc.astype(jnp.bfloat16)
    o_ref[...] = h.astype(o_ref.dtype)


# ----------------------------------------------------------------------------
# One-time parameter preparation (call once, reuse across forward calls)
# ----------------------------------------------------------------------------
def prepare_params(params):
    """bf16 weights, f32 biases; last layer zero-padded to a lane-dense multiple
    of 128 (ReLU(0)=0 so the padding is sliced off harmlessly)."""
    n = len(params)
    H = params[-1][0].shape[1]
    H_pad = _round_up(max(H, 128), 128)
    flat = []
    for li, (w, b) in enumerate(params):
        b = b.reshape(1, -1)
        if li == n - 1 and w.shape[1] != H_pad:
            w = jnp.pad(w, ((0, 0), (0, H_pad - w.shape[1])))
            b = jnp.pad(b, ((0, 0), (0, H_pad - b.shape[1])))
        flat.append((w.astype(jnp.bfloat16), b.astype(jnp.float32)))
    return tuple(flat), H, H_pad


# ----------------------------------------------------------------------------
# Tiling policy
# ----------------------------------------------------------------------------
def _choose_tile(B):
    """Batch tile: >=16 rows (bf16 sublane packing), minimize padding waste,
    and keep >= 2 grid steps when B >= 256 (so both v7x TCs get work)."""
    B16 = _round_up(max(B, 16), 16)
    if B16 < 256:
        return B16                              # one small step; weight DMA dominates
    # Candidates: large MXU-friendly tiles, plus an exact two-way split.
    cands = {512, 384, 256, 128, 64, 32, _round_up((B16 + 1) // 2, 16)}
    best_t, best_key = None, None
    for t in sorted(cands, reverse=True):
        Bp = _round_up(B16, t)
        if Bp // t < 2:                         # keep >= 2 grid steps
            continue
        key = (Bp - B, -t)                      # min pad waste, then prefer big tile
        if best_key is None or key < best_key:
            best_key, best_t = key, t
    return best_t if best_t is not None else _round_up((B16 + 1) // 2, 16)


# ----------------------------------------------------------------------------
# Forward (jit'ed so pad / cast / slice fuse with the pallas_call)
# ----------------------------------------------------------------------------
@functools.partial(jax.jit, static_argnames=("H", "H_pad"))
def _mlps_forward_impl(x, flat_params, H, H_pad):
    B, d_in = x.shape
    assert d_in == LAYER_DIMS[0]

    tile = _choose_tile(B)
    Bp = _round_up(B, tile)
    x_pad = jnp.pad(x, ((0, Bp - B), (0, 0))) if Bp != B else x
    x_bf16 = x_pad.astype(jnp.bfloat16)

    grid = (Bp // tile,)

    in_specs = [pl.BlockSpec((tile, d_in), lambda i: (i, 0))]
    flat_args = []
    for (w, b) in flat_params:
        din, dout = w.shape
        in_specs.append(pl.BlockSpec((din, dout), lambda i: (0, 0)))   # weights: block-invariant
        in_specs.append(pl.BlockSpec((1, dout), lambda i: (0, 0)))     # biases:  block-invariant
        flat_args += [w, b]

    out_spec = pl.BlockSpec((tile, H_pad), lambda i: (i, 0))           # lane-dense output slab

    out = pl.pallas_call(
        mlps_kernel,
        out_shape=jax.ShapeDtypeStruct((Bp, H_pad), x.dtype),
        grid_spec=pltpu.PrefetchScalarGridSpec(
            num_scalar_prefetch=0,
            grid=grid,
            in_specs=in_specs,
            out_specs=out_spec,
        ),
        compiler_params=pltpu.CompilerParams(
            dimension_semantics=("parallel",),
            vmem_limit_bytes=VMEM_LIMIT_BYTES,
        ),
    )(x_bf16, *flat_args)

    return out[:B, :H]


def mlps_forward(x, prepared):
    """x: (B, 768) float32. prepared: output of prepare_params(params)."""
    flat_params, H, H_pad = prepared
    return _mlps_forward_impl(x, flat_params, H=H, H_pad=H_pad)


# ----------------------------------------------------------------------------
# Init + reference
# ----------------------------------------------------------------------------
def init_params(key, H):
    """nn.Linear default init: U(-1/sqrt(fan_in), +1/sqrt(fan_in))."""
    dims = LAYER_DIMS + [H]
    params = []
    for i in range(len(dims) - 1):
        d_in, d_out = dims[i], dims[i + 1]
        key, kw, kb = jax.random.split(key, 3)
        bound = 1.0 / (d_in ** 0.5)
        w = jax.random.uniform(kw, (d_in, d_out), jnp.float32, -bound, bound)
        b = jax.random.uniform(kb, (1, d_out), jnp.float32, -bound, bound)
        params.append((w, b))
    return params


def mlps_reference(x, params, compute_dtype=jnp.bfloat16):
    """Pure-JAX reference with the kernel's numerics (bf16 matmul, f32 acc/bias/ReLU)."""
    h = x
    for w, b in params:
        acc = jnp.dot(h.astype(compute_dtype), w.astype(compute_dtype),
                      preferred_element_type=jnp.float32)
        h = jnp.maximum(acc + b.reshape(1, -1), 0.0)
    return h


if __name__ == "__main__":
    H = 32            # self.H of the PyTorch module
    batch = 8

    key = jax.random.PRNGKey(0)
    key, kx = jax.random.split(key)
    bert_tensor = jax.random.normal(kx, (batch, 768), jnp.float32)

    params = init_params(jax.random.PRNGKey(0), H)
    prepared = prepare_params(params)      # one-time bf16 cast + lane padding

    out = mlps_forward(bert_tensor, prepared)
    out = jax.block_until_ready(out)

    ref = mlps_reference(bert_tensor, params)
    assert out.shape == (batch, H), out.shape
    max_err = float(jnp.max(jnp.abs(out - ref)))
    assert jnp.allclose(out, ref, atol=2e-2, rtol=2e-2), max_err

    print("KERNEL_OK")
</pallas_src>

<mosaic_0001>
module attributes {stable_mosaic.version = 11 : i64} {
  func.func @mlps_kernel(%arg0: i32, %arg1: memref<16x768xbf16, #tpu.memory_space<vmem>>, %arg2: memref<768x1024xbf16, #tpu.memory_space<vmem>>, %arg3: memref<1x1024xf32, #tpu.memory_space<vmem>>, %arg4: memref<1024x1024xbf16, #tpu.memory_space<vmem>>, %arg5: memref<1x1024xf32, #tpu.memory_space<vmem>>, %arg6: memref<1024x512xbf16, #tpu.memory_space<vmem>>, %arg7: memref<1x512xf32, #tpu.memory_space<vmem>>, %arg8: memref<512x256xbf16, #tpu.memory_space<vmem>>, %arg9: memref<1x256xf32, #tpu.memory_space<vmem>>, %arg10: memref<256x128xbf16, #tpu.memory_space<vmem>>, %arg11: memref<1x128xf32, #tpu.memory_space<vmem>>, %arg12: memref<128x128xbf16, #tpu.memory_space<vmem>>, %arg13: memref<1x128xf32, #tpu.memory_space<vmem>>, %arg14: memref<16x128xf32, #tpu.memory_space<vmem>>) attributes {dimension_semantics = [#tpu.dimension_semantics<parallel>], iteration_bounds = array<i64: 1>, scalar_prefetch = 0 : i64, scratch_operands = 0 : i64, tpu.core_type = #tpu.core_type<tc>, window_params = [{transform_indices = @transform_0, window_bounds = array<i64: 16, 768>}, {pipeline_mode = #tpu.pipeline_mode<synchronous>, transform_indices = @transform_1, window_bounds = array<i64: 768, 1024>}, {pipeline_mode = #tpu.pipeline_mode<synchronous>, transform_indices = @transform_2, window_bounds = array<i64: 1, 1024>}, {pipeline_mode = #tpu.pipeline_mode<synchronous>, transform_indices = @transform_3, window_bounds = array<i64: 1024, 1024>}, {pipeline_mode = #tpu.pipeline_mode<synchronous>, transform_indices = @transform_4, window_bounds = array<i64: 1, 1024>}, {pipeline_mode = #tpu.pipeline_mode<synchronous>, transform_indices = @transform_5, window_bounds = array<i64: 1024, 512>}, {pipeline_mode = #tpu.pipeline_mode<synchronous>, transform_indices = @transform_6, window_bounds = array<i64: 1, 512>}, {pipeline_mode = #tpu.pipeline_mode<synchronous>, transform_indices = @transform_7, window_bounds = array<i64: 512, 256>}, {pipeline_mode = #tpu.pipeline_mode<synchronous>, transform_indices = @transform_8, window_bounds = array<i64: 1, 256>}, {pipeline_mode = #tpu.pipeline_mode<synchronous>, transform_indices = @transform_9, window_bounds = array<i64: 256, 128>}, {pipeline_mode = #tpu.pipeline_mode<synchronous>, transform_indices = @transform_10, window_bounds = array<i64: 1, 128>}, {pipeline_mode = #tpu.pipeline_mode<synchronous>, transform_indices = @transform_11, window_bounds = array<i64: 128, 128>}, {pipeline_mode = #tpu.pipeline_mode<synchronous>, transform_indices = @transform_12, window_bounds = array<i64: 1, 128>}, {transform_indices = @transform_13, window_bounds = array<i64: 16, 128>}]} {
    %c0 = arith.constant 0 : index
    %c0_0 = arith.constant 0 : index
    %0 = vector.load %arg1[%c0, %c0_0] : memref<16x768xbf16, #tpu.memory_space<vmem>>, vector<16x768xbf16>
    %c0_1 = arith.constant 0 : index
    %c0_2 = arith.constant 0 : index
    %1 = vector.load %arg2[%c0_1, %c0_2] : memref<768x1024xbf16, #tpu.memory_space<vmem>>, vector<768x1024xbf16>
    %cst = arith.constant dense<0.000000e+00> : vector<16x1024xf32>
    %2 = tpu.matmul %0, %1, %cst {dimension_numbers = #tpu.dot_dimension_numbers<[1], [0], [0], [1], [0, 0, 1, 1], [], []>} : vector<16x768xbf16>, vector<768x1024xbf16>, vector<16x1024xf32> -> vector<16x1024xf32>
    %c0_3 = arith.constant 0 : index
    %c0_4 = arith.constant 0 : index
    %3 = vector.load %arg3[%c0_3, %c0_4] : memref<1x1024xf32, #tpu.memory_space<vmem>>, vector<1x1024xf32>
    %4 = vector.broadcast %3 : vector<1x1024xf32> to vector<16x1024xf32>
    %5 = arith.addf %2, %4 : vector<16x1024xf32>
    %cst_5 = arith.constant 0.000000e+00 : f32
    %6 = vector.broadcast %cst_5 : f32 to vector<16x1024xf32>
    %7 = arith.maximumf %5, %6 : vector<16x1024xf32>
    %8 = arith.truncf %7 : vector<16x1024xf32> to vector<16x1024xbf16>
    %c0_6 = arith.constant 0 : index
    %c0_7 = arith.constant 0 : index
    %9 = vector.load %arg4[%c0_6, %c0_7] : memref<1024x1024xbf16, #tpu.memory_space<vmem>>, vector<1024x1024xbf16>
    %cst_8 = arith.constant dense<0.000000e+00> : vector<16x1024xf32>
    %10 = tpu.matmul %8, %9, %cst_8 {dimension_numbers = #tpu.dot_dimension_numbers<[1], [0], [0], [1], [0, 0, 1, 1], [], []>} : vector<16x1024xbf16>, vector<1024x1024xbf16>, vector<16x1024xf32> -> vector<16x1024xf32>
    %c0_9 = arith.constant 0 : index
    %c0_10 = arith.constant 0 : index
    %11 = vector.load %arg5[%c0_9, %c0_10] : memref<1x1024xf32, #tpu.memory_space<vmem>>, vector<1x1024xf32>
    %12 = vector.broadcast %11 : vector<1x1024xf32> to vector<16x1024xf32>
    %13 = arith.addf %10, %12 : vector<16x1024xf32>
    %cst_11 = arith.constant 0.000000e+00 : f32
    %14 = vector.broadcast %cst_11 : f32 to vector<16x1024xf32>
    %15 = arith.maximumf %13, %14 : vector<16x1024xf32>
    %16 = arith.truncf %15 : vector<16x1024xf32> to vector<16x1024xbf16>
    %c0_12 = arith.constant 0 : index
    %c0_13 = arith.constant 0 : index
    %17 = vector.load %arg6[%c0_12, %c0_13] : memref<1024x512xbf16, #tpu.memory_space<vmem>>, vector<1024x512xbf16>
    %cst_14 = arith.constant dense<0.000000e+00> : vector<16x512xf32>
    %18 = tpu.matmul %16, %17, %cst_14 {dimension_numbers = #tpu.dot_dimension_numbers<[1], [0], [0], [1], [0, 0, 1, 1], [], []>} : vector<16x1024xbf16>, vector<1024x512xbf16>, vector<16x512xf32> -> vector<16x512xf32>
    %c0_15 = arith.constant 0 : index
    %c0_16 = arith.constant 0 : index
    %19 = vector.load %arg7[%c0_15, %c0_16] : memref<1x512xf32, #tpu.memory_space<vmem>>, vector<1x512xf32>
    %20 = vector.broadcast %19 : vector<1x512xf32> to vector<16x512xf32>
    %21 = arith.addf %18, %20 : vector<16x512xf32>
    %cst_17 = arith.constant 0.000000e+00 : f32
    %22 = vector.broadcast %cst_17 : f32 to vector<16x512xf32>
    %23 = arith.maximumf %21, %22 : vector<16x512xf32>
    %24 = arith.truncf %23 : vector<16x512xf32> to vector<16x512xbf16>
    %c0_18 = arith.constant 0 : index
    %c0_19 = arith.constant 0 : index
    %25 = vector.load %arg8[%c0_18, %c0_19] : memref<512x256xbf16, #tpu.memory_space<vmem>>, vector<512x256xbf16>
    %cst_20 = arith.constant dense<0.000000e+00> : vector<16x256xf32>
    %26 = tpu.matmul %24, %25, %cst_20 {dimension_numbers = #tpu.dot_dimension_numbers<[1], [0], [0], [1], [0, 0, 1, 1], [], []>} : vector<16x512xbf16>, vector<512x256xbf16>, vector<16x256xf32> -> vector<16x256xf32>
    %c0_21 = arith.constant 0 : index
    %c0_22 = arith.constant 0 : index
    %27 = vector.load %arg9[%c0_21, %c0_22] : memref<1x256xf32, #tpu.memory_space<vmem>>, vector<1x256xf32>
    %28 = vector.broadcast %27 : vector<1x256xf32> to vector<16x256xf32>
    %29 = arith.addf %26, %28 : vector<16x256xf32>
    %cst_23 = arith.constant 0.000000e+00 : f32
    %30 = vector.broadcast %cst_23 : f32 to vector<16x256xf32>
    %31 = arith.maximumf %29, %30 : vector<16x256xf32>
    %32 = arith.truncf %31 : vector<16x256xf32> to vector<16x256xbf16>
    %c0_24 = arith.constant 0 : index
    %c0_25 = arith.constant 0 : index
    %33 = vector.load %arg10[%c0_24, %c0_25] : memref<256x128xbf16, #tpu.memory_space<vmem>>, vector<256x128xbf16>
    %cst_26 = arith.constant dense<0.000000e+00> : vector<16x128xf32>
    %34 = tpu.matmul %32, %33, %cst_26 {dimension_numbers = #tpu.dot_dimension_numbers<[1], [0], [0], [1], [0, 0, 1, 1], [], []>} : vector<16x256xbf16>, vector<256x128xbf16>, vector<16x128xf32> -> vector<16x128xf32>
    %c0_27 = arith.constant 0 : index
    %c0_28 = arith.constant 0 : index
    %35 = vector.load %arg11[%c0_27, %c0_28] : memref<1x128xf32, #tpu.memory_space<vmem>>, vector<1x128xf32>
    %36 = vector.broadcast %35 : vector<1x128xf32> to vector<16x128xf32>
    %37 = arith.addf %34, %36 : vector<16x128xf32>
    %cst_29 = arith.constant 0.000000e+00 : f32
    %38 = vector.broadcast %cst_29 : f32 to vector<16x128xf32>
    %39 = arith.maximumf %37, %38 : vector<16x128xf32>
    %40 = arith.truncf %39 : vector<16x128xf32> to vector<16x128xbf16>
    %c0_30 = arith.constant 0 : index
    %c0_31 = arith.constant 0 : index
    %41 = vector.load %arg12[%c0_30, %c0_31] : memref<128x128xbf16, #tpu.memory_space<vmem>>, vector<128x128xbf16>
    %cst_32 = arith.constant dense<0.000000e+00> : vector<16x128xf32>
    %42 = tpu.matmul %40, %41, %cst_32 {dimension_numbers = #tpu.dot_dimension_numbers<[1], [0], [0], [1], [0, 0, 1, 1], [], []>} : vector<16x128xbf16>, vector<128x128xbf16>, vector<16x128xf32> -> vector<16x128xf32>
    %c0_33 = arith.constant 0 : index
    %c0_34 = arith.constant 0 : index
    %43 = vector.load %arg13[%c0_33, %c0_34] : memref<1x128xf32, #tpu.memory_space<vmem>>, vector<1x128xf32>
    %44 = vector.broadcast %43 : vector<1x128xf32> to vector<16x128xf32>
    %45 = arith.addf %42, %44 : vector<16x128xf32>
    %cst_35 = arith.constant 0.000000e+00 : f32
    %46 = vector.broadcast %cst_35 : f32 to vector<16x128xf32>
    %47 = arith.maximumf %45, %46 : vector<16x128xf32>
    %c0_36 = arith.constant 0 : index
    %c0_37 = arith.constant 0 : index
    %48 = vector.load %arg14[%c0_36, %c0_37] : memref<16x128xf32, #tpu.memory_space<vmem>>, vector<16x128xf32>
    tpu.vector_store %arg14[%c0_36, %c0_37], %47 {strides = array<i32>} : memref<16x128xf32, #tpu.memory_space<vmem>>, vector<16x128xf32>,
    return
  }
  func.func @transform_0(%arg0: i32) -> (i32, i32) {
    %c0_i32 = arith.constant 0 : i32
    %c0_i32_0 = arith.constant 0 : i32
    return %arg0, %c0_i32 : i32, i32
  }
  func.func @transform_1(%arg0: i32) -> (i32, i32) {
    %c0_i32 = arith.constant 0 : i32
    %c0_i32_0 = arith.constant 0 : i32
    %c0_i32_1 = arith.constant 0 : i32
    return %c0_i32, %c0_i32_0 : i32, i32
  }
  func.func @transform_2(%arg0: i32) -> (i32, i32) {
    %c0_i32 = arith.constant 0 : i32
    %c0_i32_0 = arith.constant 0 : i32
    %c0_i32_1 = arith.constant 0 : i32
    return %c0_i32, %c0_i32_0 : i32, i32
  }
  func.func @transform_3(%arg0: i32) -> (i32, i32) {
    %c0_i32 = arith.constant 0 : i32
    %c0_i32_0 = arith.constant 0 : i32
    %c0_i32_1 = arith.constant 0 : i32
    return %c0_i32, %c0_i32_0 : i32, i32
  }
  func.func @transform_4(%arg0: i32) -> (i32, i32) {
    %c0_i32 = arith.constant 0 : i32
    %c0_i32_0 = arith.constant 0 : i32
    %c0_i32_1 = arith.constant 0 : i32
    return %c0_i32, %c0_i32_0 : i32, i32
  }
  func.func @transform_5(%arg0: i32) -> (i32, i32) {
    %c0_i32 = arith.constant 0 : i32
    %c0_i32_0 = arith.constant 0 : i32
    %c0_i32_1 = arith.constant 0 : i32
    return %c0_i32, %c0_i32_0 : i32, i32
  }
  func.func @transform_6(%arg0: i32) -> (i32, i32) {
    %c0_i32 = arith.constant 0 : i32
    %c0_i32_0 = arith.constant 0 : i32
    %c0_i32_1 = arith.constant 0 : i32
    return %c0_i32, %c0_i32_0 : i32, i32
  }
  func.func @transform_7(%arg0: i32) -> (i32, i32) {
    %c0_i32 = arith.constant 0 : i32
    %c0_i32_0 = arith.constant 0 : i32
    %c0_i32_1 = arith.constant 0 : i32
    return %c0_i32, %c0_i32_0 : i32, i32
  }
  func.func @transform_8(%arg0: i32) -> (i32, i32) {
    %c0_i32 = arith.constant 0 : i32
    %c0_i32_0 = arith.constant 0 : i32
    %c0_i32_1 = arith.constant 0 : i32
    return %c0_i32, %c0_i32_0 : i32, i32
  }
  func.func @transform_9(%arg0: i32) -> (i32, i32) {
    %c0_i32 = arith.constant 0 : i32
    %c0_i32_0 = arith.constant 0 : i32
    %c0_i32_1 = arith.constant 0 : i32
    return %c0_i32, %c0_i32_0 : i32, i32
  }
  func.func @transform_10(%arg0: i32) -> (i32, i32) {
    %c0_i32 = arith.constant 0 : i32
    %c0_i32_0 = arith.constant 0 : i32
    %c0_i32_1 = arith.constant 0 : i32
    return %c0_i32, %c0_i32_0 : i32, i32
  }
  func.func @transform_11(%arg0: i32) -> (i32, i32) {
    %c0_i32 = arith.constant 0 : i32
    %c0_i32_0 = arith.constant 0 : i32
    %c0_i32_1 = arith.constant 0 : i32
    return %c0_i32, %c0_i32_0 : i32, i32
  }
  func.func @transform_12(%arg0: i32) -> (i32, i32) {
    %c0_i32 = arith.constant 0 : i32
    %c0_i32_0 = arith.constant 0 : i32
    %c0_i32_1 = arith.constant 0 : i32
    return %c0_i32, %c0_i32_0 : i32, i32
  }
  func.func @transform_13(%arg0: i32) -> (i32, i32) {
    %c0_i32 = arith.constant 0 : i32
    %c0_i32_0 = arith.constant 0 : i32
    return %arg0, %c0_i32 : i32, i32
  }
}

</mosaic_0001>

<llo_original>
// kernel: _mlps_forward_impl.1
$region0: #{_mlps_forward_impl.1}
  #allocation0 [shape = 'u32[]', space=smem, size = 0x4, offset = 0x4, fixed_abs, tag = 'smem constant byte address 0x4 - core index']
  #allocation1 [shape = 'u32[144,128]{1,0:T(1,128)}', space=vmem, size = 0x12000, scoped, tag = 'internal scratch']
  %s0 = inlined_call_operand.vmem [shape: bf16[16,768], index: 0, kind: input, shape index: {}]
  %s1 = inlined_call_operand.hbm [shape: bf16[768,1024], index: 1, kind: input, shape index: {}]
  %s2 = inlined_call_operand.hbm [shape: f32[1,1024], index: 2, kind: input, shape index: {}]
  %s3 = inlined_call_operand.hbm [shape: bf16[1024,1024], index: 3, kind: input, shape index: {}]
  %s4 = inlined_call_operand.hbm [shape: f32[1,1024], index: 4, kind: input, shape index: {}]
  %s5 = inlined_call_operand.hbm [shape: bf16[1024,512], index: 5, kind: input, shape index: {}]
  %s6 = inlined_call_operand.hbm [shape: f32[1,512], index: 6, kind: input, shape index: {}]
  %s7 = inlined_call_operand.hbm [shape: bf16[512,256], index: 7, kind: input, shape index: {}]
  %s8 = inlined_call_operand.hbm [shape: f32[1,256], index: 8, kind: input, shape index: {}]
  %s9 = inlined_call_operand.hbm [shape: bf16[256,128], index: 9, kind: input, shape index: {}]
  %s10 = inlined_call_operand.hbm [shape: f32[1,128], index: 10, kind: input, shape index: {}]
  %s11 = inlined_call_operand.hbm [shape: bf16[128,128], index: 11, kind: input, shape index: {}]
  %s12 = inlined_call_operand.hbm [shape: f32[1,128], index: 12, kind: input, shape index: {}]
  %s13 = inlined_call_operand.vmem [shape: f32[16,128], index: 13, kind: output, shape index: {}]
  %s14 = sld [smem:[#allocation0]]
  $region110: #{_mlps_forward_impl.1} parent=0
    _
  %s16 = ssub.s32 1, %s14
  %s17 = scalar_select 0, %s16, %s14
  $region1: #{_mlps_forward_impl.1} parent=0
    #allocation2 [shape = 'u8[1572864]{0}', space=vmem, size = 0x180000, scoped, tag = 'input window, operand 1, single buffered']
    #allocation3 [shape = 's32[1]{0}', space=sflag, size = 0x4, scoped, tag = 'scoped memory for _mlps_forward_impl.1']
    #allocation4 [shape = 'u8[4096]{0}', space=vmem, size = 0x1000, scoped, tag = 'input window, operand 2, single buffered']
    #allocation5 [shape = 's32[1]{0}', space=sflag, size = 0x4, scoped, tag = 'scoped memory for _mlps_forward_impl.1']
    #allocation6 [shape = 'u8[2097152]{0}', space=vmem, size = 0x200000, scoped, tag = 'input window, operand 3, single buffered']
    #allocation7 [shape = 'u8[4096]{0}', space=vmem, size = 0x1000, scoped, tag = 'input window, operand 4, single buffered']
    #allocation8 [shape = 's32[1]{0}', space=sflag, size = 0x4, scoped, tag = 'scoped memory for _mlps_forward_impl.1']
    #allocation9 [shape = 'u8[1048576]{0}', space=vmem, size = 0x100000, scoped, tag = 'input window, operand 5, single buffered']
    #allocation10 [shape = 'u8[2048]{0}', space=vmem, size = 0x800, scoped, tag = 'input window, operand 6, single buffered']
    #allocation11 [shape = 's32[1]{0}', space=sflag, size = 0x4, scoped, tag = 'scoped memory for _mlps_forward_impl.1']
    #allocation12 [shape = 'u8[262144]{0}', space=vmem, size = 0x40000, scoped, tag = 'input window, operand 7, single buffered']
    #allocation13 [shape = 'u8[1024]{0}', space=vmem, size = 0x400, scoped, tag = 'input window, operand 8, single buffered']
    #allocation14 [shape = 's32[1]{0}', space=sflag, size = 0x4, scoped, tag = 'scoped memory for _mlps_forward_impl.1']
    #allocation15 [shape = 'u8[65536]{0}', space=vmem, size = 0x10000, scoped, tag = 'input window, operand 9, single buffered']
    #allocation16 [shape = 'u8[512]{0}', space=vmem, size = 0x400, scoped, tag = 'input window, operand 10, single buffered']
    #allocation17 [shape = 's32[1]{0}', space=sflag, size = 0x4, scoped, tag = 'scoped memory for _mlps_forward_impl.1']
    #allocation18 [shape = 'u8[32768]{0}', space=vmem, size = 0x8000, scoped, tag = 'input window, operand 11, single buffered']
    #allocation19 [shape = 'u8[512]{0}', space=vmem, size = 0x400, scoped, tag = 'input window, operand 12, single buffered']
    #allocation20 [shape = 's32[1]{0}', space=sflag, size = 0x4, scoped, tag = 'scoped memory for _mlps_forward_impl.1']
    %18 = vsyncpa [#allocation3], 0
    %19 = vsyncpa [#allocation5], 0
    %20 = vsyncpa [#allocation8], 0
    %21 = vsyncpa [#allocation11], 0
    %22 = vsyncpa [#allocation14], 0
    %23 = vsyncpa [#allocation17], 0
    %24 = vsyncpa [#allocation20], 0
    // Predicated region
    $region2: #{_mlps_forward_impl.1} parent=1 // pred_check
      _
    $region3: #{_mlps_forward_impl.1} parent=1 // pred_check_branch
      %26 = sbr.rel (0) target = $region5
    $region4: #{_mlps_forward_impl.1} parent=1 // pred_region
      _
    $region5: #{_mlps_forward_impl.1} parent=1 // pred_fallthru
      _
    // Predicated region
    $region6: #{_mlps_forward_impl.1} parent=1 // pred_check
      _
    $region7: #{_mlps_forward_impl.1} parent=1 // pred_check_branch
      %28 = sbr.rel (0) target = $region9
    $region8: #{_mlps_forward_impl.1} parent=1 // pred_region
      %s30 = ssub.s32 49152, 49152
      %31 = vsyncadd [#allocation3], %s30
      %s32 = sshll.u32 [#allocation2], 4
      %s33 = int_to_ptr.vmem [resolvable:$true] %s32
      %38 = dma.hbm_to_vmem [thread:$0]  %s1, 49152, %s33, [#allocation3], 512, 512, 32
    $region9: #{_mlps_forward_impl.1} parent=1 // pred_fallthru
      _
    // Predicated region
    $region10: #{_mlps_forward_impl.1} parent=1 // pred_check
      _
    $region11: #{_mlps_forward_impl.1} parent=1 // pred_check_branch
      %40 = sbr.rel (0) target = $region13
    $region12: #{_mlps_forward_impl.1} parent=1 // pred_region
      %s42 = ssub.s32 128, 128
      %43 = vsyncadd [#allocation5], %s42
      %s45 = sshll.u32 [#allocation4], 4
      %s46 = int_to_ptr.vmem [resolvable:$true] %s45
      %48 = dma.hbm_to_vmem [thread:$0]  %s2, 128, %s46, [#allocation5]
    $region13: #{_mlps_forward_impl.1} parent=1 // pred_fallthru
      _
    // Predicated region
    $region14: #{_mlps_forward_impl.1} parent=1 // pred_check
      _
    $region15: #{_mlps_forward_impl.1} parent=1 // pred_check_branch
      %50 = sbr.rel (0) target = $region17
    $region16: #{_mlps_forward_impl.1} parent=1 // pred_region
      %s52 = ssub.s32 65536, 65536
      %53 = vsyncadd [#allocation5], %s52
      %s54 = sshll.u32 [#allocation6], 4
      %s55 = int_to_ptr.vmem [resolvable:$true] %s54
      %60 = dma.hbm_to_vmem [thread:$0]  %s3, 65536, %s55, [#allocation5], 512, 512, 32
    $region17: #{_mlps_forward_impl.1} parent=1 // pred_fallthru
      _
    // Predicated region
    $region18: #{_mlps_forward_impl.1} parent=1 // pred_check
      _
    $region19: #{_mlps_forward_impl.1} parent=1 // pred_check_branch
      %62 = sbr.rel (0) target = $region21
    $region20: #{_mlps_forward_impl.1} parent=1 // pred_region
      %s64 = ssub.s32 128, 128
      %65 = vsyncadd [#allocation8], %s64
      %s67 = sshll.u32 [#allocation7], 4
      %s68 = int_to_ptr.vmem [resolvable:$true] %s67
      %70 = dma.hbm_to_vmem [thread:$0]  %s4, 128, %s68, [#allocation8]
    $region21: #{_mlps_forward_impl.1} parent=1 // pred_fallthru
      _
    // Predicated region
    $region22: #{_mlps_forward_impl.1} parent=1 // pred_check
      _
    $region23: #{_mlps_forward_impl.1} parent=1 // pred_check_branch
      %72 = sbr.rel (0) target = $region25
    $region24: #{_mlps_forward_impl.1} parent=1 // pred_region
      %s74 = ssub.s32 32768, 32768
      %75 = vsyncadd [#allocation8], %s74
      %s76 = sshll.u32 [#allocation9], 4
      %s77 = int_to_ptr.vmem [resolvable:$true] %s76
      %82 = dma.hbm_to_vmem [thread:$0]  %s5, 32768, %s77, [#allocation8], 256, 256, 16
    $region25: #{_mlps_forward_impl.1} parent=1 // pred_fallthru
      _
    // Predicated region
    $region26: #{_mlps_forward_impl.1} parent=1 // pred_check
      _
    $region27: #{_mlps_forward_impl.1} parent=1 // pred_check_branch
      %84 = sbr.rel (0) target = $region29
    $region28: #{_mlps_forward_impl.1} parent=1 // pred_region
      %s86 = ssub.s32 64, 64
      %87 = vsyncadd [#allocation11], %s86
      %s89 = sshll.u32 [#allocation10], 4
      %s90 = int_to_ptr.vmem [resolvable:$true] %s89
      %92 = dma.hbm_to_vmem [thread:$0]  %s6, 64, %s90, [#allocation11]
    $region29: #{_mlps_forward_impl.1} parent=1 // pred_fallthru
      _
    // Predicated region
    $region30: #{_mlps_forward_impl.1} parent=1 // pred_check
      _
    $region31: #{_mlps_forward_impl.1} parent=1 // pred_check_branch
      %94 = sbr.rel (0) target = $region33
    $region32: #{_mlps_forward_impl.1} parent=1 // pred_region
      %s96 = ssub.s32 8192, 8192
      %97 = vsyncadd [#allocation11], %s96
      %s98 = sshll.u32 [#allocation12], 4
      %s99 = int_to_ptr.vmem [resolvable:$true] %s98
      %104 = dma.hbm_to_vmem [thread:$0]  %s7, 8192, %s99, [#allocation11], 128, 128, 8
    $region33: #{_mlps_forward_impl.1} parent=1 // pred_fallthru
      _
    // Predicated region
    $region34: #{_mlps_forward_impl.1} parent=1 // pred_check
      _
    $region35: #{_mlps_forward_impl.1} parent=1 // pred_check_branch
      %106 = sbr.rel (0) target = $region37
    $region36: #{_mlps_forward_impl.1} parent=1 // pred_region
      %s108 = ssub.s32 32, 32
      %109 = vsyncadd [#allocation14], %s108
      %s111 = sshll.u32 [#allocation13], 4
      %s112 = int_to_ptr.vmem [resolvable:$true] %s111
      %114 = dma.hbm_to_vmem [thread:$0]  %s8, 32, %s112, [#allocation14]
    $region37: #{_mlps_forward_impl.1} parent=1 // pred_fallthru
      _
    // Predicated region
    $region38: #{_mlps_forward_impl.1} parent=1 // pred_check
      _
    $region39: #{_mlps_forward_impl.1} parent=1 // pred_check_branch
      %116 = sbr.rel (0) target = $region41
    $region40: #{_mlps_forward_impl.1} parent=1 // pred_region
      %s118 = ssub.s32 2048, 2048
      %119 = vsyncadd [#allocation14], %s118
      %s120 = sshll.u32 [#allocation15], 4
      %s121 = int_to_ptr.vmem [resolvable:$true] %s120
      %126 = dma.hbm_to_vmem [thread:$0]  %s9, 2048, %s121, [#allocation14], 64, 64, 4
    $region41: #{_mlps_forward_impl.1} parent=1 // pred_fallthru
      _
    // Predicated region
    $region42: #{_mlps_forward_impl.1} parent=1 // pred_check
      _
    $region43: #{_mlps_forward_impl.1} parent=1 // pred_check_branch
      %128 = sbr.rel (0) target = $region45
    $region44: #{_mlps_forward_impl.1} parent=1 // pred_region
      %s130 = ssub.s32 16, 16
      %131 = vsyncadd [#allocation17], %s130
      %s133 = sshll.u32 [#allocation16], 4
      %s134 = int_to_ptr.vmem [resolvable:$true] %s133
      %136 = dma.hbm_to_vmem [thread:$0]  %s10, 16, %s134, [#allocation17]
    $region45: #{_mlps_forward_impl.1} parent=1 // pred_fallthru
      _
    // Predicated region
    $region46: #{_mlps_forward_impl.1} parent=1 // pred_check
      _
    $region47: #{_mlps_forward_impl.1} parent=1 // pred_check_branch
      %138 = sbr.rel (0) target = $region49
    $region48: #{_mlps_forward_impl.1} parent=1 // pred_region
      %s140 = ssub.s32 1024, 1024
      %141 = vsyncadd [#allocation17], %s140
      %s142 = sshll.u32 [#allocation18], 4
      %s143 = int_to_ptr.vmem [resolvable:$true] %s142
      %148 = dma.hbm_to_vmem [thread:$0]  %s11, 1024, %s143, [#allocation17], 64, 64, 4
    $region49: #{_mlps_forward_impl.1} parent=1 // pred_fallthru
      _
    // Predicated region
    $region50: #{_mlps_forward_impl.1} parent=1 // pred_check
      _
    $region51: #{_mlps_forward_impl.1} parent=1 // pred_check_branch
      %150 = sbr.rel (0) target = $region53
    $region52: #{_mlps_forward_impl.1} parent=1 // pred_region
      %s152 = ssub.s32 16, 16
      %153 = vsyncadd [#allocation20], %s152
      %s155 = sshll.u32 [#allocation19], 4
      %s156 = int_to_ptr.vmem [resolvable:$true] %s155
      %158 = dma.hbm_to_vmem [thread:$0]  %s12, 16, %s156, [#allocation20]
    $region53: #{_mlps_forward_impl.1} parent=1 // pred_fallthru
      _
    // Predicated region
    $region54: #{_mlps_forward_impl.1} parent=1 // pred_check
      _
    $region55: #{_mlps_forward_impl.1} parent=1 // pred_check_branch
      %160 = sbr.rel (0) target = $region57
    $region56: #{_mlps_forward_impl.1} parent=1 // pred_region
      %161 = dma.done [#allocation3], 49152
    $region57: #{_mlps_forward_impl.1} parent=1 // pred_fallthru
      _
    // Predicated region
    $region58: #{_mlps_forward_impl.1} parent=1 // pred_check
      _
    $region59: #{_mlps_forward_impl.1} parent=1 // pred_check_branch
      %163 = sbr.rel (0) target = $region61
    $region60: #{_mlps_forward_impl.1} parent=1 // pred_region
      %164 = dma.done [#allocation5], 128
    $region61: #{_mlps_forward_impl.1} parent=1 // pred_fallthru
      _
    // Predicated region
    $region62: #{_mlps_forward_impl.1} parent=1 // pred_check
      _
    $region63: #{_mlps_forward_impl.1} parent=1 // pred_check_branch
      %166 = sbr.rel (0) target = $region65
    $region64: #{_mlps_forward_impl.1} parent=1 // pred_region
      %167 = dma.done [#allocation5], 65536
    $region65: #{_mlps_forward_impl.1} parent=1 // pred_fallthru
      _
    // Predicated region
    $region66: #{_mlps_forward_impl.1} parent=1 // pred_check
      _
    $region67: #{_mlps_forward_impl.1} parent=1 // pred_check_branch
      %169 = sbr.rel (0) target = $region69
    $region68: #{_mlps_forward_impl.1} parent=1 // pred_region
      %170 = dma.done [#allocation8], 128
    $region69: #{_mlps_forward_impl.1} parent=1 // pred_fallthru
      _
    // Predicated region
    $region70: #{_mlps_forward_impl.1} parent=1 // pred_check
      _
    $region71: #{_mlps_forward_impl.1} parent=1 // pred_check_branch
      %172 = sbr.rel (0) target = $region73
    $region72: #{_mlps_forward_impl.1} parent=1 // pred_region
      %173 = dma.done [#allocation8], 32768
    $region73: #{_mlps_forward_impl.1} parent=1 // pred_fallthru
      _
    // Predicated region
    $region74: #{_mlps_forward_impl.1} parent=1 // pred_check
      _
    $region75: #{_mlps_forward_impl.1} parent=1 // pred_check_branch
      %175 = sbr.rel (0) target = $region77
    $region76: #{_mlps_forward_impl.1} parent=1 // pred_region
      %176 = dma.done [#allocation11], 64
    $region77: #{_mlps_forward_impl.1} parent=1 // pred_fallthru
      _
    // Predicated region
    $region78: #{_mlps_forward_impl.1} parent=1 // pred_check
      _
    $region79: #{_mlps_forward_impl.1} parent=1 // pred_check_branch
      %178 = sbr.rel (0) target = $region81
    $region80: #{_mlps_forward_impl.1} parent=1 // pred_region
      %179 = dma.done [#allocation11], 8192
    $region81: #{_mlps_forward_impl.1} parent=1 // pred_fallthru
      _
    // Predicated region
    $region82: #{_mlps_forward_impl.1} parent=1 // pred_check
      _
    $region83: #{_mlps_forward_impl.1} parent=1 // pred_check_branch
      %181 = sbr.rel (0) target = $region85
    $region84: #{_mlps_forward_impl.1} parent=1 // pred_region
      %182 = dma.done [#allocation14], 32
    $region85: #{_mlps_forward_impl.1} parent=1 // pred_fallthru
      _
    // Predicated region
    $region86: #{_mlps_forward_impl.1} parent=1 // pred_check
      _
    $region87: #{_mlps_forward_impl.1} parent=1 // pred_check_branch
      %184 = sbr.rel (0) target = $region89
    $region88: #{_mlps_forward_impl.1} parent=1 // pred_region
      %185 = dma.done [#allocation14], 2048
    $region89: #{_mlps_forward_impl.1} parent=1 // pred_fallthru
      _
    // Predicated region
    $region90: #{_mlps_forward_impl.1} parent=1 // pred_check
      _
    $region91: #{_mlps_forward_impl.1} parent=1 // pred_check_branch
      %187 = sbr.rel (0) target = $region93
    $region92: #{_mlps_forward_impl.1} parent=1 // pred_region
      %188 = dma.done [#allocation17], 16
    $region93: #{_mlps_forward_impl.1} parent=1 // pred_fallthru
      _
    // Predicated region
    $region94: #{_mlps_forward_impl.1} parent=1 // pred_check
      _
    $region95: #{_mlps_forward_impl.1} parent=1 // pred_check_branch
      %190 = sbr.rel (0) target = $region97
    $region96: #{_mlps_forward_impl.1} parent=1 // pred_region
      %191 = dma.done [#allocation17], 1024
    $region97: #{_mlps_forward_impl.1} parent=1 // pred_fallthru
      _
    // Predicated region
    $region98: #{_mlps_forward_impl.1} parent=1 // pred_check
      _
    $region99: #{_mlps_forward_impl.1} parent=1 // pred_check_branch
      %193 = sbr.rel (0) target = $region101
    $region100: #{_mlps_forward_impl.1} parent=1 // pred_region
      %194 = dma.done [#allocation20], 16
    $region101: #{_mlps_forward_impl.1} parent=1 // pred_fallthru
      _
    %v196 = vld [vmem:[%s0] sm:$0xff]
    %v197 = vld [vmem:[%s0 + $0x8] sm:$0xff]
    %v198 = vld [vmem:[%s0 + $0x10] sm:$0xff]
    %v199 = vld [vmem:[%s0 + $0x18] sm:$0xff]
    %v200 = vld [vmem:[%s0 + $0x20] sm:$0xff]
    %v201 = vld [vmem:[%s0 + $0x28] sm:$0xff]
    %v202 = vld [vmem:[#allocation2] sm:$0xff]
    %v203 = vld [vmem:[#allocation2 + $0x8] sm:$0xff]
    %v204 = vld [vmem:[#allocation2 + $0x10] sm:$0xff]
    %v205 = vld [vmem:[#allocation2 + $0x18] sm:$0xff]
    %v206 = vld [vmem:[#allocation2 + $0x20] sm:$0xff]
    %v207 = vld [vmem:[#allocation2 + $0x28] sm:$0xff]
    %v208 = vld [vmem:[#allocation2 + $0x30] sm:$0xff]
    %v209 = vld [vmem:[#allocation2 + $0x38] sm:$0xff]
    %v210 = vld [vmem:[#allocation2 + $0x40] sm:$0xff]
    %v211 = vld [vmem:[#allocation2 + $0x48] sm:$0xff]
    %v212 = vld [vmem:[#allocation2 + $0x50] sm:$0xff]
    %v213 = vld [vmem:[#allocation2 + $0x58] sm:$0xff]
    %v214 = vld [vmem:[#allocation2 + $0x60] sm:$0xff]
    %v215 = vld [vmem:[#allocation2 + $0x68] sm:$0xff]
    %v216 = vld [vmem:[#allocation2 + $0x70] sm:$0xff]
    %v217 = vld [vmem:[#allocation2 + $0x78] sm:$0xff]
    %v218 = vld [vmem:[#allocation2 + $0x80] sm:$0xff]
    %v219 = vld [vmem:[#allocation2 + $0x88] sm:$0xff]
    %v220 = vld [vmem:[#allocation2 + $0x90] sm:$0xff]
    %v221 = vld [vmem:[#allocation2 + $0x98] sm:$0xff]
    %v222 = vld [vmem:[#allocation2 + $0xa0] sm:$0xff]
    %v223 = vld [vmem:[#allocation2 + $0xa8] sm:$0xff]
    %v224 = vld [vmem:[#allocation2 + $0xb0] sm:$0xff]
    %v225 = vld [vmem:[#allocation2 + $0xb8] sm:$0xff]
    %v226 = vld [vmem:[#allocation2 + $0xc0] sm:$0xff]
    %v227 = vld [vmem:[#allocation2 + $0xc8] sm:$0xff]
    %v228 = vld [vmem:[#allocation2 + $0xd0] sm:$0xff]
    %v229 = vld [vmem:[#allocation2 + $0xd8] sm:$0xff]
    %v230 = vld [vmem:[#allocation2 + $0xe0] sm:$0xff]
    %v231 = vld [vmem:[#allocation2 + $0xe8] sm:$0xff]
    %v232 = vld [vmem:[#allocation2 + $0xf0] sm:$0xff]
    %v233 = vld [vmem:[#allocation2 + $0xf8] sm:$0xff]
    %v234 = vld [vmem:[#allocation2 + $0x100] sm:$0xff]
    %v235 = vld [vmem:[#allocation2 + $0x108] sm:$0xff]
    %v236 = vld [vmem:[#allocation2 + $0x110] sm:$0xff]
    %v237 = vld [vmem:[#allocation2 + $0x118] sm:$0xff]
    %v238 = vld [vmem:[#allocation2 + $0x120] sm:$0xff]
    %v239 = vld [vmem:[#allocation2 + $0x128] sm:$0xff]
    %v240 = vld [vmem:[#allocation2 + $0x130] sm:$0xff]
    %v241 = vld [vmem:[#allocation2 + $0x138] sm:$0xff]
    %v242 = vld [vmem:[#allocation2 + $0x140] sm:$0xff]
    %v243 = vld [vmem:[#allocation2 + $0x148] sm:$0xff]
    %v244 = vld [vmem:[#allocation2 + $0x150] sm:$0xff]
    %v245 = vld [vmem:[#allocation2 + $0x158] sm:$0xff]
    %v246 = vld [vmem:[#allocation2 + $0x160] sm:$0xff]
    %v247 = vld [vmem:[#allocation2 + $0x168] sm:$0xff]
    %v248 = vld [vmem:[#allocation2 + $0x170] sm:$0xff]
    %v249 = vld [vmem:[#allocation2 + $0x178] sm:$0xff]
    %v250 = vld [vmem:[#allocation2 + $0x180] sm:$0xff]
    %v251 = vld [vmem:[#allocation2 + $0x188] sm:$0xff]
    %v252 = vld [vmem:[#allocation2 + $0x190] sm:$0xff]
    %v253 = vld [vmem:[#allocation2 + $0x198] sm:$0xff]
    %v254 = vld [vmem:[#allocation2 + $0x1a0] sm:$0xff]
    %v255 = vld [vmem:[#allocation2 + $0x1a8] sm:$0xff]
    %v256 = vld [vmem:[#allocation2 + $0x1b0] sm:$0xff]
    %v257 = vld [vmem:[#allocation2 + $0x1b8] sm:$0xff]
    %v258 = vld [vmem:[#allocation2 + $0x1c0] sm:$0xff]
    %v259 = vld [vmem:[#allocation2 + $0x1c8] sm:$0xff]
    %v260 = vld [vmem:[#allocation2 + $0x1d0] sm:$0xff]
    %v261 = vld [vmem:[#allocation2 + $0x1d8] sm:$0xff]
    %v262 = vld [vmem:[#allocation2 + $0x1e0] sm:$0xff]
    %v263 = vld [vmem:[#allocation2 + $0x1e8] sm:$0xff]
    %v264 = vld [vmem:[#allocation2 + $0x1f0] sm:$0xff]
    %v265 = vld [vmem:[#allocation2 + $0x1f8] sm:$0xff]
    %v266 = vld [vmem:[#allocation2 + $0x200] sm:$0xff]
    %v267 = vld [vmem:[#allocation2 + $0x208] sm:$0xff]
    %v268 = vld [vmem:[#allocation2 + $0x210] sm:$0xff]
    %v269 = vld [vmem:[#allocation2 + $0x218] sm:$0xff]
    %v270 = vld [vmem:[#allocation2 + $0x220] sm:$0xff]
    %v271 = vld [vmem:[#allocation2 + $0x228] sm:$0xff]
    %v272 = vld [vmem:[#allocation2 + $0x230] sm:$0xff]
    %v273 = vld [vmem:[#allocation2 + $0x238] sm:$0xff]
    %v274 = vld [vmem:[#allocation2 + $0x240] sm:$0xff]
    %v275 = vld [vmem:[#allocation2 + $0x248] sm:$0xff]
    %v276 = vld [vmem:[#allocation2 + $0x250] sm:$0xff]
    %v277 = vld [vmem:[#allocation2 + $0x258] sm:$0xff]
    %v278 = vld [vmem:[#allocation2 + $0x260] sm:$0xff]
    %v279 = vld [vmem:[#allocation2 + $0x268] sm:$0xff]
    %v280 = vld [vmem:[#allocation2 + $0x270] sm:$0xff]
    %v281 = vld [vmem:[#allocation2 + $0x278] sm:$0xff]
    %v282 = vld [vmem:[#allocation2 + $0x280] sm:$0xff]
    %v283 = vld [vmem:[#allocation2 + $0x288] sm:$0xff]
    %v284 = vld [vmem:[#allocation2 + $0x290] sm:$0xff]
    %v285 = vld [vmem:[#allocation2 + $0x298] sm:$0xff]
    %v286 = vld [vmem:[#allocation2 + $0x2a0] sm:$0xff]
    %v287 = vld [vmem:[#allocation2 + $0x2a8] sm:$0xff]
    %v288 = vld [vmem:[#allocation2 + $0x2b0] sm:$0xff]
    %v289 = vld [vmem:[#allocation2 + $0x2b8] sm:$0xff]
    %v290 = vld [vmem:[#allocation2 + $0x2c0] sm:$0xff]
    %v291 = vld [vmem:[#allocation2 + $0x2c8] sm:$0xff]
    %v292 = vld [vmem:[#allocation2 + $0x2d0] sm:$0xff]
    %v293 = vld [vmem:[#allocation2 + $0x2d8] sm:$0xff]
    %v294 = vld [vmem:[#allocation2 + $0x2e0] sm:$0xff]
    %v295 = vld [vmem:[#allocation2 + $0x2e8] sm:$0xff]
    %v296 = vld [vmem:[#allocation2 + $0x2f0] sm:$0xff]
    %v297 = vld [vmem:[#allocation2 + $0x2f8] sm:$0xff]
    %v298 = vld [vmem:[#allocation2 + $0x300] sm:$0xff]
    %v299 = vld [vmem:[#allocation2 + $0x308] sm:$0xff]
    %v300 = vld [vmem:[#allocation2 + $0x310] sm:$0xff]
    %v301 = vld [vmem:[#allocation2 + $0x318] sm:$0xff]
    %v302 = vld [vmem:[#allocation2 + $0x320] sm:$0xff]
    %v303 = vld [vmem:[#allocation2 + $0x328] sm:$0xff]
    %v304 = vld [vmem:[#allocation2 + $0x330] sm:$0xff]
    %v305 = vld [vmem:[#allocation2 + $0x338] sm:$0xff]
    %v306 = vld [vmem:[#allocation2 + $0x340] sm:$0xff]
    %v307 = vld [vmem:[#allocation2 + $0x348] sm:$0xff]
    %v308 = vld [vmem:[#allocation2 + $0x350] sm:$0xff]
    %v309 = vld [vmem:[#allocation2 + $0x358] sm:$0xff]
    %v310 = vld [vmem:[#allocation2 + $0x360] sm:$0xff]
    %v311 = vld [vmem:[#allocation2 + $0x368] sm:$0xff]
    %v312 = vld [vmem:[#allocation2 + $0x370] sm:$0xff]
    %v313 = vld [vmem:[#allocation2 + $0x378] sm:$0xff]
    %v314 = vld [vmem:[#allocation2 + $0x380] sm:$0xff]
    %v315 = vld [vmem:[#allocation2 + $0x388] sm:$0xff]
    %v316 = vld [vmem:[#allocation2 + $0x390] sm:$0xff]
    %v317 = vld [vmem:[#allocation2 + $0x398] sm:$0xff]
    %v318 = vld [vmem:[#allocation2 + $0x3a0] sm:$0xff]
    %v319 = vld [vmem:[#allocation2 + $0x3a8] sm:$0xff]
    %v320 = vld [vmem:[#allocation2 + $0x3b0] sm:$0xff]
    %v321 = vld [vmem:[#allocation2 + $0x3b8] sm:$0xff]
    %v322 = vld [vmem:[#allocation2 + $0x3c0] sm:$0xff]
    %v323 = vld [vmem:[#allocation2 + $0x3c8] sm:$0xff]
    %v324 = vld [vmem:[#allocation2 + $0x3d0] sm:$0xff]
    %v325 = vld [vmem:[#allocation2 + $0x3d8] sm:$0xff]
    %v326 = vld [vmem:[#allocation2 + $0x3e0] sm:$0xff]
    %v327 = vld [vmem:[#allocation2 + $0x3e8] sm:$0xff]
    %v328 = vld [vmem:[#allocation2 + $0x3f0] sm:$0xff]
    %v329 = vld [vmem:[#allocation2 + $0x3f8] sm:$0xff]
    %v330 = vld [vmem:[#allocation2 + $0x400] sm:$0xff]
    %v331 = vld [vmem:[#allocation2 + $0x408] sm:$0xff]
    %v332 = vld [vmem:[#allocation2 + $0x410] sm:$0xff]
    %v333 = vld [vmem:[#allocation2 + $0x418] sm:$0xff]
    %v334 = vld [vmem:[#allocation2 + $0x420] sm:$0xff]
    %v335 = vld [vmem:[#allocation2 + $0x428] sm:$0xff]
    %v336 = vld [vmem:[#allocation2 + $0x430] sm:$0xff]
    %v337 = vld [vmem:[#allocation2 + $0x438] sm:$0xff]
    %v338 = vld [vmem:[#allocation2 + $0x440] sm:$0xff]
    %v339 = vld [vmem:[#allocation2 + $0x448] sm:$0xff]
    %v340 = vld [vmem:[#allocation2 + $0x450] sm:$0xff]
    %v341 = vld [vmem:[#allocation2 + $0x458] sm:$0xff]
    %v342 = vld [vmem:[#allocation2 + $0x460] sm:$0xff]
    %v343 = vld [vmem:[#allocation2 + $0x468] sm:$0xff]
    %v344 = vld [vmem:[#allocation2 + $0x470] sm:$0xff]
    %v345 = vld [vmem:[#allocation2 + $0x478] sm:$0xff]
    %v346 = vld [vmem:[#allocation2 + $0x480] sm:$0xff]
    %v347 = vld [vmem:[#allocation2 + $0x488] sm:$0xff]
    %v348 = vld [vmem:[#allocation2 + $0x490] sm:$0xff]
    %v349 = vld [vmem:[#allocation2 + $0x498] sm:$0xff]
    %v350 = vld [vmem:[#allocation2 + $0x4a0] sm:$0xff]
    %v351 = vld [vmem:[#allocation2 + $0x4a8] sm:$0xff]
    %v352 = vld [vmem:[#allocation2 + $0x4b0] sm:$0xff]
    %v353 = vld [vmem:[#allocation2 + $0x4b8] sm:$0xff]
    %v354 = vld [vmem:[#allocation2 + $0x4c0] sm:$0xff]
    %v355 = vld [vmem:[#allocation2 + $0x4c8] sm:$0xff]
    %v356 = vld [vmem:[#allocation2 + $0x4d0] sm:$0xff]
    %v357 = vld [vmem:[#allocation2 + $0x4d8] sm:$0xff]
    %v358 = vld [vmem:[#allocation2 + $0x4e0] sm:$0xff]
    %v359 = vld [vmem:[#allocation2 + $0x4e8] sm:$0xff]
    %v360 = vld [vmem:[#allocation2 + $0x4f0] sm:$0xff]
    %v361 = vld [vmem:[#allocation2 + $0x4f8] sm:$0xff]
    %v362 = vld [vmem:[#allocation2 + $0x500] sm:$0xff]
    %v363 = vld [vmem:[#allocation2 + $0x508] sm:$0xff]
    %v364 = vld [vmem:[#allocation2 + $0x510] sm:$0xff]
    %v365 = vld [vmem:[#allocation2 + $0x518] sm:$0xff]
    %v366 = vld [vmem:[#allocation2 + $0x520] sm:$0xff]
    %v367 = vld [vmem:[#allocation2 + $0x528] sm:$0xff]
    %v368 = vld [vmem:[#allocation2 + $0x530] sm:$0xff]
    %v369 = vld [vmem:[#allocation2 + $0x538] sm:$0xff]
    %v370 = vld [vmem:[#allocation2 + $0x540] sm:$0xff]
    %v371 = vld [vmem:[#allocation2 + $0x548] sm:$0xff]
    %v372 = vld [vmem:[#allocation2 + $0x550] sm:$0xff]
    %v373 = vld [vmem:[#allocation2 + $0x558] sm:$0xff]
    %v374 = vld [vmem:[#allocation2 + $0x560] sm:$0xff]
    %v375 = vld [vmem:[#allocation2 + $0x568] sm:$0xff]
    %v376 = vld [vmem:[#allocation2 + $0x570] sm:$0xff]
    %v377 = vld [vmem:[#allocation2 + $0x578] sm:$0xff]
    %v378 = vld [vmem:[#allocation2 + $0x580] sm:$0xff]
    %v379 = vld [vmem:[#allocation2 + $0x588] sm:$0xff]
    %v380 = vld [vmem:[#allocation2 + $0x590] sm:$0xff]
    %v381 = vld [vmem:[#allocation2 + $0x598] sm:$0xff]
    %v382 = vld [vmem:[#allocation2 + $0x5a0] sm:$0xff]
    %v383 = vld [vmem:[#allocation2 + $0x5a8] sm:$0xff]
    %v384 = vld [vmem:[#allocation2 + $0x5b0] sm:$0xff]
    %v385 = vld [vmem:[#allocation2 + $0x5b8] sm:$0xff]
    %v386 = vld [vmem:[#allocation2 + $0x5c0] sm:$0xff]
    %v387 = vld [vmem:[#allocation2 + $0x5c8] sm:$0xff]
    %v388 = vld [vmem:[#allocation2 + $0x5d0] sm:$0xff]
    %v389 = vld [vmem:[#allocation2 + $0x5d8] sm:$0xff]
    %v390 = vld [vmem:[#allocation2 + $0x5e0] sm:$0xff]
    %v391 = vld [vmem:[#allocation2 + $0x5e8] sm:$0xff]
    %v392 = vld [vmem:[#allocation2 + $0x5f0] sm:$0xff]
    %v393 = vld [vmem:[#allocation2 + $0x5f8] sm:$0xff]
    %v394 = vld [vmem:[#allocation2 + $0x600] sm:$0xff]
    %v395 = vld [vmem:[#allocation2 + $0x608] sm:$0xff]
    %v396 = vld [vmem:[#allocation2 + $0x610] sm:$0xff]
    %v397 = vld [vmem:[#allocation2 + $0x618] sm:$0xff]
    %v398 = vld [vmem:[#allocation2 + $0x620] sm:$0xff]
    %v399 = vld [vmem:[#allocation2 + $0x628] sm:$0xff]
    %v400 = vld [vmem:[#allocation2 + $0x630] sm:$0xff]
    %v401 = vld [vmem:[#allocation2 + $0x638] sm:$0xff]
    %v402 = vld [vmem:[#allocation2 + $0x640] sm:$0xff]
    %v403 = vld [vmem:[#allocation2 + $0x648] sm:$0xff]
    %v404 = vld [vmem:[#allocation2 + $0x650] sm:$0xff]
    %v405 = vld [vmem:[#allocation2 + $0x658] sm:$0xff]
    %v406 = vld [vmem:[#allocation2 + $0x660] sm:$0xff]
    %v407 = vld [vmem:[#allocation2 + $0x668] sm:$0xff]
    %v408 = vld [vmem:[#allocation2 + $0x670] sm:$0xff]
    %v409 = vld [vmem:[#allocation2 + $0x678] sm:$0xff]
    %v410 = vld [vmem:[#allocation2 + $0x680] sm:$0xff]
    %v411 = vld [vmem:[#allocation2 + $0x688] sm:$0xff]
    %v412 = vld [vmem:[#allocation2 + $0x690] sm:$0xff]
    %v413 = vld [vmem:[#allocation2 + $0x698] sm:$0xff]
    %v414 = vld [vmem:[#allocation2 + $0x6a0] sm:$0xff]
    %v415 = vld [vmem:[#allocation2 + $0x6a8] sm:$0xff]
    %v416 = vld [vmem:[#allocation2 + $0x6b0] sm:$0xff]
    %v417 = vld [vmem:[#allocation2 + $0x6b8] sm:$0xff]
    %v418 = vld [vmem:[#allocation2 + $0x6c0] sm:$0xff]
    %v419 = vld [vmem:[#allocation2 + $0x6c8] sm:$0xff]
    %v420 = vld [vmem:[#allocation2 + $0x6d0] sm:$0xff]
    %v421 = vld [vmem:[#allocation2 + $0x6d8] sm:$0xff]
    %v422 = vld [vmem:[#allocation2 + $0x6e0] sm:$0xff]
    %v423 = vld [vmem:[#allocation2 + $0x6e8] sm:$0xff]
    %v424 = vld [vmem:[#allocation2 + $0x6f0] sm:$0xff]
    %v425 = vld [vmem:[#allocation2 + $0x6f8] sm:$0xff]
    %v426 = vld [vmem:[#allocation2 + $0x700] sm:$0xff]
    %v427 = vld [vmem:[#allocation2 + $0x708] sm:$0xff]
    %v428 = vld [vmem:[#allocation2 + $0x710] sm:$0xff]
    %v429 = vld [vmem:[#allocation2 + $0x718] sm:$0xff]
    %v430 = vld [vmem:[#allocation2 + $0x720] sm:$0xff]
    %v431 = vld [vmem:[#allocation2 + $0x728] sm:$0xff]
    %v432 = vld [vmem:[#allocation2 + $0x730] sm:$0xff]
    %v433 = vld [vmem:[#allocation2 + $0x738] sm:$0xff]
    %v434 = vld [vmem:[#allocation2 + $0x740] sm:$0xff]
    %v435 = vld [vmem:[#allocation2 + $0x748] sm:$0xff]
    %v436 = vld [vmem:[#allocation2 + $0x750] sm:$0xff]
    %v437 = vld [vmem:[#allocation2 + $0x758] sm:$0xff]
    %v438 = vld [vmem:[#allocation2 + $0x760] sm:$0xff]
    %v439 = vld [vmem:[#allocation2 + $0x768] sm:$0xff]
    %v440 = vld [vmem:[#allocation2 + $0x770] sm:$0xff]
    %v441 = vld [vmem:[#allocation2 + $0x778] sm:$0xff]
    %v442 = vld [vmem:[#allocation2 + $0x780] sm:$0xff]
    %v443 = vld [vmem:[#allocation2 + $0x788] sm:$0xff]
    %v444 = vld [vmem:[#allocation2 + $0x790] sm:$0xff]
    %v445 = vld [vmem:[#allocation2 + $0x798] sm:$0xff]
    %v446 = vld [vmem:[#allocation2 + $0x7a0] sm:$0xff]
    %v447 = vld [vmem:[#allocation2 + $0x7a8] sm:$0xff]
    %v448 = vld [vmem:[#allocation2 + $0x7b0] sm:$0xff]
    %v449 = vld [vmem:[#allocation2 + $0x7b8] sm:$0xff]
    %v450 = vld [vmem:[#allocation2 + $0x7c0] sm:$0xff]
    %v451 = vld [vmem:[#allocation2 + $0x7c8] sm:$0xff]
    %v452 = vld [vmem:[#allocation2 + $0x7d0] sm:$0xff]
    %v453 = vld [vmem:[#allocation2 + $0x7d8] sm:$0xff]
    %v454 = vld [vmem:[#allocation2 + $0x7e0] sm:$0xff]
    %v455 = vld [vmem:[#allocation2 + $0x7e8] sm:$0xff]
    %v456 = vld [vmem:[#allocation2 + $0x7f0] sm:$0xff]
    %v457 = vld [vmem:[#allocation2 + $0x7f8] sm:$0xff]
    %v458 = vld [vmem:[#allocation2 + $0x800] sm:$0xff]
    %v459 = vld [vmem:[#allocation2 + $0x808] sm:$0xff]
    %v460 = vld [vmem:[#allocation2 + $0x810] sm:$0xff]
    %v461 = vld [vmem:[#allocation2 + $0x818] sm:$0xff]
    %v462 = vld [vmem:[#allocation2 + $0x820] sm:$0xff]
    %v463 = vld [vmem:[#allocation2 + $0x828] sm:$0xff]
    %v464 = vld [vmem:[#allocation2 + $0x830] sm:$0xff]
    %v465 = vld [vmem:[#allocation2 + $0x838] sm:$0xff]
    %v466 = vld [vmem:[#allocation2 + $0x840] sm:$0xff]
    %v467 = vld [vmem:[#allocation2 + $0x848] sm:$0xff]
    %v468 = vld [vmem:[#allocation2 + $0x850] sm:$0xff]
    %v469 = vld [vmem:[#allocation2 + $0x858] sm:$0xff]
    %v470 = vld [vmem:[#allocation2 + $0x860] sm:$0xff]
    %v471 = vld [vmem:[#allocation2 + $0x868] sm:$0xff]
    %v472 = vld [vmem:[#allocation2 + $0x870] sm:$0xff]
    %v473 = vld [vmem:[#allocation2 + $0x878] sm:$0xff]
    %v474 = vld [vmem:[#allocation2 + $0x880] sm:$0xff]
    %v475 = vld [vmem:[#allocation2 + $0x888] sm:$0xff]
    %v476 = vld [vmem:[#allocation2 + $0x890] sm:$0xff]
    %v477 = vld [vmem:[#allocation2 + $0x898] sm:$0xff]
    %v478 = vld [vmem:[#allocation2 + $0x8a0] sm:$0xff]
    %v479 = vld [vmem:[#allocation2 + $0x8a8] sm:$0xff]
    %v480 = vld [vmem:[#allocation2 + $0x8b0] sm:$0xff]
    %v481 = vld [vmem:[#allocation2 + $0x8b8] sm:$0xff]
    %v482 = vld [vmem:[#allocation2 + $0x8c0] sm:$0xff]
    %v483 = vld [vmem:[#allocation2 + $0x8c8] sm:$0xff]
    %v484 = vld [vmem:[#allocation2 + $0x8d0] sm:$0xff]
    %v485 = vld [vmem:[#allocation2 + $0x8d8] sm:$0xff]
    %v486 = vld [vmem:[#allocation2 + $0x8e0] sm:$0xff]
    %v487 = vld [vmem:[#allocation2 + $0x8e8] sm:$0xff]
    %v488 = vld [vmem:[#allocation2 + $0x8f0] sm:$0xff]
    %v489 = vld [vmem:[#allocation2 + $0x8f8] sm:$0xff]
    %v490 = vld [vmem:[#allocation2 + $0x900] sm:$0xff]
    %v491 = vld [vmem:[#allocation2 + $0x908] sm:$0xff]
    %v492 = vld [vmem:[#allocation2 + $0x910] sm:$0xff]
    %v493 = vld [vmem:[#allocation2 + $0x918] sm:$0xff]
    %v494 = vld [vmem:[#allocation2 + $0x920] sm:$0xff]
    %v495 = vld [vmem:[#allocation2 + $0x928] sm:$0xff]
    %v496 = vld [vmem:[#allocation2 + $0x930] sm:$0xff]
    %v497 = vld [vmem:[#allocation2 + $0x938] sm:$0xff]
    %v498 = vld [vmem:[#allocation2 + $0x940] sm:$0xff]
    %v499 = vld [vmem:[#allocation2 + $0x948] sm:$0xff]
    %v500 = vld [vmem:[#allocation2 + $0x950] sm:$0xff]
    %v501 = vld [vmem:[#allocation2 + $0x958] sm:$0xff]
    %v502 = vld [vmem:[#allocation2 + $0x960] sm:$0xff]
    %v503 = vld [vmem:[#allocation2 + $0x968] sm:$0xff]
    %v504 = vld [vmem:[#allocation2 + $0x970] sm:$0xff]
    %v505 = vld [vmem:[#allocation2 + $0x978] sm:$0xff]
    %v506 = vld [vmem:[#allocation2 + $0x980] sm:$0xff]
    %v507 = vld [vmem:[#allocation2 + $0x988] sm:$0xff]
    %v508 = vld [vmem:[#allocation2 + $0x990] sm:$0xff]
    %v509 = vld [vmem:[#allocation2 + $0x998] sm:$0xff]
    %v510 = vld [vmem:[#allocation2 + $0x9a0] sm:$0xff]
    %v511 = vld [vmem:[#allocation2 + $0x9a8] sm:$0xff]
    %v512 = vld [vmem:[#allocation2 + $0x9b0] sm:$0xff]
    %v513 = vld [vmem:[#allocation2 + $0x9b8] sm:$0xff]
    %v514 = vld [vmem:[#allocation2 + $0x9c0] sm:$0xff]
    %v515 = vld [vmem:[#allocation2 + $0x9c8] sm:$0xff]
    %v516 = vld [vmem:[#allocation2 + $0x9d0] sm:$0xff]
    %v517 = vld [vmem:[#allocation2 + $0x9d8] sm:$0xff]
    %v518 = vld [vmem:[#allocation2 + $0x9e0] sm:$0xff]
    %v519 = vld [vmem:[#allocation2 + $0x9e8] sm:$0xff]
    %v520 = vld [vmem:[#allocation2 + $0x9f0] sm:$0xff]
    %v521 = vld [vmem:[#allocation2 + $0x9f8] sm:$0xff]
    %v522 = vld [vmem:[#allocation2 + $0xa00] sm:$0xff]
    %v523 = vld [vmem:[#allocation2 + $0xa08] sm:$0xff]
    %v524 = vld [vmem:[#allocation2 + $0xa10] sm:$0xff]
    %v525 = vld [vmem:[#allocation2 + $0xa18] sm:$0xff]
    %v526 = vld [vmem:[#allocation2 + $0xa20] sm:$0xff]
    %v527 = vld [vmem:[#allocation2 + $0xa28] sm:$0xff]
    %v528 = vld [vmem:[#allocation2 + $0xa30] sm:$0xff]
    %v529 = vld [vmem:[#allocation2 + $0xa38] sm:$0xff]
    %v530 = vld [vmem:[#allocation2 + $0xa40] sm:$0xff]
    %v531 = vld [vmem:[#allocation2 + $0xa48] sm:$0xff]
    %v532 = vld [vmem:[#allocation2 + $0xa50] sm:$0xff]
    %v533 = vld [vmem:[#allocation2 + $0xa58] sm:$0xff]
    %v534 = vld [vmem:[#allocation2 + $0xa60] sm:$0xff]
    %v535 = vld [vmem:[#allocation2 + $0xa68] sm:$0xff]
    %v536 = vld [vmem:[#allocation2 + $0xa70] sm:$0xff]
    %v537 = vld [vmem:[#allocation2 + $0xa78] sm:$0xff]
    %v538 = vld [vmem:[#allocation2 + $0xa80] sm:$0xff]
    %v539 = vld [vmem:[#allocation2 + $0xa88] sm:$0xff]
    %v540 = vld [vmem:[#allocation2 + $0xa90] sm:$0xff]
    %v541 = vld [vmem:[#allocation2 + $0xa98] sm:$0xff]
    %v542 = vld [vmem:[#allocation2 + $0xaa0] sm:$0xff]
    %v543 = vld [vmem:[#allocation2 + $0xaa8] sm:$0xff]
    %v544 = vld [vmem:[#allocation2 + $0xab0] sm:$0xff]
    %v545 = vld [vmem:[#allocation2 + $0xab8] sm:$0xff]
    %v546 = vld [vmem:[#allocation2 + $0xac0] sm:$0xff]
    %v547 = vld [vmem:[#allocation2 + $0xac8] sm:$0xff]
    %v548 = vld [vmem:[#allocation2 + $0xad0] sm:$0xff]
    %v549 = vld [vmem:[#allocation2 + $0xad8] sm:$0xff]
    %v550 = vld [vmem:[#allocation2 + $0xae0] sm:$0xff]
    %v551 = vld [vmem:[#allocation2 + $0xae8] sm:$0xff]
    %v552 = vld [vmem:[#allocation2 + $0xaf0] sm:$0xff]
    %v553 = vld [vmem:[#allocation2 + $0xaf8] sm:$0xff]
    %v554 = vld [vmem:[#allocation2 + $0xb00] sm:$0xff]
    %v555 = vld [vmem:[#allocation2 + $0xb08] sm:$0xff]
    %v556 = vld [vmem:[#allocation2 + $0xb10] sm:$0xff]
    %v557 = vld [vmem:[#allocation2 + $0xb18] sm:$0xff]
    %v558 = vld [vmem:[#allocation2 + $0xb20] sm:$0xff]
    %v559 = vld [vmem:[#allocation2 + $0xb28] sm:$0xff]
    %v560 = vld [vmem:[#allocation2 + $0xb30] sm:$0xff]
    %v561 = vld [vmem:[#allocation2 + $0xb38] sm:$0xff]
    %v562 = vld [vmem:[#allocation2 + $0xb40] sm:$0xff]
    %v563 = vld [vmem:[#allocation2 + $0xb48] sm:$0xff]
    %v564 = vld [vmem:[#allocation2 + $0xb50] sm:$0xff]
    %v565 = vld [vmem:[#allocation2 + $0xb58] sm:$0xff]
    %v566 = vld [vmem:[#allocation2 + $0xb60] sm:$0xff]
    %v567 = vld [vmem:[#allocation2 + $0xb68] sm:$0xff]
    %v568 = vld [vmem:[#allocation2 + $0xb70] sm:$0xff]
    %v569 = vld [vmem:[#allocation2 + $0xb78] sm:$0xff]
    %v570 = vld [vmem:[#allocation2 + $0xb80] sm:$0xff]
    %v571 = vld [vmem:[#allocation2 + $0xb88] sm:$0xff]
    %v572 = vld [vmem:[#allocation2 + $0xb90] sm:$0xff]
    %v573 = vld [vmem:[#allocation2 + $0xb98] sm:$0xff]
    %v574 = vld [vmem:[#allocation2 + $0xba0] sm:$0xff]
    %v575 = vld [vmem:[#allocation2 + $0xba8] sm:$0xff]
    %v576 = vld [vmem:[#allocation2 + $0xbb0] sm:$0xff]
    %v577 = vld [vmem:[#allocation2 + $0xbb8] sm:$0xff]
    %v578 = vld [vmem:[#allocation2 + $0xbc0] sm:$0xff]
    %v579 = vld [vmem:[#allocation2 + $0xbc8] sm:$0xff]
    %v580 = vld [vmem:[#allocation2 + $0xbd0] sm:$0xff]
    %v581 = vld [vmem:[#allocation2 + $0xbd8] sm:$0xff]
    %v582 = vld [vmem:[#allocation2 + $0xbe0] sm:$0xff]
    %v583 = vld [vmem:[#allocation2 + $0xbe8] sm:$0xff]
    %v584 = vld [vmem:[#allocation2 + $0xbf0] sm:$0xff]
    %v585 = vld [vmem:[#allocation2 + $0xbf8] sm:$0xff]
    %v586 = vld [vmem:[#allocation4] sm:$0xff]
    %v588 = vlaneseq
    %v589 = vshrl.u32 %v588, 7
    %v590 = vsub.s32 0, %v589
    %v591 = vrot.slane %v586, %v590
    %v592 = vlaneseq
    %v593 = vshrl.u32 %v592, 7
    %v594 = vsub.s32 1, %v593
    %v595 = vrot.slane %v586, %v594
    %v596 = vlaneseq
    %v597 = vshrl.u32 %v596, 7
    %v598 = vsub.s32 2, %v597
    %v599 = vrot.slane %v586, %v598
    %v600 = vlaneseq
    %v601 = vshrl.u32 %v600, 7
    %v602 = vsub.s32 3, %v601
    %v603 = vrot.slane %v586, %v602
    %v604 = vlaneseq
    %v605 = vshrl.u32 %v604, 7
    %v606 = vsub.s32 4, %v605
    %v607 = vrot.slane %v586, %v606
    %v608 = vlaneseq
    %v609 = vshrl.u32 %v608, 7
    %v610 = vsub.s32 5, %v609
    %v611 = vrot.slane %v586, %v610
    %v612 = vlaneseq
    %v613 = vshrl.u32 %v612, 7
    %v614 = vsub.s32 6, %v613
    %v615 = vrot.slane %v586, %v614
    %v616 = vlaneseq
    %v617 = vshrl.u32 %v616, 7
    %v618 = vsub.s32 7, %v617
    %v619 = vrot.slane %v586, %v618
    %v634 = vunpack.c.l.b16 %v196
    %v635 = vunpack.c.h.b16 %v196
    %v636 = vunpack.c.l.b16 %v197
    %v637 = vunpack.c.h.b16 %v197
    %v638 = vunpack.c.l.b16 %v198
    %v639 = vunpack.c.h.b16 %v198
    %v640 = vunpack.c.l.b16 %v199
    %v641 = vunpack.c.h.b16 %v199
    %v642 = vunpack.c.l.b16 %v200
    %v643 = vunpack.c.h.b16 %v200
    %v644 = vunpack.c.l.b16 %v201
    %v645 = vunpack.c.h.b16 %v201
    %v646 = vpack.c.b16 %v640, %v634
    %v647 = vpack.c.b16 %v641, %v635
    %v648 = vpack.c.b16 %v642, %v636
    %v649 = vpack.c.b16 %v643, %v637
    %v650 = vpack.c.b16 %v644, %v638
    %v651 = vpack.c.b16 %v645, %v639
    %v1042 = vunpack.c.l.b16 %v202
    %v1043 = vunpack.c.h.b16 %v202
    %v1044 = vunpack.c.l.b16 %v203
    %v1045 = vunpack.c.h.b16 %v203
    %v1046 = vunpack.c.l.b16 %v204
    %v1047 = vunpack.c.h.b16 %v204
    %v1048 = vunpack.c.l.b16 %v205
    %v1049 = vunpack.c.h.b16 %v205
    %v1050 = vunpack.c.l.b16 %v206
    %v1051 = vunpack.c.h.b16 %v206
    %v1052 = vunpack.c.l.b16 %v207
    %v1053 = vunpack.c.h.b16 %v207
    %v1054 = vunpack.c.l.b16 %v208
    %v1055 = vunpack.c.h.b16 %v208
    %v1056 = vunpack.c.l.b16 %v209
    %v1057 = vunpack.c.h.b16 %v209
    %v1058 = vunpack.c.l.b16 %v210
    %v1059 = vunpack.c.h.b16 %v210
    %v1060 = vunpack.c.l.b16 %v211
    %v1061 = vunpack.c.h.b16 %v211
    %v1062 = vunpack.c.l.b16 %v212
    %v1063 = vunpack.c.h.b16 %v212
    %v1064 = vunpack.c.l.b16 %v213
    %v1065 = vunpack.c.h.b16 %v213
    %v1066 = vunpack.c.l.b16 %v214
    %v1067 = vunpack.c.h.b16 %v214
    %v1068 = vunpack.c.l.b16 %v215
    %v1069 = vunpack.c.h.b16 %v215
    %v1070 = vunpack.c.l.b16 %v216
    %v1071 = vunpack.c.h.b16 %v216
    %v1072 = vunpack.c.l.b16 %v217
    %v1073 = vunpack.c.h.b16 %v217
    %v1074 = vunpack.c.l.b16 %v218
    %v1075 = vunpack.c.h.b16 %v218
    %v1076 = vunpack.c.l.b16 %v219
    %v1077 = vunpack.c.h.b16 %v219
    %v1078 = vunpack.c.l.b16 %v220
    %v1079 = vunpack.c.h.b16 %v220
    %v1080 = vunpack.c.l.b16 %v221
    %v1081 = vunpack.c.h.b16 %v221
    %v1082 = vunpack.c.l.b16 %v222
    %v1083 = vunpack.c.h.b16 %v222
    %v1084 = vunpack.c.l.b16 %v223
    %v1085 = vunpack.c.h.b16 %v223
    %v1086 = vunpack.c.l.b16 %v224
    %v1087 = vunpack.c.h.b16 %v224
    %v1088 = vunpack.c.l.b16 %v225
    %v1089 = vunpack.c.h.b16 %v225
    %v1090 = vunpack.c.l.b16 %v226
    %v1091 = vunpack.c.h.b16 %v226
    %v1092 = vunpack.c.l.b16 %v227
    %v1093 = vunpack.c.h.b16 %v227
    %v1094 = vunpack.c.l.b16 %v228
    %v1095 = vunpack.c.h.b16 %v228
    %v1096 = vunpack.c.l.b16 %v229
    %v1097 = vunpack.c.h.b16 %v229
    %v1098 = vunpack.c.l.b16 %v230
    %v1099 = vunpack.c.h.b16 %v230
    %v1100 = vunpack.c.l.b16 %v231
    %v1101 = vunpack.c.h.b16 %v231
    %v1102 = vunpack.c.l.b16 %v232
    %v1103 = vunpack.c.h.b16 %v232
    %v1104 = vunpack.c.l.b16 %v233
    %v1105 = vunpack.c.h.b16 %v233
    %v1106 = vunpack.c.l.b16 %v234
    %v1107 = vunpack.c.h.b16 %v234
    %v1108 = vunpack.c.l.b16 %v235
    %v1109 = vunpack.c.h.b16 %v235
    %v1110 = vunpack.c.l.b16 %v236
    %v1111 = vunpack.c.h.b16 %v236
    %v1112 = vunpack.c.l.b16 %v237
    %v1113 = vunpack.c.h.b16 %v237
    %v1114 = vunpack.c.l.b16 %v238
    %v1115 = vunpack.c.h.b16 %v238
    %v1116 = vunpack.c.l.b16 %v239
    %v1117 = vunpack.c.h.b16 %v239
    %v1118 = vunpack.c.l.b16 %v240
    %v1119 = vunpack.c.h.b16 %v240
    %v1120 = vunpack.c.l.b16 %v241
    %v1121 = vunpack.c.h.b16 %v241
    %v1122 = vunpack.c.l.b16 %v242
    %v1123 = vunpack.c.h.b16 %v242
    %v1124 = vunpack.c.l.b16 %v243
    %v1125 = vunpack.c.h.b16 %v243
    %v1126 = vunpack.c.l.b16 %v244
    %v1127 = vunpack.c.h.b16 %v244
    %v1128 = vunpack.c.l.b16 %v245
    %v1129 = vunpack.c.h.b16 %v245
    %v1130 = vunpack.c.l.b16 %v246
    %v1131 = vunpack.c.h.b16 %v246
    %v1132 = vunpack.c.l.b16 %v247
    %v1133 = vunpack.c.h.b16 %v247
    %v1134 = vunpack.c.l.b16 %v248
    %v1135 = vunpack.c.h.b16 %v248
    %v1136 = vunpack.c.l.b16 %v249
    %v1137 = vunpack.c.h.b16 %v249
    %v1138 = vunpack.c.l.b16 %v250
    %v1139 = vunpack.c.h.b16 %v250
    %v1140 = vunpack.c.l.b16 %v251
    %v1141 = vunpack.c.h.b16 %v251
    %v1142 = vunpack.c.l.b16 %v252
    %v1143 = vunpack.c.h.b16 %v252
    %v1144 = vunpack.c.l.b16 %v253
    %v1145 = vunpack.c.h.b16 %v253
    %v1146 = vunpack.c.l.b16 %v254
    %v1147 = vunpack.c.h.b16 %v254
    %v1148 = vunpack.c.l.b16 %v255
    %v1149 = vunpack.c.h.b16 %v255
    %v1150 = vunpack.c.l.b16 %v256
    %v1151 = vunpack.c.h.b16 %v256
    %v1152 = vunpack.c.l.b16 %v257
    %v1153 = vunpack.c.h.b16 %v257
    %v1154 = vunpack.c.l.b16 %v258
    %v1155 = vunpack.c.h.b16 %v258
    %v1156 = vunpack.c.l.b16 %v259
    %v1157 = vunpack.c.h.b16 %v259
    %v1158 = vunpack.c.l.b16 %v260
    %v1159 = vunpack.c.h.b16 %v260
    %v1160 = vunpack.c.l.b16 %v261
    %v1161 = vunpack.c.h.b16 %v261
    %v1162 = vunpack.c.l.b16 %v262
    %v1163 = vunpack.c.h.b16 %v262
    %v1164 = vunpack.c.l.b16 %v263
    %v1165 = vunpack.c.h.b16 %v263
    %v1166 = vunpack.c.l.b16 %v264
    %v1167 = vunpack.c.h.b16 %v264
    %v1168 = vunpack.c.l.b16 %v265
    %v1169 = vunpack.c.h.b16 %v265
    %v1170 = vunpack.c.l.b16 %v266
    %v1171 = vunpack.c.h.b16 %v266
    %v1172 = vunpack.c.l.b16 %v267
    %v1173 = vunpack.c.h.b16 %v267
    %v1174 = vunpack.c.l.b16 %v268
    %v1175 = vunpack.c.h.b16 %v268
    %v1176 = vunpack.c.l.b16 %v269
    %v1177 = vunpack.c.h.b16 %v269
    %v1178 = vunpack.c.l.b16 %v270
    %v1179 = vunpack.c.h.b16 %v270
    %v1180 = vunpack.c.l.b16 %v271
    %v1181 = vunpack.c.h.b16 %v271
    %v1182 = vunpack.c.l.b16 %v272
    %v1183 = vunpack.c.h.b16 %v272
    %v1184 = vunpack.c.l.b16 %v273
    %v1185 = vunpack.c.h.b16 %v273
    %v1186 = vunpack.c.l.b16 %v274
    %v1187 = vunpack.c.h.b16 %v274
    %v1188 = vunpack.c.l.b16 %v275
    %v1189 = vunpack.c.h.b16 %v275
    %v1190 = vunpack.c.l.b16 %v276
    %v1191 = vunpack.c.h.b16 %v276
    %v1192 = vunpack.c.l.b16 %v277
    %v1193 = vunpack.c.h.b16 %v277
    %v1194 = vunpack.c.l.b16 %v278
    %v1195 = vunpack.c.h.b16 %v278
    %v1196 = vunpack.c.l.b16 %v279
    %v1197 = vunpack.c.h.b16 %v279
    %v1198 = vunpack.c.l.b16 %v280
    %v1199 = vunpack.c.h.b16 %v280
    %v1200 = vunpack.c.l.b16 %v281
    %v1201 = vunpack.c.h.b16 %v281
    %v1202 = vunpack.c.l.b16 %v282
    %v1203 = vunpack.c.h.b16 %v282
    %v1204 = vunpack.c.l.b16 %v283
    %v1205 = vunpack.c.h.b16 %v283
    %v1206 = vunpack.c.l.b16 %v284
    %v1207 = vunpack.c.h.b16 %v284
    %v1208 = vunpack.c.l.b16 %v285
    %v1209 = vunpack.c.h.b16 %v285
    %v1210 = vunpack.c.l.b16 %v286
    %v1211 = vunpack.c.h.b16 %v286
    %v1212 = vunpack.c.l.b16 %v287
    %v1213 = vunpack.c.h.b16 %v287
    %v1214 = vunpack.c.l.b16 %v288
    %v1215 = vunpack.c.h.b16 %v288
    %v1216 = vunpack.c.l.b16 %v289
    %v1217 = vunpack.c.h.b16 %v289
    %v1218 = vunpack.c.l.b16 %v290
    %v1219 = vunpack.c.h.b16 %v290
    %v1220 = vunpack.c.l.b16 %v291
    %v1221 = vunpack.c.h.b16 %v291
    %v1222 = vunpack.c.l.b16 %v292
    %v1223 = vunpack.c.h.b16 %v292
    %v1224 = vunpack.c.l.b16 %v293
    %v1225 = vunpack.c.h.b16 %v293
    %v1226 = vunpack.c.l.b16 %v294
    %v1227 = vunpack.c.h.b16 %v294
    %v1228 = vunpack.c.l.b16 %v295
    %v1229 = vunpack.c.h.b16 %v295
    %v1230 = vunpack.c.l.b16 %v296
    %v1231 = vunpack.c.h.b16 %v296
    %v1232 = vunpack.c.l.b16 %v297
    %v1233 = vunpack.c.h.b16 %v297
    %v1234 = vunpack.c.l.b16 %v298
    %v1235 = vunpack.c.h.b16 %v298
    %v1236 = vunpack.c.l.b16 %v299
    %v1237 = vunpack.c.h.b16 %v299
    %v1238 = vunpack.c.l.b16 %v300
    %v1239 = vunpack.c.h.b16 %v300
    %v1240 = vunpack.c.l.b16 %v301
    %v1241 = vunpack.c.h.b16 %v301
    %v1242 = vunpack.c.l.b16 %v302
    %v1243 = vunpack.c.h.b16 %v302
    %v1244 = vunpack.c.l.b16 %v303
    %v1245 = vunpack.c.h.b16 %v303
    %v1246 = vunpack.c.l.b16 %v304
    %v1247 = vunpack.c.h.b16 %v304
    %v1248 = vunpack.c.l.b16 %v305
    %v1249 = vunpack.c.h.b16 %v305
    %v1250 = vunpack.c.l.b16 %v306
    %v1251 = vunpack.c.h.b16 %v306
    %v1252 = vunpack.c.l.b16 %v307
    %v1253 = vunpack.c.h.b16 %v307
    %v1254 = vunpack.c.l.b16 %v308
    %v1255 = vunpack.c.h.b16 %v308
    %v1256 = vunpack.c.l.b16 %v309
    %v1257 = vunpack.c.h.b16 %v309
    %v1258 = vunpack.c.l.b16 %v310
    %v1259 = vunpack.c.h.b16 %v310
    %v1260 = vunpack.c.l.b16 %v311
    %v1261 = vunpack.c.h.b16 %v311
    %v1262 = vunpack.c.l.b16 %v312
    %v1263 = vunpack.c.h.b16 %v312
    %v1264 = vunpack.c.l.b16 %v313
    %v1265 = vunpack.c.h.b16 %v313
    %v1266 = vunpack.c.l.b16 %v314
    %v1267 = vunpack.c.h.b16 %v314
    %v1268 = vunpack.c.l.b16 %v315
    %v1269 = vunpack.c.h.b16 %v315
    %v1270 = vunpack.c.l.b16 %v316
    %v1271 = vunpack.c.h.b16 %v316
    %v1272 = vunpack.c.l.b16 %v317
    %v1273 = vunpack.c.h.b16 %v317
    %v1274 = vunpack.c.l.b16 %v318
    %v1275 = vunpack.c.h.b16 %v318
    %v1276 = vunpack.c.l.b16 %v319
    %v1277 = vunpack.c.h.b16 %v319
    %v1278 = vunpack.c.l.b16 %v320
    %v1279 = vunpack.c.h.b16 %v320
    %v1280 = vunpack.c.l.b16 %v321
    %v1281 = vunpack.c.h.b16 %v321
    %v1282 = vunpack.c.l.b16 %v322
    %v1283 = vunpack.c.h.b16 %v322
    %v1284 = vunpack.c.l.b16 %v323
    %v1285 = vunpack.c.h.b16 %v323
    %v1286 = vunpack.c.l.b16 %v324
    %v1287 = vunpack.c.h.b16 %v324
    %v1288 = vunpack.c.l.b16 %v325
    %v1289 = vunpack.c.h.b16 %v325
    %v1290 = vunpack.c.l.b16 %v326
    %v1291 = vunpack.c.h.b16 %v326
    %v1292 = vunpack.c.l.b16 %v327
    %v1293 = vunpack.c.h.b16 %v327
    %v1294 = vunpack.c.l.b16 %v328
    %v1295 = vunpack.c.h.b16 %v328
    %v1296 = vunpack.c.l.b16 %v329
    %v1297 = vunpack.c.h.b16 %v329
    %v1298 = vunpack.c.l.b16 %v330
    %v1299 = vunpack.c.h.b16 %v330
    %v1300 = vunpack.c.l.b16 %v331
    %v1301 = vunpack.c.h.b16 %v331
    %v1302 = vunpack.c.l.b16 %v332
    %v1303 = vunpack.c.h.b16 %v332
    %v1304 = vunpack.c.l.b16 %v333
    %v1305 = vunpack.c.h.b16 %v333
    %v1306 = vunpack.c.l.b16 %v334
    %v1307 = vunpack.c.h.b16 %v334
    %v1308 = vunpack.c.l.b16 %v335
    %v1309 = vunpack.c.h.b16 %v335
    %v1310 = vunpack.c.l.b16 %v336
    %v1311 = vunpack.c.h.b16 %v336
    %v1312 = vunpack.c.l.b16 %v337
    %v1313 = vunpack.c.h.b16 %v337
    %v1314 = vunpack.c.l.b16 %v338
    %v1315 = vunpack.c.h.b16 %v338
    %v1316 = vunpack.c.l.b16 %v339
    %v1317 = vunpack.c.h.b16 %v339
    %v1318 = vunpack.c.l.b16 %v340
    %v1319 = vunpack.c.h.b16 %v340
    %v1320 = vunpack.c.l.b16 %v341
    %v1321 = vunpack.c.h.b16 %v341
    %v1322 = vunpack.c.l.b16 %v342
    %v1323 = vunpack.c.h.b16 %v342
    %v1324 = vunpack.c.l.b16 %v343
    %v1325 = vunpack.c.h.b16 %v343
    %v1326 = vunpack.c.l.b16 %v344
    %v1327 = vunpack.c.h.b16 %v344
    %v1328 = vunpack.c.l.b16 %v345
    %v1329 = vunpack.c.h.b16 %v345
    %v1330 = vunpack.c.l.b16 %v346
    %v1331 = vunpack.c.h.b16 %v346
    %v1332 = vunpack.c.l.b16 %v347
    %v1333 = vunpack.c.h.b16 %v347
    %v1334 = vunpack.c.l.b16 %v348
    %v1335 = vunpack.c.h.b16 %v348
    %v1336 = vunpack.c.l.b16 %v349
    %v1337 = vunpack.c.h.b16 %v349
    %v1338 = vunpack.c.l.b16 %v350
    %v1339 = vunpack.c.h.b16 %v350
    %v1340 = vunpack.c.l.b16 %v351
    %v1341 = vunpack.c.h.b16 %v351
    %v1342 = vunpack.c.l.b16 %v352
    %v1343 = vunpack.c.h.b16 %v352
    %v1344 = vunpack.c.l.b16 %v353
    %v1345 = vunpack.c.h.b16 %v353
    %v1346 = vunpack.c.l.b16 %v354
    %v1347 = vunpack.c.h.b16 %v354
    %v1348 = vunpack.c.l.b16 %v355
    %v1349 = vunpack.c.h.b16 %v355
    %v1350 = vunpack.c.l.b16 %v356
    %v1351 = vunpack.c.h.b16 %v356
    %v1352 = vunpack.c.l.b16 %v357
    %v1353 = vunpack.c.h.b16 %v357
    %v1354 = vunpack.c.l.b16 %v358
    %v1355 = vunpack.c.h.b16 %v358
    %v1356 = vunpack.c.l.b16 %v359
    %v1357 = vunpack.c.h.b16 %v359
    %v1358 = vunpack.c.l.b16 %v360
    %v1359 = vunpack.c.h.b16 %v360
    %v1360 = vunpack.c.l.b16 %v361
    %v1361 = vunpack.c.h.b16 %v361
    %v1362 = vunpack.c.l.b16 %v362
    %v1363 = vunpack.c.h.b16 %v362
    %v1364 = vunpack.c.l.b16 %v363
    %v1365 = vunpack.c.h.b16 %v363
    %v1366 = vunpack.c.l.b16 %v364
    %v1367 = vunpack.c.h.b16 %v364
    %v1368 = vunpack.c.l.b16 %v365
    %v1369 = vunpack.c.h.b16 %v365
    %v1370 = vunpack.c.l.b16 %v366
    %v1371 = vunpack.c.h.b16 %v366
    %v1372 = vunpack.c.l.b16 %v367
    %v1373 = vunpack.c.h.b16 %v367
    %v1374 = vunpack.c.l.b16 %v368
    %v1375 = vunpack.c.h.b16 %v368
    %v1376 = vunpack.c.l.b16 %v369
    %v1377 = vunpack.c.h.b16 %v369
    %v1378 = vunpack.c.l.b16 %v370
    %v1379 = vunpack.c.h.b16 %v370
    %v1380 = vunpack.c.l.b16 %v371
    %v1381 = vunpack.c.h.b16 %v371
    %v1382 = vunpack.c.l.b16 %v372
    %v1383 = vunpack.c.h.b16 %v372
    %v1384 = vunpack.c.l.b16 %v373
    %v1385 = vunpack.c.h.b16 %v373
    %v1386 = vunpack.c.l.b16 %v374
    %v1387 = vunpack.c.h.b16 %v374
    %v1388 = vunpack.c.l.b16 %v375
    %v1389 = vunpack.c.h.b16 %v375
    %v1390 = vunpack.c.l.b16 %v376
    %v1391 = vunpack.c.h.b16 %v376
    %v1392 = vunpack.c.l.b16 %v377
    %v1393 = vunpack.c.h.b16 %v377
    %v1394 = vunpack.c.l.b16 %v378
    %v1395 = vunpack.c.h.b16 %v378
    %v1396 = vunpack.c.l.b16 %v379
    %v1397 = vunpack.c.h.b16 %v379
    %v1398 = vunpack.c.l.b16 %v380
    %v1399 = vunpack.c.h.b16 %v380
    %v1400 = vunpack.c.l.b16 %v381
    %v1401 = vunpack.c.h.b16 %v381
    %v1402 = vunpack.c.l.b16 %v382
    %v1403 = vunpack.c.h.b16 %v382
    %v1404 = vunpack.c.l.b16 %v383
    %v1405 = vunpack.c.h.b16 %v383
    %v1406 = vunpack.c.l.b16 %v384
    %v1407 = vunpack.c.h.b16 %v384
    %v1408 = vunpack.c.l.b16 %v385
    %v1409 = vunpack.c.h.b16 %v385
    %v1410 = vunpack.c.l.b16 %v386
    %v1411 = vunpack.c.h.b16 %v386
    %v1412 = vunpack.c.l.b16 %v387
    %v1413 = vunpack.c.h.b16 %v387
    %v1414 = vunpack.c.l.b16 %v388
    %v1415 = vunpack.c.h.b16 %v388
    %v1416 = vunpack.c.l.b16 %v389
    %v1417 = vunpack.c.h.b16 %v389
    %v1418 = vunpack.c.l.b16 %v390
    %v1419 = vunpack.c.h.b16 %v390
    %v1420 = vunpack.c.l.b16 %v391
    %v1421 = vunpack.c.h.b16 %v391
    %v1422 = vunpack.c.l.b16 %v392
    %v1423 = vunpack.c.h.b16 %v392
    %v1424 = vunpack.c.l.b16 %v393
    %v1425 = vunpack.c.h.b16 %v393
    %v1426 = vunpack.c.l.b16 %v394
    %v1427 = vunpack.c.h.b16 %v394
    %v1428 = vunpack.c.l.b16 %v395
    %v1429 = vunpack.c.h.b16 %v395
    %v1430 = vunpack.c.l.b16 %v396
    %v1431 = vunpack.c.h.b16 %v396
    %v1432 = vunpack.c.l.b16 %v397
    %v1433 = vunpack.c.h.b16 %v397
    %v1434 = vunpack.c.l.b16 %v398
    %v1435 = vunpack.c.h.b16 %v398
    %v1436 = vunpack.c.l.b16 %v399
    %v1437 = vunpack.c.h.b16 %v399
    %v1438 = vunpack.c.l.b16 %v400
    %v1439 = vunpack.c.h.b16 %v400
    %v1440 = vunpack.c.l.b16 %v401
    %v1441 = vunpack.c.h.b16 %v401
    %v1442 = vunpack.c.l.b16 %v402
    %v1443 = vunpack.c.h.b16 %v402
    %v1444 = vunpack.c.l.b16 %v403
    %v1445 = vunpack.c.h.b16 %v403
    %v1446 = vunpack.c.l.b16 %v404
    %v1447 = vunpack.c.h.b16 %v404
    %v1448 = vunpack.c.l.b16 %v405
    %v1449 = vunpack.c.h.b16 %v405
    %v1450 = vunpack.c.l.b16 %v406
    %v1451 = vunpack.c.h.b16 %v406
    %v1452 = vunpack.c.l.b16 %v407
    %v1453 = vunpack.c.h.b16 %v407
    %v1454 = vunpack.c.l.b16 %v408
    %v1455 = vunpack.c.h.b16 %v408
    %v1456 = vunpack.c.l.b16 %v409
    %v1457 = vunpack.c.h.b16 %v409
    %v1458 = vunpack.c.l.b16 %v410
    %v1459 = vunpack.c.h.b16 %v410
    %v1460 = vunpack.c.l.b16 %v411
    %v1461 = vunpack.c.h.b16 %v411
    %v1462 = vunpack.c.l.b16 %v412
    %v1463 = vunpack.c.h.b16 %v412
    %v1464 = vunpack.c.l.b16 %v413
    %v1465 = vunpack.c.h.b16 %v413
    %v1466 = vunpack.c.l.b16 %v414
    %v1467 = vunpack.c.h.b16 %v414
    %v1468 = vunpack.c.l.b16 %v415
    %v1469 = vunpack.c.h.b16 %v415
    %v1470 = vunpack.c.l.b16 %v416
    %v1471 = vunpack.c.h.b16 %v416
    %v1472 = vunpack.c.l.b16 %v417
    %v1473 = vunpack.c.h.b16 %v417
    %v1474 = vunpack.c.l.b16 %v418
    %v1475 = vunpack.c.h.b16 %v418
    %v1476 = vunpack.c.l.b16 %v419
    %v1477 = vunpack.c.h.b16 %v419
    %v1478 = vunpack.c.l.b16 %v420
    %v1479 = vunpack.c.h.b16 %v420
    %v1480 = vunpack.c.l.b16 %v421
    %v1481 = vunpack.c.h.b16 %v421
    %v1482 = vunpack.c.l.b16 %v422
    %v1483 = vunpack.c.h.b16 %v422
    %v1484 = vunpack.c.l.b16 %v423
    %v1485 = vunpack.c.h.b16 %v423
    %v1486 = vunpack.c.l.b16 %v424
    %v1487 = vunpack.c.h.b16 %v424
    %v1488 = vunpack.c.l.b16 %v425
    %v1489 = vunpack.c.h.b16 %v425
    %v1490 = vunpack.c.l.b16 %v426
    %v1491 = vunpack.c.h.b16 %v426
    %v1492 = vunpack.c.l.b16 %v427
    %v1493 = vunpack.c.h.b16 %v427
    %v1494 = vunpack.c.l.b16 %v428
    %v1495 = vunpack.c.h.b16 %v428
    %v1496 = vunpack.c.l.b16 %v429
    %v1497 = vunpack.c.h.b16 %v429
    %v1498 = vunpack.c.l.b16 %v430
    %v1499 = vunpack.c.h.b16 %v430
    %v1500 = vunpack.c.l.b16 %v431
    %v1501 = vunpack.c.h.b16 %v431
    %v1502 = vunpack.c.l.b16 %v432
    %v1503 = vunpack.c.h.b16 %v432
    %v1504 = vunpack.c.l.b16 %v433
    %v1505 = vunpack.c.h.b16 %v433
    %v1506 = vunpack.c.l.b16 %v434
    %v1507 = vunpack.c.h.b16 %v434
    %v1508 = vunpack.c.l.b16 %v435
    %v1509 = vunpack.c.h.b16 %v435
    %v1510 = vunpack.c.l.b16 %v436
    %v1511 = vunpack.c.h.b16 %v436
    %v1512 = vunpack.c.l.b16 %v437
    %v1513 = vunpack.c.h.b16 %v437
    %v1514 = vunpack.c.l.b16 %v438
    %v1515 = vunpack.c.h.b16 %v438
    %v1516 = vunpack.c.l.b16 %v439
    %v1517 = vunpack.c.h.b16 %v439
    %v1518 = vunpack.c.l.b16 %v440
    %v1519 = vunpack.c.h.b16 %v440
    %v1520 = vunpack.c.l.b16 %v441
    %v1521 = vunpack.c.h.b16 %v441
    %v1522 = vunpack.c.l.b16 %v442
    %v1523 = vunpack.c.h.b16 %v442
    %v1524 = vunpack.c.l.b16 %v443
    %v1525 = vunpack.c.h.b16 %v443
    %v1526 = vunpack.c.l.b16 %v444
    %v1527 = vunpack.c.h.b16 %v444
    %v1528 = vunpack.c.l.b16 %v445
    %v1529 = vunpack.c.h.b16 %v445
    %v1530 = vunpack.c.l.b16 %v446
    %v1531 = vunpack.c.h.b16 %v446
    %v1532 = vunpack.c.l.b16 %v447
    %v1533 = vunpack.c.h.b16 %v447
    %v1534 = vunpack.c.l.b16 %v448
    %v1535 = vunpack.c.h.b16 %v448
    %v1536 = vunpack.c.l.b16 %v449
    %v1537 = vunpack.c.h.b16 %v449
    %v1538 = vunpack.c.l.b16 %v450
    %v1539 = vunpack.c.h.b16 %v450
    %v1540 = vunpack.c.l.b16 %v451
    %v1541 = vunpack.c.h.b16 %v451
    %v1542 = vunpack.c.l.b16 %v452
    %v1543 = vunpack.c.h.b16 %v452
    %v1544 = vunpack.c.l.b16 %v453
    %v1545 = vunpack.c.h.b16 %v453
    %v1546 = vunpack.c.l.b16 %v454
    %v1547 = vunpack.c.h.b16 %v454
    %v1548 = vunpack.c.l.b16 %v455
    %v1549 = vunpack.c.h.b16 %v455
    %v1550 = vunpack.c.l.b16 %v456
    %v1551 = vunpack.c.h.b16 %v456
    %v1552 = vunpack.c.l.b16 %v457
    %v1553 = vunpack.c.h.b16 %v457
    %v1554 = vunpack.c.l.b16 %v458
    %v1555 = vunpack.c.h.b16 %v458
    %v1556 = vunpack.c.l.b16 %v459
    %v1557 = vunpack.c.h.b16 %v459
    %v1558 = vunpack.c.l.b16 %v460
    %v1559 = vunpack.c.h.b16 %v460
    %v1560 = vunpack.c.l.b16 %v461
    %v1561 = vunpack.c.h.b16 %v461
    %v1562 = vunpack.c.l.b16 %v462
    %v1563 = vunpack.c.h.b16 %v462
    %v1564 = vunpack.c.l.b16 %v463
    %v1565 = vunpack.c.h.b16 %v463
    %v1566 = vunpack.c.l.b16 %v464
    %v1567 = vunpack.c.h.b16 %v464
    %v1568 = vunpack.c.l.b16 %v465
    %v1569 = vunpack.c.h.b16 %v465
    %v1570 = vunpack.c.l.b16 %v466
    %v1571 = vunpack.c.h.b16 %v466
    %v1572 = vunpack.c.l.b16 %v467
    %v1573 = vunpack.c.h.b16 %v467
    %v1574 = vunpack.c.l.b16 %v468
    %v1575 = vunpack.c.h.b16 %v468
    %v1576 = vunpack.c.l.b16 %v469
    %v1577 = vunpack.c.h.b16 %v469
    %v1578 = vunpack.c.l.b16 %v470
    %v1579 = vunpack.c.h.b16 %v470
    %v1580 = vunpack.c.l.b16 %v471
    %v1581 = vunpack.c.h.b16 %v471
    %v1582 = vunpack.c.l.b16 %v472
    %v1583 = vunpack.c.h.b16 %v472
    %v1584 = vunpack.c.l.b16 %v473
    %v1585 = vunpack.c.h.b16 %v473
    %v1586 = vunpack.c.l.b16 %v474
    %v1587 = vunpack.c.h.b16 %v474
    %v1588 = vunpack.c.l.b16 %v475
    %v1589 = vunpack.c.h.b16 %v475
    %v1590 = vunpack.c.l.b16 %v476
    %v1591 = vunpack.c.h.b16 %v476
    %v1592 = vunpack.c.l.b16 %v477
    %v1593 = vunpack.c.h.b16 %v477
    %v1594 = vunpack.c.l.b16 %v478
    %v1595 = vunpack.c.h.b16 %v478
    %v1596 = vunpack.c.l.b16 %v479
    %v1597 = vunpack.c.h.b16 %v479
    %v1598 = vunpack.c.l.b16 %v480
    %v1599 = vunpack.c.h.b16 %v480
    %v1600 = vunpack.c.l.b16 %v481
    %v1601 = vunpack.c.h.b16 %v481
    %v1602 = vunpack.c.l.b16 %v482
    %v1603 = vunpack.c.h.b16 %v482
    %v1604 = vunpack.c.l.b16 %v483
    %v1605 = vunpack.c.h.b16 %v483
    %v1606 = vunpack.c.l.b16 %v484
    %v1607 = vunpack.c.h.b16 %v484
    %v1608 = vunpack.c.l.b16 %v485
    %v1609 = vunpack.c.h.b16 %v485
    %v1610 = vunpack.c.l.b16 %v486
    %v1611 = vunpack.c.h.b16 %v486
    %v1612 = vunpack.c.l.b16 %v487
    %v1613 = vunpack.c.h.b16 %v487
    %v1614 = vunpack.c.l.b16 %v488
    %v1615 = vunpack.c.h.b16 %v488
    %v1616 = vunpack.c.l.b16 %v489
    %v1617 = vunpack.c.h.b16 %v489
    %v1618 = vunpack.c.l.b16 %v490
    %v1619 = vunpack.c.h.b16 %v490
    %v1620 = vunpack.c.l.b16 %v491
    %v1621 = vunpack.c.h.b16 %v491
    %v1622 = vunpack.c.l.b16 %v492
    %v1623 = vunpack.c.h.b16 %v492
    %v1624 = vunpack.c.l.b16 %v493
    %v1625 = vunpack.c.h.b16 %v493
    %v1626 = vunpack.c.l.b16 %v494
    %v1627 = vunpack.c.h.b16 %v494
    %v1628 = vunpack.c.l.b16 %v495
    %v1629 = vunpack.c.h.b16 %v495
    %v1630 = vunpack.c.l.b16 %v496
    %v1631 = vunpack.c.h.b16 %v496
    %v1632 = vunpack.c.l.b16 %v497
    %v1633 = vunpack.c.h.b16 %v497
    %v1634 = vunpack.c.l.b16 %v498
    %v1635 = vunpack.c.h.b16 %v498
    %v1636 = vunpack.c.l.b16 %v499
    %v1637 = vunpack.c.h.b16 %v499
    %v1638 = vunpack.c.l.b16 %v500
    %v1639 = vunpack.c.h.b16 %v500
    %v1640 = vunpack.c.l.b16 %v501
    %v1641 = vunpack.c.h.b16 %v501
    %v1642 = vunpack.c.l.b16 %v502
    %v1643 = vunpack.c.h.b16 %v502
    %v1644 = vunpack.c.l.b16 %v503
    %v1645 = vunpack.c.h.b16 %v503
    %v1646 = vunpack.c.l.b16 %v504
    %v1647 = vunpack.c.h.b16 %v504
    %v1648 = vunpack.c.l.b16 %v505
    %v1649 = vunpack.c.h.b16 %v505
    %v1650 = vunpack.c.l.b16 %v506
    %v1651 = vunpack.c.h.b16 %v506
    %v1652 = vunpack.c.l.b16 %v507
    %v1653 = vunpack.c.h.b16 %v507
    %v1654 = vunpack.c.l.b16 %v508
    %v1655 = vunpack.c.h.b16 %v508
    %v1656 = vunpack.c.l.b16 %v509
    %v1657 = vunpack.c.h.b16 %v509
    %v1658 = vunpack.c.l.b16 %v510
    %v1659 = vunpack.c.h.b16 %v510
    %v1660 = vunpack.c.l.b16 %v511
    %v1661 = vunpack.c.h.b16 %v511
    %v1662 = vunpack.c.l.b16 %v512
    %v1663 = vunpack.c.h.b16 %v512
    %v1664 = vunpack.c.l.b16 %v513
    %v1665 = vunpack.c.h.b16 %v513
    %v1666 = vunpack.c.l.b16 %v514
    %v1667 = vunpack.c.h.b16 %v514
    %v1668 = vunpack.c.l.b16 %v515
    %v1669 = vunpack.c.h.b16 %v515
    %v1670 = vunpack.c.l.b16 %v516
    %v1671 = vunpack.c.h.b16 %v516
    %v1672 = vunpack.c.l.b16 %v517
    %v1673 = vunpack.c.h.b16 %v517
    %v1674 = vunpack.c.l.b16 %v518
    %v1675 = vunpack.c.h.b16 %v518
    %v1676 = vunpack.c.l.b16 %v519
    %v1677 = vunpack.c.h.b16 %v519
    %v1678 = vunpack.c.l.b16 %v520
    %v1679 = vunpack.c.h.b16 %v520
    %v1680 = vunpack.c.l.b16 %v521
    %v1681 = vunpack.c.h.b16 %v521
    %v1682 = vunpack.c.l.b16 %v522
    %v1683 = vunpack.c.h.b16 %v522
    %v1684 = vunpack.c.l.b16 %v523
    %v1685 = vunpack.c.h.b16 %v523
    %v1686 = vunpack.c.l.b16 %v524
    %v1687 = vunpack.c.h.b16 %v524
    %v1688 = vunpack.c.l.b16 %v525
    %v1689 = vunpack.c.h.b16 %v525
    %v1690 = vunpack.c.l.b16 %v526
    %v1691 = vunpack.c.h.b16 %v526
    %v1692 = vunpack.c.l.b16 %v527
    %v1693 = vunpack.c.h.b16 %v527
    %v1694 = vunpack.c.l.b16 %v528
    %v1695 = vunpack.c.h.b16 %v528
    %v1696 = vunpack.c.l.b16 %v529
    %v1697 = vunpack.c.h.b16 %v529
    %v1698 = vunpack.c.l.b16 %v530
    %v1699 = vunpack.c.h.b16 %v530
    %v1700 = vunpack.c.l.b16 %v531
    %v1701 = vunpack.c.h.b16 %v531
    %v1702 = vunpack.c.l.b16 %v532
    %v1703 = vunpack.c.h.b16 %v532
    %v1704 = vunpack.c.l.b16 %v533
    %v1705 = vunpack.c.h.b16 %v533
    %v1706 = vunpack.c.l.b16 %v534
    %v1707 = vunpack.c.h.b16 %v534
    %v1708 = vunpack.c.l.b16 %v535
    %v1709 = vunpack.c.h.b16 %v535
    %v1710 = vunpack.c.l.b16 %v536
    %v1711 = vunpack.c.h.b16 %v536
    %v1712 = vunpack.c.l.b16 %v537
    %v1713 = vunpack.c.h.b16 %v537
    %v1714 = vunpack.c.l.b16 %v538
    %v1715 = vunpack.c.h.b16 %v538
    %v1716 = vunpack.c.l.b16 %v539
    %v1717 = vunpack.c.h.b16 %v539
    %v1718 = vunpack.c.l.b16 %v540
    %v1719 = vunpack.c.h.b16 %v540
    %v1720 = vunpack.c.l.b16 %v541
    %v1721 = vunpack.c.h.b16 %v541
    %v1722 = vunpack.c.l.b16 %v542
    %v1723 = vunpack.c.h.b16 %v542
    %v1724 = vunpack.c.l.b16 %v543
    %v1725 = vunpack.c.h.b16 %v543
    %v1726 = vunpack.c.l.b16 %v544
    %v1727 = vunpack.c.h.b16 %v544
    %v1728 = vunpack.c.l.b16 %v545
    %v1729 = vunpack.c.h.b16 %v545
    %v1730 = vunpack.c.l.b16 %v546
    %v1731 = vunpack.c.h.b16 %v546
    %v1732 = vunpack.c.l.b16 %v547
    %v1733 = vunpack.c.h.b16 %v547
    %v1734 = vunpack.c.l.b16 %v548
    %v1735 = vunpack.c.h.b16 %v548
    %v1736 = vunpack.c.l.b16 %v549
    %v1737 = vunpack.c.h.b16 %v549
    %v1738 = vunpack.c.l.b16 %v550
    %v1739 = vunpack.c.h.b16 %v550
    %v1740 = vunpack.c.l.b16 %v551
    %v1741 = vunpack.c.h.b16 %v551
    %v1742 = vunpack.c.l.b16 %v552
    %v1743 = vunpack.c.h.b16 %v552
    %v1744 = vunpack.c.l.b16 %v553
    %v1745 = vunpack.c.h.b16 %v553
    %v1746 = vunpack.c.l.b16 %v554
    %v1747 = vunpack.c.h.b16 %v554
    %v1748 = vunpack.c.l.b16 %v555
    %v1749 = vunpack.c.h.b16 %v555
    %v1750 = vunpack.c.l.b16 %v556
    %v1751 = vunpack.c.h.b16 %v556
    %v1752 = vunpack.c.l.b16 %v557
    %v1753 = vunpack.c.h.b16 %v557
    %v1754 = vunpack.c.l.b16 %v558
    %v1755 = vunpack.c.h.b16 %v558
    %v1756 = vunpack.c.l.b16 %v559
    %v1757 = vunpack.c.h.b16 %v559
    %v1758 = vunpack.c.l.b16 %v560
    %v1759 = vunpack.c.h.b16 %v560
    %v1760 = vunpack.c.l.b16 %v561
    %v1761 = vunpack.c.h.b16 %v561
    %v1762 = vunpack.c.l.b16 %v562
    %v1763 = vunpack.c.h.b16 %v562
    %v1764 = vunpack.c.l.b16 %v563
    %v1765 = vunpack.c.h.b16 %v563
    %v1766 = vunpack.c.l.b16 %v564
    %v1767 = vunpack.c.h.b16 %v564
    %v1768 = vunpack.c.l.b16 %v565
    %v1769 = vunpack.c.h.b16 %v565
    %v1770 = vunpack.c.l.b16 %v566
    %v1771 = vunpack.c.h.b16 %v566
    %v1772 = vunpack.c.l.b16 %v567
    %v1773 = vunpack.c.h.b16 %v567
    %v1774 = vunpack.c.l.b16 %v568
    %v1775 = vunpack.c.h.b16 %v568
    %v1776 = vunpack.c.l.b16 %v569
    %v1777 = vunpack.c.h.b16 %v569
    %v1778 = vunpack.c.l.b16 %v570
    %v1779 = vunpack.c.h.b16 %v570
    %v1780 = vunpack.c.l.b16 %v571
    %v1781 = vunpack.c.h.b16 %v571
    %v1782 = vunpack.c.l.b16 %v572
    %v1783 = vunpack.c.h.b16 %v572
    %v1784 = vunpack.c.l.b16 %v573
    %v1785 = vunpack.c.h.b16 %v573
    %v1786 = vunpack.c.l.b16 %v574
    %v1787 = vunpack.c.h.b16 %v574
    %v1788 = vunpack.c.l.b16 %v575
    %v1789 = vunpack.c.h.b16 %v575
    %v1790 = vunpack.c.l.b16 %v576
    %v1791 = vunpack.c.h.b16 %v576
    %v1792 = vunpack.c.l.b16 %v577
    %v1793 = vunpack.c.h.b16 %v577
    %v1794 = vunpack.c.l.b16 %v578
    %v1795 = vunpack.c.h.b16 %v578
    %v1796 = vunpack.c.l.b16 %v579
    %v1797 = vunpack.c.h.b16 %v579
    %v1798 = vunpack.c.l.b16 %v580
    %v1799 = vunpack.c.h.b16 %v580
    %v1800 = vunpack.c.l.b16 %v581
    %v1801 = vunpack.c.h.b16 %v581
    %v1802 = vunpack.c.l.b16 %v582
    %v1803 = vunpack.c.h.b16 %v582
    %v1804 = vunpack.c.l.b16 %v583
    %v1805 = vunpack.c.h.b16 %v583
    %v1806 = vunpack.c.l.b16 %v584
    %v1807 = vunpack.c.h.b16 %v584
    %v1808 = vunpack.c.l.b16 %v585
    %v1809 = vunpack.c.h.b16 %v585
    %v1810 = vpack.c.b16 %v1050, %v1042
    %v1811 = vpack.c.b16 %v1051, %v1043
    %v1812 = vpack.c.b16 %v1052, %v1044
    %v1813 = vpack.c.b16 %v1053, %v1045
    %v1814 = vpack.c.b16 %v1054, %v1046
    %v1815 = vpack.c.b16 %v1055, %v1047
    %v1816 = vpack.c.b16 %v1056, %v1048
    %v1817 = vpack.c.b16 %v1057, %v1049
    %v1818 = vpack.c.b16 %v1066, %v1058
    %v1819 = vpack.c.b16 %v1067, %v1059
    %v1820 = vpack.c.b16 %v1068, %v1060
    %v1821 = vpack.c.b16 %v1069, %v1061
    %v1822 = vpack.c.b16 %v1070, %v1062
    %v1823 = vpack.c.b16 %v1071, %v1063
    %v1824 = vpack.c.b16 %v1072, %v1064
    %v1825 = vpack.c.b16 %v1073, %v1065
    %v1826 = vpack.c.b16 %v1082, %v1074
    %v1827 = vpack.c.b16 %v1083, %v1075
    %v1828 = vpack.c.b16 %v1084, %v1076
    %v1829 = vpack.c.b16 %v1085, %v1077
    %v1830 = vpack.c.b16 %v1086, %v1078
    %v1831 = vpack.c.b16 %v1087, %v1079
    %v1832 = vpack.c.b16 %v1088, %v1080
    %v1833 = vpack.c.b16 %v1089, %v1081
    %v1834 = vpack.c.b16 %v1098, %v1090
    %v1835 = vpack.c.b16 %v1099, %v1091
    %v1836 = vpack.c.b16 %v1100, %v1092
    %v1837 = vpack.c.b16 %v1101, %v1093
    %v1838 = vpack.c.b16 %v1102, %v1094
    %v1839 = vpack.c.b16 %v1103, %v1095
    %v1840 = vpack.c.b16 %v1104, %v1096
    %v1841 = vpack.c.b16 %v1105, %v1097
    %v1842 = vpack.c.b16 %v1114, %v1106
    %v1843 = vpack.c.b16 %v1115, %v1107
    %v1844 = vpack.c.b16 %v1116, %v1108
    %v1845 = vpack.c.b16 %v1117, %v1109
    %v1846 = vpack.c.b16 %v1118, %v1110
    %v1847 = vpack.c.b16 %v1119, %v1111
    %v1848 = vpack.c.b16 %v1120, %v1112
    %v1849 = vpack.c.b16 %v1121, %v1113
    %v1850 = vpack.c.b16 %v1130, %v1122
    %v1851 = vpack.c.b16 %v1131, %v1123
    %v1852 = vpack.c.b16 %v1132, %v1124
    %v1853 = vpack.c.b16 %v1133, %v1125
    %v1854 = vpack.c.b16 %v1134, %v1126
    %v1855 = vpack.c.b16 %v1135, %v1127
    %v1856 = vpack.c.b16 %v1136, %v1128
    %v1857 = vpack.c.b16 %v1137, %v1129
    %v1858 = vpack.c.b16 %v1146, %v1138
    %v1859 = vpack.c.b16 %v1147, %v1139
    %v1860 = vpack.c.b16 %v1148, %v1140
    %v1861 = vpack.c.b16 %v1149, %v1141
    %v1862 = vpack.c.b16 %v1150, %v1142
    %v1863 = vpack.c.b16 %v1151, %v1143
    %v1864 = vpack.c.b16 %v1152, %v1144
    %v1865 = vpack.c.b16 %v1153, %v1145
    %v1866 = vpack.c.b16 %v1162, %v1154
    %v1867 = vpack.c.b16 %v1163, %v1155
    %v1868 = vpack.c.b16 %v1164, %v1156
    %v1869 = vpack.c.b16 %v1165, %v1157
    %v1870 = vpack.c.b16 %v1166, %v1158
    %v1871 = vpack.c.b16 %v1167, %v1159
    %v1872 = vpack.c.b16 %v1168, %v1160
    %v1873 = vpack.c.b16 %v1169, %v1161
    %v1874 = vpack.c.b16 %v1178, %v1170
    %v1875 = vpack.c.b16 %v1179, %v1171
    %v1876 = vpack.c.b16 %v1180, %v1172
    %v1877 = vpack.c.b16 %v1181, %v1173
    %v1878 = vpack.c.b16 %v1182, %v1174
    %v1879 = vpack.c.b16 %v1183, %v1175
    %v1880 = vpack.c.b16 %v1184, %v1176
    %v1881 = vpack.c.b16 %v1185, %v1177
    %v1882 = vpack.c.b16 %v1194, %v1186
    %v1883 = vpack.c.b16 %v1195, %v1187
    %v1884 = vpack.c.b16 %v1196, %v1188
    %v1885 = vpack.c.b16 %v1197, %v1189
    %v1886 = vpack.c.b16 %v1198, %v1190
    %v1887 = vpack.c.b16 %v1199, %v1191
    %v1888 = vpack.c.b16 %v1200, %v1192
    %v1889 = vpack.c.b16 %v1201, %v1193
    %v1890 = vpack.c.b16 %v1210, %v1202
    %v1891 = vpack.c.b16 %v1211, %v1203
    %v1892 = vpack.c.b16 %v1212, %v1204
    %v1893 = vpack.c.b16 %v1213, %v1205
    %v1894 = vpack.c.b16 %v1214, %v1206
    %v1895 = vpack.c.b16 %v1215, %v1207
    %v1896 = vpack.c.b16 %v1216, %v1208
    %v1897 = vpack.c.b16 %v1217, %v1209
    %v1898 = vpack.c.b16 %v1226, %v1218
    %v1899 = vpack.c.b16 %v1227, %v1219
    %v1900 = vpack.c.b16 %v1228, %v1220
    %v1901 = vpack.c.b16 %v1229, %v1221
    %v1902 = vpack.c.b16 %v1230, %v1222
    %v1903 = vpack.c.b16 %v1231, %v1223
    %v1904 = vpack.c.b16 %v1232, %v1224
    %v1905 = vpack.c.b16 %v1233, %v1225
    %v1906 = vpack.c.b16 %v1242, %v1234
    %v1907 = vpack.c.b16 %v1243, %v1235
    %v1908 = vpack.c.b16 %v1244, %v1236
    %v1909 = vpack.c.b16 %v1245, %v1237
    %v1910 = vpack.c.b16 %v1246, %v1238
    %v1911 = vpack.c.b16 %v1247, %v1239
    %v1912 = vpack.c.b16 %v1248, %v1240
    %v1913 = vpack.c.b16 %v1249, %v1241
    %v1914 = vpack.c.b16 %v1258, %v1250
    %v1915 = vpack.c.b16 %v1259, %v1251
    %v1916 = vpack.c.b16 %v1260, %v1252
    %v1917 = vpack.c.b16 %v1261, %v1253
    %v1918 = vpack.c.b16 %v1262, %v1254
    %v1919 = vpack.c.b16 %v1263, %v1255
    %v1920 = vpack.c.b16 %v1264, %v1256
    %v1921 = vpack.c.b16 %v1265, %v1257
    %v1922 = vpack.c.b16 %v1274, %v1266
    %v1923 = vpack.c.b16 %v1275, %v1267
    %v1924 = vpack.c.b16 %v1276, %v1268
    %v1925 = vpack.c.b16 %v1277, %v1269
    %v1926 = vpack.c.b16 %v1278, %v1270
    %v1927 = vpack.c.b16 %v1279, %v1271
    %v1928 = vpack.c.b16 %v1280, %v1272
    %v1929 = vpack.c.b16 %v1281, %v1273
    %v1930 = vpack.c.b16 %v1290, %v1282
    %v1931 = vpack.c.b16 %v1291, %v1283
    %v1932 = vpack.c.b16 %v1292, %v1284
    %v1933 = vpack.c.b16 %v1293, %v1285
    %v1934 = vpack.c.b16 %v1294, %v1286
    %v1935 = vpack.c.b16 %v1295, %v1287
    %v1936 = vpack.c.b16 %v1296, %v1288
    %v1937 = vpack.c.b16 %v1297, %v1289
    %v1938 = vpack.c.b16 %v1306, %v1298
    %v1939 = vpack.c.b16 %v1307, %v1299
    %v1940 = vpack.c.b16 %v1308, %v1300
    %v1941 = vpack.c.b16 %v1309, %v1301
    %v1942 = vpack.c.b16 %v1310, %v1302
    %v1943 = vpack.c.b16 %v1311, %v1303
    %v1944 = vpack.c.b16 %v1312, %v1304
    %v1945 = vpack.c.b16 %v1313, %v1305
    %v1946 = vpack.c.b16 %v1322, %v1314
    %v1947 = vpack.c.b16 %v1323, %v1315
    %v1948 = vpack.c.b16 %v1324, %v1316
    %v1949 = vpack.c.b16 %v1325, %v1317
    %v1950 = vpack.c.b16 %v1326, %v1318
    %v1951 = vpack.c.b16 %v1327, %v1319
    %v1952 = vpack.c.b16 %v1328, %v1320
    %v1953 = vpack.c.b16 %v1329, %v1321
    %v1954 = vpack.c.b16 %v1338, %v1330
    %v1955 = vpack.c.b16 %v1339, %v1331
    %v1956 = vpack.c.b16 %v1340, %v1332
    %v1957 = vpack.c.b16 %v1341, %v1333
    %v1958 = vpack.c.b16 %v1342, %v1334
    %v1959 = vpack.c.b16 %v1343, %v1335
    %v1960 = vpack.c.b16 %v1344, %v1336
    %v1961 = vpack.c.b16 %v1345, %v1337
    %v1962 = vpack.c.b16 %v1354, %v1346
    %v1963 = vpack.c.b16 %v1355, %v1347
    %v1964 = vpack.c.b16 %v1356, %v1348
    %v1965 = vpack.c.b16 %v1357, %v1349
    %v1966 = vpack.c.b16 %v1358, %v1350
    %v1967 = vpack.c.b16 %v1359, %v1351
    %v1968 = vpack.c.b16 %v1360, %v1352
    %v1969 = vpack.c.b16 %v1361, %v1353
    %v1970 = vpack.c.b16 %v1370, %v1362
    %v1971 = vpack.c.b16 %v1371, %v1363
    %v1972 = vpack.c.b16 %v1372, %v1364
    %v1973 = vpack.c.b16 %v1373, %v1365
    %v1974 = vpack.c.b16 %v1374, %v1366
    %v1975 = vpack.c.b16 %v1375, %v1367
    %v1976 = vpack.c.b16 %v1376, %v1368
    %v1977 = vpack.c.b16 %v1377, %v1369
    %v1978 = vpack.c.b16 %v1386, %v1378
    %v1979 = vpack.c.b16 %v1387, %v1379
    %v1980 = vpack.c.b16 %v1388, %v1380
    %v1981 = vpack.c.b16 %v1389, %v1381
    %v1982 = vpack.c.b16 %v1390, %v1382
    %v1983 = vpack.c.b16 %v1391, %v1383
    %v1984 = vpack.c.b16 %v1392, %v1384
    %v1985 = vpack.c.b16 %v1393, %v1385
    %v1986 = vpack.c.b16 %v1402, %v1394
    %v1987 = vpack.c.b16 %v1403, %v1395
    %v1988 = vpack.c.b16 %v1404, %v1396
    %v1989 = vpack.c.b16 %v1405, %v1397
    %v1990 = vpack.c.b16 %v1406, %v1398
    %v1991 = vpack.c.b16 %v1407, %v1399
    %v1992 = vpack.c.b16 %v1408, %v1400
    %v1993 = vpack.c.b16 %v1409, %v1401
    %v1994 = vpack.c.b16 %v1418, %v1410
    %v1995 = vpack.c.b16 %v1419, %v1411
    %v1996 = vpack.c.b16 %v1420, %v1412
    %v1997 = vpack.c.b16 %v1421, %v1413
    %v1998 = vpack.c.b16 %v1422, %v1414
    %v1999 = vpack.c.b16 %v1423, %v1415
    %v2000 = vpack.c.b16 %v1424, %v1416
    %v2001 = vpack.c.b16 %v1425, %v1417
    %v2002 = vpack.c.b16 %v1434, %v1426
    %v2003 = vpack.c.b16 %v1435, %v1427
    %v2004 = vpack.c.b16 %v1436, %v1428
    %v2005 = vpack.c.b16 %v1437, %v1429
    %v2006 = vpack.c.b16 %v1438, %v1430
    %v2007 = vpack.c.b16 %v1439, %v1431
    %v2008 = vpack.c.b16 %v1440, %v1432
    %v2009 = vpack.c.b16 %v1441, %v1433
    %v2010 = vpack.c.b16 %v1450, %v1442
    %v2011 = vpack.c.b16 %v1451, %v1443
    %v2012 = vpack.c.b16 %v1452, %v1444
    %v2013 = vpack.c.b16 %v1453, %v1445
    %v2014 = vpack.c.b16 %v1454, %v1446
    %v2015 = vpack.c.b16 %v1455, %v1447
    %v2016 = vpack.c.b16 %v1456, %v1448
    %v2017 = vpack.c.b16 %v1457, %v1449
    %v2018 = vpack.c.b16 %v1466, %v1458
    %v2019 = vpack.c.b16 %v1467, %v1459
    %v2020 = vpack.c.b16 %v1468, %v1460
    %v2021 = vpack.c.b16 %v1469, %v1461
    %v2022 = vpack.c.b16 %v1470, %v1462
    %v2023 = vpack.c.b16 %v1471, %v1463
    %v2024 = vpack.c.b16 %v1472, %v1464
    %v2025 = vpack.c.b16 %v1473, %v1465
    %v2026 = vpack.c.b16 %v1482, %v1474
    %v2027 = vpack.c.b16 %v1483, %v1475
    %v2028 = vpack.c.b16 %v1484, %v1476
    %v2029 = vpack.c.b16 %v1485, %v1477
    %v2030 = vpack.c.b16 %v1486, %v1478
    %v2031 = vpack.c.b16 %v1487, %v1479
    %v2032 = vpack.c.b16 %v1488, %v1480
    %v2033 = vpack.c.b16 %v1489, %v1481
    %v2034 = vpack.c.b16 %v1498, %v1490
    %v2035 = vpack.c.b16 %v1499, %v1491
    %v2036 = vpack.c.b16 %v1500, %v1492
    %v2037 = vpack.c.b16 %v1501, %v1493
    %v2038 = vpack.c.b16 %v1502, %v1494
    %v2039 = vpack.c.b16 %v1503, %v1495
    %v2040 = vpack.c.b16 %v1504, %v1496
    %v2041 = vpack.c.b16 %v1505, %v1497
    %v2042 = vpack.c.b16 %v1514, %v1506
    %v2043 = vpack.c.b16 %v1515, %v1507
    %v2044 = vpack.c.b16 %v1516, %v1508
    %v2045 = vpack.c.b16 %v1517, %v1509
    %v2046 = vpack.c.b16 %v1518, %v1510
    %v2047 = vpack.c.b16 %v1519, %v1511
    %v2048 = vpack.c.b16 %v1520, %v1512
    %v2049 = vpack.c.b16 %v1521, %v1513
    %v2050 = vpack.c.b16 %v1530, %v1522
    %v2051 = vpack.c.b16 %v1531, %v1523
    %v2052 = vpack.c.b16 %v1532, %v1524
    %v2053 = vpack.c.b16 %v1533, %v1525
    %v2054 = vpack.c.b16 %v1534, %v1526
    %v2055 = vpack.c.b16 %v1535, %v1527
    %v2056 = vpack.c.b16 %v1536, %v1528
    %v2057 = vpack.c.b16 %v1537, %v1529
    %v2058 = vpack.c.b16 %v1546, %v1538
    %v2059 = vpack.c.b16 %v1547, %v1539
    %v2060 = vpack.c.b16 %v1548, %v1540
    %v2061 = vpack.c.b16 %v1549, %v1541
    %v2062 = vpack.c.b16 %v1550, %v1542
    %v2063 = vpack.c.b16 %v1551, %v1543
    %v2064 = vpack.c.b16 %v1552, %v1544
    %v2065 = vpack.c.b16 %v1553, %v1545
    %v2066 = vpack.c.b16 %v1562, %v1554
    %v2067 = vpack.c.b16 %v1563, %v1555
    %v2068 = vpack.c.b16 %v1564, %v1556
    %v2069 = vpack.c.b16 %v1565, %v1557
    %v2070 = vpack.c.b16 %v1566, %v1558
    %v2071 = vpack.c.b16 %v1567, %v1559
    %v2072 = vpack.c.b16 %v1568, %v1560
    %v2073 = vpack.c.b16 %v1569, %v1561
    %v2074 = vpack.c.b16 %v1578, %v1570
    %v2075 = vpack.c.b16 %v1579, %v1571
    %v2076 = vpack.c.b16 %v1580, %v1572
    %v2077 = vpack.c.b16 %v1581, %v1573
    %v2078 = vpack.c.b16 %v1582, %v1574
    %v2079 = vpack.c.b16 %v1583, %v1575
    %v2080 = vpack.c.b16 %v1584, %v1576
    %v2081 = vpack.c.b16 %v1585, %v1577
    %v2082 = vpack.c.b16 %v1594, %v1586
    %v2083 = vpack.c.b16 %v1595, %v1587
    %v2084 = vpack.c.b16 %v1596, %v1588
    %v2085 = vpack.c.b16 %v1597, %v1589
    %v2086 = vpack.c.b16 %v1598, %v1590
    %v2087 = vpack.c.b16 %v1599, %v1591
    %v2088 = vpack.c.b16 %v1600, %v1592
    %v2089 = vpack.c.b16 %v1601, %v1593
    %v2090 = vpack.c.b16 %v1610, %v1602
    %v2091 = vpack.c.b16 %v1611, %v1603
    %v2092 = vpack.c.b16 %v1612, %v1604
    %v2093 = vpack.c.b16 %v1613, %v1605
    %v2094 = vpack.c.b16 %v1614, %v1606
    %v2095 = vpack.c.b16 %v1615, %v1607
    %v2096 = vpack.c.b16 %v1616, %v1608
    %v2097 = vpack.c.b16 %v1617, %v1609
    %v2098 = vpack.c.b16 %v1626, %v1618
    %v2099 = vpack.c.b16 %v1627, %v1619
    %v2100 = vpack.c.b16 %v1628, %v1620
    %v2101 = vpack.c.b16 %v1629, %v1621
    %v2102 = vpack.c.b16 %v1630, %v1622
    %v2103 = vpack.c.b16 %v1631, %v1623
    %v2104 = vpack.c.b16 %v1632, %v1624
    %v2105 = vpack.c.b16 %v1633, %v1625
    %v2106 = vpack.c.b16 %v1642, %v1634
    %v2107 = vpack.c.b16 %v1643, %v1635
    %v2108 = vpack.c.b16 %v1644, %v1636
    %v2109 = vpack.c.b16 %v1645, %v1637
    %v2110 = vpack.c.b16 %v1646, %v1638
    %v2111 = vpack.c.b16 %v1647, %v1639
    %v2112 = vpack.c.b16 %v1648, %v1640
    %v2113 = vpack.c.b16 %v1649, %v1641
    %v2114 = vpack.c.b16 %v1658, %v1650
    %v2115 = vpack.c.b16 %v1659, %v1651
    %v2116 = vpack.c.b16 %v1660, %v1652
    %v2117 = vpack.c.b16 %v1661, %v1653
    %v2118 = vpack.c.b16 %v1662, %v1654
    %v2119 = vpack.c.b16 %v1663, %v1655
    %v2120 = vpack.c.b16 %v1664, %v1656
    %v2121 = vpack.c.b16 %v1665, %v1657
    %v2122 = vpack.c.b16 %v1674, %v1666
    %v2123 = vpack.c.b16 %v1675, %v1667
    %v2124 = vpack.c.b16 %v1676, %v1668
    %v2125 = vpack.c.b16 %v1677, %v1669
    %v2126 = vpack.c.b16 %v1678, %v1670
    %v2127 = vpack.c.b16 %v1679, %v1671
    %v2128 = vpack.c.b16 %v1680, %v1672
    %v2129 = vpack.c.b16 %v1681, %v1673
    %v2130 = vpack.c.b16 %v1690, %v1682
    %v2131 = vpack.c.b16 %v1691, %v1683
    %v2132 = vpack.c.b16 %v1692, %v1684
    %v2133 = vpack.c.b16 %v1693, %v1685
    %v2134 = vpack.c.b16 %v1694, %v1686
    %v2135 = vpack.c.b16 %v1695, %v1687
    %v2136 = vpack.c.b16 %v1696, %v1688
    %v2137 = vpack.c.b16 %v1697, %v1689
    %v2138 = vpack.c.b16 %v1706, %v1698
    %v2139 = vpack.c.b16 %v1707, %v1699
    %v2140 = vpack.c.b16 %v1708, %v1700
    %v2141 = vpack.c.b16 %v1709, %v1701
    %v2142 = vpack.c.b16 %v1710, %v1702
    %v2143 = vpack.c.b16 %v1711, %v1703
    %v2144 = vpack.c.b16 %v1712, %v1704
    %v2145 = vpack.c.b16 %v1713, %v1705
    %v2146 = vpack.c.b16 %v1722, %v1714
    %v2147 = vpack.c.b16 %v1723, %v1715
    %v2148 = vpack.c.b16 %v1724, %v1716
    %v2149 = vpack.c.b16 %v1725, %v1717
    %v2150 = vpack.c.b16 %v1726, %v1718
    %v2151 = vpack.c.b16 %v1727, %v1719
    %v2152 = vpack.c.b16 %v1728, %v1720
    %v2153 = vpack.c.b16 %v1729, %v1721
    %v2154 = vpack.c.b16 %v1738, %v1730
    %v2155 = vpack.c.b16 %v1739, %v1731
    %v2156 = vpack.c.b16 %v1740, %v1732
    %v2157 = vpack.c.b16 %v1741, %v1733
    %v2158 = vpack.c.b16 %v1742, %v1734
    %v2159 = vpack.c.b16 %v1743, %v1735
    %v2160 = vpack.c.b16 %v1744, %v1736
    %v2161 = vpack.c.b16 %v1745, %v1737
    %v2162 = vpack.c.b16 %v1754, %v1746
    %v2163 = vpack.c.b16 %v1755, %v1747
    %v2164 = vpack.c.b16 %v1756, %v1748
    %v2165 = vpack.c.b16 %v1757, %v1749
    %v2166 = vpack.c.b16 %v1758, %v1750
    %v2167 = vpack.c.b16 %v1759, %v1751
    %v2168 = vpack.c.b16 %v1760, %v1752
    %v2169 = vpack.c.b16 %v1761, %v1753
    %v2170 = vpack.c.b16 %v1770, %v1762
    %v2171 = vpack.c.b16 %v1771, %v1763
    %v2172 = vpack.c.b16 %v1772, %v1764
    %v2173 = vpack.c.b16 %v1773, %v1765
    %v2174 = vpack.c.b16 %v1774, %v1766
    %v2175 = vpack.c.b16 %v1775, %v1767
    %v2176 = vpack.c.b16 %v1776, %v1768
    %v2177 = vpack.c.b16 %v1777, %v1769
    %v2178 = vpack.c.b16 %v1786, %v1778
    %v2179 = vpack.c.b16 %v1787, %v1779
    %v2180 = vpack.c.b16 %v1788, %v1780
    %v2181 = vpack.c.b16 %v1789, %v1781
    %v2182 = vpack.c.b16 %v1790, %v1782
    %v2183 = vpack.c.b16 %v1791, %v1783
    %v2184 = vpack.c.b16 %v1792, %v1784
    %v2185 = vpack.c.b16 %v1793, %v1785
    %v2186 = vpack.c.b16 %v1802, %v1794
    %v2187 = vpack.c.b16 %v1803, %v1795
    %v2188 = vpack.c.b16 %v1804, %v1796
    %v2189 = vpack.c.b16 %v1805, %v1797
    %v2190 = vpack.c.b16 %v1806, %v1798
    %v2191 = vpack.c.b16 %v1807, %v1799
    %v2192 = vpack.c.b16 %v1808, %v1800
    %v2193 = vpack.c.b16 %v1809, %v1801
    %2578 = vmatprep.subr.bf16.mxu0 %v1867
    %2579 = vmatpush1.bf16.msra.mxu0 %v1866
    %2580 = vmatprep.subr.bf16.mxu0 %v1859
    %2581 = vmatpush1.bf16.msra.mxu0 %v1858
    %2582 = vmatprep.subr.bf16.mxu0 %v1851
    %2583 = vmatpush1.bf16.msra.mxu0 %v1850
    %2584 = vmatprep.subr.bf16.mxu0 %v1843
    %2585 = vmatpush1.bf16.msra.mxu0 %v1842
    %2586 = vmatprep.subr.bf16.mxu0 %v1835
    %2587 = vmatpush1.bf16.msra.mxu0 %v1834
    %2588 = vmatprep.subr.bf16.mxu0 %v1827
    %2589 = vmatpush1.bf16.msra.mxu0 %v1826
    %2590 = vmatprep.subr.bf16.mxu0 %v1819
    %2591 = vmatpush1.bf16.msra.mxu0 %v1818
    %2592 = vmatprep.subr.bf16.mxu0 %v1811
    %2593 = vmatpush1.bf16.msra.mxu0 %v1810
    %2594 = vmatprep.subr.bf16.mxu0 %v1931
    %2595 = vmatpush2.bf16.msra.mxu0 %v1930
    %2596 = vmatprep.subr.bf16.mxu0 %v1923
    %2597 = vmatpush2.bf16.msra.mxu0 %v1922
    %2598 = vmatprep.subr.bf16.mxu0 %v1915
    %2599 = vmatpush2.bf16.msra.mxu0 %v1914
    %2600 = vmatprep.subr.bf16.mxu0 %v1907
    %2601 = vmatpush2.bf16.msra.mxu0 %v1906
    %2602 = vmatprep.subr.bf16.mxu0 %v1899
    %2603 = vmatpush2.bf16.msra.mxu0 %v1898
    %2604 = vmatprep.subr.bf16.mxu0 %v1891
    %2605 = vmatpush2.bf16.msra.mxu0 %v1890
    %2606 = vmatprep.subr.bf16.mxu0 %v1883
    %2607 = vmatpush2.bf16.msra.mxu0 %v1882
    %2608 = vmatprep.subr.bf16.mxu0 %v1875
    %2609 = vmatpush2.bf16.msra.mxu0 %v1874
    %2610 = vmatprep.mubr.bf16.mxu0 %v647
    %2611 = vmatmul.mubr.bf16.gmra.mxu0 %v646
    %v2612 = vpop.f32.mrf.mxu0
    %v2613 = vadd.f32 %v591, %v2612
    %v2614 = vpop.f32.mrf.mxu0
    %v2615 = vadd.f32 %v595, %v2614
    %v2616 = vpop.f32.mrf.mxu0
    %v2617 = vadd.f32 %v591, %v2616
    %v2618 = vpop.f32.mrf.mxu0
    %v2619 = vadd.f32 %v595, %v2618
    %2620 = vdwg.mxu0
    %2621 = vmatprep.subr.bf16.mxu0 %v1995
    %2622 = vmatpush1.bf16.msra.mxu0 %v1994
    %2623 = vmatprep.subr.bf16.mxu0 %v1987
    %2624 = vmatpush1.bf16.msra.mxu0 %v1986
    %2625 = vmatprep.subr.bf16.mxu0 %v1979
    %2626 = vmatpush1.bf16.msra.mxu0 %v1978
    %2627 = vmatprep.subr.bf16.mxu0 %v1971
    %2628 = vmatpush1.bf16.msra.mxu0 %v1970
    %2629 = vmatprep.subr.bf16.mxu0 %v1963
    %2630 = vmatpush1.bf16.msra.mxu0 %v1962
    %2631 = vmatprep.subr.bf16.mxu0 %v1955
    %2632 = vmatpush1.bf16.msra.mxu0 %v1954
    %2633 = vmatprep.subr.bf16.mxu0 %v1947
    %2634 = vmatpush1.bf16.msra.mxu0 %v1946
    %2635 = vmatprep.subr.bf16.mxu0 %v1939
    %2636 = vmatpush1.bf16.msra.mxu0 %v1938
    %2637 = vmatprep.subr.bf16.mxu0 %v2059
    %2638 = vmatpush2.bf16.msra.mxu0 %v2058
    %2639 = vmatprep.subr.bf16.mxu0 %v2051
    %2640 = vmatpush2.bf16.msra.mxu0 %v2050
    %2641 = vmatprep.subr.bf16.mxu0 %v2043
    %2642 = vmatpush2.bf16.msra.mxu0 %v2042
    %2643 = vmatprep.subr.bf16.mxu0 %v2035
    %2644 = vmatpush2.bf16.msra.mxu0 %v2034
    %2645 = vmatprep.subr.bf16.mxu0 %v2027
    %2646 = vmatpush2.bf16.msra.mxu0 %v2026
    %2647 = vmatprep.subr.bf16.mxu0 %v2019
    %2648 = vmatpush2.bf16.msra.mxu0 %v2018
    %2649 = vmatprep.subr.bf16.mxu0 %v2011
    %2650 = vmatpush2.bf16.msra.mxu0 %v2010
    %2651 = vmatprep.subr.bf16.mxu0 %v2003
    %2652 = vmatpush2.bf16.msra.mxu0 %v2002
    %2653 = vmatprep.mubr.bf16.mxu0 %v649
    %2654 = vmatmul.mubr.bf16.gmra.mxu0 %v648
    %v2655 = vpop.f32.mrf.mxu0
    %v2656 = vadd.f32 %v2613, %v2655
    %v2657 = vpop.f32.mrf.mxu0
    %v2658 = vadd.f32 %v2615, %v2657
    %v2659 = vpop.f32.mrf.mxu0
    %v2660 = vadd.f32 %v2617, %v2659
    %v2661 = vpop.f32.mrf.mxu0
    %v2662 = vadd.f32 %v2619, %v2661
    %2663 = vdwg.mxu0
    %2664 = vmatprep.subr.bf16.mxu0 %v2123
    %2665 = vmatpush1.bf16.msra.mxu0 %v2122
    %2666 = vmatprep.subr.bf16.mxu0 %v2115
    %2667 = vmatpush1.bf16.msra.mxu0 %v2114
    %2668 = vmatprep.subr.bf16.mxu0 %v2107
    %2669 = vmatpush1.bf16.msra.mxu0 %v2106
    %2670 = vmatprep.subr.bf16.mxu0 %v2099
    %2671 = vmatpush1.bf16.msra.mxu0 %v2098
    %2672 = vmatprep.subr.bf16.mxu0 %v2091
    %2673 = vmatpush1.bf16.msra.mxu0 %v2090
    %2674 = vmatprep.subr.bf16.mxu0 %v2083
    %2675 = vmatpush1.bf16.msra.mxu0 %v2082
    %2676 = vmatprep.subr.bf16.mxu0 %v2075
    %2677 = vmatpush1.bf16.msra.mxu0 %v2074
    %2678 = vmatprep.subr.bf16.mxu0 %v2067
    %2679 = vmatpush1.bf16.msra.mxu0 %v2066
    %2680 = vmatprep.subr.bf16.mxu0 %v2187
    %2681 = vmatpush2.bf16.msra.mxu0 %v2186
    %2682 = vmatprep.subr.bf16.mxu0 %v2179
    %2683 = vmatpush2.bf16.msra.mxu0 %v2178
    %2684 = vmatprep.subr.bf16.mxu0 %v2171
    %2685 = vmatpush2.bf16.msra.mxu0 %v2170
    %2686 = vmatprep.subr.bf16.mxu0 %v2163
    %2687 = vmatpush2.bf16.msra.mxu0 %v2162
    %2688 = vmatprep.subr.bf16.mxu0 %v2155
    %2689 = vmatpush2.bf16.msra.mxu0 %v2154
    %2690 = vmatprep.subr.bf16.mxu0 %v2147
    %2691 = vmatpush2.bf16.msra.mxu0 %v2146
    %2692 = vmatprep.subr.bf16.mxu0 %v2139
    %2693 = vmatpush2.bf16.msra.mxu0 %v2138
    %2694 = vmatprep.subr.bf16.mxu0 %v2131
    %2695 = vmatpush2.bf16.msra.mxu0 %v2130
    %2696 = vmatprep.mubr.bf16.mxu0 %v651
    %2697 = vmatmul.mubr.bf16.gmra.mxu0 %v650
    %v2698 = vpop.f32.mrf.mxu0
    %v2699 = vadd.f32 %v2656, %v2698
    %v2700 = vpop.f32.mrf.mxu0
    %v2701 = vadd.f32 %v2658, %v2700
    %v2702 = vpop.f32.mrf.mxu0
    %v2703 = vadd.f32 %v2660, %v2702
    %v2704 = vpop.f32.mrf.mxu0
    %v2705 = vadd.f32 %v2662, %v2704
    %2706 = vdwg.mxu0
    %2707 = vmatprep.subr.bf16.mxu0 %v1869
    %2708 = vmatpush1.bf16.msra.mxu0 %v1868
    %2709 = vmatprep.subr.bf16.mxu0 %v1861
    %2710 = vmatpush1.bf16.msra.mxu0 %v1860
    %2711 = vmatprep.subr.bf16.mxu0 %v1853
    %2712 = vmatpush1.bf16.msra.mxu0 %v1852
    %2713 = vmatprep.subr.bf16.mxu0 %v1845
    %2714 = vmatpush1.bf16.msra.mxu0 %v1844
    %2715 = vmatprep.subr.bf16.mxu0 %v1837
    %2716 = vmatpush1.bf16.msra.mxu0 %v1836
    %2717 = vmatprep.subr.bf16.mxu0 %v1829
    %2718 = vmatpush1.bf16.msra.mxu0 %v1828
    %2719 = vmatprep.subr.bf16.mxu0 %v1821
    %2720 = vmatpush1.bf16.msra.mxu0 %v1820
    %2721 = vmatprep.subr.bf16.mxu0 %v1813
    %2722 = vmatpush1.bf16.msra.mxu0 %v1812
    %2723 = vmatprep.subr.bf16.mxu0 %v1933
    %2724 = vmatpush2.bf16.msra.mxu0 %v1932
    %2725 = vmatprep.subr.bf16.mxu0 %v1925
    %2726 = vmatpush2.bf16.msra.mxu0 %v1924
    %2727 = vmatprep.subr.bf16.mxu0 %v1917
    %2728 = vmatpush2.bf16.msra.mxu0 %v1916
    %2729 = vmatprep.subr.bf16.mxu0 %v1909
    %2730 = vmatpush2.bf16.msra.mxu0 %v1908
    %2731 = vmatprep.subr.bf16.mxu0 %v1901
    %2732 = vmatpush2.bf16.msra.mxu0 %v1900
    %2733 = vmatprep.subr.bf16.mxu0 %v1893
    %2734 = vmatpush2.bf16.msra.mxu0 %v1892
    %2735 = vmatprep.subr.bf16.mxu0 %v1885
    %2736 = vmatpush2.bf16.msra.mxu0 %v1884
    %2737 = vmatprep.subr.bf16.mxu0 %v1877
    %2738 = vmatpush2.bf16.msra.mxu0 %v1876
    %2739 = vmatprep.mubr.bf16.mxu0 %v647
    %2740 = vmatmul.mubr.bf16.gmra.mxu0 %v646
    %v2741 = vpop.f32.mrf.mxu0
    %v2742 = vadd.f32 %v599, %v2741
    %v2743 = vpop.f32.mrf.mxu0
    %v2744 = vadd.f32 %v603, %v2743
    %v2745 = vpop.f32.mrf.mxu0
    %v2746 = vadd.f32 %v599, %v2745
    %v2747 = vpop.f32.mrf.mxu0
    %v2748 = vadd.f32 %v603, %v2747
    %2749 = vdwg.mxu0
    %2750 = vmatprep.subr.bf16.mxu0 %v1997
    %2751 = vmatpush1.bf16.msra.mxu0 %v1996
    %2752 = vmatprep.subr.bf16.mxu0 %v1989
    %2753 = vmatpush1.bf16.msra.mxu0 %v1988
    %2754 = vmatprep.subr.bf16.mxu0 %v1981
    %2755 = vmatpush1.bf16.msra.mxu0 %v1980
    %2756 = vmatprep.subr.bf16.mxu0 %v1973
    %2757 = vmatpush1.bf16.msra.mxu0 %v1972
    %2758 = vmatprep.subr.bf16.mxu0 %v1965
    %2759 = vmatpush1.bf16.msra.mxu0 %v1964
    %2760 = vmatprep.subr.bf16.mxu0 %v1957
    %2761 = vmatpush1.bf16.msra.mxu0 %v1956
    %2762 = vmatprep.subr.bf16.mxu0 %v1949
    %2763 = vmatpush1.bf16.msra.mxu0 %v1948
    %2764 = vmatprep.subr.bf16.mxu0 %v1941
    %2765 = vmatpush1.bf16.msra.mxu0 %v1940
    %2766 = vmatprep.subr.bf16.mxu0 %v2061
    %2767 = vmatpush2.bf16.msra.mxu0 %v2060
    %2768 = vmatprep.subr.bf16.mxu0 %v2053
    %2769 = vmatpush2.bf16.msra.mxu0 %v2052
    %2770 = vmatprep.subr.bf16.mxu0 %v2045
    %2771 = vmatpush2.bf16.msra.mxu0 %v2044
    %2772 = vmatprep.subr.bf16.mxu0 %v2037
    %2773 = vmatpush2.bf16.msra.mxu0 %v2036
    %2774 = vmatprep.subr.bf16.mxu0 %v2029
    %2775 = vmatpush2.bf16.msra.mxu0 %v2028
    %2776 = vmatprep.subr.bf16.mxu0 %v2021
    %2777 = vmatpush2.bf16.msra.mxu0 %v2020
    %2778 = vmatprep.subr.bf16.mxu0 %v2013
    %2779 = vmatpush2.bf16.msra.mxu0 %v2012
    %2780 = vmatprep.subr.bf16.mxu0 %v2005
    %2781 = vmatpush2.bf16.msra.mxu0 %v2004
    %2782 = vmatprep.mubr.bf16.mxu0 %v649
    %2783 = vmatmul.mubr.bf16.gmra.mxu0 %v648
    %v2784 = vpop.f32.mrf.mxu0
    %v2785 = vadd.f32 %v2742, %v2784
    %v2786 = vpop.f32.mrf.mxu0
    %v2787 = vadd.f32 %v2744, %v2786
    %v2788 = vpop.f32.mrf.mxu0
    %v2789 = vadd.f32 %v2746, %v2788
    %v2790 = vpop.f32.mrf.mxu0
    %v2791 = vadd.f32 %v2748, %v2790
    %2792 = vdwg.mxu0
    %2793 = vmatprep.subr.bf16.mxu0 %v2125
    %2794 = vmatpush1.bf16.msra.mxu0 %v2124
    %2795 = vmatprep.subr.bf16.mxu0 %v2117
    %2796 = vmatpush1.bf16.msra.mxu0 %v2116
    %2797 = vmatprep.subr.bf16.mxu0 %v2109
    %2798 = vmatpush1.bf16.msra.mxu0 %v2108
    %2799 = vmatprep.subr.bf16.mxu0 %v2101
    %2800 = vmatpush1.bf16.msra.mxu0 %v2100
    %2801 = vmatprep.subr.bf16.mxu0 %v2093
    %2802 = vmatpush1.bf16.msra.mxu0 %v2092
    %2803 = vmatprep.subr.bf16.mxu0 %v2085
    %2804 = vmatpush1.bf16.msra.mxu0 %v2084
    %2805 = vmatprep.subr.bf16.mxu0 %v2077
    %2806 = vmatpush1.bf16.msra.mxu0 %v2076
    %2807 = vmatprep.subr.bf16.mxu0 %v2069
    %2808 = vmatpush1.bf16.msra.mxu0 %v2068
    %2809 = vmatprep.subr.bf16.mxu0 %v2189
    %2810 = vmatpush2.bf16.msra.mxu0 %v2188
    %2811 = vmatprep.subr.bf16.mxu0 %v2181
    %2812 = vmatpush2.bf16.msra.mxu0 %v2180
    %2813 = vmatprep.subr.bf16.mxu0 %v2173
    %2814 = vmatpush2.bf16.msra.mxu0 %v2172
    %2815 = vmatprep.subr.bf16.mxu0 %v2165
    %2816 = vmatpush2.bf16.msra.mxu0 %v2164
    %2817 = vmatprep.subr.bf16.mxu0 %v2157
    %2818 = vmatpush2.bf16.msra.mxu0 %v2156
    %2819 = vmatprep.subr.bf16.mxu0 %v2149
    %2820 = vmatpush2.bf16.msra.mxu0 %v2148
    %2821 = vmatprep.subr.bf16.mxu0 %v2141
    %2822 = vmatpush2.bf16.msra.mxu0 %v2140
    %2823 = vmatprep.subr.bf16.mxu0 %v2133
    %2824 = vmatpush2.bf16.msra.mxu0 %v2132
    %2825 = vmatprep.mubr.bf16.mxu0 %v651
    %2826 = vmatmul.mubr.bf16.gmra.mxu0 %v650
    %v2827 = vpop.f32.mrf.mxu0
    %v2828 = vadd.f32 %v2785, %v2827
    %v2829 = vpop.f32.mrf.mxu0
    %v2830 = vadd.f32 %v2787, %v2829
    %v2831 = vpop.f32.mrf.mxu0
    %v2832 = vadd.f32 %v2789, %v2831
    %v2833 = vpop.f32.mrf.mxu0
    %v2834 = vadd.f32 %v2791, %v2833
    %2835 = vdwg.mxu0
    %2836 = vmatprep.subr.bf16.mxu0 %v1871
    %2837 = vmatpush1.bf16.msra.mxu0 %v1870
    %2838 = vmatprep.subr.bf16.mxu0 %v1863
    %2839 = vmatpush1.bf16.msra.mxu0 %v1862
    %2840 = vmatprep.subr.bf16.mxu0 %v1855
    %2841 = vmatpush1.bf16.msra.mxu0 %v1854
    %2842 = vmatprep.subr.bf16.mxu0 %v1847
    %2843 = vmatpush1.bf16.msra.mxu0 %v1846
    %2844 = vmatprep.subr.bf16.mxu0 %v1839
    %2845 = vmatpush1.bf16.msra.mxu0 %v1838
    %2846 = vmatprep.subr.bf16.mxu0 %v1831
    %2847 = vmatpush1.bf16.msra.mxu0 %v1830
    %2848 = vmatprep.subr.bf16.mxu0 %v1823
    %2849 = vmatpush1.bf16.msra.mxu0 %v1822
    %2850 = vmatprep.subr.bf16.mxu0 %v1815
    %2851 = vmatpush1.bf16.msra.mxu0 %v1814
    %2852 = vmatprep.subr.bf16.mxu0 %v1935
    %2853 = vmatpush2.bf16.msra.mxu0 %v1934
    %2854 = vmatprep.subr.bf16.mxu0 %v1927
    %2855 = vmatpush2.bf16.msra.mxu0 %v1926
    %2856 = vmatprep.subr.bf16.mxu0 %v1919
    %2857 = vmatpush2.bf16.msra.mxu0 %v1918
    %2858 = vmatprep.subr.bf16.mxu0 %v1911
    %2859 = vmatpush2.bf16.msra.mxu0 %v1910
    %2860 = vmatprep.subr.bf16.mxu0 %v1903
    %2861 = vmatpush2.bf16.msra.mxu0 %v1902
    %2862 = vmatprep.subr.bf16.mxu0 %v1895
    %2863 = vmatpush2.bf16.msra.mxu0 %v1894
    %2864 = vmatprep.subr.bf16.mxu0 %v1887
    %2865 = vmatpush2.bf16.msra.mxu0 %v1886
    %2866 = vmatprep.subr.bf16.mxu0 %v1879
    %2867 = vmatpush2.bf16.msra.mxu0 %v1878
    %2868 = vmatprep.mubr.bf16.mxu0 %v647
    %2869 = vmatmul.mubr.bf16.gmra.mxu0 %v646
    %v2870 = vpop.f32.mrf.mxu0
    %v2871 = vadd.f32 %v607, %v2870
    %v2872 = vpop.f32.mrf.mxu0
    %v2873 = vadd.f32 %v611, %v2872
    %v2874 = vpop.f32.mrf.mxu0
    %v2875 = vadd.f32 %v607, %v2874
    %v2876 = vpop.f32.mrf.mxu0
    %v2877 = vadd.f32 %v611, %v2876
    %2878 = vdwg.mxu0
    %2879 = vmatprep.subr.bf16.mxu0 %v1999
    %2880 = vmatpush1.bf16.msra.mxu0 %v1998
    %2881 = vmatprep.subr.bf16.mxu0 %v1991
    %2882 = vmatpush1.bf16.msra.mxu0 %v1990
    %2883 = vmatprep.subr.bf16.mxu0 %v1983
    %2884 = vmatpush1.bf16.msra.mxu0 %v1982
    %2885 = vmatprep.subr.bf16.mxu0 %v1975
    %2886 = vmatpush1.bf16.msra.mxu0 %v1974
    %2887 = vmatprep.subr.bf16.mxu0 %v1967
    %2888 = vmatpush1.bf16.msra.mxu0 %v1966
    %2889 = vmatprep.subr.bf16.mxu0 %v1959
    %2890 = vmatpush1.bf16.msra.mxu0 %v1958
    %2891 = vmatprep.subr.bf16.mxu0 %v1951
    %2892 = vmatpush1.bf16.msra.mxu0 %v1950
    %2893 = vmatprep.subr.bf16.mxu0 %v1943
    %2894 = vmatpush1.bf16.msra.mxu0 %v1942
    %2895 = vmatprep.subr.bf16.mxu0 %v2063
    %2896 = vmatpush2.bf16.msra.mxu0 %v2062
    %2897 = vmatprep.subr.bf16.mxu0 %v2055
    %2898 = vmatpush2.bf16.msra.mxu0 %v2054
    %2899 = vmatprep.subr.bf16.mxu0 %v2047
    %2900 = vmatpush2.bf16.msra.mxu0 %v2046
    %2901 = vmatprep.subr.bf16.mxu0 %v2039
    %2902 = vmatpush2.bf16.msra.mxu0 %v2038
    %2903 = vmatprep.subr.bf16.mxu0 %v2031
    %2904 = vmatpush2.bf16.msra.mxu0 %v2030
    %2905 = vmatprep.subr.bf16.mxu0 %v2023
    %2906 = vmatpush2.bf16.msra.mxu0 %v2022
    %2907 = vmatprep.subr.bf16.mxu0 %v2015
    %2908 = vmatpush2.bf16.msra.mxu0 %v2014
    %2909 = vmatprep.subr.bf16.mxu0 %v2007
    %2910 = vmatpush2.bf16.msra.mxu0 %v2006
    %2911 = vmatprep.mubr.bf16.mxu0 %v649
    %2912 = vmatmul.mubr.bf16.gmra.mxu0 %v648
    %v2913 = vpop.f32.mrf.mxu0
    %v2914 = vadd.f32 %v2871, %v2913
    %v2915 = vpop.f32.mrf.mxu0
    %v2916 = vadd.f32 %v2873, %v2915
    %v2917 = vpop.f32.mrf.mxu0
    %v2918 = vadd.f32 %v2875, %v2917
    %v2919 = vpop.f32.mrf.mxu0
    %v2920 = vadd.f32 %v2877, %v2919
    %2921 = vdwg.mxu0
    %2922 = vmatprep.subr.bf16.mxu0 %v2127
    %2923 = vmatpush1.bf16.msra.mxu0 %v2126
    %2924 = vmatprep.subr.bf16.mxu0 %v2119
    %2925 = vmatpush1.bf16.msra.mxu0 %v2118
    %2926 = vmatprep.subr.bf16.mxu0 %v2111
    %2927 = vmatpush1.bf16.msra.mxu0 %v2110
    %2928 = vmatprep.subr.bf16.mxu0 %v2103
    %2929 = vmatpush1.bf16.msra.mxu0 %v2102
    %2930 = vmatprep.subr.bf16.mxu0 %v2095
    %2931 = vmatpush1.bf16.msra.mxu0 %v2094
    %2932 = vmatprep.subr.bf16.mxu0 %v2087
    %2933 = vmatpush1.bf16.msra.mxu0 %v2086
    %2934 = vmatprep.subr.bf16.mxu0 %v2079
    %2935 = vmatpush1.bf16.msra.mxu0 %v2078
    %2936 = vmatprep.subr.bf16.mxu0 %v2071
    %2937 = vmatpush1.bf16.msra.mxu0 %v2070
    %2938 = vmatprep.subr.bf16.mxu0 %v2191
    %2939 = vmatpush2.bf16.msra.mxu0 %v2190
    %2940 = vmatprep.subr.bf16.mxu0 %v2183
    %2941 = vmatpush2.bf16.msra.mxu0 %v2182
    %2942 = vmatprep.subr.bf16.mxu0 %v2175
    %2943 = vmatpush2.bf16.msra.mxu0 %v2174
    %2944 = vmatprep.subr.bf16.mxu0 %v2167
    %2945 = vmatpush2.bf16.msra.mxu0 %v2166
    %2946 = vmatprep.subr.bf16.mxu0 %v2159
    %2947 = vmatpush2.bf16.msra.mxu0 %v2158
    %2948 = vmatprep.subr.bf16.mxu0 %v2151
    %2949 = vmatpush2.bf16.msra.mxu0 %v2150
    %2950 = vmatprep.subr.bf16.mxu0 %v2143
    %2951 = vmatpush2.bf16.msra.mxu0 %v2142
    %2952 = vmatprep.subr.bf16.mxu0 %v2135
    %2953 = vmatpush2.bf16.msra.mxu0 %v2134
    %2954 = vmatprep.mubr.bf16.mxu0 %v651
    %2955 = vmatmul.mubr.bf16.gmra.mxu0 %v650
    %v2956 = vpop.f32.mrf.mxu0
    %v2957 = vadd.f32 %v2914, %v2956
    %v2958 = vpop.f32.mrf.mxu0
    %v2959 = vadd.f32 %v2916, %v2958
    %v2960 = vpop.f32.mrf.mxu0
    %v2961 = vadd.f32 %v2918, %v2960
    %v2962 = vpop.f32.mrf.mxu0
    %v2963 = vadd.f32 %v2920, %v2962
    %2964 = vdwg.mxu0
    %2965 = vmatprep.subr.bf16.mxu0 %v1873
    %2966 = vmatpush1.bf16.msra.mxu0 %v1872
    %2967 = vmatprep.subr.bf16.mxu0 %v1865
    %2968 = vmatpush1.bf16.msra.mxu0 %v1864
    %2969 = vmatprep.subr.bf16.mxu0 %v1857
    %2970 = vmatpush1.bf16.msra.mxu0 %v1856
    %2971 = vmatprep.subr.bf16.mxu0 %v1849
    %2972 = vmatpush1.bf16.msra.mxu0 %v1848
    %2973 = vmatprep.subr.bf16.mxu0 %v1841
    %2974 = vmatpush1.bf16.msra.mxu0 %v1840
    %2975 = vmatprep.subr.bf16.mxu0 %v1833
    %2976 = vmatpush1.bf16.msra.mxu0 %v1832
    %2977 = vmatprep.subr.bf16.mxu0 %v1825
    %2978 = vmatpush1.bf16.msra.mxu0 %v1824
    %2979 = vmatprep.subr.bf16.mxu0 %v1817
    %2980 = vmatpush1.bf16.msra.mxu0 %v1816
    %2981 = vmatprep.subr.bf16.mxu0 %v1937
    %2982 = vmatpush2.bf16.msra.mxu0 %v1936
    %2983 = vmatprep.subr.bf16.mxu0 %v1929
    %2984 = vmatpush2.bf16.msra.mxu0 %v1928
    %2985 = vmatprep.subr.bf16.mxu0 %v1921
    %2986 = vmatpush2.bf16.msra.mxu0 %v1920
    %2987 = vmatprep.subr.bf16.mxu0 %v1913
    %2988 = vmatpush2.bf16.msra.mxu0 %v1912
    %2989 = vmatprep.subr.bf16.mxu0 %v1905
    %2990 = vmatpush2.bf16.msra.mxu0 %v1904
    %2991 = vmatprep.subr.bf16.mxu0 %v1897
    %2992 = vmatpush2.bf16.msra.mxu0 %v1896
    %2993 = vmatprep.subr.bf16.mxu0 %v1889
    %2994 = vmatpush2.bf16.msra.mxu0 %v1888
    %2995 = vmatprep.subr.bf16.mxu0 %v1881
    %2996 = vmatpush2.bf16.msra.mxu0 %v1880
    %2997 = vmatprep.mubr.bf16.mxu0 %v647
    %2998 = vmatmul.mubr.bf16.gmra.mxu0 %v646
    %v2999 = vpop.f32.mrf.mxu0
    %v3000 = vadd.f32 %v615, %v2999
    %v3001 = vpop.f32.mrf.mxu0
    %v3002 = vadd.f32 %v619, %v3001
    %v3003 = vpop.f32.mrf.mxu0
    %v3004 = vadd.f32 %v615, %v3003
    %v3005 = vpop.f32.mrf.mxu0
    %v3006 = vadd.f32 %v619, %v3005
    %3007 = vdwg.mxu0
    %3008 = vmatprep.subr.bf16.mxu0 %v2001
    %3009 = vmatpush1.bf16.msra.mxu0 %v2000
    %3010 = vmatprep.subr.bf16.mxu0 %v1993
    %3011 = vmatpush1.bf16.msra.mxu0 %v1992
    %3012 = vmatprep.subr.bf16.mxu0 %v1985
    %3013 = vmatpush1.bf16.msra.mxu0 %v1984
    %3014 = vmatprep.subr.bf16.mxu0 %v1977
    %3015 = vmatpush1.bf16.msra.mxu0 %v1976
    %3016 = vmatprep.subr.bf16.mxu0 %v1969
    %3017 = vmatpush1.bf16.msra.mxu0 %v1968
    %3018 = vmatprep.subr.bf16.mxu0 %v1961
    %3019 = vmatpush1.bf16.msra.mxu0 %v1960
    %3020 = vmatprep.subr.bf16.mxu0 %v1953
    %3021 = vmatpush1.bf16.msra.mxu0 %v1952
    %3022 = vmatprep.subr.bf16.mxu0 %v1945
    %3023 = vmatpush1.bf16.msra.mxu0 %v1944
    %3024 = vmatprep.subr.bf16.mxu0 %v2065
    %3025 = vmatpush2.bf16.msra.mxu0 %v2064
    %3026 = vmatprep.subr.bf16.mxu0 %v2057
    %3027 = vmatpush2.bf16.msra.mxu0 %v2056
    %3028 = vmatprep.subr.bf16.mxu0 %v2049
    %3029 = vmatpush2.bf16.msra.mxu0 %v2048
    %3030 = vmatprep.subr.bf16.mxu0 %v2041
    %3031 = vmatpush2.bf16.msra.mxu0 %v2040
    %3032 = vmatprep.subr.bf16.mxu0 %v2033
    %3033 = vmatpush2.bf16.msra.mxu0 %v2032
    %3034 = vmatprep.subr.bf16.mxu0 %v2025
    %3035 = vmatpush2.bf16.msra.mxu0 %v2024
    %3036 = vmatprep.subr.bf16.mxu0 %v2017
    %3037 = vmatpush2.bf16.msra.mxu0 %v2016
    %3038 = vmatprep.subr.bf16.mxu0 %v2009
    %3039 = vmatpush2.bf16.msra.mxu0 %v2008
    %3040 = vmatprep.mubr.bf16.mxu0 %v649
    %3041 = vmatmul.mubr.bf16.gmra.mxu0 %v648
    %v3042 = vpop.f32.mrf.mxu0
    %v3043 = vadd.f32 %v3000, %v3042
    %v3044 = vpop.f32.mrf.mxu0
    %v3045 = vadd.f32 %v3002, %v3044
    %v3046 = vpop.f32.mrf.mxu0
    %v3047 = vadd.f32 %v3004, %v3046
    %v3048 = vpop.f32.mrf.mxu0
    %v3049 = vadd.f32 %v3006, %v3048
    %3050 = vdwg.mxu0
    %3051 = vmatprep.subr.bf16.mxu0 %v2129
    %3052 = vmatpush1.bf16.msra.mxu0 %v2128
    %3053 = vmatprep.subr.bf16.mxu0 %v2121
    %3054 = vmatpush1.bf16.msra.mxu0 %v2120
    %3055 = vmatprep.subr.bf16.mxu0 %v2113
    %3056 = vmatpush1.bf16.msra.mxu0 %v2112
    %3057 = vmatprep.subr.bf16.mxu0 %v2105
    %3058 = vmatpush1.bf16.msra.mxu0 %v2104
    %3059 = vmatprep.subr.bf16.mxu0 %v2097
    %3060 = vmatpush1.bf16.msra.mxu0 %v2096
    %3061 = vmatprep.subr.bf16.mxu0 %v2089
    %3062 = vmatpush1.bf16.msra.mxu0 %v2088
    %3063 = vmatprep.subr.bf16.mxu0 %v2081
    %3064 = vmatpush1.bf16.msra.mxu0 %v2080
    %3065 = vmatprep.subr.bf16.mxu0 %v2073
    %3066 = vmatpush1.bf16.msra.mxu0 %v2072
    %3067 = vmatprep.subr.bf16.mxu0 %v2193
    %3068 = vmatpush2.bf16.msra.mxu0 %v2192
    %3069 = vmatprep.subr.bf16.mxu0 %v2185
    %3070 = vmatpush2.bf16.msra.mxu0 %v2184
    %3071 = vmatprep.subr.bf16.mxu0 %v2177
    %3072 = vmatpush2.bf16.msra.mxu0 %v2176
    %3073 = vmatprep.subr.bf16.mxu0 %v2169
    %3074 = vmatpush2.bf16.msra.mxu0 %v2168
    %3075 = vmatprep.subr.bf16.mxu0 %v2161
    %3076 = vmatpush2.bf16.msra.mxu0 %v2160
    %3077 = vmatprep.subr.bf16.mxu0 %v2153
    %3078 = vmatpush2.bf16.msra.mxu0 %v2152
    %3079 = vmatprep.subr.bf16.mxu0 %v2145
    %3080 = vmatpush2.bf16.msra.mxu0 %v2144
    %3081 = vmatprep.subr.bf16.mxu0 %v2137
    %3082 = vmatpush2.bf16.msra.mxu0 %v2136
    %3083 = vmatprep.mubr.bf16.mxu0 %v651
    %3084 = vmatmul.mubr.bf16.gmra.mxu0 %v650
    %v3085 = vpop.f32.mrf.mxu0
    %v3086 = vadd.f32 %v3043, %v3085
    %v3087 = vpop.f32.mrf.mxu0
    %v3088 = vadd.f32 %v3045, %v3087
    %v3089 = vpop.f32.mrf.mxu0
    %v3090 = vadd.f32 %v3047, %v3089
    %v3091 = vpop.f32.mrf.mxu0
    %v3092 = vadd.f32 %v3049, %v3091
    %3093 = vdwg.mxu0
    %v3094 = vmax.f32 %v2699, 0.0
    %v3095 = vmax.f32 %v2701, 0.0
    %v3096 = vmax.f32 %v2828, 0.0
    %v3097 = vmax.f32 %v2830, 0.0
    %v3098 = vmax.f32 %v2957, 0.0
    %v3099 = vmax.f32 %v2959, 0.0
    %v3100 = vmax.f32 %v3086, 0.0
    %v3101 = vmax.f32 %v3088, 0.0
    %v3102 = vmax.f32 %v2703, 0.0
    %v3103 = vmax.f32 %v2705, 0.0
    %v3104 = vmax.f32 %v2832, 0.0
    %v3105 = vmax.f32 %v2834, 0.0
    %v3106 = vmax.f32 %v2961, 0.0
    %v3107 = vmax.f32 %v2963, 0.0
    %v3108 = vmax.f32 %v3090, 0.0
    %v3109 = vmax.f32 %v3092, 0.0
    %v3110 = vpack.c.bf16 %v3102, %v3094
    %v3111 = vpack.c.bf16 %v3103, %v3095
    %v3112 = vpack.c.bf16 %v3104, %v3096
    %v3113 = vpack.c.bf16 %v3105, %v3097
    %v3114 = vpack.c.bf16 %v3106, %v3098
    %v3115 = vpack.c.bf16 %v3107, %v3099
    %v3116 = vpack.c.bf16 %v3108, %v3100
    %v3117 = vpack.c.bf16 %v3109, %v3101
    %v3118 = vld [vmem:[#allocation6] sm:$0xff]
    %v3119 = vld [vmem:[#allocation6 + $0x8] sm:$0xff]
    %v3120 = vld [vmem:[#allocation6 + $0x10] sm:$0xff]
    %v3121 = vld [vmem:[#allocation6 + $0x18] sm:$0xff]
    %v3122 = vld [vmem:[#allocation6 + $0x20] sm:$0xff]
    %v3123 = vld [vmem:[#allocation6 + $0x28] sm:$0xff]
    %v3124 = vld [vmem:[#allocation6 + $0x30] sm:$0xff]
    %v3125 = vld [vmem:[#allocation6 + $0x38] sm:$0xff]
    %v3126 = vld [vmem:[#allocation6 + $0x40] sm:$0xff]
    %v3127 = vld [vmem:[#allocation6 + $0x48] sm:$0xff]
    %v3128 = vld [vmem:[#allocation6 + $0x50] sm:$0xff]
    %v3129 = vld [vmem:[#allocation6 + $0x58] sm:$0xff]
    %v3130 = vld [vmem:[#allocation6 + $0x60] sm:$0xff]
    %v3131 = vld [vmem:[#allocation6 + $0x68] sm:$0xff]
    %v3132 = vld [vmem:[#allocation6 + $0x70] sm:$0xff]
    %v3133 = vld [vmem:[#allocation6 + $0x78] sm:$0xff]
    %v3134 = vld [vmem:[#allocation6 + $0x80] sm:$0xff]
    %v3135 = vld [vmem:[#allocation6 + $0x88] sm:$0xff]
    %v3136 = vld [vmem:[#allocation6 + $0x90] sm:$0xff]
    %v3137 = vld [vmem:[#allocation6 + $0x98] sm:$0xff]
    %v3138 = vld [vmem:[#allocation6 + $0xa0] sm:$0xff]
    %v3139 = vld [vmem:[#allocation6 + $0xa8] sm:$0xff]
    %v3140 = vld [vmem:[#allocation6 + $0xb0] sm:$0xff]
    %v3141 = vld [vmem:[#allocation6 + $0xb8] sm:$0xff]
    %v3142 = vld [vmem:[#allocation6 + $0xc0] sm:$0xff]
    %v3143 = vld [vmem:[#allocation6 + $0xc8] sm:$0xff]
    %v3144 = vld [vmem:[#allocation6 + $0xd0] sm:$0xff]
    %v3145 = vld [vmem:[#allocation6 + $0xd8] sm:$0xff]
    %v3146 = vld [vmem:[#allocation6 + $0xe0] sm:$0xff]
    %v3147 = vld [vmem:[#allocation6 + $0xe8] sm:$0xff]
    %v3148 = vld [vmem:[#allocation6 + $0xf0] sm:$0xff]
    %v3149 = vld [vmem:[#allocation6 + $0xf8] sm:$0xff]
    %v3150 = vld [vmem:[#allocation6 + $0x100] sm:$0xff]
    %v3151 = vld [vmem:[#allocation6 + $0x108] sm:$0xff]
    %v3152 = vld [vmem:[#allocation6 + $0x110] sm:$0xff]
    %v3153 = vld [vmem:[#allocation6 + $0x118] sm:$0xff]
    %v3154 = vld [vmem:[#allocation6 + $0x120] sm:$0xff]
    %v3155 = vld [vmem:[#allocation6 + $0x128] sm:$0xff]
    %v3156 = vld [vmem:[#allocation6 + $0x130] sm:$0xff]
    %v3157 = vld [vmem:[#allocation6 + $0x138] sm:$0xff]
    %v3158 = vld [vmem:[#allocation6 + $0x140] sm:$0xff]
    %v3159 = vld [vmem:[#allocation6 + $0x148] sm:$0xff]
    %v3160 = vld [vmem:[#allocation6 + $0x150] sm:$0xff]
    %v3161 = vld [vmem:[#allocation6 + $0x158] sm:$0xff]
    %v3162 = vld [vmem:[#allocation6 + $0x160] sm:$0xff]
    %v3163 = vld [vmem:[#allocation6 + $0x168] sm:$0xff]
    %v3164 = vld [vmem:[#allocation6 + $0x170] sm:$0xff]
    %v3165 = vld [vmem:[#allocation6 + $0x178] sm:$0xff]
    %v3166 = vld [vmem:[#allocation6 + $0x180] sm:$0xff]
    %v3167 = vld [vmem:[#allocation6 + $0x188] sm:$0xff]
    %v3168 = vld [vmem:[#allocation6 + $0x190] sm:$0xff]
    %v3169 = vld [vmem:[#allocation6 + $0x198] sm:$0xff]
    %v3170 = vld [vmem:[#allocation6 + $0x1a0] sm:$0xff]
    %v3171 = vld [vmem:[#allocation6 + $0x1a8] sm:$0xff]
    %v3172 = vld [vmem:[#allocation6 + $0x1b0] sm:$0xff]
    %v3173 = vld [vmem:[#allocation6 + $0x1b8] sm:$0xff]
    %v3174 = vld [vmem:[#allocation6 + $0x1c0] sm:$0xff]
    %v3175 = vld [vmem:[#allocation6 + $0x1c8] sm:$0xff]
    %v3176 = vld [vmem:[#allocation6 + $0x1d0] sm:$0xff]
    %v3177 = vld [vmem:[#allocation6 + $0x1d8] sm:$0xff]
    %v3178 = vld [vmem:[#allocation6 + $0x1e0] sm:$0xff]
    %v3179 = vld [vmem:[#allocation6 + $0x1e8] sm:$0xff]
    %v3180 = vld [vmem:[#allocation6 + $0x1f0] sm:$0xff]
    %v3181 = vld [vmem:[#allocation6 + $0x1f8] sm:$0xff]
    %v3182 = vld [vmem:[#allocation6 + $0x200] sm:$0xff]
    %v3183 = vld [vmem:[#allocation6 + $0x208] sm:$0xff]
    %v3184 = vld [vmem:[#allocation6 + $0x210] sm:$0xff]
    %v3185 = vld [vmem:[#allocation6 + $0x218] sm:$0xff]
    %v3186 = vld [vmem:[#allocation6 + $0x220] sm:$0xff]
    %v3187 = vld [vmem:[#allocation6 + $0x228] sm:$0xff]
    %v3188 = vld [vmem:[#allocation6 + $0x230] sm:$0xff]
    %v3189 = vld [vmem:[#allocation6 + $0x238] sm:$0xff]
    %v3190 = vld [vmem:[#allocation6 + $0x240] sm:$0xff]
    %v3191 = vld [vmem:[#allocation6 + $0x248] sm:$0xff]
    %v3192 = vld [vmem:[#allocation6 + $0x250] sm:$0xff]
    %v3193 = vld [vmem:[#allocation6 + $0x258] sm:$0xff]
    %v3194 = vld [vmem:[#allocation6 + $0x260] sm:$0xff]
    %v3195 = vld [vmem:[#allocation6 + $0x268] sm:$0xff]
    %v3196 = vld [vmem:[#allocation6 + $0x270] sm:$0xff]
    %v3197 = vld [vmem:[#allocation6 + $0x278] sm:$0xff]
    %v3198 = vld [vmem:[#allocation6 + $0x280] sm:$0xff]
    %v3199 = vld [vmem:[#allocation6 + $0x288] sm:$0xff]
    %v3200 = vld [vmem:[#allocation6 + $0x290] sm:$0xff]
    %v3201 = vld [vmem:[#allocation6 + $0x298] sm:$0xff]
    %v3202 = vld [vmem:[#allocation6 + $0x2a0] sm:$0xff]
    %v3203 = vld [vmem:[#allocation6 + $0x2a8] sm:$0xff]
    %v3204 = vld [vmem:[#allocation6 + $0x2b0] sm:$0xff]
    %v3205 = vld [vmem:[#allocation6 + $0x2b8] sm:$0xff]
    %v3206 = vld [vmem:[#allocation6 + $0x2c0] sm:$0xff]
    %v3207 = vld [vmem:[#allocation6 + $0x2c8] sm:$0xff]
    %v3208 = vld [vmem:[#allocation6 + $0x2d0] sm:$0xff]
    %v3209 = vld [vmem:[#allocation6 + $0x2d8] sm:$0xff]
    %v3210 = vld [vmem:[#allocation6 + $0x2e0] sm:$0xff]
    %v3211 = vld [vmem:[#allocation6 + $0x2e8] sm:$0xff]
    %v3212 = vld [vmem:[#allocation6 + $0x2f0] sm:$0xff]
    %v3213 = vld [vmem:[#allocation6 + $0x2f8] sm:$0xff]
    %v3214 = vld [vmem:[#allocation6 + $0x300] sm:$0xff]
    %v3215 = vld [vmem:[#allocation6 + $0x308] sm:$0xff]
    %v3216 = vld [vmem:[#allocation6 + $0x310] sm:$0xff]
    %v3217 = vld [vmem:[#allocation6 + $0x318] sm:$0xff]
    %v3218 = vld [vmem:[#allocation6 + $0x320] sm:$0xff]
    %v3219 = vld [vmem:[#allocation6 + $0x328] sm:$0xff]
    %v3220 = vld [vmem:[#allocation6 + $0x330] sm:$0xff]
    %v3221 = vld [vmem:[#allocation6 + $0x338] sm:$0xff]
    %v3222 = vld [vmem:[#allocation6 + $0x340] sm:$0xff]
    %v3223 = vld [vmem:[#allocation6 + $0x348] sm:$0xff]
    %v3224 = vld [vmem:[#allocation6 + $0x350] sm:$0xff]
    %v3225 = vld [vmem:[#allocation6 + $0x358] sm:$0xff]
    %v3226 = vld [vmem:[#allocation6 + $0x360] sm:$0xff]
    %v3227 = vld [vmem:[#allocation6 + $0x368] sm:$0xff]
    %v3228 = vld [vmem:[#allocation6 + $0x370] sm:$0xff]
    %v3229 = vld [vmem:[#allocation6 + $0x378] sm:$0xff]
    %v3230 = vld [vmem:[#allocation6 + $0x380] sm:$0xff]
    %v3231 = vld [vmem:[#allocation6 + $0x388] sm:$0xff]
    %v3232 = vld [vmem:[#allocation6 + $0x390] sm:$0xff]
    %v3233 = vld [vmem:[#allocation6 + $0x398] sm:$0xff]
    %v3234 = vld [vmem:[#allocation6 + $0x3a0] sm:$0xff]
    %v3235 = vld [vmem:[#allocation6 + $0x3a8] sm:$0xff]
    %v3236 = vld [vmem:[#allocation6 + $0x3b0] sm:$0xff]
    %v3237 = vld [vmem:[#allocation6 + $0x3b8] sm:$0xff]
    %v3238 = vld [vmem:[#allocation6 + $0x3c0] sm:$0xff]
    %v3239 = vld [vmem:[#allocation6 + $0x3c8] sm:$0xff]
    %v3240 = vld [vmem:[#allocation6 + $0x3d0] sm:$0xff]
    %v3241 = vld [vmem:[#allocation6 + $0x3d8] sm:$0xff]
    %v3242 = vld [vmem:[#allocation6 + $0x3e0] sm:$0xff]
    %v3243 = vld [vmem:[#allocation6 + $0x3e8] sm:$0xff]
    %v3244 = vld [vmem:[#allocation6 + $0x3f0] sm:$0xff]
    %v3245 = vld [vmem:[#allocation6 + $0x3f8] sm:$0xff]
    %v3246 = vld [vmem:[#allocation6 + $0x400] sm:$0xff]
    %v3247 = vld [vmem:[#allocation6 + $0x408] sm:$0xff]
    %v3248 = vld [vmem:[#allocation6 + $0x410] sm:$0xff]
    %v3249 = vld [vmem:[#allocation6 + $0x418] sm:$0xff]
    %v3250 = vld [vmem:[#allocation6 + $0x420] sm:$0xff]
    %v3251 = vld [vmem:[#allocation6 + $0x428] sm:$0xff]
    %v3252 = vld [vmem:[#allocation6 + $0x430] sm:$0xff]
    %v3253 = vld [vmem:[#allocation6 + $0x438] sm:$0xff]
    %v3254 = vld [vmem:[#allocation6 + $0x440] sm:$0xff]
    %v3255 = vld [vmem:[#allocation6 + $0x448] sm:$0xff]
    %v3256 = vld [vmem:[#allocation6 + $0x450] sm:$0xff]
    %v3257 = vld [vmem:[#allocation6 + $0x458] sm:$0xff]
    %v3258 = vld [vmem:[#allocation6 + $0x460] sm:$0xff]
    %v3259 = vld [vmem:[#allocation6 + $0x468] sm:$0xff]
    %v3260 = vld [vmem:[#allocation6 + $0x470] sm:$0xff]
    %v3261 = vld [vmem:[#allocation6 + $0x478] sm:$0xff]
    %v3262 = vld [vmem:[#allocation6 + $0x480] sm:$0xff]
    %v3263 = vld [vmem:[#allocation6 + $0x488] sm:$0xff]
    %v3264 = vld [vmem:[#allocation6 + $0x490] sm:$0xff]
    %v3265 = vld [vmem:[#allocation6 + $0x498] sm:$0xff]
    %v3266 = vld [vmem:[#allocation6 + $0x4a0] sm:$0xff]
    %v3267 = vld [vmem:[#allocation6 + $0x4a8] sm:$0xff]
    %v3268 = vld [vmem:[#allocation6 + $0x4b0] sm:$0xff]
    %v3269 = vld [vmem:[#allocation6 + $0x4b8] sm:$0xff]
    %v3270 = vld [vmem:[#allocation6 + $0x4c0] sm:$0xff]
    %v3271 = vld [vmem:[#allocation6 + $0x4c8] sm:$0xff]
    %v3272 = vld [vmem:[#allocation6 + $0x4d0] sm:$0xff]
    %v3273 = vld [vmem:[#allocation6 + $0x4d8] sm:$0xff]
    %v3274 = vld [vmem:[#allocation6 + $0x4e0] sm:$0xff]
    %v3275 = vld [vmem:[#allocation6 + $0x4e8] sm:$0xff]
    %v3276 = vld [vmem:[#allocation6 + $0x4f0] sm:$0xff]
    %v3277 = vld [vmem:[#allocation6 + $0x4f8] sm:$0xff]
    %v3278 = vld [vmem:[#allocation6 + $0x500] sm:$0xff]
    %v3279 = vld [vmem:[#allocation6 + $0x508] sm:$0xff]
    %v3280 = vld [vmem:[#allocation6 + $0x510] sm:$0xff]
    %v3281 = vld [vmem:[#allocation6 + $0x518] sm:$0xff]
    %v3282 = vld [vmem:[#allocation6 + $0x520] sm:$0xff]
    %v3283 = vld [vmem:[#allocation6 + $0x528] sm:$0xff]
    %v3284 = vld [vmem:[#allocation6 + $0x530] sm:$0xff]
    %v3285 = vld [vmem:[#allocation6 + $0x538] sm:$0xff]
    %v3286 = vld [vmem:[#allocation6 + $0x540] sm:$0xff]
    %v3287 = vld [vmem:[#allocation6 + $0x548] sm:$0xff]
    %v3288 = vld [vmem:[#allocation6 + $0x550] sm:$0xff]
    %v3289 = vld [vmem:[#allocation6 + $0x558] sm:$0xff]
    %v3290 = vld [vmem:[#allocation6 + $0x560] sm:$0xff]
    %v3291 = vld [vmem:[#allocation6 + $0x568] sm:$0xff]
    %v3292 = vld [vmem:[#allocation6 + $0x570] sm:$0xff]
    %v3293 = vld [vmem:[#allocation6 + $0x578] sm:$0xff]
    %v3294 = vld [vmem:[#allocation6 + $0x580] sm:$0xff]
    %v3295 = vld [vmem:[#allocation6 + $0x588] sm:$0xff]
    %v3296 = vld [vmem:[#allocation6 + $0x590] sm:$0xff]
    %v3297 = vld [vmem:[#allocation6 + $0x598] sm:$0xff]
    %v3298 = vld [vmem:[#allocation6 + $0x5a0] sm:$0xff]
    %v3299 = vld [vmem:[#allocation6 + $0x5a8] sm:$0xff]
    %v3300 = vld [vmem:[#allocation6 + $0x5b0] sm:$0xff]
    %v3301 = vld [vmem:[#allocation6 + $0x5b8] sm:$0xff]
    %v3302 = vld [vmem:[#allocation6 + $0x5c0] sm:$0xff]
    %v3303 = vld [vmem:[#allocation6 + $0x5c8] sm:$0xff]
    %v3304 = vld [vmem:[#allocation6 + $0x5d0] sm:$0xff]
    %v3305 = vld [vmem:[#allocation6 + $0x5d8] sm:$0xff]
    %v3306 = vld [vmem:[#allocation6 + $0x5e0] sm:$0xff]
    %v3307 = vld [vmem:[#allocation6 + $0x5e8] sm:$0xff]
    %v3308 = vld [vmem:[#allocation6 + $0x5f0] sm:$0xff]
    %v3309 = vld [vmem:[#allocation6 + $0x5f8] sm:$0xff]
    %v3310 = vld [vmem:[#allocation6 + $0x600] sm:$0xff]
    %v3311 = vld [vmem:[#allocation6 + $0x608] sm:$0xff]
    %v3312 = vld [vmem:[#allocation6 + $0x610] sm:$0xff]
    %v3313 = vld [vmem:[#allocation6 + $0x618] sm:$0xff]
    %v3314 = vld [vmem:[#allocation6 + $0x620] sm:$0xff]
    %v3315 = vld [vmem:[#allocation6 + $0x628] sm:$0xff]
    %v3316 = vld [vmem:[#allocation6 + $0x630] sm:$0xff]
    %v3317 = vld [vmem:[#allocation6 + $0x638] sm:$0xff]
    %v3318 = vld [vmem:[#allocation6 + $0x640] sm:$0xff]
    %v3319 = vld [vmem:[#allocation6 + $0x648] sm:$0xff]
    %v3320 = vld [vmem:[#allocation6 + $0x650] sm:$0xff]
    %v3321 = vld [vmem:[#allocation6 + $0x658] sm:$0xff]
    %v3322 = vld [vmem:[#allocation6 + $0x660] sm:$0xff]
    %v3323 = vld [vmem:[#allocation6 + $0x668] sm:$0xff]
    %v3324 = vld [vmem:[#allocation6 + $0x670] sm:$0xff]
    %v3325 = vld [vmem:[#allocation6 + $0x678] sm:$0xff]
    %v3326 = vld [vmem:[#allocation6 + $0x680] sm:$0xff]
    %v3327 = vld [vmem:[#allocation6 + $0x688] sm:$0xff]
    %v3328 = vld [vmem:[#allocation6 + $0x690] sm:$0xff]
    %v3329 = vld [vmem:[#allocation6 + $0x698] sm:$0xff]
    %v3330 = vld [vmem:[#allocation6 + $0x6a0] sm:$0xff]
    %v3331 = vld [vmem:[#allocation6 + $0x6a8] sm:$0xff]
    %v3332 = vld [vmem:[#allocation6 + $0x6b0] sm:$0xff]
    %v3333 = vld [vmem:[#allocation6 + $0x6b8] sm:$0xff]
    %v3334 = vld [vmem:[#allocation6 + $0x6c0] sm:$0xff]
    %v3335 = vld [vmem:[#allocation6 + $0x6c8] sm:$0xff]
    %v3336 = vld [vmem:[#allocation6 + $0x6d0] sm:$0xff]
    %v3337 = vld [vmem:[#allocation6 + $0x6d8] sm:$0xff]
    %v3338 = vld [vmem:[#allocation6 + $0x6e0] sm:$0xff]
    %v3339 = vld [vmem:[#allocation6 + $0x6e8] sm:$0xff]
    %v3340 = vld [vmem:[#allocation6 + $0x6f0] sm:$0xff]
    %v3341 = vld [vmem:[#allocation6 + $0x6f8] sm:$0xff]
    %v3342 = vld [vmem:[#allocation6 + $0x700] sm:$0xff]
    %v3343 = vld [vmem:[#allocation6 + $0x708] sm:$0xff]
    %v3344 = vld [vmem:[#allocation6 + $0x710] sm:$0xff]
    %v3345 = vld [vmem:[#allocation6 + $0x718] sm:$0xff]
    %v3346 = vld [vmem:[#allocation6 + $0x720] sm:$0xff]
    %v3347 = vld [vmem:[#allocation6 + $0x728] sm:$0xff]
    %v3348 = vld [vmem:[#allocation6 + $0x730] sm:$0xff]
    %v3349 = vld [vmem:[#allocation6 + $0x738] sm:$0xff]
    %v3350 = vld [vmem:[#allocation6 + $0x740] sm:$0xff]
    %v3351 = vld [vmem:[#allocation6 + $0x748] sm:$0xff]
    %v3352 = vld [vmem:[#allocation6 + $0x750] sm:$0xff]
    %v3353 = vld [vmem:[#allocation6 + $0x758] sm:$0xff]
    %v3354 = vld [vmem:[#allocation6 + $0x760] sm:$0xff]
    %v3355 = vld [vmem:[#allocation6 + $0x768] sm:$0xff]
    %v3356 = vld [vmem:[#allocation6 + $0x770] sm:$0xff]
    %v3357 = vld [vmem:[#allocation6 + $0x778] sm:$0xff]
    %v3358 = vld [vmem:[#allocation6 + $0x780] sm:$0xff]
    %v3359 = vld [vmem:[#allocation6 + $0x788] sm:$0xff]
    %v3360 = vld [vmem:[#allocation6 + $0x790] sm:$0xff]
    %v3361 = vld [vmem:[#allocation6 + $0x798] sm:$0xff]
    %v3362 = vld [vmem:[#allocation6 + $0x7a0] sm:$0xff]
    %v3363 = vld [vmem:[#allocation6 + $0x7a8] sm:$0xff]
    %v3364 = vld [vmem:[#allocation6 + $0x7b0] sm:$0xff]
    %v3365 = vld [vmem:[#allocation6 + $0x7b8] sm:$0xff]
    %v3366 = vld [vmem:[#allocation6 + $0x7c0] sm:$0xff]
    %v3367 = vld [vmem:[#allocation6 + $0x7c8] sm:$0xff]
    %v3368 = vld [vmem:[#allocation6 + $0x7d0] sm:$0xff]
    %v3369 = vld [vmem:[#allocation6 + $0x7d8] sm:$0xff]
    %v3370 = vld [vmem:[#allocation6 + $0x7e0] sm:$0xff]
    %v3371 = vld [vmem:[#allocation6 + $0x7e8] sm:$0xff]
    %v3372 = vld [vmem:[#allocation6 + $0x7f0] sm:$0xff]
    %v3373 = vld [vmem:[#allocation6 + $0x7f8] sm:$0xff]
    %v3374 = vld [vmem:[#allocation6 + $0x800] sm:$0xff]
    %v3375 = vld [vmem:[#allocation6 + $0x808] sm:$0xff]
    %v3376 = vld [vmem:[#allocation6 + $0x810] sm:$0xff]
    %v3377 = vld [vmem:[#allocation6 + $0x818] sm:$0xff]
    %v3378 = vld [vmem:[#allocation6 + $0x820] sm:$0xff]
    %v3379 = vld [vmem:[#allocation6 + $0x828] sm:$0xff]
    %v3380 = vld [vmem:[#allocation6 + $0x830] sm:$0xff]
    %v3381 = vld [vmem:[#allocation6 + $0x838] sm:$0xff]
    %v3382 = vld [vmem:[#allocation6 + $0x840] sm:$0xff]
    %v3383 = vld [vmem:[#allocation6 + $0x848] sm:$0xff]
    %v3384 = vld [vmem:[#allocation6 + $0x850] sm:$0xff]
    %v3385 = vld [vmem:[#allocation6 + $0x858] sm:$0xff]
    %v3386 = vld [vmem:[#allocation6 + $0x860] sm:$0xff]
    %v3387 = vld [vmem:[#allocation6 + $0x868] sm:$0xff]
    %v3388 = vld [vmem:[#allocation6 + $0x870] sm:$0xff]
    %v3389 = vld [vmem:[#allocation6 + $0x878] sm:$0xff]
    %v3390 = vld [vmem:[#allocation6 + $0x880] sm:$0xff]
    %v3391 = vld [vmem:[#allocation6 + $0x888] sm:$0xff]
    %v3392 = vld [vmem:[#allocation6 + $0x890] sm:$0xff]
    %v3393 = vld [vmem:[#allocation6 + $0x898] sm:$0xff]
    %v3394 = vld [vmem:[#allocation6 + $0x8a0] sm:$0xff]
    %v3395 = vld [vmem:[#allocation6 + $0x8a8] sm:$0xff]
    %v3396 = vld [vmem:[#allocation6 + $0x8b0] sm:$0xff]
    %v3397 = vld [vmem:[#allocation6 + $0x8b8] sm:$0xff]
    %v3398 = vld [vmem:[#allocation6 + $0x8c0] sm:$0xff]
    %v3399 = vld [vmem:[#allocation6 + $0x8c8] sm:$0xff]
    %v3400 = vld [vmem:[#allocation6 + $0x8d0] sm:$0xff]
    %v3401 = vld [vmem:[#allocation6 + $0x8d8] sm:$0xff]
    %v3402 = vld [vmem:[#allocation6 + $0x8e0] sm:$0xff]
    %v3403 = vld [vmem:[#allocation6 + $0x8e8] sm:$0xff]
    %v3404 = vld [vmem:[#allocation6 + $0x8f0] sm:$0xff]
    %v3405 = vld [vmem:[#allocation6 + $0x8f8] sm:$0xff]
    %v3406 = vld [vmem:[#allocation6 + $0x900] sm:$0xff]
    %v3407 = vld [vmem:[#allocation6 + $0x908] sm:$0xff]
    %v3408 = vld [vmem:[#allocation6 + $0x910] sm:$0xff]
    %v3409 = vld [vmem:[#allocation6 + $0x918] sm:$0xff]
    %v3410 = vld [vmem:[#allocation6 + $0x920] sm:$0xff]
    %v3411 = vld [vmem:[#allocation6 + $0x928] sm:$0xff]
    %v3412 = vld [vmem:[#allocation6 + $0x930] sm:$0xff]
    %v3413 = vld [vmem:[#allocation6 + $0x938] sm:$0xff]
    %v3414 = vld [vmem:[#allocation6 + $0x940] sm:$0xff]
    %v3415 = vld [vmem:[#allocation6 + $0x948] sm:$0xff]
    %v3416 = vld [vmem:[#allocation6 + $0x950] sm:$0xff]
    %v3417 = vld [vmem:[#allocation6 + $0x958] sm:$0xff]
    %v3418 = vld [vmem:[#allocation6 + $0x960] sm:$0xff]
    %v3419 = vld [vmem:[#allocation6 + $0x968] sm:$0xff]
    %v3420 = vld [vmem:[#allocation6 + $0x970] sm:$0xff]
    %v3421 = vld [vmem:[#allocation6 + $0x978] sm:$0xff]
    %v3422 = vld [vmem:[#allocation6 + $0x980] sm:$0xff]
    %v3423 = vld [vmem:[#allocation6 + $0x988] sm:$0xff]
    %v3424 = vld [vmem:[#allocation6 + $0x990] sm:$0xff]
    %v3425 = vld [vmem:[#allocation6 + $0x998] sm:$0xff]
    %v3426 = vld [vmem:[#allocation6 + $0x9a0] sm:$0xff]
    %v3427 = vld [vmem:[#allocation6 + $0x9a8] sm:$0xff]
    %v3428 = vld [vmem:[#allocation6 + $0x9b0] sm:$0xff]
    %v3429 = vld [vmem:[#allocation6 + $0x9b8] sm:$0xff]
    %v3430 = vld [vmem:[#allocation6 + $0x9c0] sm:$0xff]
    %v3431 = vld [vmem:[#allocation6 + $0x9c8] sm:$0xff]
    %v3432 = vld [vmem:[#allocation6 + $0x9d0] sm:$0xff]
    %v3433 = vld [vmem:[#allocation6 + $0x9d8] sm:$0xff]
    %v3434 = vld [vmem:[#allocation6 + $0x9e0] sm:$0xff]
    %v3435 = vld [vmem:[#allocation6 + $0x9e8] sm:$0xff]
    %v3436 = vld [vmem:[#allocation6 + $0x9f0] sm:$0xff]
    %v3437 = vld [vmem:[#allocation6 + $0x9f8] sm:$0xff]
    %v3438 = vld [vmem:[#allocation6 + $0xa00] sm:$0xff]
    %v3439 = vld [vmem:[#allocation6 + $0xa08] sm:$0xff]
    %v3440 = vld [vmem:[#allocation6 + $0xa10] sm:$0xff]
    %v3441 = vld [vmem:[#allocation6 + $0xa18] sm:$0xff]
    %v3442 = vld [vmem:[#allocation6 + $0xa20] sm:$0xff]
    %v3443 = vld [vmem:[#allocation6 + $0xa28] sm:$0xff]
    %v3444 = vld [vmem:[#allocation6 + $0xa30] sm:$0xff]
    %v3445 = vld [vmem:[#allocation6 + $0xa38] sm:$0xff]
    %v3446 = vld [vmem:[#allocation6 + $0xa40] sm:$0xff]
    %v3447 = vld [vmem:[#allocation6 + $0xa48] sm:$0xff]
    %v3448 = vld [vmem:[#allocation6 + $0xa50] sm:$0xff]
    %v3449 = vld [vmem:[#allocation6 + $0xa58] sm:$0xff]
    %v3450 = vld [vmem:[#allocation6 + $0xa60] sm:$0xff]
    %v3451 = vld [vmem:[#allocation6 + $0xa68] sm:$0xff]
    %v3452 = vld [vmem:[#allocation6 + $0xa70] sm:$0xff]
    %v3453 = vld [vmem:[#allocation6 + $0xa78] sm:$0xff]
    %v3454 = vld [vmem:[#allocation6 + $0xa80] sm:$0xff]
    %v3455 = vld [vmem:[#allocation6 + $0xa88] sm:$0xff]
    %v3456 = vld [vmem:[#allocation6 + $0xa90] sm:$0xff]
    %v3457 = vld [vmem:[#allocation6 + $0xa98] sm:$0xff]
    %v3458 = vld [vmem:[#allocation6 + $0xaa0] sm:$0xff]
    %v3459 = vld [vmem:[#allocation6 + $0xaa8] sm:$0xff]
    %v3460 = vld [vmem:[#allocation6 + $0xab0] sm:$0xff]
    %v3461 = vld [vmem:[#allocation6 + $0xab8] sm:$0xff]
    %v3462 = vld [vmem:[#allocation6 + $0xac0] sm:$0xff]
    %v3463 = vld [vmem:[#allocation6 + $0xac8] sm:$0xff]
    %v3464 = vld [vmem:[#allocation6 + $0xad0] sm:$0xff]
    %v3465 = vld [vmem:[#allocation6 + $0xad8] sm:$0xff]
    %v3466 = vld [vmem:[#allocation6 + $0xae0] sm:$0xff]
    %v3467 = vld [vmem:[#allocation6 + $0xae8] sm:$0xff]
    %v3468 = vld [vmem:[#allocation6 + $0xaf0] sm:$0xff]
    %v3469 = vld [vmem:[#allocation6 + $0xaf8] sm:$0xff]
    %v3470 = vld [vmem:[#allocation6 + $0xb00] sm:$0xff]
    %v3471 = vld [vmem:[#allocation6 + $0xb08] sm:$0xff]
    %v3472 = vld [vmem:[#allocation6 + $0xb10] sm:$0xff]
    %v3473 = vld [vmem:[#allocation6 + $0xb18] sm:$0xff]
    %v3474 = vld [vmem:[#allocation6 + $0xb20] sm:$0xff]
    %v3475 = vld [vmem:[#allocation6 + $0xb28] sm:$0xff]
    %v3476 = vld [vmem:[#allocation6 + $0xb30] sm:$0xff]
    %v3477 = vld [vmem:[#allocation6 + $0xb38] sm:$0xff]
    %v3478 = vld [vmem:[#allocation6 + $0xb40] sm:$0xff]
    %v3479 = vld [vmem:[#allocation6 + $0xb48] sm:$0xff]
    %v3480 = vld [vmem:[#allocation6 + $0xb50] sm:$0xff]
    %v3481 = vld [vmem:[#allocation6 + $0xb58] sm:$0xff]
    %v3482 = vld [vmem:[#allocation6 + $0xb60] sm:$0xff]
    %v3483 = vld [vmem:[#allocation6 + $0xb68] sm:$0xff]
    %v3484 = vld [vmem:[#allocation6 + $0xb70] sm:$0xff]
    %v3485 = vld [vmem:[#allocation6 + $0xb78] sm:$0xff]
    %v3486 = vld [vmem:[#allocation6 + $0xb80] sm:$0xff]
    %v3487 = vld [vmem:[#allocation6 + $0xb88] sm:$0xff]
    %v3488 = vld [vmem:[#allocation6 + $0xb90] sm:$0xff]
    %v3489 = vld [vmem:[#allocation6 + $0xb98] sm:$0xff]
    %v3490 = vld [vmem:[#allocation6 + $0xba0] sm:$0xff]
    %v3491 = vld [vmem:[#allocation6 + $0xba8] sm:$0xff]
    %v3492 = vld [vmem:[#allocation6 + $0xbb0] sm:$0xff]
    %v3493 = vld [vmem:[#allocation6 + $0xbb8] sm:$0xff]
    %v3494 = vld [vmem:[#allocation6 + $0xbc0] sm:$0xff]
    %v3495 = vld [vmem:[#allocation6 + $0xbc8] sm:$0xff]
    %v3496 = vld [vmem:[#allocation6 + $0xbd0] sm:$0xff]
    %v3497 = vld [vmem:[#allocation6 + $0xbd8] sm:$0xff]
    %v3498 = vld [vmem:[#allocation6 + $0xbe0] sm:$0xff]
    %v3499 = vld [vmem:[#allocation6 + $0xbe8] sm:$0xff]
    %v3500 = vld [vmem:[#allocation6 + $0xbf0] sm:$0xff]
    %v3501 = vld [vmem:[#allocation6 + $0xbf8] sm:$0xff]
    %v3502 = vld [vmem:[#allocation6 + $0xc00] sm:$0xff]
    %v3503 = vld [vmem:[#allocation6 + $0xc08] sm:$0xff]
    %v3504 = vld [vmem:[#allocation6 + $0xc10] sm:$0xff]
    %v3505 = vld [vmem:[#allocation6 + $0xc18] sm:$0xff]
    %v3506 = vld [vmem:[#allocation6 + $0xc20] sm:$0xff]
    %v3507 = vld [vmem:[#allocation6 + $0xc28] sm:$0xff]
    %v3508 = vld [vmem:[#allocation6 + $0xc30] sm:$0xff]
    %v3509 = vld [vmem:[#allocation6 + $0xc38] sm:$0xff]
    %v3510 = vld [vmem:[#allocation6 + $0xc40] sm:$0xff]
    %v3511 = vld [vmem:[#allocation6 + $0xc48] sm:$0xff]
    %v3512 = vld [vmem:[#allocation6 + $0xc50] sm:$0xff]
    %v3513 = vld [vmem:[#allocation6 + $0xc58] sm:$0xff]
    %v3514 = vld [vmem:[#allocation6 + $0xc60] sm:$0xff]
    %v3515 = vld [vmem:[#allocation6 + $0xc68] sm:$0xff]
    %v3516 = vld [vmem:[#allocation6 + $0xc70] sm:$0xff]
    %v3517 = vld [vmem:[#allocation6 + $0xc78] sm:$0xff]
    %v3518 = vld [vmem:[#allocation6 + $0xc80] sm:$0xff]
    %v3519 = vld [vmem:[#allocation6 + $0xc88] sm:$0xff]
    %v3520 = vld [vmem:[#allocation6 + $0xc90] sm:$0xff]
    %v3521 = vld [vmem:[#allocation6 + $0xc98] sm:$0xff]
    %v3522 = vld [vmem:[#allocation6 + $0xca0] sm:$0xff]
    %v3523 = vld [vmem:[#allocation6 + $0xca8] sm:$0xff]
    %v3524 = vld [vmem:[#allocation6 + $0xcb0] sm:$0xff]
    %v3525 = vld [vmem:[#allocation6 + $0xcb8] sm:$0xff]
    %v3526 = vld [vmem:[#allocation6 + $0xcc0] sm:$0xff]
    %v3527 = vld [vmem:[#allocation6 + $0xcc8] sm:$0xff]
    %v3528 = vld [vmem:[#allocation6 + $0xcd0] sm:$0xff]
    %v3529 = vld [vmem:[#allocation6 + $0xcd8] sm:$0xff]
    %v3530 = vld [vmem:[#allocation6 + $0xce0] sm:$0xff]
    %v3531 = vld [vmem:[#allocation6 + $0xce8] sm:$0xff]
    %v3532 = vld [vmem:[#allocation6 + $0xcf0] sm:$0xff]
    %v3533 = vld [vmem:[#allocation6 + $0xcf8] sm:$0xff]
    %v3534 = vld [vmem:[#allocation6 + $0xd00] sm:$0xff]
    %v3535 = vld [vmem:[#allocation6 + $0xd08] sm:$0xff]
    %v3536 = vld [vmem:[#allocation6 + $0xd10] sm:$0xff]
    %v3537 = vld [vmem:[#allocation6 + $0xd18] sm:$0xff]
    %v3538 = vld [vmem:[#allocation6 + $0xd20] sm:$0xff]
    %v3539 = vld [vmem:[#allocation6 + $0xd28] sm:$0xff]
    %v3540 = vld [vmem:[#allocation6 + $0xd30] sm:$0xff]
    %v3541 = vld [vmem:[#allocation6 + $0xd38] sm:$0xff]
    %v3542 = vld [vmem:[#allocation6 + $0xd40] sm:$0xff]
    %v3543 = vld [vmem:[#allocation6 + $0xd48] sm:$0xff]
    %v3544 = vld [vmem:[#allocation6 + $0xd50] sm:$0xff]
    %v3545 = vld [vmem:[#allocation6 + $0xd58] sm:$0xff]
    %v3546 = vld [vmem:[#allocation6 + $0xd60] sm:$0xff]
    %v3547 = vld [vmem:[#allocation6 + $0xd68] sm:$0xff]
    %v3548 = vld [vmem:[#allocation6 + $0xd70] sm:$0xff]
    %v3549 = vld [vmem:[#allocation6 + $0xd78] sm:$0xff]
    %v3550 = vld [vmem:[#allocation6 + $0xd80] sm:$0xff]
    %v3551 = vld [vmem:[#allocation6 + $0xd88] sm:$0xff]
    %v3552 = vld [vmem:[#allocation6 + $0xd90] sm:$0xff]
    %v3553 = vld [vmem:[#allocation6 + $0xd98] sm:$0xff]
    %v3554 = vld [vmem:[#allocation6 + $0xda0] sm:$0xff]
    %v3555 = vld [vmem:[#allocation6 + $0xda8] sm:$0xff]
    %v3556 = vld [vmem:[#allocation6 + $0xdb0] sm:$0xff]
    %v3557 = vld [vmem:[#allocation6 + $0xdb8] sm:$0xff]
    %v3558 = vld [vmem:[#allocation6 + $0xdc0] sm:$0xff]
    %v3559 = vld [vmem:[#allocation6 + $0xdc8] sm:$0xff]
    %v3560 = vld [vmem:[#allocation6 + $0xdd0] sm:$0xff]
    %v3561 = vld [vmem:[#allocation6 + $0xdd8] sm:$0xff]
    %v3562 = vld [vmem:[#allocation6 + $0xde0] sm:$0xff]
    %v3563 = vld [vmem:[#allocation6 + $0xde8] sm:$0xff]
    %v3564 = vld [vmem:[#allocation6 + $0xdf0] sm:$0xff]
    %v3565 = vld [vmem:[#allocation6 + $0xdf8] sm:$0xff]
    %v3566 = vld [vmem:[#allocation6 + $0xe00] sm:$0xff]
    %v3567 = vld [vmem:[#allocation6 + $0xe08] sm:$0xff]
    %v3568 = vld [vmem:[#allocation6 + $0xe10] sm:$0xff]
    %v3569 = vld [vmem:[#allocation6 + $0xe18] sm:$0xff]
    %v3570 = vld [vmem:[#allocation6 + $0xe20] sm:$0xff]
    %v3571 = vld [vmem:[#allocation6 + $0xe28] sm:$0xff]
    %v3572 = vld [vmem:[#allocation6 + $0xe30] sm:$0xff]
    %v3573 = vld [vmem:[#allocation6 + $0xe38] sm:$0xff]
    %v3574 = vld [vmem:[#allocation6 + $0xe40] sm:$0xff]
    %v3575 = vld [vmem:[#allocation6 + $0xe48] sm:$0xff]
    %v3576 = vld [vmem:[#allocation6 + $0xe50] sm:$0xff]
    %v3577 = vld [vmem:[#allocation6 + $0xe58] sm:$0xff]
    %v3578 = vld [vmem:[#allocation6 + $0xe60] sm:$0xff]
    %v3579 = vld [vmem:[#allocation6 + $0xe68] sm:$0xff]
    %v3580 = vld [vmem:[#allocation6 + $0xe70] sm:$0xff]
    %v3581 = vld [vmem:[#allocation6 + $0xe78] sm:$0xff]
    %v3582 = vld [vmem:[#allocation6 + $0xe80] sm:$0xff]
    %v3583 = vld [vmem:[#allocation6 + $0xe88] sm:$0xff]
    %v3584 = vld [vmem:[#allocation6 + $0xe90] sm:$0xff]
    %v3585 = vld [vmem:[#allocation6 + $0xe98] sm:$0xff]
    %v3586 = vld [vmem:[#allocation6 + $0xea0] sm:$0xff]
    %v3587 = vld [vmem:[#allocation6 + $0xea8] sm:$0xff]
    %v3588 = vld [vmem:[#allocation6 + $0xeb0] sm:$0xff]
    %v3589 = vld [vmem:[#allocation6 + $0xeb8] sm:$0xff]
    %v3590 = vld [vmem:[#allocation6 + $0xec0] sm:$0xff]
    %v3591 = vld [vmem:[#allocation6 + $0xec8] sm:$0xff]
    %v3592 = vld [vmem:[#allocation6 + $0xed0] sm:$0xff]
    %v3593 = vld [vmem:[#allocation6 + $0xed8] sm:$0xff]
    %v3594 = vld [vmem:[#allocation6 + $0xee0] sm:$0xff]
    %v3595 = vld [vmem:[#allocation6 + $0xee8] sm:$0xff]
    %v3596 = vld [vmem:[#allocation6 + $0xef0] sm:$0xff]
    %v3597 = vld [vmem:[#allocation6 + $0xef8] sm:$0xff]
    %v3598 = vld [vmem:[#allocation6 + $0xf00] sm:$0xff]
    %v3599 = vld [vmem:[#allocation6 + $0xf08] sm:$0xff]
    %v3600 = vld [vmem:[#allocation6 + $0xf10] sm:$0xff]
    %v3601 = vld [vmem:[#allocation6 + $0xf18] sm:$0xff]
    %v3602 = vld [vmem:[#allocation6 + $0xf20] sm:$0xff]
    %v3603 = vld [vmem:[#allocation6 + $0xf28] sm:$0xff]
    %v3604 = vld [vmem:[#allocation6 + $0xf30] sm:$0xff]
    %v3605 = vld [vmem:[#allocation6 + $0xf38] sm:$0xff]
    %v3606 = vld [vmem:[#allocation6 + $0xf40] sm:$0xff]
    %v3607 = vld [vmem:[#allocation6 + $0xf48] sm:$0xff]
    %v3608 = vld [vmem:[#allocation6 + $0xf50] sm:$0xff]
    %v3609 = vld [vmem:[#allocation6 + $0xf58] sm:$0xff]
    %v3610 = vld [vmem:[#allocation6 + $0xf60] sm:$0xff]
    %v3611 = vld [vmem:[#allocation6 + $0xf68] sm:$0xff]
    %v3612 = vld [vmem:[#allocation6 + $0xf70] sm:$0xff]
    %v3613 = vld [vmem:[#allocation6 + $0xf78] sm:$0xff]
    %v3614 = vld [vmem:[#allocation6 + $0xf80] sm:$0xff]
    %v3615 = vld [vmem:[#allocation6 + $0xf88] sm:$0xff]
    %v3616 = vld [vmem:[#allocation6 + $0xf90] sm:$0xff]
    %v3617 = vld [vmem:[#allocation6 + $0xf98] sm:$0xff]
    %v3618 = vld [vmem:[#allocation6 + $0xfa0] sm:$0xff]
    %v3619 = vld [vmem:[#allocation6 + $0xfa8] sm:$0xff]
    %v3620 = vld [vmem:[#allocation6 + $0xfb0] sm:$0xff]
    %v3621 = vld [vmem:[#allocation6 + $0xfb8] sm:$0xff]
    %v3622 = vld [vmem:[#allocation6 + $0xfc0] sm:$0xff]
    %v3623 = vld [vmem:[#allocation6 + $0xfc8] sm:$0xff]
    %v3624 = vld [vmem:[#allocation6 + $0xfd0] sm:$0xff]
    %v3625 = vld [vmem:[#allocation6 + $0xfd8] sm:$0xff]
    %v3626 = vld [vmem:[#allocation6 + $0xfe0] sm:$0xff]
    %v3627 = vld [vmem:[#allocation6 + $0xfe8] sm:$0xff]
    %v3628 = vld [vmem:[#allocation6 + $0xff0] sm:$0xff]
    %v3629 = vld [vmem:[#allocation6 + $0xff8] sm:$0xff]
    %v3630 = vld [vmem:[#allocation7] sm:$0xff]
    %v3632 = vlaneseq
    %v3633 = vshrl.u32 %v3632, 7
    %v3634 = vsub.s32 0, %v3633
    %v3635 = vrot.slane %v3630, %v3634
    %v3636 = vlaneseq
    %v3637 = vshrl.u32 %v3636, 7
    %v3638 = vsub.s32 1, %v3637
    %v3639 = vrot.slane %v3630, %v3638
    %v3640 = vlaneseq
    %v3641 = vshrl.u32 %v3640, 7
    %v3642 = vsub.s32 2, %v3641
    %v3643 = vrot.slane %v3630, %v3642
    %v3644 = vlaneseq
    %v3645 = vshrl.u32 %v3644, 7
    %v3646 = vsub.s32 3, %v3645
    %v3647 = vrot.slane %v3630, %v3646
    %v3648 = vlaneseq
    %v3649 = vshrl.u32 %v3648, 7
    %v3650 = vsub.s32 4, %v3649
    %v3651 = vrot.slane %v3630, %v3650
    %v3652 = vlaneseq
    %v3653 = vshrl.u32 %v3652, 7
    %v3654 = vsub.s32 5, %v3653
    %v3655 = vrot.slane %v3630, %v3654
    %v3656 = vlaneseq
    %v3657 = vshrl.u32 %v3656, 7
    %v3658 = vsub.s32 6, %v3657
    %v3659 = vrot.slane %v3630, %v3658
    %v3660 = vlaneseq
    %v3661 = vshrl.u32 %v3660, 7
    %v3662 = vsub.s32 7, %v3661
    %v3663 = vrot.slane %v3630, %v3662
    %v4184 = vunpack.c.l.b16 %v3118
    %v4185 = vunpack.c.h.b16 %v3118
    %v4186 = vunpack.c.l.b16 %v3119
    %v4187 = vunpack.c.h.b16 %v3119
    %v4188 = vunpack.c.l.b16 %v3120
    %v4189 = vunpack.c.h.b16 %v3120
    %v4190 = vunpack.c.l.b16 %v3121
    %v4191 = vunpack.c.h.b16 %v3121
    %v4192 = vunpack.c.l.b16 %v3122
    %v4193 = vunpack.c.h.b16 %v3122
    %v4194 = vunpack.c.l.b16 %v3123
    %v4195 = vunpack.c.h.b16 %v3123
    %v4196 = vunpack.c.l.b16 %v3124
    %v4197 = vunpack.c.h.b16 %v3124
    %v4198 = vunpack.c.l.b16 %v3125
    %v4199 = vunpack.c.h.b16 %v3125
    %v4200 = vunpack.c.l.b16 %v3126
    %v4201 = vunpack.c.h.b16 %v3126
    %v4202 = vunpack.c.l.b16 %v3127
    %v4203 = vunpack.c.h.b16 %v3127
    %v4204 = vunpack.c.l.b16 %v3128
    %v4205 = vunpack.c.h.b16 %v3128
    %v4206 = vunpack.c.l.b16 %v3129
    %v4207 = vunpack.c.h.b16 %v3129
    %v4208 = vunpack.c.l.b16 %v3130
    %v4209 = vunpack.c.h.b16 %v3130
    %v4210 = vunpack.c.l.b16 %v3131
    %v4211 = vunpack.c.h.b16 %v3131
    %v4212 = vunpack.c.l.b16 %v3132
    %v4213 = vunpack.c.h.b16 %v3132
    %v4214 = vunpack.c.l.b16 %v3133
    %v4215 = vunpack.c.h.b16 %v3133
    %v4216 = vunpack.c.l.b16 %v3134
    %v4217 = vunpack.c.h.b16 %v3134
    %v4218 = vunpack.c.l.b16 %v3135
    %v4219 = vunpack.c.h.b16 %v3135
    %v4220 = vunpack.c.l.b16 %v3136
    %v4221 = vunpack.c.h.b16 %v3136
    %v4222 = vunpack.c.l.b16 %v3137
    %v4223 = vunpack.c.h.b16 %v3137
    %v4224 = vunpack.c.l.b16 %v3138
    %v4225 = vunpack.c.h.b16 %v3138
    %v4226 = vunpack.c.l.b16 %v3139
    %v4227 = vunpack.c.h.b16 %v3139
    %v4228 = vunpack.c.l.b16 %v3140
    %v4229 = vunpack.c.h.b16 %v3140
    %v4230 = vunpack.c.l.b16 %v3141
    %v4231 = vunpack.c.h.b16 %v3141
    %v4232 = vunpack.c.l.b16 %v3142
    %v4233 = vunpack.c.h.b16 %v3142
    %v4234 = vunpack.c.l.b16 %v3143
    %v4235 = vunpack.c.h.b16 %v3143
    %v4236 = vunpack.c.l.b16 %v3144
    %v4237 = vunpack.c.h.b16 %v3144
    %v4238 = vunpack.c.l.b16 %v3145
    %v4239 = vunpack.c.h.b16 %v3145
    %v4240 = vunpack.c.l.b16 %v3146
    %v4241 = vunpack.c.h.b16 %v3146
    %v4242 = vunpack.c.l.b16 %v3147
    %v4243 = vunpack.c.h.b16 %v3147
    %v4244 = vunpack.c.l.b16 %v3148
    %v4245 = vunpack.c.h.b16 %v3148
    %v4246 = vunpack.c.l.b16 %v3149
    %v4247 = vunpack.c.h.b16 %v3149
    %v4248 = vunpack.c.l.b16 %v3150
    %v4249 = vunpack.c.h.b16 %v3150
    %v4250 = vunpack.c.l.b16 %v3151
    %v4251 = vunpack.c.h.b16 %v3151
    %v4252 = vunpack.c.l.b16 %v3152
    %v4253 = vunpack.c.h.b16 %v3152
    %v4254 = vunpack.c.l.b16 %v3153
    %v4255 = vunpack.c.h.b16 %v3153
    %v4256 = vunpack.c.l.b16 %v3154
    %v4257 = vunpack.c.h.b16 %v3154
    %v4258 = vunpack.c.l.b16 %v3155
    %v4259 = vunpack.c.h.b16 %v3155
    %v4260 = vunpack.c.l.b16 %v3156
    %v4261 = vunpack.c.h.b16 %v3156
    %v4262 = vunpack.c.l.b16 %v3157
    %v4263 = vunpack.c.h.b16 %v3157
    %v4264 = vunpack.c.l.b16 %v3158
    %v4265 = vunpack.c.h.b16 %v3158
    %v4266 = vunpack.c.l.b16 %v3159
    %v4267 = vunpack.c.h.b16 %v3159
    %v4268 = vunpack.c.l.b16 %v3160
    %v4269 = vunpack.c.h.b16 %v3160
    %v4270 = vunpack.c.l.b16 %v3161
    %v4271 = vunpack.c.h.b16 %v3161
    %v4272 = vunpack.c.l.b16 %v3162
    %v4273 = vunpack.c.h.b16 %v3162
    %v4274 = vunpack.c.l.b16 %v3163
    %v4275 = vunpack.c.h.b16 %v3163
    %v4276 = vunpack.c.l.b16 %v3164
    %v4277 = vunpack.c.h.b16 %v3164
    %v4278 = vunpack.c.l.b16 %v3165
    %v4279 = vunpack.c.h.b16 %v3165
    %v4280 = vunpack.c.l.b16 %v3166
    %v4281 = vunpack.c.h.b16 %v3166
    %v4282 = vunpack.c.l.b16 %v3167
    %v4283 = vunpack.c.h.b16 %v3167
    %v4284 = vunpack.c.l.b16 %v3168
    %v4285 = vunpack.c.h.b16 %v3168
    %v4286 = vunpack.c.l.b16 %v3169
    %v4287 = vunpack.c.h.b16 %v3169
    %v4288 = vunpack.c.l.b16 %v3170
    %v4289 = vunpack.c.h.b16 %v3170
    %v4290 = vunpack.c.l.b16 %v3171
    %v4291 = vunpack.c.h.b16 %v3171
    %v4292 = vunpack.c.l.b16 %v3172
    %v4293 = vunpack.c.h.b16 %v3172
    %v4294 = vunpack.c.l.b16 %v3173
    %v4295 = vunpack.c.h.b16 %v3173
    %v4296 = vunpack.c.l.b16 %v3174
    %v4297 = vunpack.c.h.b16 %v3174
    %v4298 = vunpack.c.l.b16 %v3175
    %v4299 = vunpack.c.h.b16 %v3175
    %v4300 = vunpack.c.l.b16 %v3176
    %v4301 = vunpack.c.h.b16 %v3176
    %v4302 = vunpack.c.l.b16 %v3177
    %v4303 = vunpack.c.h.b16 %v3177
    %v4304 = vunpack.c.l.b16 %v3178
    %v4305 = vunpack.c.h.b16 %v3178
    %v4306 = vunpack.c.l.b16 %v3179
    %v4307 = vunpack.c.h.b16 %v3179
    %v4308 = vunpack.c.l.b16 %v3180
    %v4309 = vunpack.c.h.b16 %v3180
    %v4310 = vunpack.c.l.b16 %v3181
    %v4311 = vunpack.c.h.b16 %v3181
    %v4312 = vunpack.c.l.b16 %v3182
    %v4313 = vunpack.c.h.b16 %v3182
    %v4314 = vunpack.c.l.b16 %v3183
    %v4315 = vunpack.c.h.b16 %v3183
    %v4316 = vunpack.c.l.b16 %v3184
    %v4317 = vunpack.c.h.b16 %v3184
    %v4318 = vunpack.c.l.b16 %v3185
    %v4319 = vunpack.c.h.b16 %v3185
    %v4320 = vunpack.c.l.b16 %v3186
    %v4321 = vunpack.c.h.b16 %v3186
    %v4322 = vunpack.c.l.b16 %v3187
    %v4323 = vunpack.c.h.b16 %v3187
    %v4324 = vunpack.c.l.b16 %v3188
    %v4325 = vunpack.c.h.b16 %v3188
    %v4326 = vunpack.c.l.b16 %v3189
    %v4327 = vunpack.c.h.b16 %v3189
    %v4328 = vunpack.c.l.b16 %v3190
    %v4329 = vunpack.c.h.b16 %v3190
    %v4330 = vunpack.c.l.b16 %v3191
    %v4331 = vunpack.c.h.b16 %v3191
    %v4332 = vunpack.c.l.b16 %v3192
    %v4333 = vunpack.c.h.b16 %v3192
    %v4334 = vunpack.c.l.b16 %v3193
    %v4335 = vunpack.c.h.b16 %v3193
    %v4336 = vunpack.c.l.b16 %v3194
    %v4337 = vunpack.c.h.b16 %v3194
    %v4338 = vunpack.c.l.b16 %v3195
    %v4339 = vunpack.c.h.b16 %v3195
    %v4340 = vunpack.c.l.b16 %v3196
    %v4341 = vunpack.c.h.b16 %v3196
    %v4342 = vunpack.c.l.b16 %v3197
    %v4343 = vunpack.c.h.b16 %v3197
    %v4344 = vunpack.c.l.b16 %v3198
    %v4345 = vunpack.c.h.b16 %v3198
    %v4346 = vunpack.c.l.b16 %v3199
    %v4347 = vunpack.c.h.b16 %v3199
    %v4348 = vunpack.c.l.b16 %v3200
    %v4349 = vunpack.c.h.b16 %v3200
    %v4350 = vunpack.c.l.b16 %v3201
    %v4351 = vunpack.c.h.b16 %v3201
    %v4352 = vunpack.c.l.b16 %v3202
    %v4353 = vunpack.c.h.b16 %v3202
    %v4354 = vunpack.c.l.b16 %v3203
    %v4355 = vunpack.c.h.b16 %v3203
    %v4356 = vunpack.c.l.b16 %v3204
    %v4357 = vunpack.c.h.b16 %v3204
    %v4358 = vunpack.c.l.b16 %v3205
    %v4359 = vunpack.c.h.b16 %v3205
    %v4360 = vunpack.c.l.b16 %v3206
    %v4361 = vunpack.c.h.b16 %v3206
    %v4362 = vunpack.c.l.b16 %v3207
    %v4363 = vunpack.c.h.b16 %v3207
    %v4364 = vunpack.c.l.b16 %v3208
    %v4365 = vunpack.c.h.b16 %v3208
    %v4366 = vunpack.c.l.b16 %v3209
    %v4367 = vunpack.c.h.b16 %v3209
    %v4368 = vunpack.c.l.b16 %v3210
    %v4369 = vunpack.c.h.b16 %v3210
    %v4370 = vunpack.c.l.b16 %v3211
    %v4371 = vunpack.c.h.b16 %v3211
    %v4372 = vunpack.c.l.b16 %v3212
    %v4373 = vunpack.c.h.b16 %v3212
    %v4374 = vunpack.c.l.b16 %v3213
    %v4375 = vunpack.c.h.b16 %v3213
    %v4376 = vunpack.c.l.b16 %v3214
    %v4377 = vunpack.c.h.b16 %v3214
    %v4378 = vunpack.c.l.b16 %v3215
    %v4379 = vunpack.c.h.b16 %v3215
    %v4380 = vunpack.c.l.b16 %v3216
    %v4381 = vunpack.c.h.b16 %v3216
    %v4382 = vunpack.c.l.b16 %v3217
    %v4383 = vunpack.c.h.b16 %v3217
    %v4384 = vunpack.c.l.b16 %v3218
    %v4385 = vunpack.c.h.b16 %v3218
    %v4386 = vunpack.c.l.b16 %v3219
    %v4387 = vunpack.c.h.b16 %v3219
    %v4388 = vunpack.c.l.b16 %v3220
    %v4389 = vunpack.c.h.b16 %v3220
    %v4390 = vunpack.c.l.b16 %v3221
    %v4391 = vunpack.c.h.b16 %v3221
    %v4392 = vunpack.c.l.b16 %v3222
    %v4393 = vunpack.c.h.b16 %v3222
    %v4394 = vunpack.c.l.b16 %v3223
    %v4395 = vunpack.c.h.b16 %v3223
    %v4396 = vunpack.c.l.b16 %v3224
    %v4397 = vunpack.c.h.b16 %v3224
    %v4398 = vunpack.c.l.b16 %v3225
    %v4399 = vunpack.c.h.b16 %v3225
    %v4400 = vunpack.c.l.b16 %v3226
    %v4401 = vunpack.c.h.b16 %v3226
    %v4402 = vunpack.c.l.b16 %v3227
    %v4403 = vunpack.c.h.b16 %v3227
    %v4404 = vunpack.c.l.b16 %v3228
    %v4405 = vunpack.c.h.b16 %v3228
    %v4406 = vunpack.c.l.b16 %v3229
    %v4407 = vunpack.c.h.b16 %v3229
    %v4408 = vunpack.c.l.b16 %v3230
    %v4409 = vunpack.c.h.b16 %v3230
    %v4410 = vunpack.c.l.b16 %v3231
    %v4411 = vunpack.c.h.b16 %v3231
    %v4412 = vunpack.c.l.b16 %v3232
    %v4413 = vunpack.c.h.b16 %v3232
    %v4414 = vunpack.c.l.b16 %v3233
    %v4415 = vunpack.c.h.b16 %v3233
    %v4416 = vunpack.c.l.b16 %v3234
    %v4417 = vunpack.c.h.b16 %v3234
    %v4418 = vunpack.c.l.b16 %v3235
    %v4419 = vunpack.c.h.b16 %v3235
    %v4420 = vunpack.c.l.b16 %v3236
    %v4421 = vunpack.c.h.b16 %v3236
    %v4422 = vunpack.c.l.b16 %v3237
    %v4423 = vunpack.c.h.b16 %v3237
    %v4424 = vunpack.c.l.b16 %v3238
    %v4425 = vunpack.c.h.b16 %v3238
    %v4426 = vunpack.c.l.b16 %v3239
    %v4427 = vunpack.c.h.b16 %v3239
    %v4428 = vunpack.c.l.b16 %v3240
    %v4429 = vunpack.c.h.b16 %v3240
    %v4430 = vunpack.c.l.b16 %v3241
    %v4431 = vunpack.c.h.b16 %v3241
    %v4432 = vunpack.c.l.b16 %v3242
    %v4433 = vunpack.c.h.b16 %v3242
    %v4434 = vunpack.c.l.b16 %v3243
    %v4435 = vunpack.c.h.b16 %v3243
    %v4436 = vunpack.c.l.b16 %v3244
    %v4437 = vunpack.c.h.b16 %v3244
    %v4438 = vunpack.c.l.b16 %v3245
    %v4439 = vunpack.c.h.b16 %v3245
    %v4440 = vunpack.c.l.b16 %v3246
    %v4441 = vunpack.c.h.b16 %v3246
    %v4442 = vunpack.c.l.b16 %v3247
    %v4443 = vunpack.c.h.b16 %v3247
    %v4444 = vunpack.c.l.b16 %v3248
    %v4445 = vunpack.c.h.b16 %v3248
    %v4446 = vunpack.c.l.b16 %v3249
    %v4447 = vunpack.c.h.b16 %v3249
    %v4448 = vunpack.c.l.b16 %v3250
    %v4449 = vunpack.c.h.b16 %v3250
    %v4450 = vunpack.c.l.b16 %v3251
    %v4451 = vunpack.c.h.b16 %v3251
    %v4452 = vunpack.c.l.b16 %v3252
    %v4453 = vunpack.c.h.b16 %v3252
    %v4454 = vunpack.c.l.b16 %v3253
    %v4455 = vunpack.c.h.b16 %v3253
    %v4456 = vunpack.c.l.b16 %v3254
    %v4457 = vunpack.c.h.b16 %v3254
    %v4458 = vunpack.c.l.b16 %v3255
    %v4459 = vunpack.c.h.b16 %v3255
    %v4460 = vunpack.c.l.b16 %v3256
    %v4461 = vunpack.c.h.b16 %v3256
    %v4462 = vunpack.c.l.b16 %v3257
    %v4463 = vunpack.c.h.b16 %v3257
    %v4464 = vunpack.c.l.b16 %v3258
    %v4465 = vunpack.c.h.b16 %v3258
    %v4466 = vunpack.c.l.b16 %v3259
    %v4467 = vunpack.c.h.b16 %v3259
    %v4468 = vunpack.c.l.b16 %v3260
    %v4469 = vunpack.c.h.b16 %v3260
    %v4470 = vunpack.c.l.b16 %v3261
    %v4471 = vunpack.c.h.b16 %v3261
    %v4472 = vunpack.c.l.b16 %v3262
    %v4473 = vunpack.c.h.b16 %v3262
    %v4474 = vunpack.c.l.b16 %v3263
    %v4475 = vunpack.c.h.b16 %v3263
    %v4476 = vunpack.c.l.b16 %v3264
    %v4477 = vunpack.c.h.b16 %v3264
    %v4478 = vunpack.c.l.b16 %v3265
    %v4479 = vunpack.c.h.b16 %v3265
    %v4480 = vunpack.c.l.b16 %v3266
    %v4481 = vunpack.c.h.b16 %v3266
    %v4482 = vunpack.c.l.b16 %v3267
    %v4483 = vunpack.c.h.b16 %v3267
    %v4484 = vunpack.c.l.b16 %v3268
    %v4485 = vunpack.c.h.b16 %v3268
    %v4486 = vunpack.c.l.b16 %v3269
    %v4487 = vunpack.c.h.b16 %v3269
    %v4488 = vunpack.c.l.b16 %v3270
    %v4489 = vunpack.c.h.b16 %v3270
    %v4490 = vunpack.c.l.b16 %v3271
    %v4491 = vunpack.c.h.b16 %v3271
    %v4492 = vunpack.c.l.b16 %v3272
    %v4493 = vunpack.c.h.b16 %v3272
    %v4494 = vunpack.c.l.b16 %v3273
    %v4495 = vunpack.c.h.b16 %v3273
    %v4496 = vunpack.c.l.b16 %v3274
    %v4497 = vunpack.c.h.b16 %v3274
    %v4498 = vunpack.c.l.b16 %v3275
    %v4499 = vunpack.c.h.b16 %v3275
    %v4500 = vunpack.c.l.b16 %v3276
    %v4501 = vunpack.c.h.b16 %v3276
    %v4502 = vunpack.c.l.b16 %v3277
    %v4503 = vunpack.c.h.b16 %v3277
    %v4504 = vunpack.c.l.b16 %v3278
    %v4505 = vunpack.c.h.b16 %v3278
    %v4506 = vunpack.c.l.b16 %v3279
    %v4507 = vunpack.c.h.b16 %v3279
    %v4508 = vunpack.c.l.b16 %v3280
    %v4509 = vunpack.c.h.b16 %v3280
    %v4510 = vunpack.c.l.b16 %v3281
    %v4511 = vunpack.c.h.b16 %v3281
    %v4512 = vunpack.c.l.b16 %v3282
    %v4513 = vunpack.c.h.b16 %v3282
    %v4514 = vunpack.c.l.b16 %v3283
    %v4515 = vunpack.c.h.b16 %v3283
    %v4516 = vunpack.c.l.b16 %v3284
    %v4517 = vunpack.c.h.b16 %v3284
    %v4518 = vunpack.c.l.b16 %v3285
    %v4519 = vunpack.c.h.b16 %v3285
    %v4520 = vunpack.c.l.b16 %v3286
    %v4521 = vunpack.c.h.b16 %v3286
    %v4522 = vunpack.c.l.b16 %v3287
    %v4523 = vunpack.c.h.b16 %v3287
    %v4524 = vunpack.c.l.b16 %v3288
    %v4525 = vunpack.c.h.b16 %v3288
    %v4526 = vunpack.c.l.b16 %v3289
    %v4527 = vunpack.c.h.b16 %v3289
    %v4528 = vunpack.c.l.b16 %v3290
    %v4529 = vunpack.c.h.b16 %v3290
    %v4530 = vunpack.c.l.b16 %v3291
    %v4531 = vunpack.c.h.b16 %v3291
    %v4532 = vunpack.c.l.b16 %v3292
    %v4533 = vunpack.c.h.b16 %v3292
    %v4534 = vunpack.c.l.b16 %v3293
    %v4535 = vunpack.c.h.b16 %v3293
    %v4536 = vunpack.c.l.b16 %v3294
    %v4537 = vunpack.c.h.b16 %v3294
    %v4538 = vunpack.c.l.b16 %v3295
    %v4539 = vunpack.c.h.b16 %v3295
    %v4540 = vunpack.c.l.b16 %v3296
    %v4541 = vunpack.c.h.b16 %v3296
    %v4542 = vunpack.c.l.b16 %v3297
    %v4543 = vunpack.c.h.b16 %v3297
    %v4544 = vunpack.c.l.b16 %v3298
    %v4545 = vunpack.c.h.b16 %v3298
    %v4546 = vunpack.c.l.b16 %v3299
    %v4547 = vunpack.c.h.b16 %v3299
    %v4548 = vunpack.c.l.b16 %v3300
    %v4549 = vunpack.c.h.b16 %v3300
    %v4550 = vunpack.c.l.b16 %v3301
    %v4551 = vunpack.c.h.b16 %v3301
    %v4552 = vunpack.c.l.b16 %v3302
    %v4553 = vunpack.c.h.b16 %v3302
    %v4554 = vunpack.c.l.b16 %v3303
    %v4555 = vunpack.c.h.b16 %v3303
    %v4556 = vunpack.c.l.b16 %v3304
    %v4557 = vunpack.c.h.b16 %v3304
    %v4558 = vunpack.c.l.b16 %v3305
    %v4559 = vunpack.c.h.b16 %v3305
    %v4560 = vunpack.c.l.b16 %v3306
    %v4561 = vunpack.c.h.b16 %v3306
    %v4562 = vunpack.c.l.b16 %v3307
    %v4563 = vunpack.c.h.b16 %v3307
    %v4564 = vunpack.c.l.b16 %v3308
    %v4565 = vunpack.c.h.b16 %v3308
    %v4566 = vunpack.c.l.b16 %v3309
    %v4567 = vunpack.c.h.b16 %v3309
    %v4568 = vunpack.c.l.b16 %v3310
    %v4569 = vunpack.c.h.b16 %v3310
    %v4570 = vunpack.c.l.b16 %v3311
    %v4571 = vunpack.c.h.b16 %v3311
    %v4572 = vunpack.c.l.b16 %v3312
    %v4573 = vunpack.c.h.b16 %v3312
    %v4574 = vunpack.c.l.b16 %v3313
    %v4575 = vunpack.c.h.b16 %v3313
    %v4576 = vunpack.c.l.b16 %v3314
    %v4577 = vunpack.c.h.b16 %v3314
    %v4578 = vunpack.c.l.b16 %v3315
    %v4579 = vunpack.c.h.b16 %v3315
    %v4580 = vunpack.c.l.b16 %v3316
    %v4581 = vunpack.c.h.b16 %v3316
    %v4582 = vunpack.c.l.b16 %v3317
    %v4583 = vunpack.c.h.b16 %v3317
    %v4584 = vunpack.c.l.b16 %v3318
    %v4585 = vunpack.c.h.b16 %v3318
    %v4586 = vunpack.c.l.b16 %v3319
    %v4587 = vunpack.c.h.b16 %v3319
    %v4588 = vunpack.c.l.b16 %v3320
    %v4589 = vunpack.c.h.b16 %v3320
    %v4590 = vunpack.c.l.b16 %v3321
    %v4591 = vunpack.c.h.b16 %v3321
    %v4592 = vunpack.c.l.b16 %v3322
    %v4593 = vunpack.c.h.b16 %v3322
    %v4594 = vunpack.c.l.b16 %v3323
    %v4595 = vunpack.c.h.b16 %v3323
    %v4596 = vunpack.c.l.b16 %v3324
    %v4597 = vunpack.c.h.b16 %v3324
    %v4598 = vunpack.c.l.b16 %v3325
    %v4599 = vunpack.c.h.b16 %v3325
    %v4600 = vunpack.c.l.b16 %v3326
    %v4601 = vunpack.c.h.b16 %v3326
    %v4602 = vunpack.c.l.b16 %v3327
    %v4603 = vunpack.c.h.b16 %v3327
    %v4604 = vunpack.c.l.b16 %v3328
    %v4605 = vunpack.c.h.b16 %v3328
    %v4606 = vunpack.c.l.b16 %v3329
    %v4607 = vunpack.c.h.b16 %v3329
    %v4608 = vunpack.c.l.b16 %v3330
    %v4609 = vunpack.c.h.b16 %v3330
    %v4610 = vunpack.c.l.b16 %v3331
    %v4611 = vunpack.c.h.b16 %v3331
    %v4612 = vunpack.c.l.b16 %v3332
    %v4613 = vunpack.c.h.b16 %v3332
    %v4614 = vunpack.c.l.b16 %v3333
    %v4615 = vunpack.c.h.b16 %v3333
    %v4616 = vunpack.c.l.b16 %v3334
    %v4617 = vunpack.c.h.b16 %v3334
    %v4618 = vunpack.c.l.b16 %v3335
    %v4619 = vunpack.c.h.b16 %v3335
    %v4620 = vunpack.c.l.b16 %v3336
    %v4621 = vunpack.c.h.b16 %v3336
    %v4622 = vunpack.c.l.b16 %v3337
    %v4623 = vunpack.c.h.b16 %v3337
    %v4624 = vunpack.c.l.b16 %v3338
    %v4625 = vunpack.c.h.b16 %v3338
    %v4626 = vunpack.c.l.b16 %v3339
    %v4627 = vunpack.c.h.b16 %v3339
    %v4628 = vunpack.c.l.b16 %v3340
    %v4629 = vunpack.c.h.b16 %v3340
    %v4630 = vunpack.c.l.b16 %v3341
    %v4631 = vunpack.c.h.b16 %v3341
    %v4632 = vunpack.c.l.b16 %v3342
    %v4633 = vunpack.c.h.b16 %v3342
    %v4634 = vunpack.c.l.b16 %v3343
    %v4635 = vunpack.c.h.b16 %v3343
    %v4636 = vunpack.c.l.b16 %v3344
    %v4637 = vunpack.c.h.b16 %v3344
    %v4638 = vunpack.c.l.b16 %v3345
    %v4639 = vunpack.c.h.b16 %v3345
    %v4640 = vunpack.c.l.b16 %v3346
    %v4641 = vunpack.c.h.b16 %v3346
    %v4642 = vunpack.c.l.b16 %v3347
    %v4643 = vunpack.c.h.b16 %v3347
    %v4644 = vunpack.c.l.b16 %v3348
    %v4645 = vunpack.c.h.b16 %v3348
    %v4646 = vunpack.c.l.b16 %v3349
    %v4647 = vunpack.c.h.b16 %v3349
    %v4648 = vunpack.c.l.b16 %v3350
    %v4649 = vunpack.c.h.b16 %v3350
    %v4650 = vunpack.c.l.b16 %v3351
    %v4651 = vunpack.c.h.b16 %v3351
    %v4652 = vunpack.c.l.b16 %v3352
    %v4653 = vunpack.c.h.b16 %v3352
    %v4654 = vunpack.c.l.b16 %v3353
    %v4655 = vunpack.c.h.b16 %v3353
    %v4656 = vunpack.c.l.b16 %v3354
    %v4657 = vunpack.c.h.b16 %v3354
    %v4658 = vunpack.c.l.b16 %v3355
    %v4659 = vunpack.c.h.b16 %v3355
    %v4660 = vunpack.c.l.b16 %v3356
    %v4661 = vunpack.c.h.b16 %v3356
    %v4662 = vunpack.c.l.b16 %v3357
    %v4663 = vunpack.c.h.b16 %v3357
    %v4664 = vunpack.c.l.b16 %v3358
    %v4665 = vunpack.c.h.b16 %v3358
    %v4666 = vunpack.c.l.b16 %v3359
    %v4667 = vunpack.c.h.b16 %v3359
    %v4668 = vunpack.c.l.b16 %v3360
    %v4669 = vunpack.c.h.b16 %v3360
    %v4670 = vunpack.c.l.b16 %v3361
    %v4671 = vunpack.c.h.b16 %v3361
    %v4672 = vunpack.c.l.b16 %v3362
    %v4673 = vunpack.c.h.b16 %v3362
    %v4674 = vunpack.c.l.b16 %v3363
    %v4675 = vunpack.c.h.b16 %v3363
    %v4676 = vunpack.c.l.b16 %v3364
    %v4677 = vunpack.c.h.b16 %v3364
    %v4678 = vunpack.c.l.b16 %v3365
    %v4679 = vunpack.c.h.b16 %v3365
    %v4680 = vunpack.c.l.b16 %v3366
    %v4681 = vunpack.c.h.b16 %v3366
    %v4682 = vunpack.c.l.b16 %v3367
    %v4683 = vunpack.c.h.b16 %v3367
    %v4684 = vunpack.c.l.b16 %v3368
    %v4685 = vunpack.c.h.b16 %v3368
    %v4686 = vunpack.c.l.b16 %v3369
    %v4687 = vunpack.c.h.b16 %v3369
    %v4688 = vunpack.c.l.b16 %v3370
    %v4689 = vunpack.c.h.b16 %v3370
    %v4690 = vunpack.c.l.b16 %v3371
    %v4691 = vunpack.c.h.b16 %v3371
    %v4692 = vunpack.c.l.b16 %v3372
    %v4693 = vunpack.c.h.b16 %v3372
    %v4694 = vunpack.c.l.b16 %v3373
    %v4695 = vunpack.c.h.b16 %v3373
    %v4696 = vunpack.c.l.b16 %v3374
    %v4697 = vunpack.c.h.b16 %v3374
    %v4698 = vunpack.c.l.b16 %v3375
    %v4699 = vunpack.c.h.b16 %v3375
    %v4700 = vunpack.c.l.b16 %v3376
    %v4701 = vunpack.c.h.b16 %v3376
    %v4702 = vunpack.c.l.b16 %v3377
    %v4703 = vunpack.c.h.b16 %v3377
    %v4704 = vunpack.c.l.b16 %v3378
    %v4705 = vunpack.c.h.b16 %v3378
    %v4706 = vunpack.c.l.b16 %v3379
    %v4707 = vunpack.c.h.b16 %v3379
    %v4708 = vunpack.c.l.b16 %v3380
    %v4709 = vunpack.c.h.b16 %v3380
    %v4710 = vunpack.c.l.b16 %v3381
    %v4711 = vunpack.c.h.b16 %v3381
    %v4712 = vunpack.c.l.b16 %v3382
    %v4713 = vunpack.c.h.b16 %v3382
    %v4714 = vunpack.c.l.b16 %v3383
    %v4715 = vunpack.c.h.b16 %v3383
    %v4716 = vunpack.c.l.b16 %v3384
    %v4717 = vunpack.c.h.b16 %v3384
    %v4718 = vunpack.c.l.b16 %v3385
    %v4719 = vunpack.c.h.b16 %v3385
    %v4720 = vunpack.c.l.b16 %v3386
    %v4721 = vunpack.c.h.b16 %v3386
    %v4722 = vunpack.c.l.b16 %v3387
    %v4723 = vunpack.c.h.b16 %v3387
    %v4724 = vunpack.c.l.b16 %v3388
    %v4725 = vunpack.c.h.b16 %v3388
    %v4726 = vunpack.c.l.b16 %v3389
    %v4727 = vunpack.c.h.b16 %v3389
    %v4728 = vunpack.c.l.b16 %v3390
    %v4729 = vunpack.c.h.b16 %v3390
    %v4730 = vunpack.c.l.b16 %v3391
    %v4731 = vunpack.c.h.b16 %v3391
    %v4732 = vunpack.c.l.b16 %v3392
    %v4733 = vunpack.c.h.b16 %v3392
    %v4734 = vunpack.c.l.b16 %v3393
    %v4735 = vunpack.c.h.b16 %v3393
    %v4736 = vunpack.c.l.b16 %v3394
    %v4737 = vunpack.c.h.b16 %v3394
    %v4738 = vunpack.c.l.b16 %v3395
    %v4739 = vunpack.c.h.b16 %v3395
    %v4740 = vunpack.c.l.b16 %v3396
    %v4741 = vunpack.c.h.b16 %v3396
    %v4742 = vunpack.c.l.b16 %v3397
    %v4743 = vunpack.c.h.b16 %v3397
    %v4744 = vunpack.c.l.b16 %v3398
    %v4745 = vunpack.c.h.b16 %v3398
    %v4746 = vunpack.c.l.b16 %v3399
    %v4747 = vunpack.c.h.b16 %v3399
    %v4748 = vunpack.c.l.b16 %v3400
    %v4749 = vunpack.c.h.b16 %v3400
    %v4750 = vunpack.c.l.b16 %v3401
    %v4751 = vunpack.c.h.b16 %v3401
    %v4752 = vunpack.c.l.b16 %v3402
    %v4753 = vunpack.c.h.b16 %v3402
    %v4754 = vunpack.c.l.b16 %v3403
    %v4755 = vunpack.c.h.b16 %v3403
    %v4756 = vunpack.c.l.b16 %v3404
    %v4757 = vunpack.c.h.b16 %v3404
    %v4758 = vunpack.c.l.b16 %v3405
    %v4759 = vunpack.c.h.b16 %v3405
    %v4760 = vunpack.c.l.b16 %v3406
    %v4761 = vunpack.c.h.b16 %v3406
    %v4762 = vunpack.c.l.b16 %v3407
    %v4763 = vunpack.c.h.b16 %v3407
    %v4764 = vunpack.c.l.b16 %v3408
    %v4765 = vunpack.c.h.b16 %v3408
    %v4766 = vunpack.c.l.b16 %v3409
    %v4767 = vunpack.c.h.b16 %v3409
    %v4768 = vunpack.c.l.b16 %v3410
    %v4769 = vunpack.c.h.b16 %v3410
    %v4770 = vunpack.c.l.b16 %v3411
    %v4771 = vunpack.c.h.b16 %v3411
    %v4772 = vunpack.c.l.b16 %v3412
    %v4773 = vunpack.c.h.b16 %v3412
    %v4774 = vunpack.c.l.b16 %v3413
    %v4775 = vunpack.c.h.b16 %v3413
    %v4776 = vunpack.c.l.b16 %v3414
    %v4777 = vunpack.c.h.b16 %v3414
    %v4778 = vunpack.c.l.b16 %v3415
    %v4779 = vunpack.c.h.b16 %v3415
    %v4780 = vunpack.c.l.b16 %v3416
    %v4781 = vunpack.c.h.b16 %v3416
    %v4782 = vunpack.c.l.b16 %v3417
    %v4783 = vunpack.c.h.b16 %v3417
    %v4784 = vunpack.c.l.b16 %v3418
    %v4785 = vunpack.c.h.b16 %v3418
    %v4786 = vunpack.c.l.b16 %v3419
    %v4787 = vunpack.c.h.b16 %v3419
    %v4788 = vunpack.c.l.b16 %v3420
    %v4789 = vunpack.c.h.b16 %v3420
    %v4790 = vunpack.c.l.b16 %v3421
    %v4791 = vunpack.c.h.b16 %v3421
    %v4792 = vunpack.c.l.b16 %v3422
    %v4793 = vunpack.c.h.b16 %v3422
    %v4794 = vunpack.c.l.b16 %v3423
    %v4795 = vunpack.c.h.b16 %v3423
    %v4796 = vunpack.c.l.b16 %v3424
    %v4797 = vunpack.c.h.b16 %v3424
    %v4798 = vunpack.c.l.b16 %v3425
    %v4799 = vunpack.c.h.b16 %v3425
    %v4800 = vunpack.c.l.b16 %v3426
    %v4801 = vunpack.c.h.b16 %v3426
    %v4802 = vunpack.c.l.b16 %v3427
    %v4803 = vunpack.c.h.b16 %v3427
    %v4804 = vunpack.c.l.b16 %v3428
    %v4805 = vunpack.c.h.b16 %v3428
    %v4806 = vunpack.c.l.b16 %v3429
    %v4807 = vunpack.c.h.b16 %v3429
    %v4808 = vunpack.c.l.b16 %v3430
    %v4809 = vunpack.c.h.b16 %v3430
    %v4810 = vunpack.c.l.b16 %v3431
    %v4811 = vunpack.c.h.b16 %v3431
    %v4812 = vunpack.c.l.b16 %v3432
    %v4813 = vunpack.c.h.b16 %v3432
    %v4814 = vunpack.c.l.b16 %v3433
    %v4815 = vunpack.c.h.b16 %v3433
    %v4816 = vunpack.c.l.b16 %v3434
    %v4817 = vunpack.c.h.b16 %v3434
    %v4818 = vunpack.c.l.b16 %v3435
    %v4819 = vunpack.c.h.b16 %v3435
    %v4820 = vunpack.c.l.b16 %v3436
    %v4821 = vunpack.c.h.b16 %v3436
    %v4822 = vunpack.c.l.b16 %v3437
    %v4823 = vunpack.c.h.b16 %v3437
    %v4824 = vunpack.c.l.b16 %v3438
    %v4825 = vunpack.c.h.b16 %v3438
    %v4826 = vunpack.c.l.b16 %v3439
    %v4827 = vunpack.c.h.b16 %v3439
    %v4828 = vunpack.c.l.b16 %v3440
    %v4829 = vunpack.c.h.b16 %v3440
    %v4830 = vunpack.c.l.b16 %v3441
    %v4831 = vunpack.c.h.b16 %v3441
    %v4832 = vunpack.c.l.b16 %v3442
    %v4833 = vunpack.c.h.b16 %v3442
    %v4834 = vunpack.c.l.b16 %v3443
    %v4835 = vunpack.c.h.b16 %v3443
    %v4836 = vunpack.c.l.b16 %v3444
    %v4837 = vunpack.c.h.b16 %v3444
    %v4838 = vunpack.c.l.b16 %v3445
    %v4839 = vunpack.c.h.b16 %v3445
    %v4840 = vunpack.c.l.b16 %v3446
    %v4841 = vunpack.c.h.b16 %v3446
    %v4842 = vunpack.c.l.b16 %v3447
    %v4843 = vunpack.c.h.b16 %v3447
    %v4844 = vunpack.c.l.b16 %v3448
    %v4845 = vunpack.c.h.b16 %v3448
    %v4846 = vunpack.c.l.b16 %v3449
    %v4847 = vunpack.c.h.b16 %v3449
    %v4848 = vunpack.c.l.b16 %v3450
    %v4849 = vunpack.c.h.b16 %v3450
    %v4850 = vunpack.c.l.b16 %v3451
    %v4851 = vunpack.c.h.b16 %v3451
    %v4852 = vunpack.c.l.b16 %v3452
    %v4853 = vunpack.c.h.b16 %v3452
    %v4854 = vunpack.c.l.b16 %v3453
    %v4855 = vunpack.c.h.b16 %v3453
    %v4856 = vunpack.c.l.b16 %v3454
    %v4857 = vunpack.c.h.b16 %v3454
    %v4858 = vunpack.c.l.b16 %v3455
    %v4859 = vunpack.c.h.b16 %v3455
    %v4860 = vunpack.c.l.b16 %v3456
    %v4861 = vunpack.c.h.b16 %v3456
    %v4862 = vunpack.c.l.b16 %v3457
    %v4863 = vunpack.c.h.b16 %v3457
    %v4864 = vunpack.c.l.b16 %v3458
    %v4865 = vunpack.c.h.b16 %v3458
    %v4866 = vunpack.c.l.b16 %v3459
    %v4867 = vunpack.c.h.b16 %v3459
    %v4868 = vunpack.c.l.b16 %v3460
    %v4869 = vunpack.c.h.b16 %v3460
    %v4870 = vunpack.c.l.b16 %v3461
    %v4871 = vunpack.c.h.b16 %v3461
    %v4872 = vunpack.c.l.b16 %v3462
    %v4873 = vunpack.c.h.b16 %v3462
    %v4874 = vunpack.c.l.b16 %v3463
    %v4875 = vunpack.c.h.b16 %v3463
    %v4876 = vunpack.c.l.b16 %v3464
    %v4877 = vunpack.c.h.b16 %v3464
    %v4878 = vunpack.c.l.b16 %v3465
    %v4879 = vunpack.c.h.b16 %v3465
    %v4880 = vunpack.c.l.b16 %v3466
    %v4881 = vunpack.c.h.b16 %v3466
    %v4882 = vunpack.c.l.b16 %v3467
    %v4883 = vunpack.c.h.b16 %v3467
    %v4884 = vunpack.c.l.b16 %v3468
    %v4885 = vunpack.c.h.b16 %v3468
    %v4886 = vunpack.c.l.b16 %v3469
    %v4887 = vunpack.c.h.b16 %v3469
    %v4888 = vunpack.c.l.b16 %v3470
    %v4889 = vunpack.c.h.b16 %v3470
    %v4890 = vunpack.c.l.b16 %v3471
    %v4891 = vunpack.c.h.b16 %v3471
    %v4892 = vunpack.c.l.b16 %v3472
    %v4893 = vunpack.c.h.b16 %v3472
    %v4894 = vunpack.c.l.b16 %v3473
    %v4895 = vunpack.c.h.b16 %v3473
    %v4896 = vunpack.c.l.b16 %v3474
    %v4897 = vunpack.c.h.b16 %v3474
    %v4898 = vunpack.c.l.b16 %v3475
    %v4899 = vunpack.c.h.b16 %v3475
    %v4900 = vunpack.c.l.b16 %v3476
    %v4901 = vunpack.c.h.b16 %v3476
    %v4902 = vunpack.c.l.b16 %v3477
    %v4903 = vunpack.c.h.b16 %v3477
    %v4904 = vunpack.c.l.b16 %v3478
    %v4905 = vunpack.c.h.b16 %v3478
    %v4906 = vunpack.c.l.b16 %v3479
    %v4907 = vunpack.c.h.b16 %v3479
    %v4908 = vunpack.c.l.b16 %v3480
    %v4909 = vunpack.c.h.b16 %v3480
    %v4910 = vunpack.c.l.b16 %v3481
    %v4911 = vunpack.c.h.b16 %v3481
    %v4912 = vunpack.c.l.b16 %v3482
    %v4913 = vunpack.c.h.b16 %v3482
    %v4914 = vunpack.c.l.b16 %v3483
    %v4915 = vunpack.c.h.b16 %v3483
    %v4916 = vunpack.c.l.b16 %v3484
    %v4917 = vunpack.c.h.b16 %v3484
    %v4918 = vunpack.c.l.b16 %v3485
    %v4919 = vunpack.c.h.b16 %v3485
    %v4920 = vunpack.c.l.b16 %v3486
    %v4921 = vunpack.c.h.b16 %v3486
    %v4922 = vunpack.c.l.b16 %v3487
    %v4923 = vunpack.c.h.b16 %v3487
    %v4924 = vunpack.c.l.b16 %v3488
    %v4925 = vunpack.c.h.b16 %v3488
    %v4926 = vunpack.c.l.b16 %v3489
    %v4927 = vunpack.c.h.b16 %v3489
    %v4928 = vunpack.c.l.b16 %v3490
    %v4929 = vunpack.c.h.b16 %v3490
    %v4930 = vunpack.c.l.b16 %v3491
    %v4931 = vunpack.c.h.b16 %v3491
    %v4932 = vunpack.c.l.b16 %v3492
    %v4933 = vunpack.c.h.b16 %v3492
    %v4934 = vunpack.c.l.b16 %v3493
    %v4935 = vunpack.c.h.b16 %v3493
    %v4936 = vunpack.c.l.b16 %v3494
    %v4937 = vunpack.c.h.b16 %v3494
    %v4938 = vunpack.c.l.b16 %v3495
    %v4939 = vunpack.c.h.b16 %v3495
    %v4940 = vunpack.c.l.b16 %v3496
    %v4941 = vunpack.c.h.b16 %v3496
    %v4942 = vunpack.c.l.b16 %v3497
    %v4943 = vunpack.c.h.b16 %v3497
    %v4944 = vunpack.c.l.b16 %v3498
    %v4945 = vunpack.c.h.b16 %v3498
    %v4946 = vunpack.c.l.b16 %v3499
    %v4947 = vunpack.c.h.b16 %v3499
    %v4948 = vunpack.c.l.b16 %v3500
    %v4949 = vunpack.c.h.b16 %v3500
    %v4950 = vunpack.c.l.b16 %v3501
    %v4951 = vunpack.c.h.b16 %v3501
    %v4952 = vunpack.c.l.b16 %v3502
    %v4953 = vunpack.c.h.b16 %v3502
    %v4954 = vunpack.c.l.b16 %v3503
    %v4955 = vunpack.c.h.b16 %v3503
    %v4956 = vunpack.c.l.b16 %v3504
    %v4957 = vunpack.c.h.b16 %v3504
    %v4958 = vunpack.c.l.b16 %v3505
    %v4959 = vunpack.c.h.b16 %v3505
    %v4960 = vunpack.c.l.b16 %v3506
    %v4961 = vunpack.c.h.b16 %v3506
    %v4962 = vunpack.c.l.b16 %v3507
    %v4963 = vunpack.c.h.b16 %v3507
    %v4964 = vunpack.c.l.b16 %v3508
    %v4965 = vunpack.c.h.b16 %v3508
    %v4966 = vunpack.c.l.b16 %v3509
    %v4967 = vunpack.c.h.b16 %v3509
    %v4968 = vunpack.c.l.b16 %v3510
    %v4969 = vunpack.c.h.b16 %v3510
    %v4970 = vunpack.c.l.b16 %v3511
    %v4971 = vunpack.c.h.b16 %v3511
    %v4972 = vunpack.c.l.b16 %v3512
    %v4973 = vunpack.c.h.b16 %v3512
    %v4974 = vunpack.c.l.b16 %v3513
    %v4975 = vunpack.c.h.b16 %v3513
    %v4976 = vunpack.c.l.b16 %v3514
    %v4977 = vunpack.c.h.b16 %v3514
    %v4978 = vunpack.c.l.b16 %v3515
    %v4979 = vunpack.c.h.b16 %v3515
    %v4980 = vunpack.c.l.b16 %v3516
    %v4981 = vunpack.c.h.b16 %v3516
    %v4982 = vunpack.c.l.b16 %v3517
    %v4983 = vunpack.c.h.b16 %v3517
    %v4984 = vunpack.c.l.b16 %v3518
    %v4985 = vunpack.c.h.b16 %v3518
    %v4986 = vunpack.c.l.b16 %v3519
    %v4987 = vunpack.c.h.b16 %v3519
    %v4988 = vunpack.c.l.b16 %v3520
    %v4989 = vunpack.c.h.b16 %v3520
    %v4990 = vunpack.c.l.b16 %v3521
    %v4991 = vunpack.c.h.b16 %v3521
    %v4992 = vunpack.c.l.b16 %v3522
    %v4993 = vunpack.c.h.b16 %v3522
    %v4994 = vunpack.c.l.b16 %v3523
    %v4995 = vunpack.c.h.b16 %v3523
    %v4996 = vunpack.c.l.b16 %v3524
    %v4997 = vunpack.c.h.b16 %v3524
    %v4998 = vunpack.c.l.b16 %v3525
    %v4999 = vunpack.c.h.b16 %v3525
    %v5000 = vunpack.c.l.b16 %v3526
    %v5001 = vunpack.c.h.b16 %v3526
    %v5002 = vunpack.c.l.b16 %v3527
    %v5003 = vunpack.c.h.b16 %v3527
    %v5004 = vunpack.c.l.b16 %v3528
    %v5005 = vunpack.c.h.b16 %v3528
    %v5006 = vunpack.c.l.b16 %v3529
    %v5007 = vunpack.c.h.b16 %v3529
    %v5008 = vunpack.c.l.b16 %v3530
    %v5009 = vunpack.c.h.b16 %v3530
    %v5010 = vunpack.c.l.b16 %v3531
    %v5011 = vunpack.c.h.b16 %v3531
    %v5012 = vunpack.c.l.b16 %v3532
    %v5013 = vunpack.c.h.b16 %v3532
    %v5014 = vunpack.c.l.b16 %v3533
    %v5015 = vunpack.c.h.b16 %v3533
    %v5016 = vunpack.c.l.b16 %v3534
    %v5017 = vunpack.c.h.b16 %v3534
    %v5018 = vunpack.c.l.b16 %v3535
    %v5019 = vunpack.c.h.b16 %v3535
    %v5020 = vunpack.c.l.b16 %v3536
    %v5021 = vunpack.c.h.b16 %v3536
    %v5022 = vunpack.c.l.b16 %v3537
    %v5023 = vunpack.c.h.b16 %v3537
    %v5024 = vunpack.c.l.b16 %v3538
    %v5025 = vunpack.c.h.b16 %v3538
    %v5026 = vunpack.c.l.b16 %v3539
    %v5027 = vunpack.c.h.b16 %v3539
    %v5028 = vunpack.c.l.b16 %v3540
    %v5029 = vunpack.c.h.b16 %v3540
    %v5030 = vunpack.c.l.b16 %v3541
    %v5031 = vunpack.c.h.b16 %v3541
    %v5032 = vunpack.c.l.b16 %v3542
    %v5033 = vunpack.c.h.b16 %v3542
    %v5034 = vunpack.c.l.b16 %v3543
    %v5035 = vunpack.c.h.b16 %v3543
    %v5036 = vunpack.c.l.b16 %v3544
    %v5037 = vunpack.c.h.b16 %v3544
    %v5038 = vunpack.c.l.b16 %v3545
    %v5039 = vunpack.c.h.b16 %v3545
    %v5040 = vunpack.c.l.b16 %v3546
    %v5041 = vunpack.c.h.b16 %v3546
    %v5042 = vunpack.c.l.b16 %v3547
    %v5043 = vunpack.c.h.b16 %v3547
    %v5044 = vunpack.c.l.b16 %v3548
    %v5045 = vunpack.c.h.b16 %v3548
    %v5046 = vunpack.c.l.b16 %v3549
    %v5047 = vunpack.c.h.b16 %v3549
    %v5048 = vunpack.c.l.b16 %v3550
    %v5049 = vunpack.c.h.b16 %v3550
    %v5050 = vunpack.c.l.b16 %v3551
    %v5051 = vunpack.c.h.b16 %v3551
    %v5052 = vunpack.c.l.b16 %v3552
    %v5053 = vunpack.c.h.b16 %v3552
    %v5054 = vunpack.c.l.b16 %v3553
    %v5055 = vunpack.c.h.b16 %v3553
    %v5056 = vunpack.c.l.b16 %v3554
    %v5057 = vunpack.c.h.b16 %v3554
    %v5058 = vunpack.c.l.b16 %v3555
    %v5059 = vunpack.c.h.b16 %v3555
    %v5060 = vunpack.c.l.b16 %v3556
    %v5061 = vunpack.c.h.b16 %v3556
    %v5062 = vunpack.c.l.b16 %v3557
    %v5063 = vunpack.c.h.b16 %v3557
    %v5064 = vunpack.c.l.b16 %v3558
    %v5065 = vunpack.c.h.b16 %v3558
    %v5066 = vunpack.c.l.b16 %v3559
    %v5067 = vunpack.c.h.b16 %v3559
    %v5068 = vunpack.c.l.b16 %v3560
    %v5069 = vunpack.c.h.b16 %v3560
    %v5070 = vunpack.c.l.b16 %v3561
    %v5071 = vunpack.c.h.b16 %v3561
    %v5072 = vunpack.c.l.b16 %v3562
    %v5073 = vunpack.c.h.b16 %v3562
    %v5074 = vunpack.c.l.b16 %v3563
    %v5075 = vunpack.c.h.b16 %v3563
    %v5076 = vunpack.c.l.b16 %v3564
    %v5077 = vunpack.c.h.b16 %v3564
    %v5078 = vunpack.c.l.b16 %v3565
    %v5079 = vunpack.c.h.b16 %v3565
    %v5080 = vunpack.c.l.b16 %v3566
    %v5081 = vunpack.c.h.b16 %v3566
    %v5082 = vunpack.c.l.b16 %v3567
    %v5083 = vunpack.c.h.b16 %v3567
    %v5084 = vunpack.c.l.b16 %v3568
    %v5085 = vunpack.c.h.b16 %v3568
    %v5086 = vunpack.c.l.b16 %v3569
    %v5087 = vunpack.c.h.b16 %v3569
    %v5088 = vunpack.c.l.b16 %v3570
    %v5089 = vunpack.c.h.b16 %v3570
    %v5090 = vunpack.c.l.b16 %v3571
    %v5091 = vunpack.c.h.b16 %v3571
    %v5092 = vunpack.c.l.b16 %v3572
    %v5093 = vunpack.c.h.b16 %v3572
    %v5094 = vunpack.c.l.b16 %v3573
    %v5095 = vunpack.c.h.b16 %v3573
    %v5096 = vunpack.c.l.b16 %v3574
    %v5097 = vunpack.c.h.b16 %v3574
    %v5098 = vunpack.c.l.b16 %v3575
    %v5099 = vunpack.c.h.b16 %v3575
    %v5100 = vunpack.c.l.b16 %v3576
    %v5101 = vunpack.c.h.b16 %v3576
    %v5102 = vunpack.c.l.b16 %v3577
    %v5103 = vunpack.c.h.b16 %v3577
    %v5104 = vunpack.c.l.b16 %v3578
    %v5105 = vunpack.c.h.b16 %v3578
    %v5106 = vunpack.c.l.b16 %v3579
    %v5107 = vunpack.c.h.b16 %v3579
    %v5108 = vunpack.c.l.b16 %v3580
    %v5109 = vunpack.c.h.b16 %v3580
    %v5110 = vunpack.c.l.b16 %v3581
    %v5111 = vunpack.c.h.b16 %v3581
    %v5112 = vunpack.c.l.b16 %v3582
    %v5113 = vunpack.c.h.b16 %v3582
    %v5114 = vunpack.c.l.b16 %v3583
    %v5115 = vunpack.c.h.b16 %v3583
    %v5116 = vunpack.c.l.b16 %v3584
    %v5117 = vunpack.c.h.b16 %v3584
    %v5118 = vunpack.c.l.b16 %v3585
    %v5119 = vunpack.c.h.b16 %v3585
    %v5120 = vunpack.c.l.b16 %v3586
    %v5121 = vunpack.c.h.b16 %v3586
    %v5122 = vunpack.c.l.b16 %v3587
    %v5123 = vunpack.c.h.b16 %v3587
    %v5124 = vunpack.c.l.b16 %v3588
    %v5125 = vunpack.c.h.b16 %v3588
    %v5126 = vunpack.c.l.b16 %v3589
    %v5127 = vunpack.c.h.b16 %v3589
    %v5128 = vunpack.c.l.b16 %v3590
    %v5129 = vunpack.c.h.b16 %v3590
    %v5130 = vunpack.c.l.b16 %v3591
    %v5131 = vunpack.c.h.b16 %v3591
    %v5132 = vunpack.c.l.b16 %v3592
    %v5133 = vunpack.c.h.b16 %v3592
    %v5134 = vunpack.c.l.b16 %v3593
    %v5135 = vunpack.c.h.b16 %v3593
    %v5136 = vunpack.c.l.b16 %v3594
    %v5137 = vunpack.c.h.b16 %v3594
    %v5138 = vunpack.c.l.b16 %v3595
    %v5139 = vunpack.c.h.b16 %v3595
    %v5140 = vunpack.c.l.b16 %v3596
    %v5141 = vunpack.c.h.b16 %v3596
    %v5142 = vunpack.c.l.b16 %v3597
    %v5143 = vunpack.c.h.b16 %v3597
    %v5144 = vunpack.c.l.b16 %v3598
    %v5145 = vunpack.c.h.b16 %v3598
    %v5146 = vunpack.c.l.b16 %v3599
    %v5147 = vunpack.c.h.b16 %v3599
    %v5148 = vunpack.c.l.b16 %v3600
    %v5149 = vunpack.c.h.b16 %v3600
    %v5150 = vunpack.c.l.b16 %v3601
    %v5151 = vunpack.c.h.b16 %v3601
    %v5152 = vunpack.c.l.b16 %v3602
    %v5153 = vunpack.c.h.b16 %v3602
    %v5154 = vunpack.c.l.b16 %v3603
    %v5155 = vunpack.c.h.b16 %v3603
    %v5156 = vunpack.c.l.b16 %v3604
    %v5157 = vunpack.c.h.b16 %v3604
    %v5158 = vunpack.c.l.b16 %v3605
    %v5159 = vunpack.c.h.b16 %v3605
    %v5160 = vunpack.c.l.b16 %v3606
    %v5161 = vunpack.c.h.b16 %v3606
    %v5162 = vunpack.c.l.b16 %v3607
    %v5163 = vunpack.c.h.b16 %v3607
    %v5164 = vunpack.c.l.b16 %v3608
    %v5165 = vunpack.c.h.b16 %v3608
    %v5166 = vunpack.c.l.b16 %v3609
    %v5167 = vunpack.c.h.b16 %v3609
    %v5168 = vunpack.c.l.b16 %v3610
    %v5169 = vunpack.c.h.b16 %v3610
    %v5170 = vunpack.c.l.b16 %v3611
    %v5171 = vunpack.c.h.b16 %v3611
    %v5172 = vunpack.c.l.b16 %v3612
    %v5173 = vunpack.c.h.b16 %v3612
    %v5174 = vunpack.c.l.b16 %v3613
    %v5175 = vunpack.c.h.b16 %v3613
    %v5176 = vunpack.c.l.b16 %v3614
    %v5177 = vunpack.c.h.b16 %v3614
    %v5178 = vunpack.c.l.b16 %v3615
    %v5179 = vunpack.c.h.b16 %v3615
    %v5180 = vunpack.c.l.b16 %v3616
    %v5181 = vunpack.c.h.b16 %v3616
    %v5182 = vunpack.c.l.b16 %v3617
    %v5183 = vunpack.c.h.b16 %v3617
    %v5184 = vunpack.c.l.b16 %v3618
    %v5185 = vunpack.c.h.b16 %v3618
    %v5186 = vunpack.c.l.b16 %v3619
    %v5187 = vunpack.c.h.b16 %v3619
    %v5188 = vunpack.c.l.b16 %v3620
    %v5189 = vunpack.c.h.b16 %v3620
    %v5190 = vunpack.c.l.b16 %v3621
    %v5191 = vunpack.c.h.b16 %v3621
    %v5192 = vunpack.c.l.b16 %v3622
    %v5193 = vunpack.c.h.b16 %v3622
    %v5194 = vunpack.c.l.b16 %v3623
    %v5195 = vunpack.c.h.b16 %v3623
    %v5196 = vunpack.c.l.b16 %v3624
    %v5197 = vunpack.c.h.b16 %v3624
    %v5198 = vunpack.c.l.b16 %v3625
    %v5199 = vunpack.c.h.b16 %v3625
    %v5200 = vunpack.c.l.b16 %v3626
    %v5201 = vunpack.c.h.b16 %v3626
    %v5202 = vunpack.c.l.b16 %v3627
    %v5203 = vunpack.c.h.b16 %v3627
    %v5204 = vunpack.c.l.b16 %v3628
    %v5205 = vunpack.c.h.b16 %v3628
    %v5206 = vunpack.c.l.b16 %v3629
    %v5207 = vunpack.c.h.b16 %v3629
    %v5208 = vpack.c.b16 %v4192, %v4184
    %v5209 = vpack.c.b16 %v4193, %v4185
    %v5210 = vpack.c.b16 %v4194, %v4186
    %v5211 = vpack.c.b16 %v4195, %v4187
    %v5212 = vpack.c.b16 %v4196, %v4188
    %v5213 = vpack.c.b16 %v4197, %v4189
    %v5214 = vpack.c.b16 %v4198, %v4190
    %v5215 = vpack.c.b16 %v4199, %v4191
    %v5216 = vpack.c.b16 %v4208, %v4200
    %v5217 = vpack.c.b16 %v4209, %v4201
    %v5218 = vpack.c.b16 %v4210, %v4202
    %v5219 = vpack.c.b16 %v4211, %v4203
    %v5220 = vpack.c.b16 %v4212, %v4204
    %v5221 = vpack.c.b16 %v4213, %v4205
    %v5222 = vpack.c.b16 %v4214, %v4206
    %v5223 = vpack.c.b16 %v4215, %v4207
    %v5224 = vpack.c.b16 %v4224, %v4216
    %v5225 = vpack.c.b16 %v4225, %v4217
    %v5226 = vpack.c.b16 %v4226, %v4218
    %v5227 = vpack.c.b16 %v4227, %v4219
    %v5228 = vpack.c.b16 %v4228, %v4220
    %v5229 = vpack.c.b16 %v4229, %v4221
    %v5230 = vpack.c.b16 %v4230, %v4222
    %v5231 = vpack.c.b16 %v4231, %v4223
    %v5232 = vpack.c.b16 %v4240, %v4232
    %v5233 = vpack.c.b16 %v4241, %v4233
    %v5234 = vpack.c.b16 %v4242, %v4234
    %v5235 = vpack.c.b16 %v4243, %v4235
    %v5236 = vpack.c.b16 %v4244, %v4236
    %v5237 = vpack.c.b16 %v4245, %v4237
    %v5238 = vpack.c.b16 %v4246, %v4238
    %v5239 = vpack.c.b16 %v4247, %v4239
    %v5240 = vpack.c.b16 %v4256, %v4248
    %v5241 = vpack.c.b16 %v4257, %v4249
    %v5242 = vpack.c.b16 %v4258, %v4250
    %v5243 = vpack.c.b16 %v4259, %v4251
    %v5244 = vpack.c.b16 %v4260, %v4252
    %v5245 = vpack.c.b16 %v4261, %v4253
    %v5246 = vpack.c.b16 %v4262, %v4254
    %v5247 = vpack.c.b16 %v4263, %v4255
    %v5248 = vpack.c.b16 %v4272, %v4264
    %v5249 = vpack.c.b16 %v4273, %v4265
    %v5250 = vpack.c.b16 %v4274, %v4266
    %v5251 = vpack.c.b16 %v4275, %v4267
    %v5252 = vpack.c.b16 %v4276, %v4268
    %v5253 = vpack.c.b16 %v4277, %v4269
    %v5254 = vpack.c.b16 %v4278, %v4270
    %v5255 = vpack.c.b16 %v4279, %v4271
    %v5256 = vpack.c.b16 %v4288, %v4280
    %v5257 = vpack.c.b16 %v4289, %v4281
    %v5258 = vpack.c.b16 %v4290, %v4282
    %v5259 = vpack.c.b16 %v4291, %v4283
    %v5260 = vpack.c.b16 %v4292, %v4284
    %v5261 = vpack.c.b16 %v4293, %v4285
    %v5262 = vpack.c.b16 %v4294, %v4286
    %v5263 = vpack.c.b16 %v4295, %v4287
    %v5264 = vpack.c.b16 %v4304, %v4296
    %v5265 = vpack.c.b16 %v4305, %v4297
    %v5266 = vpack.c.b16 %v4306, %v4298
    %v5267 = vpack.c.b16 %v4307, %v4299
    %v5268 = vpack.c.b16 %v4308, %v4300
    %v5269 = vpack.c.b16 %v4309, %v4301
    %v5270 = vpack.c.b16 %v4310, %v4302
    %v5271 = vpack.c.b16 %v4311, %v4303
    %v5272 = vpack.c.b16 %v4320, %v4312
    %v5273 = vpack.c.b16 %v4321, %v4313
    %v5274 = vpack.c.b16 %v4322, %v4314
    %v5275 = vpack.c.b16 %v4323, %v4315
    %v5276 = vpack.c.b16 %v4324, %v4316
    %v5277 = vpack.c.b16 %v4325, %v4317
    %v5278 = vpack.c.b16 %v4326, %v4318
    %v5279 = vpack.c.b16 %v4327, %v4319
    %v5280 = vpack.c.b16 %v4336, %v4328
    %v5281 = vpack.c.b16 %v4337, %v4329
    %v5282 = vpack.c.b16 %v4338, %v4330
    %v5283 = vpack.c.b16 %v4339, %v4331
    %v5284 = vpack.c.b16 %v4340, %v4332
    %v5285 = vpack.c.b16 %v4341, %v4333
    %v5286 = vpack.c.b16 %v4342, %v4334
    %v5287 = vpack.c.b16 %v4343, %v4335
    %v5288 = vpack.c.b16 %v4352, %v4344
    %v5289 = vpack.c.b16 %v4353, %v4345
    %v5290 = vpack.c.b16 %v4354, %v4346
    %v5291 = vpack.c.b16 %v4355, %v4347
    %v5292 = vpack.c.b16 %v4356, %v4348
    %v5293 = vpack.c.b16 %v4357, %v4349
    %v5294 = vpack.c.b16 %v4358, %v4350
    %v5295 = vpack.c.b16 %v4359, %v4351
    %v5296 = vpack.c.b16 %v4368, %v4360
    %v5297 = vpack.c.b16 %v4369, %v4361
    %v5298 = vpack.c.b16 %v4370, %v4362
    %v5299 = vpack.c.b16 %v4371, %v4363
    %v5300 = vpack.c.b16 %v4372, %v4364
    %v5301 = vpack.c.b16 %v4373, %v4365
    %v5302 = vpack.c.b16 %v4374, %v4366
    %v5303 = vpack.c.b16 %v4375, %v4367
    %v5304 = vpack.c.b16 %v4384, %v4376
    %v5305 = vpack.c.b16 %v4385, %v4377
    %v5306 = vpack.c.b16 %v4386, %v4378
    %v5307 = vpack.c.b16 %v4387, %v4379
    %v5308 = vpack.c.b16 %v4388, %v4380
    %v5309 = vpack.c.b16 %v4389, %v4381
    %v5310 = vpack.c.b16 %v4390, %v4382
    %v5311 = vpack.c.b16 %v4391, %v4383
    %v5312 = vpack.c.b16 %v4400, %v4392
    %v5313 = vpack.c.b16 %v4401, %v4393
    %v5314 = vpack.c.b16 %v4402, %v4394
    %v5315 = vpack.c.b16 %v4403, %v4395
    %v5316 = vpack.c.b16 %v4404, %v4396
    %v5317 = vpack.c.b16 %v4405, %v4397
    %v5318 = vpack.c.b16 %v4406, %v4398
    %v5319 = vpack.c.b16 %v4407, %v4399
    %v5320 = vpack.c.b16 %v4416, %v4408
    %v5321 = vpack.c.b16 %v4417, %v4409
    %v5322 = vpack.c.b16 %v4418, %v4410
    %v5323 = vpack.c.b16 %v4419, %v4411
    %v5324 = vpack.c.b16 %v4420, %v4412
    %v5325 = vpack.c.b16 %v4421, %v4413
    %v5326 = vpack.c.b16 %v4422, %v4414
    %v5327 = vpack.c.b16 %v4423, %v4415
    %v5328 = vpack.c.b16 %v4432, %v4424
    %v5329 = vpack.c.b16 %v4433, %v4425
    %v5330 = vpack.c.b16 %v4434, %v4426
    %v5331 = vpack.c.b16 %v4435, %v4427
    %v5332 = vpack.c.b16 %v4436, %v4428
    %v5333 = vpack.c.b16 %v4437, %v4429
    %v5334 = vpack.c.b16 %v4438, %v4430
    %v5335 = vpack.c.b16 %v4439, %v4431
    %v5336 = vpack.c.b16 %v4448, %v4440
    %v5337 = vpack.c.b16 %v4449, %v4441
    %v5338 = vpack.c.b16 %v4450, %v4442
    %v5339 = vpack.c.b16 %v4451, %v4443
    %v5340 = vpack.c.b16 %v4452, %v4444
    %v5341 = vpack.c.b16 %v4453, %v4445
    %v5342 = vpack.c.b16 %v4454, %v4446
    %v5343 = vpack.c.b16 %v4455, %v4447
    %v5344 = vpack.c.b16 %v4464, %v4456
    %v5345 = vpack.c.b16 %v4465, %v4457
    %v5346 = vpack.c.b16 %v4466, %v4458
    %v5347 = vpack.c.b16 %v4467, %v4459
    %v5348 = vpack.c.b16 %v4468, %v4460
    %v5349 = vpack.c.b16 %v4469, %v4461
    %v5350 = vpack.c.b16 %v4470, %v4462
    %v5351 = vpack.c.b16 %v4471, %v4463
    %v5352 = vpack.c.b16 %v4480, %v4472
    %v5353 = vpack.c.b16 %v4481, %v4473
    %v5354 = vpack.c.b16 %v4482, %v4474
    %v5355 = vpack.c.b16 %v4483, %v4475
    %v5356 = vpack.c.b16 %v4484, %v4476
    %v5357 = vpack.c.b16 %v4485, %v4477
    %v5358 = vpack.c.b16 %v4486, %v4478
    %v5359 = vpack.c.b16 %v4487, %v4479
    %v5360 = vpack.c.b16 %v4496, %v4488
    %v5361 = vpack.c.b16 %v4497, %v4489
    %v5362 = vpack.c.b16 %v4498, %v4490
    %v5363 = vpack.c.b16 %v4499, %v4491
    %v5364 = vpack.c.b16 %v4500, %v4492
    %v5365 = vpack.c.b16 %v4501, %v4493
    %v5366 = vpack.c.b16 %v4502, %v4494
    %v5367 = vpack.c.b16 %v4503, %v4495
    %v5368 = vpack.c.b16 %v4512, %v4504
    %v5369 = vpack.c.b16 %v4513, %v4505
    %v5370 = vpack.c.b16 %v4514, %v4506
    %v5371 = vpack.c.b16 %v4515, %v4507
    %v5372 = vpack.c.b16 %v4516, %v4508
    %v5373 = vpack.c.b16 %v4517, %v4509
    %v5374 = vpack.c.b16 %v4518, %v4510
    %v5375 = vpack.c.b16 %v4519, %v4511
    %v5376 = vpack.c.b16 %v4528, %v4520
    %v5377 = vpack.c.b16 %v4529, %v4521
    %v5378 = vpack.c.b16 %v4530, %v4522
    %v5379 = vpack.c.b16 %v4531, %v4523
    %v5380 = vpack.c.b16 %v4532, %v4524
    %v5381 = vpack.c.b16 %v4533, %v4525
    %v5382 = vpack.c.b16 %v4534, %v4526
    %v5383 = vpack.c.b16 %v4535, %v4527
    %v5384 = vpack.c.b16 %v4544, %v4536
    %v5385 = vpack.c.b16 %v4545, %v4537
    %v5386 = vpack.c.b16 %v4546, %v4538
    %v5387 = vpack.c.b16 %v4547, %v4539
    %v5388 = vpack.c.b16 %v4548, %v4540
    %v5389 = vpack.c.b16 %v4549, %v4541
    %v5390 = vpack.c.b16 %v4550, %v4542
    %v5391 = vpack.c.b16 %v4551, %v4543
    %v5392 = vpack.c.b16 %v4560, %v4552
    %v5393 = vpack.c.b16 %v4561, %v4553
    %v5394 = vpack.c.b16 %v4562, %v4554
    %v5395 = vpack.c.b16 %v4563, %v4555
    %v5396 = vpack.c.b16 %v4564, %v4556
    %v5397 = vpack.c.b16 %v4565, %v4557
    %v5398 = vpack.c.b16 %v4566, %v4558
    %v5399 = vpack.c.b16 %v4567, %v4559
    %v5400 = vpack.c.b16 %v4576, %v4568
    %v5401 = vpack.c.b16 %v4577, %v4569
    %v5402 = vpack.c.b16 %v4578, %v4570
    %v5403 = vpack.c.b16 %v4579, %v4571
    %v5404 = vpack.c.b16 %v4580, %v4572
    %v5405 = vpack.c.b16 %v4581, %v4573
    %v5406 = vpack.c.b16 %v4582, %v4574
    %v5407 = vpack.c.b16 %v4583, %v4575
    %v5408 = vpack.c.b16 %v4592, %v4584
    %v5409 = vpack.c.b16 %v4593, %v4585
    %v5410 = vpack.c.b16 %v4594, %v4586
    %v5411 = vpack.c.b16 %v4595, %v4587
    %v5412 = vpack.c.b16 %v4596, %v4588
    %v5413 = vpack.c.b16 %v4597, %v4589
    %v5414 = vpack.c.b16 %v4598, %v4590
    %v5415 = vpack.c.b16 %v4599, %v4591
    %v5416 = vpack.c.b16 %v4608, %v4600
    %v5417 = vpack.c.b16 %v4609, %v4601
    %v5418 = vpack.c.b16 %v4610, %v4602
    %v5419 = vpack.c.b16 %v4611, %v4603
    %v5420 = vpack.c.b16 %v4612, %v4604
    %v5421 = vpack.c.b16 %v4613, %v4605
    %v5422 = vpack.c.b16 %v4614, %v4606
    %v5423 = vpack.c.b16 %v4615, %v4607
    %v5424 = vpack.c.b16 %v4624, %v4616
    %v5425 = vpack.c.b16 %v4625, %v4617
    %v5426 = vpack.c.b16 %v4626, %v4618
    %v5427 = vpack.c.b16 %v4627, %v4619
    %v5428 = vpack.c.b16 %v4628, %v4620
    %v5429 = vpack.c.b16 %v4629, %v4621
    %v5430 = vpack.c.b16 %v4630, %v4622
    %v5431 = vpack.c.b16 %v4631, %v4623
    %v5432 = vpack.c.b16 %v4640, %v4632
    %v5433 = vpack.c.b16 %v4641, %v4633
    %v5434 = vpack.c.b16 %v4642, %v4634
    %v5435 = vpack.c.b16 %v4643, %v4635
    %v5436 = vpack.c.b16 %v4644, %v4636
    %v5437 = vpack.c.b16 %v4645, %v4637
    %v5438 = vpack.c.b16 %v4646, %v4638
    %v5439 = vpack.c.b16 %v4647, %v4639
    %v5440 = vpack.c.b16 %v4656, %v4648
    %v5441 = vpack.c.b16 %v4657, %v4649
    %v5442 = vpack.c.b16 %v4658, %v4650
    %v5443 = vpack.c.b16 %v4659, %v4651
    %v5444 = vpack.c.b16 %v4660, %v4652
    %v5445 = vpack.c.b16 %v4661, %v4653
    %v5446 = vpack.c.b16 %v4662, %v4654
    %v5447 = vpack.c.b16 %v4663, %v4655
    %v5448 = vpack.c.b16 %v4672, %v4664
    %v5449 = vpack.c.b16 %v4673, %v4665
    %v5450 = vpack.c.b16 %v4674, %v4666
    %v5451 = vpack.c.b16 %v4675, %v4667
    %v5452 = vpack.c.b16 %v4676, %v4668
    %v5453 = vpack.c.b16 %v4677, %v4669
    %v5454 = vpack.c.b16 %v4678, %v4670
    %v5455 = vpack.c.b16 %v4679, %v4671
    %v5456 = vpack.c.b16 %v4688, %v4680
    %v5457 = vpack.c.b16 %v4689, %v4681
    %v5458 = vpack.c.b16 %v4690, %v4682
    %v5459 = vpack.c.b16 %v4691, %v4683
    %v5460 = vpack.c.b16 %v4692, %v4684
    %v5461 = vpack.c.b16 %v4693, %v4685
    %v5462 = vpack.c.b16 %v4694, %v4686
    %v5463 = vpack.c.b16 %v4695, %v4687
    %v5464 = vpack.c.b16 %v4704, %v4696
    %v5465 = vpack.c.b16 %v4705, %v4697
    %v5466 = vpack.c.b16 %v4706, %v4698
    %v5467 = vpack.c.b16 %v4707, %v4699
    %v5468 = vpack.c.b16 %v4708, %v4700
    %v5469 = vpack.c.b16 %v4709, %v4701
    %v5470 = vpack.c.b16 %v4710, %v4702
    %v5471 = vpack.c.b16 %v4711, %v4703
    %v5472 = vpack.c.b16 %v4720, %v4712
    %v5473 = vpack.c.b16 %v4721, %v4713
    %v5474 = vpack.c.b16 %v4722, %v4714
    %v5475 = vpack.c.b16 %v4723, %v4715
    %v5476 = vpack.c.b16 %v4724, %v4716
    %v5477 = vpack.c.b16 %v4725, %v4717
    %v5478 = vpack.c.b16 %v4726, %v4718
    %v5479 = vpack.c.b16 %v4727, %v4719
    %v5480 = vpack.c.b16 %v4736, %v4728
    %v5481 = vpack.c.b16 %v4737, %v4729
    %v5482 = vpack.c.b16 %v4738, %v4730
    %v5483 = vpack.c.b16 %v4739, %v4731
    %v5484 = vpack.c.b16 %v4740, %v4732
    %v5485 = vpack.c.b16 %v4741, %v4733
    %v5486 = vpack.c.b16 %v4742, %v4734
    %v5487 = vpack.c.b16 %v4743, %v4735
    %v5488 = vpack.c.b16 %v4752, %v4744
    %v5489 = vpack.c.b16 %v4753, %v4745
    %v5490 = vpack.c.b16 %v4754, %v4746
    %v5491 = vpack.c.b16 %v4755, %v4747
    %v5492 = vpack.c.b16 %v4756, %v4748
    %v5493 = vpack.c.b16 %v4757, %v4749
    %v5494 = vpack.c.b16 %v4758, %v4750
    %v5495 = vpack.c.b16 %v4759, %v4751
    %v5496 = vpack.c.b16 %v4768, %v4760
    %v5497 = vpack.c.b16 %v4769, %v4761
    %v5498 = vpack.c.b16 %v4770, %v4762
    %v5499 = vpack.c.b16 %v4771, %v4763
    %v5500 = vpack.c.b16 %v4772, %v4764
    %v5501 = vpack.c.b16 %v4773, %v4765
    %v5502 = vpack.c.b16 %v4774, %v4766
    %v5503 = vpack.c.b16 %v4775, %v4767
    %v5504 = vpack.c.b16 %v4784, %v4776
    %v5505 = vpack.c.b16 %v4785, %v4777
    %v5506 = vpack.c.b16 %v4786, %v4778
    %v5507 = vpack.c.b16 %v4787, %v4779
    %v5508 = vpack.c.b16 %v4788, %v4780
    %v5509 = vpack.c.b16 %v4789, %v4781
    %v5510 = vpack.c.b16 %v4790, %v4782
    %v5511 = vpack.c.b16 %v4791, %v4783
    %v5512 = vpack.c.b16 %v4800, %v4792
    %v5513 = vpack.c.b16 %v4801, %v4793
    %v5514 = vpack.c.b16 %v4802, %v4794
    %v5515 = vpack.c.b16 %v4803, %v4795
    %v5516 = vpack.c.b16 %v4804, %v4796
    %v5517 = vpack.c.b16 %v4805, %v4797
    %v5518 = vpack.c.b16 %v4806, %v4798
    %v5519 = vpack.c.b16 %v4807, %v4799
    %v5520 = vpack.c.b16 %v4816, %v4808
    %v5521 = vpack.c.b16 %v4817, %v4809
    %v5522 = vpack.c.b16 %v4818, %v4810
    %v5523 = vpack.c.b16 %v4819, %v4811
    %v5524 = vpack.c.b16 %v4820, %v4812
    %v5525 = vpack.c.b16 %v4821, %v4813
    %v5526 = vpack.c.b16 %v4822, %v4814
    %v5527 = vpack.c.b16 %v4823, %v4815
    %v5528 = vpack.c.b16 %v4832, %v4824
    %v5529 = vpack.c.b16 %v4833, %v4825
    %v5530 = vpack.c.b16 %v4834, %v4826
    %v5531 = vpack.c.b16 %v4835, %v4827
    %v5532 = vpack.c.b16 %v4836, %v4828
    %v5533 = vpack.c.b16 %v4837, %v4829
    %v5534 = vpack.c.b16 %v4838, %v4830
    %v5535 = vpack.c.b16 %v4839, %v4831
    %v5536 = vpack.c.b16 %v4848, %v4840
    %v5537 = vpack.c.b16 %v4849, %v4841
    %v5538 = vpack.c.b16 %v4850, %v4842
    %v5539 = vpack.c.b16 %v4851, %v4843
    %v5540 = vpack.c.b16 %v4852, %v4844
    %v5541 = vpack.c.b16 %v4853, %v4845
    %v5542 = vpack.c.b16 %v4854, %v4846
    %v5543 = vpack.c.b16 %v4855, %v4847
    %v5544 = vpack.c.b16 %v4864, %v4856
    %v5545 = vpack.c.b16 %v4865, %v4857
    %v5546 = vpack.c.b16 %v4866, %v4858
    %v5547 = vpack.c.b16 %v4867, %v4859
    %v5548 = vpack.c.b16 %v4868, %v4860
    %v5549 = vpack.c.b16 %v4869, %v4861
    %v5550 = vpack.c.b16 %v4870, %v4862
    %v5551 = vpack.c.b16 %v4871, %v4863
    %v5552 = vpack.c.b16 %v4880, %v4872
    %v5553 = vpack.c.b16 %v4881, %v4873
    %v5554 = vpack.c.b16 %v4882, %v4874
    %v5555 = vpack.c.b16 %v4883, %v4875
    %v5556 = vpack.c.b16 %v4884, %v4876
    %v5557 = vpack.c.b16 %v4885, %v4877
    %v5558 = vpack.c.b16 %v4886, %v4878
    %v5559 = vpack.c.b16 %v4887, %v4879
    %v5560 = vpack.c.b16 %v4896, %v4888
    %v5561 = vpack.c.b16 %v4897, %v4889
    %v5562 = vpack.c.b16 %v4898, %v4890
    %v5563 = vpack.c.b16 %v4899, %v4891
    %v5564 = vpack.c.b16 %v4900, %v4892
    %v5565 = vpack.c.b16 %v4901, %v4893
    %v5566 = vpack.c.b16 %v4902, %v4894
    %v5567 = vpack.c.b16 %v4903, %v4895
    %v5568 = vpack.c.b16 %v4912, %v4904
    %v5569 = vpack.c.b16 %v4913, %v4905
    %v5570 = vpack.c.b16 %v4914, %v4906
    %v5571 = vpack.c.b16 %v4915, %v4907
    %v5572 = vpack.c.b16 %v4916, %v4908
    %v5573 = vpack.c.b16 %v4917, %v4909
    %v5574 = vpack.c.b16 %v4918, %v4910
    %v5575 = vpack.c.b16 %v4919, %v4911
    %v5576 = vpack.c.b16 %v4928, %v4920
    %v5577 = vpack.c.b16 %v4929, %v4921
    %v5578 = vpack.c.b16 %v4930, %v4922
    %v5579 = vpack.c.b16 %v4931, %v4923
    %v5580 = vpack.c.b16 %v4932, %v4924
    %v5581 = vpack.c.b16 %v4933, %v4925
    %v5582 = vpack.c.b16 %v4934, %v4926
    %v5583 = vpack.c.b16 %v4935, %v4927
    %v5584 = vpack.c.b16 %v4944, %v4936
    %v5585 = vpack.c.b16 %v4945, %v4937
    %v5586 = vpack.c.b16 %v4946, %v4938
    %v5587 = vpack.c.b16 %v4947, %v4939
    %v5588 = vpack.c.b16 %v4948, %v4940
    %v5589 = vpack.c.b16 %v4949, %v4941
    %v5590 = vpack.c.b16 %v4950, %v4942
    %v5591 = vpack.c.b16 %v4951, %v4943
    %v5592 = vpack.c.b16 %v4960, %v4952
    %v5593 = vpack.c.b16 %v4961, %v4953
    %v5594 = vpack.c.b16 %v4962, %v4954
    %v5595 = vpack.c.b16 %v4963, %v4955
    %v5596 = vpack.c.b16 %v4964, %v4956
    %v5597 = vpack.c.b16 %v4965, %v4957
    %v5598 = vpack.c.b16 %v4966, %v4958
    %v5599 = vpack.c.b16 %v4967, %v4959
    %v5600 = vpack.c.b16 %v4976, %v4968
    %v5601 = vpack.c.b16 %v4977, %v4969
    %v5602 = vpack.c.b16 %v4978, %v4970
    %v5603 = vpack.c.b16 %v4979, %v4971
    %v5604 = vpack.c.b16 %v4980, %v4972
    %v5605 = vpack.c.b16 %v4981, %v4973
    %v5606 = vpack.c.b16 %v4982, %v4974
    %v5607 = vpack.c.b16 %v4983, %v4975
    %v5608 = vpack.c.b16 %v4992, %v4984
    %v5609 = vpack.c.b16 %v4993, %v4985
    %v5610 = vpack.c.b16 %v4994, %v4986
    %v5611 = vpack.c.b16 %v4995, %v4987
    %v5612 = vpack.c.b16 %v4996, %v4988
    %v5613 = vpack.c.b16 %v4997, %v4989
    %v5614 = vpack.c.b16 %v4998, %v4990
    %v5615 = vpack.c.b16 %v4999, %v4991
    %v5616 = vpack.c.b16 %v5008, %v5000
    %v5617 = vpack.c.b16 %v5009, %v5001
    %v5618 = vpack.c.b16 %v5010, %v5002
    %v5619 = vpack.c.b16 %v5011, %v5003
    %v5620 = vpack.c.b16 %v5012, %v5004
    %v5621 = vpack.c.b16 %v5013, %v5005
    %v5622 = vpack.c.b16 %v5014, %v5006
    %v5623 = vpack.c.b16 %v5015, %v5007
    %v5624 = vpack.c.b16 %v5024, %v5016
    %v5625 = vpack.c.b16 %v5025, %v5017
    %v5626 = vpack.c.b16 %v5026, %v5018
    %v5627 = vpack.c.b16 %v5027, %v5019
    %v5628 = vpack.c.b16 %v5028, %v5020
    %v5629 = vpack.c.b16 %v5029, %v5021
    %v5630 = vpack.c.b16 %v5030, %v5022
    %v5631 = vpack.c.b16 %v5031, %v5023
    %v5632 = vpack.c.b16 %v5040, %v5032
    %v5633 = vpack.c.b16 %v5041, %v5033
    %v5634 = vpack.c.b16 %v5042, %v5034
    %v5635 = vpack.c.b16 %v5043, %v5035
    %v5636 = vpack.c.b16 %v5044, %v5036
    %v5637 = vpack.c.b16 %v5045, %v5037
    %v5638 = vpack.c.b16 %v5046, %v5038
    %v5639 = vpack.c.b16 %v5047, %v5039
    %v5640 = vpack.c.b16 %v5056, %v5048
    %v5641 = vpack.c.b16 %v5057, %v5049
    %v5642 = vpack.c.b16 %v5058, %v5050
    %v5643 = vpack.c.b16 %v5059, %v5051
    %v5644 = vpack.c.b16 %v5060, %v5052
    %v5645 = vpack.c.b16 %v5061, %v5053
    %v5646 = vpack.c.b16 %v5062, %v5054
    %v5647 = vpack.c.b16 %v5063, %v5055
    %v5648 = vpack.c.b16 %v5072, %v5064
    %v5649 = vpack.c.b16 %v5073, %v5065
    %v5650 = vpack.c.b16 %v5074, %v5066
    %v5651 = vpack.c.b16 %v5075, %v5067
    %v5652 = vpack.c.b16 %v5076, %v5068
    %v5653 = vpack.c.b16 %v5077, %v5069
    %v5654 = vpack.c.b16 %v5078, %v5070
    %v5655 = vpack.c.b16 %v5079, %v5071
    %v5656 = vpack.c.b16 %v5088, %v5080
    %v5657 = vpack.c.b16 %v5089, %v5081
    %v5658 = vpack.c.b16 %v5090, %v5082
    %v5659 = vpack.c.b16 %v5091, %v5083
    %v5660 = vpack.c.b16 %v5092, %v5084
    %v5661 = vpack.c.b16 %v5093, %v5085
    %v5662 = vpack.c.b16 %v5094, %v5086
    %v5663 = vpack.c.b16 %v5095, %v5087
    %v5664 = vpack.c.b16 %v5104, %v5096
    %v5665 = vpack.c.b16 %v5105, %v5097
    %v5666 = vpack.c.b16 %v5106, %v5098
    %v5667 = vpack.c.b16 %v5107, %v5099
    %v5668 = vpack.c.b16 %v5108, %v5100
    %v5669 = vpack.c.b16 %v5109, %v5101
    %v5670 = vpack.c.b16 %v5110, %v5102
    %v5671 = vpack.c.b16 %v5111, %v5103
    %v5672 = vpack.c.b16 %v5120, %v5112
    %v5673 = vpack.c.b16 %v5121, %v5113
    %v5674 = vpack.c.b16 %v5122, %v5114
    %v5675 = vpack.c.b16 %v5123, %v5115
    %v5676 = vpack.c.b16 %v5124, %v5116
    %v5677 = vpack.c.b16 %v5125, %v5117
    %v5678 = vpack.c.b16 %v5126, %v5118
    %v5679 = vpack.c.b16 %v5127, %v5119
    %v5680 = vpack.c.b16 %v5136, %v5128
    %v5681 = vpack.c.b16 %v5137, %v5129
    %v5682 = vpack.c.b16 %v5138, %v5130
    %v5683 = vpack.c.b16 %v5139, %v5131
    %v5684 = vpack.c.b16 %v5140, %v5132
    %v5685 = vpack.c.b16 %v5141, %v5133
    %v5686 = vpack.c.b16 %v5142, %v5134
    %v5687 = vpack.c.b16 %v5143, %v5135
    %v5688 = vpack.c.b16 %v5152, %v5144
    %v5689 = vpack.c.b16 %v5153, %v5145
    %v5690 = vpack.c.b16 %v5154, %v5146
    %v5691 = vpack.c.b16 %v5155, %v5147
    %v5692 = vpack.c.b16 %v5156, %v5148
    %v5693 = vpack.c.b16 %v5157, %v5149
    %v5694 = vpack.c.b16 %v5158, %v5150
    %v5695 = vpack.c.b16 %v5159, %v5151
    %v5696 = vpack.c.b16 %v5168, %v5160
    %v5697 = vpack.c.b16 %v5169, %v5161
    %v5698 = vpack.c.b16 %v5170, %v5162
    %v5699 = vpack.c.b16 %v5171, %v5163
    %v5700 = vpack.c.b16 %v5172, %v5164
    %v5701 = vpack.c.b16 %v5173, %v5165
    %v5702 = vpack.c.b16 %v5174, %v5166
    %v5703 = vpack.c.b16 %v5175, %v5167
    %v5704 = vpack.c.b16 %v5184, %v5176
    %v5705 = vpack.c.b16 %v5185, %v5177
    %v5706 = vpack.c.b16 %v5186, %v5178
    %v5707 = vpack.c.b16 %v5187, %v5179
    %v5708 = vpack.c.b16 %v5188, %v5180
    %v5709 = vpack.c.b16 %v5189, %v5181
    %v5710 = vpack.c.b16 %v5190, %v5182
    %v5711 = vpack.c.b16 %v5191, %v5183
    %v5712 = vpack.c.b16 %v5200, %v5192
    %v5713 = vpack.c.b16 %v5201, %v5193
    %v5714 = vpack.c.b16 %v5202, %v5194
    %v5715 = vpack.c.b16 %v5203, %v5195
    %v5716 = vpack.c.b16 %v5204, %v5196
    %v5717 = vpack.c.b16 %v5205, %v5197
    %v5718 = vpack.c.b16 %v5206, %v5198
    %v5719 = vpack.c.b16 %v5207, %v5199
    %6232 = vmatprep.subr.bf16.mxu0 %v5265
    %6233 = vmatpush1.bf16.msra.mxu0 %v5264
    %6234 = vmatprep.subr.bf16.mxu0 %v5257
    %6235 = vmatpush1.bf16.msra.mxu0 %v5256
    %6236 = vmatprep.subr.bf16.mxu0 %v5249
    %6237 = vmatpush1.bf16.msra.mxu0 %v5248
    %6238 = vmatprep.subr.bf16.mxu0 %v5241
    %6239 = vmatpush1.bf16.msra.mxu0 %v5240
    %6240 = vmatprep.subr.bf16.mxu0 %v5233
    %6241 = vmatpush1.bf16.msra.mxu0 %v5232
    %6242 = vmatprep.subr.bf16.mxu0 %v5225
    %6243 = vmatpush1.bf16.msra.mxu0 %v5224
    %6244 = vmatprep.subr.bf16.mxu0 %v5217
    %6245 = vmatpush1.bf16.msra.mxu0 %v5216
    %6246 = vmatprep.subr.bf16.mxu0 %v5209
    %6247 = vmatpush1.bf16.msra.mxu0 %v5208
    %6248 = vmatprep.subr.bf16.mxu0 %v5329
    %6249 = vmatpush2.bf16.msra.mxu0 %v5328
    %6250 = vmatprep.subr.bf16.mxu0 %v5321
    %6251 = vmatpush2.bf16.msra.mxu0 %v5320
    %6252 = vmatprep.subr.bf16.mxu0 %v5313
    %6253 = vmatpush2.bf16.msra.mxu0 %v5312
    %6254 = vmatprep.subr.bf16.mxu0 %v5305
    %6255 = vmatpush2.bf16.msra.mxu0 %v5304
    %6256 = vmatprep.subr.bf16.mxu0 %v5297
    %6257 = vmatpush2.bf16.msra.mxu0 %v5296
    %6258 = vmatprep.subr.bf16.mxu0 %v5289
    %6259 = vmatpush2.bf16.msra.mxu0 %v5288
    %6260 = vmatprep.subr.bf16.mxu0 %v5281
    %6261 = vmatpush2.bf16.msra.mxu0 %v5280
    %6262 = vmatprep.subr.bf16.mxu0 %v5273
    %6263 = vmatpush2.bf16.msra.mxu0 %v5272
    %6264 = vmatprep.mubr.bf16.mxu0 %v3111
    %6265 = vmatmul.mubr.bf16.gmra.mxu0 %v3110
    %v6266 = vpop.f32.mrf.mxu0
    %v6267 = vadd.f32 %v3635, %v6266
    %v6268 = vpop.f32.mrf.mxu0
    %v6269 = vadd.f32 %v3639, %v6268
    %v6270 = vpop.f32.mrf.mxu0
    %v6271 = vadd.f32 %v3635, %v6270
    %v6272 = vpop.f32.mrf.mxu0
    %v6273 = vadd.f32 %v3639, %v6272
    %6274 = vdwg.mxu0
    %6275 = vmatprep.subr.bf16.mxu0 %v5393
    %6276 = vmatpush1.bf16.msra.mxu0 %v5392
    %6277 = vmatprep.subr.bf16.mxu0 %v5385
    %6278 = vmatpush1.bf16.msra.mxu0 %v5384
    %6279 = vmatprep.subr.bf16.mxu0 %v5377
    %6280 = vmatpush1.bf16.msra.mxu0 %v5376
    %6281 = vmatprep.subr.bf16.mxu0 %v5369
    %6282 = vmatpush1.bf16.msra.mxu0 %v5368
    %6283 = vmatprep.subr.bf16.mxu0 %v5361
    %6284 = vmatpush1.bf16.msra.mxu0 %v5360
    %6285 = vmatprep.subr.bf16.mxu0 %v5353
    %6286 = vmatpush1.bf16.msra.mxu0 %v5352
    %6287 = vmatprep.subr.bf16.mxu0 %v5345
    %6288 = vmatpush1.bf16.msra.mxu0 %v5344
    %6289 = vmatprep.subr.bf16.mxu0 %v5337
    %6290 = vmatpush1.bf16.msra.mxu0 %v5336
    %6291 = vmatprep.subr.bf16.mxu0 %v5457
    %6292 = vmatpush2.bf16.msra.mxu0 %v5456
    %6293 = vmatprep.subr.bf16.mxu0 %v5449
    %6294 = vmatpush2.bf16.msra.mxu0 %v5448
    %6295 = vmatprep.subr.bf16.mxu0 %v5441
    %6296 = vmatpush2.bf16.msra.mxu0 %v5440
    %6297 = vmatprep.subr.bf16.mxu0 %v5433
    %6298 = vmatpush2.bf16.msra.mxu0 %v5432
    %6299 = vmatprep.subr.bf16.mxu0 %v5425
    %6300 = vmatpush2.bf16.msra.mxu0 %v5424
    %6301 = vmatprep.subr.bf16.mxu0 %v5417
    %6302 = vmatpush2.bf16.msra.mxu0 %v5416
    %6303 = vmatprep.subr.bf16.mxu0 %v5409
    %6304 = vmatpush2.bf16.msra.mxu0 %v5408
    %6305 = vmatprep.subr.bf16.mxu0 %v5401
    %6306 = vmatpush2.bf16.msra.mxu0 %v5400
    %6307 = vmatprep.mubr.bf16.mxu0 %v3113
    %6308 = vmatmul.mubr.bf16.gmra.mxu0 %v3112
    %v6309 = vpop.f32.mrf.mxu0
    %v6310 = vadd.f32 %v6267, %v6309
    %v6311 = vpop.f32.mrf.mxu0
    %v6312 = vadd.f32 %v6269, %v6311
    %v6313 = vpop.f32.mrf.mxu0
    %v6314 = vadd.f32 %v6271, %v6313
    %v6315 = vpop.f32.mrf.mxu0
    %v6316 = vadd.f32 %v6273, %v6315
    %6317 = vdwg.mxu0
    %6318 = vmatprep.subr.bf16.mxu0 %v5521
    %6319 = vmatpush1.bf16.msra.mxu0 %v5520
    %6320 = vmatprep.subr.bf16.mxu0 %v5513
    %6321 = vmatpush1.bf16.msra.mxu0 %v5512
    %6322 = vmatprep.subr.bf16.mxu0 %v5505
    %6323 = vmatpush1.bf16.msra.mxu0 %v5504
    %6324 = vmatprep.subr.bf16.mxu0 %v5497
    %6325 = vmatpush1.bf16.msra.mxu0 %v5496
    %6326 = vmatprep.subr.bf16.mxu0 %v5489
    %6327 = vmatpush1.bf16.msra.mxu0 %v5488
    %6328 = vmatprep.subr.bf16.mxu0 %v5481
    %6329 = vmatpush1.bf16.msra.mxu0 %v5480
    %6330 = vmatprep.subr.bf16.mxu0 %v5473
    %6331 = vmatpush1.bf16.msra.mxu0 %v5472
    %6332 = vmatprep.subr.bf16.mxu0 %v5465
    %6333 = vmatpush1.bf16.msra.mxu0 %v5464
    %6334 = vmatprep.subr.bf16.mxu0 %v5585
    %6335 = vmatpush2.bf16.msra.mxu0 %v5584
    %6336 = vmatprep.subr.bf16.mxu0 %v5577
    %6337 = vmatpush2.bf16.msra.mxu0 %v5576
    %6338 = vmatprep.subr.bf16.mxu0 %v5569
    %6339 = vmatpush2.bf16.msra.mxu0 %v5568
    %6340 = vmatprep.subr.bf16.mxu0 %v5561
    %6341 = vmatpush2.bf16.msra.mxu0 %v5560
    %6342 = vmatprep.subr.bf16.mxu0 %v5553
    %6343 = vmatpush2.bf16.msra.mxu0 %v5552
    %6344 = vmatprep.subr.bf16.mxu0 %v5545
    %6345 = vmatpush2.bf16.msra.mxu0 %v5544
    %6346 = vmatprep.subr.bf16.mxu0 %v5537
    %6347 = vmatpush2.bf16.msra.mxu0 %v5536
    %6348 = vmatprep.subr.bf16.mxu0 %v5529
    %6349 = vmatpush2.bf16.msra.mxu0 %v5528
    %6350 = vmatprep.mubr.bf16.mxu0 %v3115
    %6351 = vmatmul.mubr.bf16.gmra.mxu0 %v3114
    %v6352 = vpop.f32.mrf.mxu0
    %v6353 = vadd.f32 %v6310, %v6352
    %v6354 = vpop.f32.mrf.mxu0
    %v6355 = vadd.f32 %v6312, %v6354
    %v6356 = vpop.f32.mrf.mxu0
    %v6357 = vadd.f32 %v6314, %v6356
    %v6358 = vpop.f32.mrf.mxu0
    %v6359 = vadd.f32 %v6316, %v6358
    %6360 = vdwg.mxu0
    %6361 = vmatprep.subr.bf16.mxu0 %v5649
    %6362 = vmatpush1.bf16.msra.mxu0 %v5648
    %6363 = vmatprep.subr.bf16.mxu0 %v5641
    %6364 = vmatpush1.bf16.msra.mxu0 %v5640
    %6365 = vmatprep.subr.bf16.mxu0 %v5633
    %6366 = vmatpush1.bf16.msra.mxu0 %v5632
    %6367 = vmatprep.subr.bf16.mxu0 %v5625
    %6368 = vmatpush1.bf16.msra.mxu0 %v5624
    %6369 = vmatprep.subr.bf16.mxu0 %v5617
    %6370 = vmatpush1.bf16.msra.mxu0 %v5616
    %6371 = vmatprep.subr.bf16.mxu0 %v5609
    %6372 = vmatpush1.bf16.msra.mxu0 %v5608
    %6373 = vmatprep.subr.bf16.mxu0 %v5601
    %6374 = vmatpush1.bf16.msra.mxu0 %v5600
    %6375 = vmatprep.subr.bf16.mxu0 %v5593
    %6376 = vmatpush1.bf16.msra.mxu0 %v5592
    %6377 = vmatprep.subr.bf16.mxu0 %v5713
    %6378 = vmatpush2.bf16.msra.mxu0 %v5712
    %6379 = vmatprep.subr.bf16.mxu0 %v5705
    %6380 = vmatpush2.bf16.msra.mxu0 %v5704
    %6381 = vmatprep.subr.bf16.mxu0 %v5697
    %6382 = vmatpush2.bf16.msra.mxu0 %v5696
    %6383 = vmatprep.subr.bf16.mxu0 %v5689
    %6384 = vmatpush2.bf16.msra.mxu0 %v5688
    %6385 = vmatprep.subr.bf16.mxu0 %v5681
    %6386 = vmatpush2.bf16.msra.mxu0 %v5680
    %6387 = vmatprep.subr.bf16.mxu0 %v5673
    %6388 = vmatpush2.bf16.msra.mxu0 %v5672
    %6389 = vmatprep.subr.bf16.mxu0 %v5665
    %6390 = vmatpush2.bf16.msra.mxu0 %v5664
    %6391 = vmatprep.subr.bf16.mxu0 %v5657
    %6392 = vmatpush2.bf16.msra.mxu0 %v5656
    %6393 = vmatprep.mubr.bf16.mxu0 %v3117
    %6394 = vmatmul.mubr.bf16.gmra.mxu0 %v3116
    %v6395 = vpop.f32.mrf.mxu0
    %v6396 = vadd.f32 %v6353, %v6395
    %v6397 = vpop.f32.mrf.mxu0
    %v6398 = vadd.f32 %v6355, %v6397
    %v6399 = vpop.f32.mrf.mxu0
    %v6400 = vadd.f32 %v6357, %v6399
    %v6401 = vpop.f32.mrf.mxu0
    %v6402 = vadd.f32 %v6359, %v6401
    %6403 = vdwg.mxu0
    %6404 = vmatprep.subr.bf16.mxu0 %v5267
    %6405 = vmatpush1.bf16.msra.mxu0 %v5266
    %6406 = vmatprep.subr.bf16.mxu0 %v5259
    %6407 = vmatpush1.bf16.msra.mxu0 %v5258
    %6408 = vmatprep.subr.bf16.mxu0 %v5251
    %6409 = vmatpush1.bf16.msra.mxu0 %v5250
    %6410 = vmatprep.subr.bf16.mxu0 %v5243
    %6411 = vmatpush1.bf16.msra.mxu0 %v5242
    %6412 = vmatprep.subr.bf16.mxu0 %v5235
    %6413 = vmatpush1.bf16.msra.mxu0 %v5234
    %6414 = vmatprep.subr.bf16.mxu0 %v5227
    %6415 = vmatpush1.bf16.msra.mxu0 %v5226
    %6416 = vmatprep.subr.bf16.mxu0 %v5219
    %6417 = vmatpush1.bf16.msra.mxu0 %v5218
    %6418 = vmatprep.subr.bf16.mxu0 %v5211
    %6419 = vmatpush1.bf16.msra.mxu0 %v5210
    %6420 = vmatprep.subr.bf16.mxu0 %v5331
    %6421 = vmatpush2.bf16.msra.mxu0 %v5330
    %6422 = vmatprep.subr.bf16.mxu0 %v5323
    %6423 = vmatpush2.bf16.msra.mxu0 %v5322
    %6424 = vmatprep.subr.bf16.mxu0 %v5315
    %6425 = vmatpush2.bf16.msra.mxu0 %v5314
    %6426 = vmatprep.subr.bf16.mxu0 %v5307
    %6427 = vmatpush2.bf16.msra.mxu0 %v5306
    %6428 = vmatprep.subr.bf16.mxu0 %v5299
    %6429 = vmatpush2.bf16.msra.mxu0 %v5298
    %6430 = vmatprep.subr.bf16.mxu0 %v5291
    %6431 = vmatpush2.bf16.msra.mxu0 %v5290
    %6432 = vmatprep.subr.bf16.mxu0 %v5283
    %6433 = vmatpush2.bf16.msra.mxu0 %v5282
    %6434 = vmatprep.subr.bf16.mxu0 %v5275
    %6435 = vmatpush2.bf16.msra.mxu0 %v5274
    %6436 = vmatprep.mubr.bf16.mxu0 %v3111
    %6437 = vmatmul.mubr.bf16.gmra.mxu0 %v3110
    %v6438 = vpop.f32.mrf.mxu0
    %v6439 = vadd.f32 %v3643, %v6438
    %v6440 = vpop.f32.mrf.mxu0
    %v6441 = vadd.f32 %v3647, %v6440
    %v6442 = vpop.f32.mrf.mxu0
    %v6443 = vadd.f32 %v3643, %v6442
    %v6444 = vpop.f32.mrf.mxu0
    %v6445 = vadd.f32 %v3647, %v6444
    %6446 = vdwg.mxu0
    %6447 = vmatprep.subr.bf16.mxu0 %v5395
    %6448 = vmatpush1.bf16.msra.mxu0 %v5394
    %6449 = vmatprep.subr.bf16.mxu0 %v5387
    %6450 = vmatpush1.bf16.msra.mxu0 %v5386
    %6451 = vmatprep.subr.bf16.mxu0 %v5379
    %6452 = vmatpush1.bf16.msra.mxu0 %v5378
    %6453 = vmatprep.subr.bf16.mxu0 %v5371
    %6454 = vmatpush1.bf16.msra.mxu0 %v5370
    %6455 = vmatprep.subr.bf16.mxu0 %v5363
    %6456 = vmatpush1.bf16.msra.mxu0 %v5362
    %6457 = vmatprep.subr.bf16.mxu0 %v5355
    %6458 = vmatpush1.bf16.msra.mxu0 %v5354
    %6459 = vmatprep.subr.bf16.mxu0 %v5347
    %6460 = vmatpush1.bf16.msra.mxu0 %v5346
    %6461 = vmatprep.subr.bf16.mxu0 %v5339
    %6462 = vmatpush1.bf16.msra.mxu0 %v5338
    %6463 = vmatprep.subr.bf16.mxu0 %v5459
    %6464 = vmatpush2.bf16.msra.mxu0 %v5458
    %6465 = vmatprep.subr.bf16.mxu0 %v5451
    %6466 = vmatpush2.bf16.msra.mxu0 %v5450
    %6467 = vmatprep.subr.bf16.mxu0 %v5443
    %6468 = vmatpush2.bf16.msra.mxu0 %v5442
    %6469 = vmatprep.subr.bf16.mxu0 %v5435
    %6470 = vmatpush2.bf16.msra.mxu0 %v5434
    %6471 = vmatprep.subr.bf16.mxu0 %v5427
    %6472 = vmatpush2.bf16.msra.mxu0 %v5426
    %6473 = vmatprep.subr.bf16.mxu0 %v5419
    %6474 = vmatpush2.bf16.msra.mxu0 %v5418
    %6475 = vmatprep.subr.bf16.mxu0 %v5411
    %6476 = vmatpush2.bf16.msra.mxu0 %v5410
    %6477 = vmatprep.subr.bf16.mxu0 %v5403
    %6478 = vmatpush2.bf16.msra.mxu0 %v5402
    %6479 = vmatprep.mubr.bf16.mxu0 %v3113
    %6480 = vmatmul.mubr.bf16.gmra.mxu0 %v3112
    %v6481 = vpop.f32.mrf.mxu0
    %v6482 = vadd.f32 %v6439, %v6481
    %v6483 = vpop.f32.mrf.mxu0
    %v6484 = vadd.f32 %v6441, %v6483
    %v6485 = vpop.f32.mrf.mxu0
    %v6486 = vadd.f32 %v6443, %v6485
    %v6487 = vpop.f32.mrf.mxu0
    %v6488 = vadd.f32 %v6445, %v6487
    %6489 = vdwg.mxu0
    %6490 = vmatprep.subr.bf16.mxu0 %v5523
    %6491 = vmatpush1.bf16.msra.mxu0 %v5522
    %6492 = vmatprep.subr.bf16.mxu0 %v5515
    %6493 = vmatpush1.bf16.msra.mxu0 %v5514
    %6494 = vmatprep.subr.bf16.mxu0 %v5507
    %6495 = vmatpush1.bf16.msra.mxu0 %v5506
    %6496 = vmatprep.subr.bf16.mxu0 %v5499
    %6497 = vmatpush1.bf16.msra.mxu0 %v5498
    %6498 = vmatprep.subr.bf16.mxu0 %v5491
    %6499 = vmatpush1.bf16.msra.mxu0 %v5490
    %6500 = vmatprep.subr.bf16.mxu0 %v5483
    %6501 = vmatpush1.bf16.msra.mxu0 %v5482
    %6502 = vmatprep.subr.bf16.mxu0 %v5475
    %6503 = vmatpush1.bf16.msra.mxu0 %v5474
    %6504 = vmatprep.subr.bf16.mxu0 %v5467
    %6505 = vmatpush1.bf16.msra.mxu0 %v5466
    %6506 = vmatprep.subr.bf16.mxu0 %v5587
    %6507 = vmatpush2.bf16.msra.mxu0 %v5586
    %6508 = vmatprep.subr.bf16.mxu0 %v5579
    %6509 = vmatpush2.bf16.msra.mxu0 %v5578
    %6510 = vmatprep.subr.bf16.mxu0 %v5571
    %6511 = vmatpush2.bf16.msra.mxu0 %v5570
    %6512 = vmatprep.subr.bf16.mxu0 %v5563
    %6513 = vmatpush2.bf16.msra.mxu0 %v5562
    %6514 = vmatprep.subr.bf16.mxu0 %v5555
    %6515 = vmatpush2.bf16.msra.mxu0 %v5554
    %6516 = vmatprep.subr.bf16.mxu0 %v5547
    %6517 = vmatpush2.bf16.msra.mxu0 %v5546
    %6518 = vmatprep.subr.bf16.mxu0 %v5539
    %6519 = vmatpush2.bf16.msra.mxu0 %v5538
    %6520 = vmatprep.subr.bf16.mxu0 %v5531
    %6521 = vmatpush2.bf16.msra.mxu0 %v5530
    %6522 = vmatprep.mubr.bf16.mxu0 %v3115
    %6523 = vmatmul.mubr.bf16.gmra.mxu0 %v3114
    %v6524 = vpop.f32.mrf.mxu0
    %v6525 = vadd.f32 %v6482, %v6524
    %v6526 = vpop.f32.mrf.mxu0
    %v6527 = vadd.f32 %v6484, %v6526
    %v6528 = vpop.f32.mrf.mxu0
    %v6529 = vadd.f32 %v6486, %v6528
    %v6530 = vpop.f32.mrf.mxu0
    %v6531 = vadd.f32 %v6488, %v6530
    %6532 = vdwg.mxu0
    %6533 = vmatprep.subr.bf16.mxu0 %v5651
    %6534 = vmatpush1.bf16.msra.mxu0 %v5650
    %6535 = vmatprep.subr.bf16.mxu0 %v5643
    %6536 = vmatpush1.bf16.msra.mxu0 %v5642
    %6537 = vmatprep.subr.bf16.mxu0 %v5635
    %6538 = vmatpush1.bf16.msra.mxu0 %v5634
    %6539 = vmatprep.subr.bf16.mxu0 %v5627
    %6540 = vmatpush1.bf16.msra.mxu0 %v5626
    %6541 = vmatprep.subr.bf16.mxu0 %v5619
    %6542 = vmatpush1.bf16.msra.mxu0 %v5618
    %6543 = vmatprep.subr.bf16.mxu0 %v5611
    %6544 = vmatpush1.bf16.msra.mxu0 %v5610
    %6545 = vmatprep.subr.bf16.mxu0 %v5603
    %6546 = vmatpush1.bf16.msra.mxu0 %v5602
    %6547 = vmatprep.subr.bf16.mxu0 %v5595
    %6548 = vmatpush1.bf16.msra.mxu0 %v5594
    %6549 = vmatprep.subr.bf16.mxu0 %v5715
    %6550 = vmatpush2.bf16.msra.mxu0 %v5714
    %6551 = vmatprep.subr.bf16.mxu0 %v5707
    %6552 = vmatpush2.bf16.msra.mxu0 %v5706
    %6553 = vmatprep.subr.bf16.mxu0 %v5699
    %6554 = vmatpush2.bf16.msra.mxu0 %v5698
    %6555 = vmatprep.subr.bf16.mxu0 %v5691
    %6556 = vmatpush2.bf16.msra.mxu0 %v5690
    %6557 = vmatprep.subr.bf16.mxu0 %v5683
    %6558 = vmatpush2.bf16.msra.mxu0 %v5682
    %6559 = vmatprep.subr.bf16.mxu0 %v5675
    %6560 = vmatpush2.bf16.msra.mxu0 %v5674
    %6561 = vmatprep.subr.bf16.mxu0 %v5667
    %6562 = vmatpush2.bf16.msra.mxu0 %v5666
    %6563 = vmatprep.subr.bf16.mxu0 %v5659
    %6564 = vmatpush2.bf16.msra.mxu0 %v5658
    %6565 = vmatprep.mubr.bf16.mxu0 %v3117
    %6566 = vmatmul.mubr.bf16.gmra.mxu0 %v3116
    %v6567 = vpop.f32.mrf.mxu0
    %v6568 = vadd.f32 %v6525, %v6567
    %v6569 = vpop.f32.mrf.mxu0
    %v6570 = vadd.f32 %v6527, %v6569
    %v6571 = vpop.f32.mrf.mxu0
    %v6572 = vadd.f32 %v6529, %v6571
    %v6573 = vpop.f32.mrf.mxu0
    %v6574 = vadd.f32 %v6531, %v6573
    %6575 = vdwg.mxu0
    %6576 = vmatprep.subr.bf16.mxu0 %v5269
    %6577 = vmatpush1.bf16.msra.mxu0 %v5268
    %6578 = vmatprep.subr.bf16.mxu0 %v5261
    %6579 = vmatpush1.bf16.msra.mxu0 %v5260
    %6580 = vmatprep.subr.bf16.mxu0 %v5253
    %6581 = vmatpush1.bf16.msra.mxu0 %v5252
    %6582 = vmatprep.subr.bf16.mxu0 %v5245
    %6583 = vmatpush1.bf16.msra.mxu0 %v5244
    %6584 = vmatprep.subr.bf16.mxu0 %v5237
    %6585 = vmatpush1.bf16.msra.mxu0 %v5236
    %6586 = vmatprep.subr.bf16.mxu0 %v5229
    %6587 = vmatpush1.bf16.msra.mxu0 %v5228
    %6588 = vmatprep.subr.bf16.mxu0 %v5221
    %6589 = vmatpush1.bf16.msra.mxu0 %v5220
    %6590 = vmatprep.subr.bf16.mxu0 %v5213
    %6591 = vmatpush1.bf16.msra.mxu0 %v5212
    %6592 = vmatprep.subr.bf16.mxu0 %v5333
    %6593 = vmatpush2.bf16.msra.mxu0 %v5332
    %6594 = vmatprep.subr.bf16.mxu0 %v5325
    %6595 = vmatpush2.bf16.msra.mxu0 %v5324
    %6596 = vmatprep.subr.bf16.mxu0 %v5317
    %6597 = vmatpush2.bf16.msra.mxu0 %v5316
    %6598 = vmatprep.subr.bf16.mxu0 %v5309
    %6599 = vmatpush2.bf16.msra.mxu0 %v5308
    %6600 = vmatprep.subr.bf16.mxu0 %v5301
    %6601 = vmatpush2.bf16.msra.mxu0 %v5300
    %6602 = vmatprep.subr.bf16.mxu0 %v5293
    %6603 = vmatpush2.bf16.msra.mxu0 %v5292
    %6604 = vmatprep.subr.bf16.mxu0 %v5285
    %6605 = vmatpush2.bf16.msra.mxu0 %v5284
    %6606 = vmatprep.subr.bf16.mxu0 %v5277
    %6607 = vmatpush2.bf16.msra.mxu0 %v5276
    %6608 = vmatprep.mubr.bf16.mxu0 %v3111
    %6609 = vmatmul.mubr.bf16.gmra.mxu0 %v3110
    %v6610 = vpop.f32.mrf.mxu0
    %v6611 = vadd.f32 %v3651, %v6610
    %v6612 = vpop.f32.mrf.mxu0
    %v6613 = vadd.f32 %v3655, %v6612
    %v6614 = vpop.f32.mrf.mxu0
    %v6615 = vadd.f32 %v3651, %v6614
    %v6616 = vpop.f32.mrf.mxu0
    %v6617 = vadd.f32 %v3655, %v6616
    %6618 = vdwg.mxu0
    %6619 = vmatprep.subr.bf16.mxu0 %v5397
    %6620 = vmatpush1.bf16.msra.mxu0 %v5396
    %6621 = vmatprep.subr.bf16.mxu0 %v5389
    %6622 = vmatpush1.bf16.msra.mxu0 %v5388
    %6623 = vmatprep.subr.bf16.mxu0 %v5381
    %6624 = vmatpush1.bf16.msra.mxu0 %v5380
    %6625 = vmatprep.subr.bf16.mxu0 %v5373
    %6626 = vmatpush1.bf16.msra.mxu0 %v5372
    %6627 = vmatprep.subr.bf16.mxu0 %v5365
    %6628 = vmatpush1.bf16.msra.mxu0 %v5364
    %6629 = vmatprep.subr.bf16.mxu0 %v5357
    %6630 = vmatpush1.bf16.msra.mxu0 %v5356
    %6631 = vmatprep.subr.bf16.mxu0 %v5349
    %6632 = vmatpush1.bf16.msra.mxu0 %v5348
    %6633 = vmatprep.subr.bf16.mxu0 %v5341
    %6634 = vmatpush1.bf16.msra.mxu0 %v5340
    %6635 = vmatprep.subr.bf16.mxu0 %v5461
    %6636 = vmatpush2.bf16.msra.mxu0 %v5460
    %6637 = vmatprep.subr.bf16.mxu0 %v5453
    %6638 = vmatpush2.bf16.msra.mxu0 %v5452
    %6639 = vmatprep.subr.bf16.mxu0 %v5445
    %6640 = vmatpush2.bf16.msra.mxu0 %v5444
    %6641 = vmatprep.subr.bf16.mxu0 %v5437
    %6642 = vmatpush2.bf16.msra.mxu0 %v5436
    %6643 = vmatprep.subr.bf16.mxu0 %v5429
    %6644 = vmatpush2.bf16.msra.mxu0 %v5428
    %6645 = vmatprep.subr.bf16.mxu0 %v5421
    %6646 = vmatpush2.bf16.msra.mxu0 %v5420
    %6647 = vmatprep.subr.bf16.mxu0 %v5413
    %6648 = vmatpush2.bf16.msra.mxu0 %v5412
    %6649 = vmatprep.subr.bf16.mxu0 %v5405
    %6650 = vmatpush2.bf16.msra.mxu0 %v5404
    %6651 = vmatprep.mubr.bf16.mxu0 %v3113
    %6652 = vmatmul.mubr.bf16.gmra.mxu0 %v3112
    %v6653 = vpop.f32.mrf.mxu0
    %v6654 = vadd.f32 %v6611, %v6653
    %v6655 = vpop.f32.mrf.mxu0
    %v6656 = vadd.f32 %v6613, %v6655
    %v6657 = vpop.f32.mrf.mxu0
    %v6658 = vadd.f32 %v6615, %v6657
    %v6659 = vpop.f32.mrf.mxu0
    %v6660 = vadd.f32 %v6617, %v6659
    %6661 = vdwg.mxu0
    %6662 = vmatprep.subr.bf16.mxu0 %v5525
    %6663 = vmatpush1.bf16.msra.mxu0 %v5524
    %6664 = vmatprep.subr.bf16.mxu0 %v5517
    %6665 = vmatpush1.bf16.msra.mxu0 %v5516
    %6666 = vmatprep.subr.bf16.mxu0 %v5509
    %6667 = vmatpush1.bf16.msra.mxu0 %v5508
    %6668 = vmatprep.subr.bf16.mxu0 %v5501
    %6669 = vmatpush1.bf16.msra.mxu0 %v5500
    %6670 = vmatprep.subr.bf16.mxu0 %v5493
    %6671 = vmatpush1.bf16.msra.mxu0 %v5492
    %6672 = vmatprep.subr.bf16.mxu0 %v5485
    %6673 = vmatpush1.bf16.msra.mxu0 %v5484
    %6674 = vmatprep.subr.bf16.mxu0 %v5477
    %6675 = vmatpush1.bf16.msra.mxu0 %v5476
    %6676 = vmatprep.subr.bf16.mxu0 %v5469
    %6677 = vmatpush1.bf16.msra.mxu0 %v5468
    %6678 = vmatprep.subr.bf16.mxu0 %v5589
    %6679 = vmatpush2.bf16.msra.mxu0 %v5588
    %6680 = vmatprep.subr.bf16.mxu0 %v5581
    %6681 = vmatpush2.bf16.msra.mxu0 %v5580
    %6682 = vmatprep.subr.bf16.mxu0 %v5573
    %6683 = vmatpush2.bf16.msra.mxu0 %v5572
    %6684 = vmatprep.subr.bf16.mxu0 %v5565
    %6685 = vmatpush2.bf16.msra.mxu0 %v5564
    %6686 = vmatprep.subr.bf16.mxu0 %v5557
    %6687 = vmatpush2.bf16.msra.mxu0 %v5556
    %6688 = vmatprep.subr.bf16.mxu0 %v5549
    %6689 = vmatpush2.bf16.msra.mxu0 %v5548
    %6690 = vmatprep.subr.bf16.mxu0 %v5541
    %6691 = vmatpush2.bf16.msra.mxu0 %v5540
    %6692 = vmatprep.subr.bf16.mxu0 %v5533
    %6693 = vmatpush2.bf16.msra.mxu0 %v5532
    %6694 = vmatprep.mubr.bf16.mxu0 %v3115
    %6695 = vmatmul.mubr.bf16.gmra.mxu0 %v3114
    %v6696 = vpop.f32.mrf.mxu0
    %v6697 = vadd.f32 %v6654, %v6696
    %v6698 = vpop.f32.mrf.mxu0
    %v6699 = vadd.f32 %v6656, %v6698
    %v6700 = vpop.f32.mrf.mxu0
    %v6701 = vadd.f32 %v6658, %v6700
    %v6702 = vpop.f32.mrf.mxu0
    %v6703 = vadd.f32 %v6660, %v6702
    %6704 = vdwg.mxu0
    %6705 = vmatprep.subr.bf16.mxu0 %v5653
    %6706 = vmatpush1.bf16.msra.mxu0 %v5652
    %6707 = vmatprep.subr.bf16.mxu0 %v5645
    %6708 = vmatpush1.bf16.msra.mxu0 %v5644
    %6709 = vmatprep.subr.bf16.mxu0 %v5637
    %6710 = vmatpush1.bf16.msra.mxu0 %v5636
    %6711 = vmatprep.subr.bf16.mxu0 %v5629
    %6712 = vmatpush1.bf16.msra.mxu0 %v5628
    %6713 = vmatprep.subr.bf16.mxu0 %v5621
    %6714 = vmatpush1.bf16.msra.mxu0 %v5620
    %6715 = vmatprep.subr.bf16.mxu0 %v5613
    %6716 = vmatpush1.bf16.msra.mxu0 %v5612
    %6717 = vmatprep.subr.bf16.mxu0 %v5605
    %6718 = vmatpush1.bf16.msra.mxu0 %v5604
    %6719 = vmatprep.subr.bf16.mxu0 %v5597
    %6720 = vmatpush1.bf16.msra.mxu0 %v5596
    %6721 = vmatprep.subr.bf16.mxu0 %v5717
    %6722 = vmatpush2.bf16.msra.mxu0 %v5716
    %6723 = vmatprep.subr.bf16.mxu0 %v5709
    %6724 = vmatpush2.bf16.msra.mxu0 %v5708
    %6725 = vmatprep.subr.bf16.mxu0 %v5701
    %6726 = vmatpush2.bf16.msra.mxu0 %v5700
    %6727 = vmatprep.subr.bf16.mxu0 %v5693
    %6728 = vmatpush2.bf16.msra.mxu0 %v5692
    %6729 = vmatprep.subr.bf16.mxu0 %v5685
    %6730 = vmatpush2.bf16.msra.mxu0 %v5684
    %6731 = vmatprep.subr.bf16.mxu0 %v5677
    %6732 = vmatpush2.bf16.msra.mxu0 %v5676
    %6733 = vmatprep.subr.bf16.mxu0 %v5669
    %6734 = vmatpush2.bf16.msra.mxu0 %v5668
    %6735 = vmatprep.subr.bf16.mxu0 %v5661
    %6736 = vmatpush2.bf16.msra.mxu0 %v5660
    %6737 = vmatprep.mubr.bf16.mxu0 %v3117
    %6738 = vmatmul.mubr.bf16.gmra.mxu0 %v3116
    %v6739 = vpop.f32.mrf.mxu0
    %v6740 = vadd.f32 %v6697, %v6739
    %v6741 = vpop.f32.mrf.mxu0
    %v6742 = vadd.f32 %v6699, %v6741
    %v6743 = vpop.f32.mrf.mxu0
    %v6744 = vadd.f32 %v6701, %v6743
    %v6745 = vpop.f32.mrf.mxu0
    %v6746 = vadd.f32 %v6703, %v6745
    %6747 = vdwg.mxu0
    %6748 = vmatprep.subr.bf16.mxu0 %v5271
    %6749 = vmatpush1.bf16.msra.mxu0 %v5270
    %6750 = vmatprep.subr.bf16.mxu0 %v5263
    %6751 = vmatpush1.bf16.msra.mxu0 %v5262
    %6752 = vmatprep.subr.bf16.mxu0 %v5255
    %6753 = vmatpush1.bf16.msra.mxu0 %v5254
    %6754 = vmatprep.subr.bf16.mxu0 %v5247
    %6755 = vmatpush1.bf16.msra.mxu0 %v5246
    %6756 = vmatprep.subr.bf16.mxu0 %v5239
    %6757 = vmatpush1.bf16.msra.mxu0 %v5238
    %6758 = vmatprep.subr.bf16.mxu0 %v5231
    %6759 = vmatpush1.bf16.msra.mxu0 %v5230
    %6760 = vmatprep.subr.bf16.mxu0 %v5223
    %6761 = vmatpush1.bf16.msra.mxu0 %v5222
    %6762 = vmatprep.subr.bf16.mxu0 %v5215
    %6763 = vmatpush1.bf16.msra.mxu0 %v5214
    %6764 = vmatprep.subr.bf16.mxu0 %v5335
    %6765 = vmatpush2.bf16.msra.mxu0 %v5334
    %6766 = vmatprep.subr.bf16.mxu0 %v5327
    %6767 = vmatpush2.bf16.msra.mxu0 %v5326
    %6768 = vmatprep.subr.bf16.mxu0 %v5319
    %6769 = vmatpush2.bf16.msra.mxu0 %v5318
    %6770 = vmatprep.subr.bf16.mxu0 %v5311
    %6771 = vmatpush2.bf16.msra.mxu0 %v5310
    %6772 = vmatprep.subr.bf16.mxu0 %v5303
    %6773 = vmatpush2.bf16.msra.mxu0 %v5302
    %6774 = vmatprep.subr.bf16.mxu0 %v5295
    %6775 = vmatpush2.bf16.msra.mxu0 %v5294
    %6776 = vmatprep.subr.bf16.mxu0 %v5287
    %6777 = vmatpush2.bf16.msra.mxu0 %v5286
    %6778 = vmatprep.subr.bf16.mxu0 %v5279
    %6779 = vmatpush2.bf16.msra.mxu0 %v5278
    %6780 = vmatprep.mubr.bf16.mxu0 %v3111
    %6781 = vmatmul.mubr.bf16.gmra.mxu0 %v3110
    %v6782 = vpop.f32.mrf.mxu0
    %v6783 = vadd.f32 %v3659, %v6782
    %v6784 = vpop.f32.mrf.mxu0
    %v6785 = vadd.f32 %v3663, %v6784
    %v6786 = vpop.f32.mrf.mxu0
    %v6787 = vadd.f32 %v3659, %v6786
    %v6788 = vpop.f32.mrf.mxu0
    %v6789 = vadd.f32 %v3663, %v6788
    %6790 = vdwg.mxu0
    %6791 = vmatprep.subr.bf16.mxu0 %v5399
    %6792 = vmatpush1.bf16.msra.mxu0 %v5398
    %6793 = vmatprep.subr.bf16.mxu0 %v5391
    %6794 = vmatpush1.bf16.msra.mxu0 %v5390
    %6795 = vmatprep.subr.bf16.mxu0 %v5383
    %6796 = vmatpush1.bf16.msra.mxu0 %v5382
    %6797 = vmatprep.subr.bf16.mxu0 %v5375
    %6798 = vmatpush1.bf16.msra.mxu0 %v5374
    %6799 = vmatprep.subr.bf16.mxu0 %v5367
    %6800 = vmatpush1.bf16.msra.mxu0 %v5366
    %6801 = vmatprep.subr.bf16.mxu0 %v5359
    %6802 = vmatpush1.bf16.msra.mxu0 %v5358
    %6803 = vmatprep.subr.bf16.mxu0 %v5351
    %6804 = vmatpush1.bf16.msra.mxu0 %v5350
    %6805 = vmatprep.subr.bf16.mxu0 %v5343
    %6806 = vmatpush1.bf16.msra.mxu0 %v5342
    %6807 = vmatprep.subr.bf16.mxu0 %v5463
    %6808 = vmatpush2.bf16.msra.mxu0 %v5462
    %6809 = vmatprep.subr.bf16.mxu0 %v5455
    %6810 = vmatpush2.bf16.msra.mxu0 %v5454
    %6811 = vmatprep.subr.bf16.mxu0 %v5447
    %6812 = vmatpush2.bf16.msra.mxu0 %v5446
    %6813 = vmatprep.subr.bf16.mxu0 %v5439
    %6814 = vmatpush2.bf16.msra.mxu0 %v5438
    %6815 = vmatprep.subr.bf16.mxu0 %v5431
    %6816 = vmatpush2.bf16.msra.mxu0 %v5430
    %6817 = vmatprep.subr.bf16.mxu0 %v5423
    %6818 = vmatpush2.bf16.msra.mxu0 %v5422
    %6819 = vmatprep.subr.bf16.mxu0 %v5415
    %6820 = vmatpush2.bf16.msra.mxu0 %v5414
    %6821 = vmatprep.subr.bf16.mxu0 %v5407
    %6822 = vmatpush2.bf16.msra.mxu0 %v5406
    %6823 = vmatprep.mubr.bf16.mxu0 %v3113
    %6824 = vmatmul.mubr.bf16.gmra.mxu0 %v3112
    %v6825 = vpop.f32.mrf.mxu0
    %v6826 = vadd.f32 %v6783, %v6825
    %v6827 = vpop.f32.mrf.mxu0
    %v6828 = vadd.f32 %v6785, %v6827
    %v6829 = vpop.f32.mrf.mxu0
    %v6830 = vadd.f32 %v6787, %v6829
    %v6831 = vpop.f32.mrf.mxu0
    %v6832 = vadd.f32 %v6789, %v6831
    %6833 = vdwg.mxu0
    %6834 = vmatprep.subr.bf16.mxu0 %v5527
    %6835 = vmatpush1.bf16.msra.mxu0 %v5526
    %6836 = vmatprep.subr.bf16.mxu0 %v5519
    %6837 = vmatpush1.bf16.msra.mxu0 %v5518
    %6838 = vmatprep.subr.bf16.mxu0 %v5511
    %6839 = vmatpush1.bf16.msra.mxu0 %v5510
    %6840 = vmatprep.subr.bf16.mxu0 %v5503
    %6841 = vmatpush1.bf16.msra.mxu0 %v5502
    %6842 = vmatprep.subr.bf16.mxu0 %v5495
    %6843 = vmatpush1.bf16.msra.mxu0 %v5494
    %6844 = vmatprep.subr.bf16.mxu0 %v5487
    %6845 = vmatpush1.bf16.msra.mxu0 %v5486
    %6846 = vmatprep.subr.bf16.mxu0 %v5479
    %6847 = vmatpush1.bf16.msra.mxu0 %v5478
    %6848 = vmatprep.subr.bf16.mxu0 %v5471
    %6849 = vmatpush1.bf16.msra.mxu0 %v5470
    %6850 = vmatprep.subr.bf16.mxu0 %v5591
    %6851 = vmatpush2.bf16.msra.mxu0 %v5590
    %6852 = vmatprep.subr.bf16.mxu0 %v5583
    %6853 = vmatpush2.bf16.msra.mxu0 %v5582
    %6854 = vmatprep.subr.bf16.mxu0 %v5575
    %6855 = vmatpush2.bf16.msra.mxu0 %v5574
    %6856 = vmatprep.subr.bf16.mxu0 %v5567
    %6857 = vmatpush2.bf16.msra.mxu0 %v5566
    %6858 = vmatprep.subr.bf16.mxu0 %v5559
    %6859 = vmatpush2.bf16.msra.mxu0 %v5558
    %6860 = vmatprep.subr.bf16.mxu0 %v5551
    %6861 = vmatpush2.bf16.msra.mxu0 %v5550
    %6862 = vmatprep.subr.bf16.mxu0 %v5543
    %6863 = vmatpush2.bf16.msra.mxu0 %v5542
    %6864 = vmatprep.subr.bf16.mxu0 %v5535
    %6865 = vmatpush2.bf16.msra.mxu0 %v5534
    %6866 = vmatprep.mubr.bf16.mxu0 %v3115
    %6867 = vmatmul.mubr.bf16.gmra.mxu0 %v3114
    %v6868 = vpop.f32.mrf.mxu0
    %v6869 = vadd.f32 %v6826, %v6868
    %v6870 = vpop.f32.mrf.mxu0
    %v6871 = vadd.f32 %v6828, %v6870
    %v6872 = vpop.f32.mrf.mxu0
    %v6873 = vadd.f32 %v6830, %v6872
    %v6874 = vpop.f32.mrf.mxu0
    %v6875 = vadd.f32 %v6832, %v6874
    %6876 = vdwg.mxu0
    %6877 = vmatprep.subr.bf16.mxu0 %v5655
    %6878 = vmatpush1.bf16.msra.mxu0 %v5654
    %6879 = vmatprep.subr.bf16.mxu0 %v5647
    %6880 = vmatpush1.bf16.msra.mxu0 %v5646
    %6881 = vmatprep.subr.bf16.mxu0 %v5639
    %6882 = vmatpush1.bf16.msra.mxu0 %v5638
    %6883 = vmatprep.subr.bf16.mxu0 %v5631
    %6884 = vmatpush1.bf16.msra.mxu0 %v5630
    %6885 = vmatprep.subr.bf16.mxu0 %v5623
    %6886 = vmatpush1.bf16.msra.mxu0 %v5622
    %6887 = vmatprep.subr.bf16.mxu0 %v5615
    %6888 = vmatpush1.bf16.msra.mxu0 %v5614
    %6889 = vmatprep.subr.bf16.mxu0 %v5607
    %6890 = vmatpush1.bf16.msra.mxu0 %v5606
    %6891 = vmatprep.subr.bf16.mxu0 %v5599
    %6892 = vmatpush1.bf16.msra.mxu0 %v5598
    %6893 = vmatprep.subr.bf16.mxu0 %v5719
    %6894 = vmatpush2.bf16.msra.mxu0 %v5718
    %6895 = vmatprep.subr.bf16.mxu0 %v5711
    %6896 = vmatpush2.bf16.msra.mxu0 %v5710
    %6897 = vmatprep.subr.bf16.mxu0 %v5703
    %6898 = vmatpush2.bf16.msra.mxu0 %v5702
    %6899 = vmatprep.subr.bf16.mxu0 %v5695
    %6900 = vmatpush2.bf16.msra.mxu0 %v5694
    %6901 = vmatprep.subr.bf16.mxu0 %v5687
    %6902 = vmatpush2.bf16.msra.mxu0 %v5686
    %6903 = vmatprep.subr.bf16.mxu0 %v5679
    %6904 = vmatpush2.bf16.msra.mxu0 %v5678
    %6905 = vmatprep.subr.bf16.mxu0 %v5671
    %6906 = vmatpush2.bf16.msra.mxu0 %v5670
    %6907 = vmatprep.subr.bf16.mxu0 %v5663
    %6908 = vmatpush2.bf16.msra.mxu0 %v5662
    %6909 = vmatprep.mubr.bf16.mxu0 %v3117
    %6910 = vmatmul.mubr.bf16.gmra.mxu0 %v3116
    %v6911 = vpop.f32.mrf.mxu0
    %v6912 = vadd.f32 %v6869, %v6911
    %v6913 = vpop.f32.mrf.mxu0
    %v6914 = vadd.f32 %v6871, %v6913
    %v6915 = vpop.f32.mrf.mxu0
    %v6916 = vadd.f32 %v6873, %v6915
    %v6917 = vpop.f32.mrf.mxu0
    %v6918 = vadd.f32 %v6875, %v6917
    %6919 = vdwg.mxu0
    %v6920 = vmax.f32 %v6396, 0.0
    %v6921 = vmax.f32 %v6398, 0.0
    %v6922 = vmax.f32 %v6568, 0.0
    %v6923 = vmax.f32 %v6570, 0.0
    %v6924 = vmax.f32 %v6740, 0.0
    %v6925 = vmax.f32 %v6742, 0.0
    %v6926 = vmax.f32 %v6912, 0.0
    %v6927 = vmax.f32 %v6914, 0.0
    %v6928 = vmax.f32 %v6400, 0.0
    %v6929 = vmax.f32 %v6402, 0.0
    %v6930 = vmax.f32 %v6572, 0.0
    %v6931 = vmax.f32 %v6574, 0.0
    %v6932 = vmax.f32 %v6744, 0.0
    %v6933 = vmax.f32 %v6746, 0.0
    %v6934 = vmax.f32 %v6916, 0.0
    %v6935 = vmax.f32 %v6918, 0.0
    %v6936 = vpack.c.bf16 %v6928, %v6920
    %v6937 = vpack.c.bf16 %v6929, %v6921
    %v6938 = vpack.c.bf16 %v6930, %v6922
    %v6939 = vpack.c.bf16 %v6931, %v6923
    %v6940 = vpack.c.bf16 %v6932, %v6924
    %v6941 = vpack.c.bf16 %v6933, %v6925
    %v6942 = vpack.c.bf16 %v6934, %v6926
    %v6943 = vpack.c.bf16 %v6935, %v6927
    %v6944 = vld [vmem:[#allocation9] sm:$0xff]
    %v6945 = vld [vmem:[#allocation9 + $0x8] sm:$0xff]
    %v6946 = vld [vmem:[#allocation9 + $0x10] sm:$0xff]
    %v6947 = vld [vmem:[#allocation9 + $0x18] sm:$0xff]
    %v6948 = vld [vmem:[#allocation9 + $0x20] sm:$0xff]
    %v6949 = vld [vmem:[#allocation9 + $0x28] sm:$0xff]
    %v6950 = vld [vmem:[#allocation9 + $0x30] sm:$0xff]
    %v6951 = vld [vmem:[#allocation9 + $0x38] sm:$0xff]
    %v6952 = vld [vmem:[#allocation9 + $0x40] sm:$0xff]
    %v6953 = vld [vmem:[#allocation9 + $0x48] sm:$0xff]
    %v6954 = vld [vmem:[#allocation9 + $0x50] sm:$0xff]
    %v6955 = vld [vmem:[#allocation9 + $0x58] sm:$0xff]
    %v6956 = vld [vmem:[#allocation9 + $0x60] sm:$0xff]
    %v6957 = vld [vmem:[#allocation9 + $0x68] sm:$0xff]
    %v6958 = vld [vmem:[#allocation9 + $0x70] sm:$0xff]
    %v6959 = vld [vmem:[#allocation9 + $0x78] sm:$0xff]
    %v6960 = vld [vmem:[#allocation9 + $0x80] sm:$0xff]
    %v6961 = vld [vmem:[#allocation9 + $0x88] sm:$0xff]
    %v6962 = vld [vmem:[#allocation9 + $0x90] sm:$0xff]
    %v6963 = vld [vmem:[#allocation9 + $0x98] sm:$0xff]
    %v6964 = vld [vmem:[#allocation9 + $0xa0] sm:$0xff]
    %v6965 = vld [vmem:[#allocation9 + $0xa8] sm:$0xff]
    %v6966 = vld [vmem:[#allocation9 + $0xb0] sm:$0xff]
    %v6967 = vld [vmem:[#allocation9 + $0xb8] sm:$0xff]
    %v6968 = vld [vmem:[#allocation9 + $0xc0] sm:$0xff]
    %v6969 = vld [vmem:[#allocation9 + $0xc8] sm:$0xff]
    %v6970 = vld [vmem:[#allocation9 + $0xd0] sm:$0xff]
    %v6971 = vld [vmem:[#allocation9 + $0xd8] sm:$0xff]
    %v6972 = vld [vmem:[#allocation9 + $0xe0] sm:$0xff]
    %v6973 = vld [vmem:[#allocation9 + $0xe8] sm:$0xff]
    %v6974 = vld [vmem:[#allocation9 + $0xf0] sm:$0xff]
    %v6975 = vld [vmem:[#allocation9 + $0xf8] sm:$0xff]
    %v6976 = vld [vmem:[#allocation9 + $0x100] sm:$0xff]
    %v6977 = vld [vmem:[#allocation9 + $0x108] sm:$0xff]
    %v6978 = vld [vmem:[#allocation9 + $0x110] sm:$0xff]
    %v6979 = vld [vmem:[#allocation9 + $0x118] sm:$0xff]
    %v6980 = vld [vmem:[#allocation9 + $0x120] sm:$0xff]
    %v6981 = vld [vmem:[#allocation9 + $0x128] sm:$0xff]
    %v6982 = vld [vmem:[#allocation9 + $0x130] sm:$0xff]
    %v6983 = vld [vmem:[#allocation9 + $0x138] sm:$0xff]
    %v6984 = vld [vmem:[#allocation9 + $0x140] sm:$0xff]
    %v6985 = vld [vmem:[#allocation9 + $0x148] sm:$0xff]
    %v6986 = vld [vmem:[#allocation9 + $0x150] sm:$0xff]
    %v6987 = vld [vmem:[#allocation9 + $0x158] sm:$0xff]
    %v6988 = vld [vmem:[#allocation9 + $0x160] sm:$0xff]
    %v6989 = vld [vmem:[#allocation9 + $0x168] sm:$0xff]
    %v6990 = vld [vmem:[#allocation9 + $0x170] sm:$0xff]
    %v6991 = vld [vmem:[#allocation9 + $0x178] sm:$0xff]
    %v6992 = vld [vmem:[#allocation9 + $0x180] sm:$0xff]
    %v6993 = vld [vmem:[#allocation9 + $0x188] sm:$0xff]
    %v6994 = vld [vmem:[#allocation9 + $0x190] sm:$0xff]
    %v6995 = vld [vmem:[#allocation9 + $0x198] sm:$0xff]
    %v6996 = vld [vmem:[#allocation9 + $0x1a0] sm:$0xff]
    %v6997 = vld [vmem:[#allocation9 + $0x1a8] sm:$0xff]
    %v6998 = vld [vmem:[#allocation9 + $0x1b0] sm:$0xff]
    %v6999 = vld [vmem:[#allocation9 + $0x1b8] sm:$0xff]
    %v7000 = vld [vmem:[#allocation9 + $0x1c0] sm:$0xff]
    %v7001 = vld [vmem:[#allocation9 + $0x1c8] sm:$0xff]
    %v7002 = vld [vmem:[#allocation9 + $0x1d0] sm:$0xff]
    %v7003 = vld [vmem:[#allocation9 + $0x1d8] sm:$0xff]
    %v7004 = vld [vmem:[#allocation9 + $0x1e0] sm:$0xff]
    %v7005 = vld [vmem:[#allocation9 + $0x1e8] sm:$0xff]
    %v7006 = vld [vmem:[#allocation9 + $0x1f0] sm:$0xff]
    %v7007 = vld [vmem:[#allocation9 + $0x1f8] sm:$0xff]
    %v7008 = vld [vmem:[#allocation9 + $0x200] sm:$0xff]
    %v7009 = vld [vmem:[#allocation9 + $0x208] sm:$0xff]
    %v7010 = vld [vmem:[#allocation9 + $0x210] sm:$0xff]
    %v7011 = vld [vmem:[#allocation9 + $0x218] sm:$0xff]
    %v7012 = vld [vmem:[#allocation9 + $0x220] sm:$0xff]
    %v7013 = vld [vmem:[#allocation9 + $0x228] sm:$0xff]
    %v7014 = vld [vmem:[#allocation9 + $0x230] sm:$0xff]
    %v7015 = vld [vmem:[#allocation9 + $0x238] sm:$0xff]
    %v7016 = vld [vmem:[#allocation9 + $0x240] sm:$0xff]
    %v7017 = vld [vmem:[#allocation9 + $0x248] sm:$0xff]
    %v7018 = vld [vmem:[#allocation9 + $0x250] sm:$0xff]
    %v7019 = vld [vmem:[#allocation9 + $0x258] sm:$0xff]
    %v7020 = vld [vmem:[#allocation9 + $0x260] sm:$0xff]
    %v7021 = vld [vmem:[#allocation9 + $0x268] sm:$0xff]
    %v7022 = vld [vmem:[#allocation9 + $0x270] sm:$0xff]
    %v7023 = vld [vmem:[#allocation9 + $0x278] sm:$0xff]
    %v7024 = vld [vmem:[#allocation9 + $0x280] sm:$0xff]
    %v7025 = vld [vmem:[#allocation9 + $0x288] sm:$0xff]
    %v7026 = vld [vmem:[#allocation9 + $0x290] sm:$0xff]
    %v7027 = vld [vmem:[#allocation9 + $0x298] sm:$0xff]
    %v7028 = vld [vmem:[#allocation9 + $0x2a0] sm:$0xff]
    %v7029 = vld [vmem:[#allocation9 + $0x2a8] sm:$0xff]
    %v7030 = vld [vmem:[#allocation9 + $0x2b0] sm:$0xff]
    %v7031 = vld [vmem:[#allocation9 + $0x2b8] sm:$0xff]
    %v7032 = vld [vmem:[#allocation9 + $0x2c0] sm:$0xff]
    %v7033 = vld [vmem:[#allocation9 + $0x2c8] sm:$0xff]
    %v7034 = vld [vmem:[#allocation9 + $0x2d0] sm:$0xff]
    %v7035 = vld [vmem:[#allocation9 + $0x2d8] sm:$0xff]
    %v7036 = vld [vmem:[#allocation9 + $0x2e0] sm:$0xff]
    %v7037 = vld [vmem:[#allocation9 + $0x2e8] sm:$0xff]
    %v7038 = vld [vmem:[#allocation9 + $0x2f0] sm:$0xff]
    %v7039 = vld [vmem:[#allocation9 + $0x2f8] sm:$0xff]
    %v7040 = vld [vmem:[#allocation9 + $0x300] sm:$0xff]
    %v7041 = vld [vmem:[#allocation9 + $0x308] sm:$0xff]
    %v7042 = vld [vmem:[#allocation9 + $0x310] sm:$0xff]
    %v7043 = vld [vmem:[#allocation9 + $0x318] sm:$0xff]
    %v7044 = vld [vmem:[#allocation9 + $0x320] sm:$0xff]
    %v7045 = vld [vmem:[#allocation9 + $0x328] sm:$0xff]
    %v7046 = vld [vmem:[#allocation9 + $0x330] sm:$0xff]
    %v7047 = vld [vmem:[#allocation9 + $0x338] sm:$0xff]
    %v7048 = vld [vmem:[#allocation9 + $0x340] sm:$0xff]
    %v7049 = vld [vmem:[#allocation9 + $0x348] sm:$0xff]
    %v7050 = vld [vmem:[#allocation9 + $0x350] sm:$0xff]
    %v7051 = vld [vmem:[#allocation9 + $0x358] sm:$0xff]
    %v7052 = vld [vmem:[#allocation9 + $0x360] sm:$0xff]
    %v7053 = vld [vmem:[#allocation9 + $0x368] sm:$0xff]
    %v7054 = vld [vmem:[#allocation9 + $0x370] sm:$0xff]
    %v7055 = vld [vmem:[#allocation9 + $0x378] sm:$0xff]
    %v7056 = vld [vmem:[#allocation9 + $0x380] sm:$0xff]
    %v7057 = vld [vmem:[#allocation9 + $0x388] sm:$0xff]
    %v7058 = vld [vmem:[#allocation9 + $0x390] sm:$0xff]
    %v7059 = vld [vmem:[#allocation9 + $0x398] sm:$0xff]
    %v7060 = vld [vmem:[#allocation9 + $0x3a0] sm:$0xff]
    %v7061 = vld [vmem:[#allocation9 + $0x3a8] sm:$0xff]
    %v7062 = vld [vmem:[#allocation9 + $0x3b0] sm:$0xff]
    %v7063 = vld [vmem:[#allocation9 + $0x3b8] sm:$0xff]
    %v7064 = vld [vmem:[#allocation9 + $0x3c0] sm:$0xff]
    %v7065 = vld [vmem:[#allocation9 + $0x3c8] sm:$0xff]
    %v7066 = vld [vmem:[#allocation9 + $0x3d0] sm:$0xff]
    %v7067 = vld [vmem:[#allocation9 + $0x3d8] sm:$0xff]
    %v7068 = vld [vmem:[#allocation9 + $0x3e0] sm:$0xff]
    %v7069 = vld [vmem:[#allocation9 + $0x3e8] sm:$0xff]
    %v7070 = vld [vmem:[#allocation9 + $0x3f0] sm:$0xff]
    %v7071 = vld [vmem:[#allocation9 + $0x3f8] sm:$0xff]
    %v7072 = vld [vmem:[#allocation9 + $0x400] sm:$0xff]
    %v7073 = vld [vmem:[#allocation9 + $0x408] sm:$0xff]
    %v7074 = vld [vmem:[#allocation9 + $0x410] sm:$0xff]
    %v7075 = vld [vmem:[#allocation9 + $0x418] sm:$0xff]
    %v7076 = vld [vmem:[#allocation9 + $0x420] sm:$0xff]
    %v7077 = vld [vmem:[#allocation9 + $0x428] sm:$0xff]
    %v7078 = vld [vmem:[#allocation9 + $0x430] sm:$0xff]
    %v7079 = vld [vmem:[#allocation9 + $0x438] sm:$0xff]
    %v7080 = vld [vmem:[#allocation9 + $0x440] sm:$0xff]
    %v7081 = vld [vmem:[#allocation9 + $0x448] sm:$0xff]
    %v7082 = vld [vmem:[#allocation9 + $0x450] sm:$0xff]
    %v7083 = vld [vmem:[#allocation9 + $0x458] sm:$0xff]
    %v7084 = vld [vmem:[#allocation9 + $0x460] sm:$0xff]
    %v7085 = vld [vmem:[#allocation9 + $0x468] sm:$0xff]
    %v7086 = vld [vmem:[#allocation9 + $0x470] sm:$0xff]
    %v7087 = vld [vmem:[#allocation9 + $0x478] sm:$0xff]
    %v7088 = vld [vmem:[#allocation9 + $0x480] sm:$0xff]
    %v7089 = vld [vmem:[#allocation9 + $0x488] sm:$0xff]
    %v7090 = vld [vmem:[#allocation9 + $0x490] sm:$0xff]
    %v7091 = vld [vmem:[#allocation9 + $0x498] sm:$0xff]
    %v7092 = vld [vmem:[#allocation9 + $0x4a0] sm:$0xff]
    %v7093 = vld [vmem:[#allocation9 + $0x4a8] sm:$0xff]
    %v7094 = vld [vmem:[#allocation9 + $0x4b0] sm:$0xff]
    %v7095 = vld [vmem:[#allocation9 + $0x4b8] sm:$0xff]
    %v7096 = vld [vmem:[#allocation9 + $0x4c0] sm:$0xff]
    %v7097 = vld [vmem:[#allocation9 + $0x4c8] sm:$0xff]
    %v7098 = vld [vmem:[#allocation9 + $0x4d0] sm:$0xff]
    %v7099 = vld [vmem:[#allocation9 + $0x4d8] sm:$0xff]
    %v7100 = vld [vmem:[#allocation9 + $0x4e0] sm:$0xff]
    %v7101 = vld [vmem:[#allocation9 + $0x4e8] sm:$0xff]
    %v7102 = vld [vmem:[#allocation9 + $0x4f0] sm:$0xff]
    %v7103 = vld [vmem:[#allocation9 + $0x4f8] sm:$0xff]
    %v7104 = vld [vmem:[#allocation9 + $0x500] sm:$0xff]
    %v7105 = vld [vmem:[#allocation9 + $0x508] sm:$0xff]
    %v7106 = vld [vmem:[#allocation9 + $0x510] sm:$0xff]
    %v7107 = vld [vmem:[#allocation9 + $0x518] sm:$0xff]
    %v7108 = vld [vmem:[#allocation9 + $0x520] sm:$0xff]
    %v7109 = vld [vmem:[#allocation9 + $0x528] sm:$0xff]
    %v7110 = vld [vmem:[#allocation9 + $0x530] sm:$0xff]
    %v7111 = vld [vmem:[#allocation9 + $0x538] sm:$0xff]
    %v7112 = vld [vmem:[#allocation9 + $0x540] sm:$0xff]
    %v7113 = vld [vmem:[#allocation9 + $0x548] sm:$0xff]
    %v7114 = vld [vmem:[#allocation9 + $0x550] sm:$0xff]
    %v7115 = vld [vmem:[#allocation9 + $0x558] sm:$0xff]
    %v7116 = vld [vmem:[#allocation9 + $0x560] sm:$0xff]
    %v7117 = vld [vmem:[#allocation9 + $0x568] sm:$0xff]
    %v7118 = vld [vmem:[#allocation9 + $0x570] sm:$0xff]
    %v7119 = vld [vmem:[#allocation9 + $0x578] sm:$0xff]
    %v7120 = vld [vmem:[#allocation9 + $0x580] sm:$0xff]
    %v7121 = vld [vmem:[#allocation9 + $0x588] sm:$0xff]
    %v7122 = vld [vmem:[#allocation9 + $0x590] sm:$0xff]
    %v7123 = vld [vmem:[#allocation9 + $0x598] sm:$0xff]
    %v7124 = vld [vmem:[#allocation9 + $0x5a0] sm:$0xff]
    %v7125 = vld [vmem:[#allocation9 + $0x5a8] sm:$0xff]
    %v7126 = vld [vmem:[#allocation9 + $0x5b0] sm:$0xff]
    %v7127 = vld [vmem:[#allocation9 + $0x5b8] sm:$0xff]
    %v7128 = vld [vmem:[#allocation9 + $0x5c0] sm:$0xff]
    %v7129 = vld [vmem:[#allocation9 + $0x5c8] sm:$0xff]
    %v7130 = vld [vmem:[#allocation9 + $0x5d0] sm:$0xff]
    %v7131 = vld [vmem:[#allocation9 + $0x5d8] sm:$0xff]
    %v7132 = vld [vmem:[#allocation9 + $0x5e0] sm:$0xff]
    %v7133 = vld [vmem:[#allocation9 + $0x5e8] sm:$0xff]
    %v7134 = vld [vmem:[#allocation9 + $0x5f0] sm:$0xff]
    %v7135 = vld [vmem:[#allocation9 + $0x5f8] sm:$0xff]
    %v7136 = vld [vmem:[#allocation9 + $0x600] sm:$0xff]
    %v7137 = vld [vmem:[#allocation9 + $0x608] sm:$0xff]
    %v7138 = vld [vmem:[#allocation9 + $0x610] sm:$0xff]
    %v7139 = vld [vmem:[#allocation9 + $0x618] sm:$0xff]
    %v7140 = vld [vmem:[#allocation9 + $0x620] sm:$0xff]
    %v7141 = vld [vmem:[#allocation9 + $0x628] sm:$0xff]
    %v7142 = vld [vmem:[#allocation9 + $0x630] sm:$0xff]
    %v7143 = vld [vmem:[#allocation9 + $0x638] sm:$0xff]
    %v7144 = vld [vmem:[#allocation9 + $0x640] sm:$0xff]
    %v7145 = vld [vmem:[#allocation9 + $0x648] sm:$0xff]
    %v7146 = vld [vmem:[#allocation9 + $0x650] sm:$0xff]
    %v7147 = vld [vmem:[#allocation9 + $0x658] sm:$0xff]
    %v7148 = vld [vmem:[#allocation9 + $0x660] sm:$0xff]
    %v7149 = vld [vmem:[#allocation9 + $0x668] sm:$0xff]
    %v7150 = vld [vmem:[#allocation9 + $0x670] sm:$0xff]
    %v7151 = vld [vmem:[#allocation9 + $0x678] sm:$0xff]
    %v7152 = vld [vmem:[#allocation9 + $0x680] sm:$0xff]
    %v7153 = vld [vmem:[#allocation9 + $0x688] sm:$0xff]
    %v7154 = vld [vmem:[#allocation9 + $0x690] sm:$0xff]
    %v7155 = vld [vmem:[#allocation9 + $0x698] sm:$0xff]
    %v7156 = vld [vmem:[#allocation9 + $0x6a0] sm:$0xff]
    %v7157 = vld [vmem:[#allocation9 + $0x6a8] sm:$0xff]
    %v7158 = vld [vmem:[#allocation9 + $0x6b0] sm:$0xff]
    %v7159 = vld [vmem:[#allocation9 + $0x6b8] sm:$0xff]
    %v7160 = vld [vmem:[#allocation9 + $0x6c0] sm:$0xff]
    %v7161 = vld [vmem:[#allocation9 + $0x6c8] sm:$0xff]
    %v7162 = vld [vmem:[#allocation9 + $0x6d0] sm:$0xff]
    %v7163 = vld [vmem:[#allocation9 + $0x6d8] sm:$0xff]
    %v7164 = vld [vmem:[#allocation9 + $0x6e0] sm:$0xff]
    %v7165 = vld [vmem:[#allocation9 + $0x6e8] sm:$0xff]
    %v7166 = vld [vmem:[#allocation9 + $0x6f0] sm:$0xff]
    %v7167 = vld [vmem:[#allocation9 + $0x6f8] sm:$0xff]
    %v7168 = vld [vmem:[#allocation9 + $0x700] sm:$0xff]
    %v7169 = vld [vmem:[#allocation9 + $0x708] sm:$0xff]
    %v7170 = vld [vmem:[#allocation9 + $0x710] sm:$0xff]
    %v7171 = vld [vmem:[#allocation9 + $0x718] sm:$0xff]
    %v7172 = vld [vmem:[#allocation9 + $0x720] sm:$0xff]
    %v7173 = vld [vmem:[#allocation9 + $0x728] sm:$0xff]
    %v7174 = vld [vmem:[#allocation9 + $0x730] sm:$0xff]
    %v7175 = vld [vmem:[#allocation9 + $0x738] sm:$0xff]
    %v7176 = vld [vmem:[#allocation9 + $0x740] sm:$0xff]
    %v7177 = vld [vmem:[#allocation9 + $0x748] sm:$0xff]
    %v7178 = vld [vmem:[#allocation9 + $0x750] sm:$0xff]
    %v7179 = vld [vmem:[#allocation9 + $0x758] sm:$0xff]
    %v7180 = vld [vmem:[#allocation9 + $0x760] sm:$0xff]
    %v7181 = vld [vmem:[#allocation9 + $0x768] sm:$0xff]
    %v7182 = vld [vmem:[#allocation9 + $0x770] sm:$0xff]
    %v7183 = vld [vmem:[#allocation9 + $0x778] sm:$0xff]
    %v7184 = vld [vmem:[#allocation9 + $0x780] sm:$0xff]
    %v7185 = vld [vmem:[#allocation9 + $0x788] sm:$0xff]
    %v7186 = vld [vmem:[#allocation9 + $0x790] sm:$0xff]
    %v7187 = vld [vmem:[#allocation9 + $0x798] sm:$0xff]
    %v7188 = vld [vmem:[#allocation9 + $0x7a0] sm:$0xff]
    %v7189 = vld [vmem:[#allocation9 + $0x7a8] sm:$0xff]
    %v7190 = vld [vmem:[#allocation9 + $0x7b0] sm:$0xff]
    %v7191 = vld [vmem:[#allocation9 + $0x7b8] sm:$0xff]
    %v7192 = vld [vmem:[#allocation9 + $0x7c0] sm:$0xff]
    %v7193 = vld [vmem:[#allocation9 + $0x7c8] sm:$0xff]
    %v7194 = vld [vmem:[#allocation9 + $0x7d0] sm:$0xff]
    %v7195 = vld [vmem:[#allocation9 + $0x7d8] sm:$0xff]
    %v7196 = vld [vmem:[#allocation9 + $0x7e0] sm:$0xff]
    %v7197 = vld [vmem:[#allocation9 + $0x7e8] sm:$0xff]
    %v7198 = vld [vmem:[#allocation9 + $0x7f0] sm:$0xff]
    %v7199 = vld [vmem:[#allocation9 + $0x7f8] sm:$0xff]
    %v7200 = vld [vmem:[#allocation10] sm:$0xf]
    %v7202 = vlaneseq
    %v7203 = vshrl.u32 %v7202, 7
    %v7204 = vsub.s32 0, %v7203
    %v7205 = vrot.slane %v7200, %v7204
    %v7206 = vlaneseq
    %v7207 = vshrl.u32 %v7206, 7
    %v7208 = vsub.s32 1, %v7207
    %v7209 = vrot.slane %v7200, %v7208
    %v7210 = vlaneseq
    %v7211 = vshrl.u32 %v7210, 7
    %v7212 = vsub.s32 2, %v7211
    %v7213 = vrot.slane %v7200, %v7212
    %v7214 = vlaneseq
    %v7215 = vshrl.u32 %v7214, 7
    %v7216 = vsub.s32 3, %v7215
    %v7217 = vrot.slane %v7200, %v7216
    %v7478 = vunpack.c.l.b16 %v6944
    %v7479 = vunpack.c.h.b16 %v6944
    %v7480 = vunpack.c.l.b16 %v6945
    %v7481 = vunpack.c.h.b16 %v6945
    %v7482 = vunpack.c.l.b16 %v6946
    %v7483 = vunpack.c.h.b16 %v6946
    %v7484 = vunpack.c.l.b16 %v6947
    %v7485 = vunpack.c.h.b16 %v6947
    %v7486 = vunpack.c.l.b16 %v6948
    %v7487 = vunpack.c.h.b16 %v6948
    %v7488 = vunpack.c.l.b16 %v6949
    %v7489 = vunpack.c.h.b16 %v6949
    %v7490 = vunpack.c.l.b16 %v6950
    %v7491 = vunpack.c.h.b16 %v6950
    %v7492 = vunpack.c.l.b16 %v6951
    %v7493 = vunpack.c.h.b16 %v6951
    %v7494 = vunpack.c.l.b16 %v6952
    %v7495 = vunpack.c.h.b16 %v6952
    %v7496 = vunpack.c.l.b16 %v6953
    %v7497 = vunpack.c.h.b16 %v6953
    %v7498 = vunpack.c.l.b16 %v6954
    %v7499 = vunpack.c.h.b16 %v6954
    %v7500 = vunpack.c.l.b16 %v6955
    %v7501 = vunpack.c.h.b16 %v6955
    %v7502 = vunpack.c.l.b16 %v6956
    %v7503 = vunpack.c.h.b16 %v6956
    %v7504 = vunpack.c.l.b16 %v6957
    %v7505 = vunpack.c.h.b16 %v6957
    %v7506 = vunpack.c.l.b16 %v6958
    %v7507 = vunpack.c.h.b16 %v6958
    %v7508 = vunpack.c.l.b16 %v6959
    %v7509 = vunpack.c.h.b16 %v6959
    %v7510 = vunpack.c.l.b16 %v6960
    %v7511 = vunpack.c.h.b16 %v6960
    %v7512 = vunpack.c.l.b16 %v6961
    %v7513 = vunpack.c.h.b16 %v6961
    %v7514 = vunpack.c.l.b16 %v6962
    %v7515 = vunpack.c.h.b16 %v6962
    %v7516 = vunpack.c.l.b16 %v6963
    %v7517 = vunpack.c.h.b16 %v6963
    %v7518 = vunpack.c.l.b16 %v6964
    %v7519 = vunpack.c.h.b16 %v6964
    %v7520 = vunpack.c.l.b16 %v6965
    %v7521 = vunpack.c.h.b16 %v6965
    %v7522 = vunpack.c.l.b16 %v6966
    %v7523 = vunpack.c.h.b16 %v6966
    %v7524 = vunpack.c.l.b16 %v6967
    %v7525 = vunpack.c.h.b16 %v6967
    %v7526 = vunpack.c.l.b16 %v6968
    %v7527 = vunpack.c.h.b16 %v6968
    %v7528 = vunpack.c.l.b16 %v6969
    %v7529 = vunpack.c.h.b16 %v6969
    %v7530 = vunpack.c.l.b16 %v6970
    %v7531 = vunpack.c.h.b16 %v6970
    %v7532 = vunpack.c.l.b16 %v6971
    %v7533 = vunpack.c.h.b16 %v6971
    %v7534 = vunpack.c.l.b16 %v6972
    %v7535 = vunpack.c.h.b16 %v6972
    %v7536 = vunpack.c.l.b16 %v6973
    %v7537 = vunpack.c.h.b16 %v6973
    %v7538 = vunpack.c.l.b16 %v6974
    %v7539 = vunpack.c.h.b16 %v6974
    %v7540 = vunpack.c.l.b16 %v6975
    %v7541 = vunpack.c.h.b16 %v6975
    %v7542 = vunpack.c.l.b16 %v6976
    %v7543 = vunpack.c.h.b16 %v6976
    %v7544 = vunpack.c.l.b16 %v6977
    %v7545 = vunpack.c.h.b16 %v6977
    %v7546 = vunpack.c.l.b16 %v6978
    %v7547 = vunpack.c.h.b16 %v6978
    %v7548 = vunpack.c.l.b16 %v6979
    %v7549 = vunpack.c.h.b16 %v6979
    %v7550 = vunpack.c.l.b16 %v6980
    %v7551 = vunpack.c.h.b16 %v6980
    %v7552 = vunpack.c.l.b16 %v6981
    %v7553 = vunpack.c.h.b16 %v6981
    %v7554 = vunpack.c.l.b16 %v6982
    %v7555 = vunpack.c.h.b16 %v6982
    %v7556 = vunpack.c.l.b16 %v6983
    %v7557 = vunpack.c.h.b16 %v6983
    %v7558 = vunpack.c.l.b16 %v6984
    %v7559 = vunpack.c.h.b16 %v6984
    %v7560 = vunpack.c.l.b16 %v6985
    %v7561 = vunpack.c.h.b16 %v6985
    %v7562 = vunpack.c.l.b16 %v6986
    %v7563 = vunpack.c.h.b16 %v6986
    %v7564 = vunpack.c.l.b16 %v6987
    %v7565 = vunpack.c.h.b16 %v6987
    %v7566 = vunpack.c.l.b16 %v6988
    %v7567 = vunpack.c.h.b16 %v6988
    %v7568 = vunpack.c.l.b16 %v6989
    %v7569 = vunpack.c.h.b16 %v6989
    %v7570 = vunpack.c.l.b16 %v6990
    %v7571 = vunpack.c.h.b16 %v6990
    %v7572 = vunpack.c.l.b16 %v6991
    %v7573 = vunpack.c.h.b16 %v6991
    %v7574 = vunpack.c.l.b16 %v6992
    %v7575 = vunpack.c.h.b16 %v6992
    %v7576 = vunpack.c.l.b16 %v6993
    %v7577 = vunpack.c.h.b16 %v6993
    %v7578 = vunpack.c.l.b16 %v6994
    %v7579 = vunpack.c.h.b16 %v6994
    %v7580 = vunpack.c.l.b16 %v6995
    %v7581 = vunpack.c.h.b16 %v6995
    %v7582 = vunpack.c.l.b16 %v6996
    %v7583 = vunpack.c.h.b16 %v6996
    %v7584 = vunpack.c.l.b16 %v6997
    %v7585 = vunpack.c.h.b16 %v6997
    %v7586 = vunpack.c.l.b16 %v6998
    %v7587 = vunpack.c.h.b16 %v6998
    %v7588 = vunpack.c.l.b16 %v6999
    %v7589 = vunpack.c.h.b16 %v6999
    %v7590 = vunpack.c.l.b16 %v7000
    %v7591 = vunpack.c.h.b16 %v7000
    %v7592 = vunpack.c.l.b16 %v7001
    %v7593 = vunpack.c.h.b16 %v7001
    %v7594 = vunpack.c.l.b16 %v7002
    %v7595 = vunpack.c.h.b16 %v7002
    %v7596 = vunpack.c.l.b16 %v7003
    %v7597 = vunpack.c.h.b16 %v7003
    %v7598 = vunpack.c.l.b16 %v7004
    %v7599 = vunpack.c.h.b16 %v7004
    %v7600 = vunpack.c.l.b16 %v7005
    %v7601 = vunpack.c.h.b16 %v7005
    %v7602 = vunpack.c.l.b16 %v7006
    %v7603 = vunpack.c.h.b16 %v7006
    %v7604 = vunpack.c.l.b16 %v7007
    %v7605 = vunpack.c.h.b16 %v7007
    %v7606 = vunpack.c.l.b16 %v7008
    %v7607 = vunpack.c.h.b16 %v7008
    %v7608 = vunpack.c.l.b16 %v7009
    %v7609 = vunpack.c.h.b16 %v7009
    %v7610 = vunpack.c.l.b16 %v7010
    %v7611 = vunpack.c.h.b16 %v7010
    %v7612 = vunpack.c.l.b16 %v7011
    %v7613 = vunpack.c.h.b16 %v7011
    %v7614 = vunpack.c.l.b16 %v7012
    %v7615 = vunpack.c.h.b16 %v7012
    %v7616 = vunpack.c.l.b16 %v7013
    %v7617 = vunpack.c.h.b16 %v7013
    %v7618 = vunpack.c.l.b16 %v7014
    %v7619 = vunpack.c.h.b16 %v7014
    %v7620 = vunpack.c.l.b16 %v7015
    %v7621 = vunpack.c.h.b16 %v7015
    %v7622 = vunpack.c.l.b16 %v7016
    %v7623 = vunpack.c.h.b16 %v7016
    %v7624 = vunpack.c.l.b16 %v7017
    %v7625 = vunpack.c.h.b16 %v7017
    %v7626 = vunpack.c.l.b16 %v7018
    %v7627 = vunpack.c.h.b16 %v7018
    %v7628 = vunpack.c.l.b16 %v7019
    %v7629 = vunpack.c.h.b16 %v7019
    %v7630 = vunpack.c.l.b16 %v7020
    %v7631 = vunpack.c.h.b16 %v7020
    %v7632 = vunpack.c.l.b16 %v7021
    %v7633 = vunpack.c.h.b16 %v7021
    %v7634 = vunpack.c.l.b16 %v7022
    %v7635 = vunpack.c.h.b16 %v7022
    %v7636 = vunpack.c.l.b16 %v7023
    %v7637 = vunpack.c.h.b16 %v7023
    %v7638 = vunpack.c.l.b16 %v7024
    %v7639 = vunpack.c.h.b16 %v7024
    %v7640 = vunpack.c.l.b16 %v7025
    %v7641 = vunpack.c.h.b16 %v7025
    %v7642 = vunpack.c.l.b16 %v7026
    %v7643 = vunpack.c.h.b16 %v7026
    %v7644 = vunpack.c.l.b16 %v7027
    %v7645 = vunpack.c.h.b16 %v7027
    %v7646 = vunpack.c.l.b16 %v7028
    %v7647 = vunpack.c.h.b16 %v7028
    %v7648 = vunpack.c.l.b16 %v7029
    %v7649 = vunpack.c.h.b16 %v7029
    %v7650 = vunpack.c.l.b16 %v7030
    %v7651 = vunpack.c.h.b16 %v7030
    %v7652 = vunpack.c.l.b16 %v7031
    %v7653 = vunpack.c.h.b16 %v7031
    %v7654 = vunpack.c.l.b16 %v7032
    %v7655 = vunpack.c.h.b16 %v7032
    %v7656 = vunpack.c.l.b16 %v7033
    %v7657 = vunpack.c.h.b16 %v7033
    %v7658 = vunpack.c.l.b16 %v7034
    %v7659 = vunpack.c.h.b16 %v7034
    %v7660 = vunpack.c.l.b16 %v7035
    %v7661 = vunpack.c.h.b16 %v7035
    %v7662 = vunpack.c.l.b16 %v7036
    %v7663 = vunpack.c.h.b16 %v7036
    %v7664 = vunpack.c.l.b16 %v7037
    %v7665 = vunpack.c.h.b16 %v7037
    %v7666 = vunpack.c.l.b16 %v7038
    %v7667 = vunpack.c.h.b16 %v7038
    %v7668 = vunpack.c.l.b16 %v7039
    %v7669 = vunpack.c.h.b16 %v7039
    %v7670 = vunpack.c.l.b16 %v7040
    %v7671 = vunpack.c.h.b16 %v7040
    %v7672 = vunpack.c.l.b16 %v7041
    %v7673 = vunpack.c.h.b16 %v7041
    %v7674 = vunpack.c.l.b16 %v7042
    %v7675 = vunpack.c.h.b16 %v7042
    %v7676 = vunpack.c.l.b16 %v7043
    %v7677 = vunpack.c.h.b16 %v7043
    %v7678 = vunpack.c.l.b16 %v7044
    %v7679 = vunpack.c.h.b16 %v7044
    %v7680 = vunpack.c.l.b16 %v7045
    %v7681 = vunpack.c.h.b16 %v7045
    %v7682 = vunpack.c.l.b16 %v7046
    %v7683 = vunpack.c.h.b16 %v7046
    %v7684 = vunpack.c.l.b16 %v7047
    %v7685 = vunpack.c.h.b16 %v7047
    %v7686 = vunpack.c.l.b16 %v7048
    %v7687 = vunpack.c.h.b16 %v7048
    %v7688 = vunpack.c.l.b16 %v7049
    %v7689 = vunpack.c.h.b16 %v7049
    %v7690 = vunpack.c.l.b16 %v7050
    %v7691 = vunpack.c.h.b16 %v7050
    %v7692 = vunpack.c.l.b16 %v7051
    %v7693 = vunpack.c.h.b16 %v7051
    %v7694 = vunpack.c.l.b16 %v7052
    %v7695 = vunpack.c.h.b16 %v7052
    %v7696 = vunpack.c.l.b16 %v7053
    %v7697 = vunpack.c.h.b16 %v7053
    %v7698 = vunpack.c.l.b16 %v7054
    %v7699 = vunpack.c.h.b16 %v7054
    %v7700 = vunpack.c.l.b16 %v7055
    %v7701 = vunpack.c.h.b16 %v7055
    %v7702 = vunpack.c.l.b16 %v7056
    %v7703 = vunpack.c.h.b16 %v7056
    %v7704 = vunpack.c.l.b16 %v7057
    %v7705 = vunpack.c.h.b16 %v7057
    %v7706 = vunpack.c.l.b16 %v7058
    %v7707 = vunpack.c.h.b16 %v7058
    %v7708 = vunpack.c.l.b16 %v7059
    %v7709 = vunpack.c.h.b16 %v7059
    %v7710 = vunpack.c.l.b16 %v7060
    %v7711 = vunpack.c.h.b16 %v7060
    %v7712 = vunpack.c.l.b16 %v7061
    %v7713 = vunpack.c.h.b16 %v7061
    %v7714 = vunpack.c.l.b16 %v7062
    %v7715 = vunpack.c.h.b16 %v7062
    %v7716 = vunpack.c.l.b16 %v7063
    %v7717 = vunpack.c.h.b16 %v7063
    %v7718 = vunpack.c.l.b16 %v7064
    %v7719 = vunpack.c.h.b16 %v7064
    %v7720 = vunpack.c.l.b16 %v7065
    %v7721 = vunpack.c.h.b16 %v7065
    %v7722 = vunpack.c.l.b16 %v7066
    %v7723 = vunpack.c.h.b16 %v7066
    %v7724 = vunpack.c.l.b16 %v7067
    %v7725 = vunpack.c.h.b16 %v7067
    %v7726 = vunpack.c.l.b16 %v7068
    %v7727 = vunpack.c.h.b16 %v7068
    %v7728 = vunpack.c.l.b16 %v7069
    %v7729 = vunpack.c.h.b16 %v7069
    %v7730 = vunpack.c.l.b16 %v7070
    %v7731 = vunpack.c.h.b16 %v7070
    %v7732 = vunpack.c.l.b16 %v7071
    %v7733 = vunpack.c.h.b16 %v7071
    %v7734 = vunpack.c.l.b16 %v7072
    %v7735 = vunpack.c.h.b16 %v7072
    %v7736 = vunpack.c.l.b16 %v7073
    %v7737 = vunpack.c.h.b16 %v7073
    %v7738 = vunpack.c.l.b16 %v7074
    %v7739 = vunpack.c.h.b16 %v7074
    %v7740 = vunpack.c.l.b16 %v7075
    %v7741 = vunpack.c.h.b16 %v7075
    %v7742 = vunpack.c.l.b16 %v7076
    %v7743 = vunpack.c.h.b16 %v7076
    %v7744 = vunpack.c.l.b16 %v7077
    %v7745 = vunpack.c.h.b16 %v7077
    %v7746 = vunpack.c.l.b16 %v7078
    %v7747 = vunpack.c.h.b16 %v7078
    %v7748 = vunpack.c.l.b16 %v7079
    %v7749 = vunpack.c.h.b16 %v7079
    %v7750 = vunpack.c.l.b16 %v7080
    %v7751 = vunpack.c.h.b16 %v7080
    %v7752 = vunpack.c.l.b16 %v7081
    %v7753 = vunpack.c.h.b16 %v7081
    %v7754 = vunpack.c.l.b16 %v7082
    %v7755 = vunpack.c.h.b16 %v7082
    %v7756 = vunpack.c.l.b16 %v7083
    %v7757 = vunpack.c.h.b16 %v7083
    %v7758 = vunpack.c.l.b16 %v7084
    %v7759 = vunpack.c.h.b16 %v7084
    %v7760 = vunpack.c.l.b16 %v7085
    %v7761 = vunpack.c.h.b16 %v7085
    %v7762 = vunpack.c.l.b16 %v7086
    %v7763 = vunpack.c.h.b16 %v7086
    %v7764 = vunpack.c.l.b16 %v7087
    %v7765 = vunpack.c.h.b16 %v7087
    %v7766 = vunpack.c.l.b16 %v7088
    %v7767 = vunpack.c.h.b16 %v7088
    %v7768 = vunpack.c.l.b16 %v7089
    %v7769 = vunpack.c.h.b16 %v7089
    %v7770 = vunpack.c.l.b16 %v7090
    %v7771 = vunpack.c.h.b16 %v7090
    %v7772 = vunpack.c.l.b16 %v7091
    %v7773 = vunpack.c.h.b16 %v7091
    %v7774 = vunpack.c.l.b16 %v7092
    %v7775 = vunpack.c.h.b16 %v7092
    %v7776 = vunpack.c.l.b16 %v7093
    %v7777 = vunpack.c.h.b16 %v7093
    %v7778 = vunpack.c.l.b16 %v7094
    %v7779 = vunpack.c.h.b16 %v7094
    %v7780 = vunpack.c.l.b16 %v7095
    %v7781 = vunpack.c.h.b16 %v7095
    %v7782 = vunpack.c.l.b16 %v7096
    %v7783 = vunpack.c.h.b16 %v7096
    %v7784 = vunpack.c.l.b16 %v7097
    %v7785 = vunpack.c.h.b16 %v7097
    %v7786 = vunpack.c.l.b16 %v7098
    %v7787 = vunpack.c.h.b16 %v7098
    %v7788 = vunpack.c.l.b16 %v7099
    %v7789 = vunpack.c.h.b16 %v7099
    %v7790 = vunpack.c.l.b16 %v7100
    %v7791 = vunpack.c.h.b16 %v7100
    %v7792 = vunpack.c.l.b16 %v7101
    %v7793 = vunpack.c.h.b16 %v7101
    %v7794 = vunpack.c.l.b16 %v7102
    %v7795 = vunpack.c.h.b16 %v7102
    %v7796 = vunpack.c.l.b16 %v7103
    %v7797 = vunpack.c.h.b16 %v7103
    %v7798 = vunpack.c.l.b16 %v7104
    %v7799 = vunpack.c.h.b16 %v7104
    %v7800 = vunpack.c.l.b16 %v7105
    %v7801 = vunpack.c.h.b16 %v7105
    %v7802 = vunpack.c.l.b16 %v7106
    %v7803 = vunpack.c.h.b16 %v7106
    %v7804 = vunpack.c.l.b16 %v7107
    %v7805 = vunpack.c.h.b16 %v7107
    %v7806 = vunpack.c.l.b16 %v7108
    %v7807 = vunpack.c.h.b16 %v7108
    %v7808 = vunpack.c.l.b16 %v7109
    %v7809 = vunpack.c.h.b16 %v7109
    %v7810 = vunpack.c.l.b16 %v7110
    %v7811 = vunpack.c.h.b16 %v7110
    %v7812 = vunpack.c.l.b16 %v7111
    %v7813 = vunpack.c.h.b16 %v7111
    %v7814 = vunpack.c.l.b16 %v7112
    %v7815 = vunpack.c.h.b16 %v7112
    %v7816 = vunpack.c.l.b16 %v7113
    %v7817 = vunpack.c.h.b16 %v7113
    %v7818 = vunpack.c.l.b16 %v7114
    %v7819 = vunpack.c.h.b16 %v7114
    %v7820 = vunpack.c.l.b16 %v7115
    %v7821 = vunpack.c.h.b16 %v7115
    %v7822 = vunpack.c.l.b16 %v7116
    %v7823 = vunpack.c.h.b16 %v7116
    %v7824 = vunpack.c.l.b16 %v7117
    %v7825 = vunpack.c.h.b16 %v7117
    %v7826 = vunpack.c.l.b16 %v7118
    %v7827 = vunpack.c.h.b16 %v7118
    %v7828 = vunpack.c.l.b16 %v7119
    %v7829 = vunpack.c.h.b16 %v7119
    %v7830 = vunpack.c.l.b16 %v7120
    %v7831 = vunpack.c.h.b16 %v7120
    %v7832 = vunpack.c.l.b16 %v7121
    %v7833 = vunpack.c.h.b16 %v7121
    %v7834 = vunpack.c.l.b16 %v7122
    %v7835 = vunpack.c.h.b16 %v7122
    %v7836 = vunpack.c.l.b16 %v7123
    %v7837 = vunpack.c.h.b16 %v7123
    %v7838 = vunpack.c.l.b16 %v7124
    %v7839 = vunpack.c.h.b16 %v7124
    %v7840 = vunpack.c.l.b16 %v7125
    %v7841 = vunpack.c.h.b16 %v7125
    %v7842 = vunpack.c.l.b16 %v7126
    %v7843 = vunpack.c.h.b16 %v7126
    %v7844 = vunpack.c.l.b16 %v7127
    %v7845 = vunpack.c.h.b16 %v7127
    %v7846 = vunpack.c.l.b16 %v7128
    %v7847 = vunpack.c.h.b16 %v7128
    %v7848 = vunpack.c.l.b16 %v7129
    %v7849 = vunpack.c.h.b16 %v7129
    %v7850 = vunpack.c.l.b16 %v7130
    %v7851 = vunpack.c.h.b16 %v7130
    %v7852 = vunpack.c.l.b16 %v7131
    %v7853 = vunpack.c.h.b16 %v7131
    %v7854 = vunpack.c.l.b16 %v7132
    %v7855 = vunpack.c.h.b16 %v7132
    %v7856 = vunpack.c.l.b16 %v7133
    %v7857 = vunpack.c.h.b16 %v7133
    %v7858 = vunpack.c.l.b16 %v7134
    %v7859 = vunpack.c.h.b16 %v7134
    %v7860 = vunpack.c.l.b16 %v7135
    %v7861 = vunpack.c.h.b16 %v7135
    %v7862 = vunpack.c.l.b16 %v7136
    %v7863 = vunpack.c.h.b16 %v7136
    %v7864 = vunpack.c.l.b16 %v7137
    %v7865 = vunpack.c.h.b16 %v7137
    %v7866 = vunpack.c.l.b16 %v7138
    %v7867 = vunpack.c.h.b16 %v7138
    %v7868 = vunpack.c.l.b16 %v7139
    %v7869 = vunpack.c.h.b16 %v7139
    %v7870 = vunpack.c.l.b16 %v7140
    %v7871 = vunpack.c.h.b16 %v7140
    %v7872 = vunpack.c.l.b16 %v7141
    %v7873 = vunpack.c.h.b16 %v7141
    %v7874 = vunpack.c.l.b16 %v7142
    %v7875 = vunpack.c.h.b16 %v7142
    %v7876 = vunpack.c.l.b16 %v7143
    %v7877 = vunpack.c.h.b16 %v7143
    %v7878 = vunpack.c.l.b16 %v7144
    %v7879 = vunpack.c.h.b16 %v7144
    %v7880 = vunpack.c.l.b16 %v7145
    %v7881 = vunpack.c.h.b16 %v7145
    %v7882 = vunpack.c.l.b16 %v7146
    %v7883 = vunpack.c.h.b16 %v7146
    %v7884 = vunpack.c.l.b16 %v7147
    %v7885 = vunpack.c.h.b16 %v7147
    %v7886 = vunpack.c.l.b16 %v7148
    %v7887 = vunpack.c.h.b16 %v7148
    %v7888 = vunpack.c.l.b16 %v7149
    %v7889 = vunpack.c.h.b16 %v7149
    %v7890 = vunpack.c.l.b16 %v7150
    %v7891 = vunpack.c.h.b16 %v7150
    %v7892 = vunpack.c.l.b16 %v7151
    %v7893 = vunpack.c.h.b16 %v7151
    %v7894 = vunpack.c.l.b16 %v7152
    %v7895 = vunpack.c.h.b16 %v7152
    %v7896 = vunpack.c.l.b16 %v7153
    %v7897 = vunpack.c.h.b16 %v7153
    %v7898 = vunpack.c.l.b16 %v7154
    %v7899 = vunpack.c.h.b16 %v7154
    %v7900 = vunpack.c.l.b16 %v7155
    %v7901 = vunpack.c.h.b16 %v7155
    %v7902 = vunpack.c.l.b16 %v7156
    %v7903 = vunpack.c.h.b16 %v7156
    %v7904 = vunpack.c.l.b16 %v7157
    %v7905 = vunpack.c.h.b16 %v7157
    %v7906 = vunpack.c.l.b16 %v7158
    %v7907 = vunpack.c.h.b16 %v7158
    %v7908 = vunpack.c.l.b16 %v7159
    %v7909 = vunpack.c.h.b16 %v7159
    %v7910 = vunpack.c.l.b16 %v7160
    %v7911 = vunpack.c.h.b16 %v7160
    %v7912 = vunpack.c.l.b16 %v7161
    %v7913 = vunpack.c.h.b16 %v7161
    %v7914 = vunpack.c.l.b16 %v7162
    %v7915 = vunpack.c.h.b16 %v7162
    %v7916 = vunpack.c.l.b16 %v7163
    %v7917 = vunpack.c.h.b16 %v7163
    %v7918 = vunpack.c.l.b16 %v7164
    %v7919 = vunpack.c.h.b16 %v7164
    %v7920 = vunpack.c.l.b16 %v7165
    %v7921 = vunpack.c.h.b16 %v7165
    %v7922 = vunpack.c.l.b16 %v7166
    %v7923 = vunpack.c.h.b16 %v7166
    %v7924 = vunpack.c.l.b16 %v7167
    %v7925 = vunpack.c.h.b16 %v7167
    %v7926 = vunpack.c.l.b16 %v7168
    %v7927 = vunpack.c.h.b16 %v7168
    %v7928 = vunpack.c.l.b16 %v7169
    %v7929 = vunpack.c.h.b16 %v7169
    %v7930 = vunpack.c.l.b16 %v7170
    %v7931 = vunpack.c.h.b16 %v7170
    %v7932 = vunpack.c.l.b16 %v7171
    %v7933 = vunpack.c.h.b16 %v7171
    %v7934 = vunpack.c.l.b16 %v7172
    %v7935 = vunpack.c.h.b16 %v7172
    %v7936 = vunpack.c.l.b16 %v7173
    %v7937 = vunpack.c.h.b16 %v7173
    %v7938 = vunpack.c.l.b16 %v7174
    %v7939 = vunpack.c.h.b16 %v7174
    %v7940 = vunpack.c.l.b16 %v7175
    %v7941 = vunpack.c.h.b16 %v7175
    %v7942 = vunpack.c.l.b16 %v7176
    %v7943 = vunpack.c.h.b16 %v7176
    %v7944 = vunpack.c.l.b16 %v7177
    %v7945 = vunpack.c.h.b16 %v7177
    %v7946 = vunpack.c.l.b16 %v7178
    %v7947 = vunpack.c.h.b16 %v7178
    %v7948 = vunpack.c.l.b16 %v7179
    %v7949 = vunpack.c.h.b16 %v7179
    %v7950 = vunpack.c.l.b16 %v7180
    %v7951 = vunpack.c.h.b16 %v7180
    %v7952 = vunpack.c.l.b16 %v7181
    %v7953 = vunpack.c.h.b16 %v7181
    %v7954 = vunpack.c.l.b16 %v7182
    %v7955 = vunpack.c.h.b16 %v7182
    %v7956 = vunpack.c.l.b16 %v7183
    %v7957 = vunpack.c.h.b16 %v7183
    %v7958 = vunpack.c.l.b16 %v7184
    %v7959 = vunpack.c.h.b16 %v7184
    %v7960 = vunpack.c.l.b16 %v7185
    %v7961 = vunpack.c.h.b16 %v7185
    %v7962 = vunpack.c.l.b16 %v7186
    %v7963 = vunpack.c.h.b16 %v7186
    %v7964 = vunpack.c.l.b16 %v7187
    %v7965 = vunpack.c.h.b16 %v7187
    %v7966 = vunpack.c.l.b16 %v7188
    %v7967 = vunpack.c.h.b16 %v7188
    %v7968 = vunpack.c.l.b16 %v7189
    %v7969 = vunpack.c.h.b16 %v7189
    %v7970 = vunpack.c.l.b16 %v7190
    %v7971 = vunpack.c.h.b16 %v7190
    %v7972 = vunpack.c.l.b16 %v7191
    %v7973 = vunpack.c.h.b16 %v7191
    %v7974 = vunpack.c.l.b16 %v7192
    %v7975 = vunpack.c.h.b16 %v7192
    %v7976 = vunpack.c.l.b16 %v7193
    %v7977 = vunpack.c.h.b16 %v7193
    %v7978 = vunpack.c.l.b16 %v7194
    %v7979 = vunpack.c.h.b16 %v7194
    %v7980 = vunpack.c.l.b16 %v7195
    %v7981 = vunpack.c.h.b16 %v7195
    %v7982 = vunpack.c.l.b16 %v7196
    %v7983 = vunpack.c.h.b16 %v7196
    %v7984 = vunpack.c.l.b16 %v7197
    %v7985 = vunpack.c.h.b16 %v7197
    %v7986 = vunpack.c.l.b16 %v7198
    %v7987 = vunpack.c.h.b16 %v7198
    %v7988 = vunpack.c.l.b16 %v7199
    %v7989 = vunpack.c.h.b16 %v7199
    %v7990 = vpack.c.b16 %v7482, %v7478
    %v7991 = vpack.c.b16 %v7483, %v7479
    %v7992 = vpack.c.b16 %v7484, %v7480
    %v7993 = vpack.c.b16 %v7485, %v7481
    %v7994 = vpack.c.b16 %v7490, %v7486
    %v7995 = vpack.c.b16 %v7491, %v7487
    %v7996 = vpack.c.b16 %v7492, %v7488
    %v7997 = vpack.c.b16 %v7493, %v7489
    %v7998 = vpack.c.b16 %v7498, %v7494
    %v7999 = vpack.c.b16 %v7499, %v7495
    %v8000 = vpack.c.b16 %v7500, %v7496
    %v8001 = vpack.c.b16 %v7501, %v7497
    %v8002 = vpack.c.b16 %v7506, %v7502
    %v8003 = vpack.c.b16 %v7507, %v7503
    %v8004 = vpack.c.b16 %v7508, %v7504
    %v8005 = vpack.c.b16 %v7509, %v7505
    %v8006 = vpack.c.b16 %v7514, %v7510
    %v8007 = vpack.c.b16 %v7515, %v7511
    %v8008 = vpack.c.b16 %v7516, %v7512
    %v8009 = vpack.c.b16 %v7517, %v7513
    %v8010 = vpack.c.b16 %v7522, %v7518
    %v8011 = vpack.c.b16 %v7523, %v7519
    %v8012 = vpack.c.b16 %v7524, %v7520
    %v8013 = vpack.c.b16 %v7525, %v7521
    %v8014 = vpack.c.b16 %v7530, %v7526
    %v8015 = vpack.c.b16 %v7531, %v7527
    %v8016 = vpack.c.b16 %v7532, %v7528
    %v8017 = vpack.c.b16 %v7533, %v7529
    %v8018 = vpack.c.b16 %v7538, %v7534
    %v8019 = vpack.c.b16 %v7539, %v7535
    %v8020 = vpack.c.b16 %v7540, %v7536
    %v8021 = vpack.c.b16 %v7541, %v7537
    %v8022 = vpack.c.b16 %v7546, %v7542
    %v8023 = vpack.c.b16 %v7547, %v7543
    %v8024 = vpack.c.b16 %v7548, %v7544
    %v8025 = vpack.c.b16 %v7549, %v7545
    %v8026 = vpack.c.b16 %v7554, %v7550
    %v8027 = vpack.c.b16 %v7555, %v7551
    %v8028 = vpack.c.b16 %v7556, %v7552
    %v8029 = vpack.c.b16 %v7557, %v7553
    %v8030 = vpack.c.b16 %v7562, %v7558
    %v8031 = vpack.c.b16 %v7563, %v7559
    %v8032 = vpack.c.b16 %v7564, %v7560
    %v8033 = vpack.c.b16 %v7565, %v7561
    %v8034 = vpack.c.b16 %v7570, %v7566
    %v8035 = vpack.c.b16 %v7571, %v7567
    %v8036 = vpack.c.b16 %v7572, %v7568
    %v8037 = vpack.c.b16 %v7573, %v7569
    %v8038 = vpack.c.b16 %v7578, %v7574
    %v8039 = vpack.c.b16 %v7579, %v7575
    %v8040 = vpack.c.b16 %v7580, %v7576
    %v8041 = vpack.c.b16 %v7581, %v7577
    %v8042 = vpack.c.b16 %v7586, %v7582
    %v8043 = vpack.c.b16 %v7587, %v7583
    %v8044 = vpack.c.b16 %v7588, %v7584
    %v8045 = vpack.c.b16 %v7589, %v7585
    %v8046 = vpack.c.b16 %v7594, %v7590
    %v8047 = vpack.c.b16 %v7595, %v7591
    %v8048 = vpack.c.b16 %v7596, %v7592
    %v8049 = vpack.c.b16 %v7597, %v7593
    %v8050 = vpack.c.b16 %v7602, %v7598
    %v8051 = vpack.c.b16 %v7603, %v7599
    %v8052 = vpack.c.b16 %v7604, %v7600
    %v8053 = vpack.c.b16 %v7605, %v7601
    %v8054 = vpack.c.b16 %v7610, %v7606
    %v8055 = vpack.c.b16 %v7611, %v7607
    %v8056 = vpack.c.b16 %v7612, %v7608
    %v8057 = vpack.c.b16 %v7613, %v7609
    %v8058 = vpack.c.b16 %v7618, %v7614
    %v8059 = vpack.c.b16 %v7619, %v7615
    %v8060 = vpack.c.b16 %v7620, %v7616
    %v8061 = vpack.c.b16 %v7621, %v7617
    %v8062 = vpack.c.b16 %v7626, %v7622
    %v8063 = vpack.c.b16 %v7627, %v7623
    %v8064 = vpack.c.b16 %v7628, %v7624
    %v8065 = vpack.c.b16 %v7629, %v7625
    %v8066 = vpack.c.b16 %v7634, %v7630
    %v8067 = vpack.c.b16 %v7635, %v7631
    %v8068 = vpack.c.b16 %v7636, %v7632
    %v8069 = vpack.c.b16 %v7637, %v7633
    %v8070 = vpack.c.b16 %v7642, %v7638
    %v8071 = vpack.c.b16 %v7643, %v7639
    %v8072 = vpack.c.b16 %v7644, %v7640
    %v8073 = vpack.c.b16 %v7645, %v7641
    %v8074 = vpack.c.b16 %v7650, %v7646
    %v8075 = vpack.c.b16 %v7651, %v7647
    %v8076 = vpack.c.b16 %v7652, %v7648
    %v8077 = vpack.c.b16 %v7653, %v7649
    %v8078 = vpack.c.b16 %v7658, %v7654
    %v8079 = vpack.c.b16 %v7659, %v7655
    %v8080 = vpack.c.b16 %v7660, %v7656
    %v8081 = vpack.c.b16 %v7661, %v7657
    %v8082 = vpack.c.b16 %v7666, %v7662
    %v8083 = vpack.c.b16 %v7667, %v7663
    %v8084 = vpack.c.b16 %v7668, %v7664
    %v8085 = vpack.c.b16 %v7669, %v7665
    %v8086 = vpack.c.b16 %v7674, %v7670
    %v8087 = vpack.c.b16 %v7675, %v7671
    %v8088 = vpack.c.b16 %v7676, %v7672
    %v8089 = vpack.c.b16 %v7677, %v7673
    %v8090 = vpack.c.b16 %v7682, %v7678
    %v8091 = vpack.c.b16 %v7683, %v7679
    %v8092 = vpack.c.b16 %v7684, %v7680
    %v8093 = vpack.c.b16 %v7685, %v7681
    %v8094 = vpack.c.b16 %v7690, %v7686
    %v8095 = vpack.c.b16 %v7691, %v7687
    %v8096 = vpack.c.b16 %v7692, %v7688
    %v8097 = vpack.c.b16 %v7693, %v7689
    %v8098 = vpack.c.b16 %v7698, %v7694
    %v8099 = vpack.c.b16 %v7699, %v7695
    %v8100 = vpack.c.b16 %v7700, %v7696
    %v8101 = vpack.c.b16 %v7701, %v7697
    %v8102 = vpack.c.b16 %v7706, %v7702
    %v8103 = vpack.c.b16 %v7707, %v7703
    %v8104 = vpack.c.b16 %v7708, %v7704
    %v8105 = vpack.c.b16 %v7709, %v7705
    %v8106 = vpack.c.b16 %v7714, %v7710
    %v8107 = vpack.c.b16 %v7715, %v7711
    %v8108 = vpack.c.b16 %v7716, %v7712
    %v8109 = vpack.c.b16 %v7717, %v7713
    %v8110 = vpack.c.b16 %v7722, %v7718
    %v8111 = vpack.c.b16 %v7723, %v7719
    %v8112 = vpack.c.b16 %v7724, %v7720
    %v8113 = vpack.c.b16 %v7725, %v7721
    %v8114 = vpack.c.b16 %v7730, %v7726
    %v8115 = vpack.c.b16 %v7731, %v7727
    %v8116 = vpack.c.b16 %v7732, %v7728
    %v8117 = vpack.c.b16 %v7733, %v7729
    %v8118 = vpack.c.b16 %v7738, %v7734
    %v8119 = vpack.c.b16 %v7739, %v7735
    %v8120 = vpack.c.b16 %v7740, %v7736
    %v8121 = vpack.c.b16 %v7741, %v7737
    %v8122 = vpack.c.b16 %v7746, %v7742
    %v8123 = vpack.c.b16 %v7747, %v7743
    %v8124 = vpack.c.b16 %v7748, %v7744
    %v8125 = vpack.c.b16 %v7749, %v7745
    %v8126 = vpack.c.b16 %v7754, %v7750
    %v8127 = vpack.c.b16 %v7755, %v7751
    %v8128 = vpack.c.b16 %v7756, %v7752
    %v8129 = vpack.c.b16 %v7757, %v7753
    %v8130 = vpack.c.b16 %v7762, %v7758
    %v8131 = vpack.c.b16 %v7763, %v7759
    %v8132 = vpack.c.b16 %v7764, %v7760
    %v8133 = vpack.c.b16 %v7765, %v7761
    %v8134 = vpack.c.b16 %v7770, %v7766
    %v8135 = vpack.c.b16 %v7771, %v7767
    %v8136 = vpack.c.b16 %v7772, %v7768
    %v8137 = vpack.c.b16 %v7773, %v7769
    %v8138 = vpack.c.b16 %v7778, %v7774
    %v8139 = vpack.c.b16 %v7779, %v7775
    %v8140 = vpack.c.b16 %v7780, %v7776
    %v8141 = vpack.c.b16 %v7781, %v7777
    %v8142 = vpack.c.b16 %v7786, %v7782
    %v8143 = vpack.c.b16 %v7787, %v7783
    %v8144 = vpack.c.b16 %v7788, %v7784
    %v8145 = vpack.c.b16 %v7789, %v7785
    %v8146 = vpack.c.b16 %v7794, %v7790
    %v8147 = vpack.c.b16 %v7795, %v7791
    %v8148 = vpack.c.b16 %v7796, %v7792
    %v8149 = vpack.c.b16 %v7797, %v7793
    %v8150 = vpack.c.b16 %v7802, %v7798
    %v8151 = vpack.c.b16 %v7803, %v7799
    %v8152 = vpack.c.b16 %v7804, %v7800
    %v8153 = vpack.c.b16 %v7805, %v7801
    %v8154 = vpack.c.b16 %v7810, %v7806
    %v8155 = vpack.c.b16 %v7811, %v7807
    %v8156 = vpack.c.b16 %v7812, %v7808
    %v8157 = vpack.c.b16 %v7813, %v7809
    %v8158 = vpack.c.b16 %v7818, %v7814
    %v8159 = vpack.c.b16 %v7819, %v7815
    %v8160 = vpack.c.b16 %v7820, %v7816
    %v8161 = vpack.c.b16 %v7821, %v7817
    %v8162 = vpack.c.b16 %v7826, %v7822
    %v8163 = vpack.c.b16 %v7827, %v7823
    %v8164 = vpack.c.b16 %v7828, %v7824
    %v8165 = vpack.c.b16 %v7829, %v7825
    %v8166 = vpack.c.b16 %v7834, %v7830
    %v8167 = vpack.c.b16 %v7835, %v7831
    %v8168 = vpack.c.b16 %v7836, %v7832
    %v8169 = vpack.c.b16 %v7837, %v7833
    %v8170 = vpack.c.b16 %v7842, %v7838
    %v8171 = vpack.c.b16 %v7843, %v7839
    %v8172 = vpack.c.b16 %v7844, %v7840
    %v8173 = vpack.c.b16 %v7845, %v7841
    %v8174 = vpack.c.b16 %v7850, %v7846
    %v8175 = vpack.c.b16 %v7851, %v7847
    %v8176 = vpack.c.b16 %v7852, %v7848
    %v8177 = vpack.c.b16 %v7853, %v7849
    %v8178 = vpack.c.b16 %v7858, %v7854
    %v8179 = vpack.c.b16 %v7859, %v7855
    %v8180 = vpack.c.b16 %v7860, %v7856
    %v8181 = vpack.c.b16 %v7861, %v7857
    %v8182 = vpack.c.b16 %v7866, %v7862
    %v8183 = vpack.c.b16 %v7867, %v7863
    %v8184 = vpack.c.b16 %v7868, %v7864
    %v8185 = vpack.c.b16 %v7869, %v7865
    %v8186 = vpack.c.b16 %v7874, %v7870
    %v8187 = vpack.c.b16 %v7875, %v7871
    %v8188 = vpack.c.b16 %v7876, %v7872
    %v8189 = vpack.c.b16 %v7877, %v7873
    %v8190 = vpack.c.b16 %v7882, %v7878
    %v8191 = vpack.c.b16 %v7883, %v7879
    %v8192 = vpack.c.b16 %v7884, %v7880
    %v8193 = vpack.c.b16 %v7885, %v7881
    %v8194 = vpack.c.b16 %v7890, %v7886
    %v8195 = vpack.c.b16 %v7891, %v7887
    %v8196 = vpack.c.b16 %v7892, %v7888
    %v8197 = vpack.c.b16 %v7893, %v7889
    %v8198 = vpack.c.b16 %v7898, %v7894
    %v8199 = vpack.c.b16 %v7899, %v7895
    %v8200 = vpack.c.b16 %v7900, %v7896
    %v8201 = vpack.c.b16 %v7901, %v7897
    %v8202 = vpack.c.b16 %v7906, %v7902
    %v8203 = vpack.c.b16 %v7907, %v7903
    %v8204 = vpack.c.b16 %v7908, %v7904
    %v8205 = vpack.c.b16 %v7909, %v7905
    %v8206 = vpack.c.b16 %v7914, %v7910
    %v8207 = vpack.c.b16 %v7915, %v7911
    %v8208 = vpack.c.b16 %v7916, %v7912
    %v8209 = vpack.c.b16 %v7917, %v7913
    %v8210 = vpack.c.b16 %v7922, %v7918
    %v8211 = vpack.c.b16 %v7923, %v7919
    %v8212 = vpack.c.b16 %v7924, %v7920
    %v8213 = vpack.c.b16 %v7925, %v7921
    %v8214 = vpack.c.b16 %v7930, %v7926
    %v8215 = vpack.c.b16 %v7931, %v7927
    %v8216 = vpack.c.b16 %v7932, %v7928
    %v8217 = vpack.c.b16 %v7933, %v7929
    %v8218 = vpack.c.b16 %v7938, %v7934
    %v8219 = vpack.c.b16 %v7939, %v7935
    %v8220 = vpack.c.b16 %v7940, %v7936
    %v8221 = vpack.c.b16 %v7941, %v7937
    %v8222 = vpack.c.b16 %v7946, %v7942
    %v8223 = vpack.c.b16 %v7947, %v7943
    %v8224 = vpack.c.b16 %v7948, %v7944
    %v8225 = vpack.c.b16 %v7949, %v7945
    %v8226 = vpack.c.b16 %v7954, %v7950
    %v8227 = vpack.c.b16 %v7955, %v7951
    %v8228 = vpack.c.b16 %v7956, %v7952
    %v8229 = vpack.c.b16 %v7957, %v7953
    %v8230 = vpack.c.b16 %v7962, %v7958
    %v8231 = vpack.c.b16 %v7963, %v7959
    %v8232 = vpack.c.b16 %v7964, %v7960
    %v8233 = vpack.c.b16 %v7965, %v7961
    %v8234 = vpack.c.b16 %v7970, %v7966
    %v8235 = vpack.c.b16 %v7971, %v7967
    %v8236 = vpack.c.b16 %v7972, %v7968
    %v8237 = vpack.c.b16 %v7973, %v7969
    %v8238 = vpack.c.b16 %v7978, %v7974
    %v8239 = vpack.c.b16 %v7979, %v7975
    %v8240 = vpack.c.b16 %v7980, %v7976
    %v8241 = vpack.c.b16 %v7981, %v7977
    %v8242 = vpack.c.b16 %v7986, %v7982
    %v8243 = vpack.c.b16 %v7987, %v7983
    %v8244 = vpack.c.b16 %v7988, %v7984
    %v8245 = vpack.c.b16 %v7989, %v7985
    %8502 = vmatprep.subr.bf16.mxu0 %v8019
    %8503 = vmatpush1.bf16.msra.mxu0 %v8018
    %8504 = vmatprep.subr.bf16.mxu0 %v8015
    %8505 = vmatpush1.bf16.msra.mxu0 %v8014
    %8506 = vmatprep.subr.bf16.mxu0 %v8011
    %8507 = vmatpush1.bf16.msra.mxu0 %v8010
    %8508 = vmatprep.subr.bf16.mxu0 %v8007
    %8509 = vmatpush1.bf16.msra.mxu0 %v8006
    %8510 = vmatprep.subr.bf16.mxu0 %v8003
    %8511 = vmatpush1.bf16.msra.mxu0 %v8002
    %8512 = vmatprep.subr.bf16.mxu0 %v7999
    %8513 = vmatpush1.bf16.msra.mxu0 %v7998
    %8514 = vmatprep.subr.bf16.mxu0 %v7995
    %8515 = vmatpush1.bf16.msra.mxu0 %v7994
    %8516 = vmatprep.subr.bf16.mxu0 %v7991
    %8517 = vmatpush1.bf16.msra.mxu0 %v7990
    %8518 = vmatprep.subr.bf16.mxu0 %v8051
    %8519 = vmatpush2.bf16.msra.mxu0 %v8050
    %8520 = vmatprep.subr.bf16.mxu0 %v8047
    %8521 = vmatpush2.bf16.msra.mxu0 %v8046
    %8522 = vmatprep.subr.bf16.mxu0 %v8043
    %8523 = vmatpush2.bf16.msra.mxu0 %v8042
    %8524 = vmatprep.subr.bf16.mxu0 %v8039
    %8525 = vmatpush2.bf16.msra.mxu0 %v8038
    %8526 = vmatprep.subr.bf16.mxu0 %v8035
    %8527 = vmatpush2.bf16.msra.mxu0 %v8034
    %8528 = vmatprep.subr.bf16.mxu0 %v8031
    %8529 = vmatpush2.bf16.msra.mxu0 %v8030
    %8530 = vmatprep.subr.bf16.mxu0 %v8027
    %8531 = vmatpush2.bf16.msra.mxu0 %v8026
    %8532 = vmatprep.subr.bf16.mxu0 %v8023
    %8533 = vmatpush2.bf16.msra.mxu0 %v8022
    %8534 = vmatprep.mubr.bf16.mxu0 %v6937
    %8535 = vmatmul.mubr.bf16.gmra.mxu0 %v6936
    %v8536 = vpop.f32.mrf.mxu0
    %v8537 = vadd.f32 %v7205, %v8536
    %v8538 = vpop.f32.mrf.mxu0
    %v8539 = vadd.f32 %v7209, %v8538
    %v8540 = vpop.f32.mrf.mxu0
    %v8541 = vadd.f32 %v7205, %v8540
    %v8542 = vpop.f32.mrf.mxu0
    %v8543 = vadd.f32 %v7209, %v8542
    %8544 = vdwg.mxu0
    %8545 = vmatprep.subr.bf16.mxu0 %v8083
    %8546 = vmatpush1.bf16.msra.mxu0 %v8082
    %8547 = vmatprep.subr.bf16.mxu0 %v8079
    %8548 = vmatpush1.bf16.msra.mxu0 %v8078
    %8549 = vmatprep.subr.bf16.mxu0 %v8075
    %8550 = vmatpush1.bf16.msra.mxu0 %v8074
    %8551 = vmatprep.subr.bf16.mxu0 %v8071
    %8552 = vmatpush1.bf16.msra.mxu0 %v8070
    %8553 = vmatprep.subr.bf16.mxu0 %v8067
    %8554 = vmatpush1.bf16.msra.mxu0 %v8066
    %8555 = vmatprep.subr.bf16.mxu0 %v8063
    %8556 = vmatpush1.bf16.msra.mxu0 %v8062
    %8557 = vmatprep.subr.bf16.mxu0 %v8059
    %8558 = vmatpush1.bf16.msra.mxu0 %v8058
    %8559 = vmatprep.subr.bf16.mxu0 %v8055
    %8560 = vmatpush1.bf16.msra.mxu0 %v8054
    %8561 = vmatprep.subr.bf16.mxu0 %v8115
    %8562 = vmatpush2.bf16.msra.mxu0 %v8114
    %8563 = vmatprep.subr.bf16.mxu0 %v8111
    %8564 = vmatpush2.bf16.msra.mxu0 %v8110
    %8565 = vmatprep.subr.bf16.mxu0 %v8107
    %8566 = vmatpush2.bf16.msra.mxu0 %v8106
    %8567 = vmatprep.subr.bf16.mxu0 %v8103
    %8568 = vmatpush2.bf16.msra.mxu0 %v8102
    %8569 = vmatprep.subr.bf16.mxu0 %v8099
    %8570 = vmatpush2.bf16.msra.mxu0 %v8098
    %8571 = vmatprep.subr.bf16.mxu0 %v8095
    %8572 = vmatpush2.bf16.msra.mxu0 %v8094
    %8573 = vmatprep.subr.bf16.mxu0 %v8091
    %8574 = vmatpush2.bf16.msra.mxu0 %v8090
    %8575 = vmatprep.subr.bf16.mxu0 %v8087
    %8576 = vmatpush2.bf16.msra.mxu0 %v8086
    %8577 = vmatprep.mubr.bf16.mxu0 %v6939
    %8578 = vmatmul.mubr.bf16.gmra.mxu0 %v6938
    %v8579 = vpop.f32.mrf.mxu0
    %v8580 = vadd.f32 %v8537, %v8579
    %v8581 = vpop.f32.mrf.mxu0
    %v8582 = vadd.f32 %v8539, %v8581
    %v8583 = vpop.f32.mrf.mxu0
    %v8584 = vadd.f32 %v8541, %v8583
    %v8585 = vpop.f32.mrf.mxu0
    %v8586 = vadd.f32 %v8543, %v8585
    %8587 = vdwg.mxu0
    %8588 = vmatprep.subr.bf16.mxu0 %v8147
    %8589 = vmatpush1.bf16.msra.mxu0 %v8146
    %8590 = vmatprep.subr.bf16.mxu0 %v8143
    %8591 = vmatpush1.bf16.msra.mxu0 %v8142
    %8592 = vmatprep.subr.bf16.mxu0 %v8139
    %8593 = vmatpush1.bf16.msra.mxu0 %v8138
    %8594 = vmatprep.subr.bf16.mxu0 %v8135
    %8595 = vmatpush1.bf16.msra.mxu0 %v8134
    %8596 = vmatprep.subr.bf16.mxu0 %v8131
    %8597 = vmatpush1.bf16.msra.mxu0 %v8130
    %8598 = vmatprep.subr.bf16.mxu0 %v8127
    %8599 = vmatpush1.bf16.msra.mxu0 %v8126
    %8600 = vmatprep.subr.bf16.mxu0 %v8123
    %8601 = vmatpush1.bf16.msra.mxu0 %v8122
    %8602 = vmatprep.subr.bf16.mxu0 %v8119
    %8603 = vmatpush1.bf16.msra.mxu0 %v8118
    %8604 = vmatprep.subr.bf16.mxu0 %v8179
    %8605 = vmatpush2.bf16.msra.mxu0 %v8178
    %8606 = vmatprep.subr.bf16.mxu0 %v8175
    %8607 = vmatpush2.bf16.msra.mxu0 %v8174
    %8608 = vmatprep.subr.bf16.mxu0 %v8171
    %8609 = vmatpush2.bf16.msra.mxu0 %v8170
    %8610 = vmatprep.subr.bf16.mxu0 %v8167
    %8611 = vmatpush2.bf16.msra.mxu0 %v8166
    %8612 = vmatprep.subr.bf16.mxu0 %v8163
    %8613 = vmatpush2.bf16.msra.mxu0 %v8162
    %8614 = vmatprep.subr.bf16.mxu0 %v8159
    %8615 = vmatpush2.bf16.msra.mxu0 %v8158
    %8616 = vmatprep.subr.bf16.mxu0 %v8155
    %8617 = vmatpush2.bf16.msra.mxu0 %v8154
    %8618 = vmatprep.subr.bf16.mxu0 %v8151
    %8619 = vmatpush2.bf16.msra.mxu0 %v8150
    %8620 = vmatprep.mubr.bf16.mxu0 %v6941
    %8621 = vmatmul.mubr.bf16.gmra.mxu0 %v6940
    %v8622 = vpop.f32.mrf.mxu0
    %v8623 = vadd.f32 %v8580, %v8622
    %v8624 = vpop.f32.mrf.mxu0
    %v8625 = vadd.f32 %v8582, %v8624
    %v8626 = vpop.f32.mrf.mxu0
    %v8627 = vadd.f32 %v8584, %v8626
    %v8628 = vpop.f32.mrf.mxu0
    %v8629 = vadd.f32 %v8586, %v8628
    %8630 = vdwg.mxu0
    %8631 = vmatprep.subr.bf16.mxu0 %v8211
    %8632 = vmatpush1.bf16.msra.mxu0 %v8210
    %8633 = vmatprep.subr.bf16.mxu0 %v8207
    %8634 = vmatpush1.bf16.msra.mxu0 %v8206
    %8635 = vmatprep.subr.bf16.mxu0 %v8203
    %8636 = vmatpush1.bf16.msra.mxu0 %v8202
    %8637 = vmatprep.subr.bf16.mxu0 %v8199
    %8638 = vmatpush1.bf16.msra.mxu0 %v8198
    %8639 = vmatprep.subr.bf16.mxu0 %v8195
    %8640 = vmatpush1.bf16.msra.mxu0 %v8194
    %8641 = vmatprep.subr.bf16.mxu0 %v8191
    %8642 = vmatpush1.bf16.msra.mxu0 %v8190
    %8643 = vmatprep.subr.bf16.mxu0 %v8187
    %8644 = vmatpush1.bf16.msra.mxu0 %v8186
    %8645 = vmatprep.subr.bf16.mxu0 %v8183
    %8646 = vmatpush1.bf16.msra.mxu0 %v8182
    %8647 = vmatprep.subr.bf16.mxu0 %v8243
    %8648 = vmatpush2.bf16.msra.mxu0 %v8242
    %8649 = vmatprep.subr.bf16.mxu0 %v8239
    %8650 = vmatpush2.bf16.msra.mxu0 %v8238
    %8651 = vmatprep.subr.bf16.mxu0 %v8235
    %8652 = vmatpush2.bf16.msra.mxu0 %v8234
    %8653 = vmatprep.subr.bf16.mxu0 %v8231
    %8654 = vmatpush2.bf16.msra.mxu0 %v8230
    %8655 = vmatprep.subr.bf16.mxu0 %v8227
    %8656 = vmatpush2.bf16.msra.mxu0 %v8226
    %8657 = vmatprep.subr.bf16.mxu0 %v8223
    %8658 = vmatpush2.bf16.msra.mxu0 %v8222
    %8659 = vmatprep.subr.bf16.mxu0 %v8219
    %8660 = vmatpush2.bf16.msra.mxu0 %v8218
    %8661 = vmatprep.subr.bf16.mxu0 %v8215
    %8662 = vmatpush2.bf16.msra.mxu0 %v8214
    %8663 = vmatprep.mubr.bf16.mxu0 %v6943
    %8664 = vmatmul.mubr.bf16.gmra.mxu0 %v6942
    %v8665 = vpop.f32.mrf.mxu0
    %v8666 = vadd.f32 %v8623, %v8665
    %v8667 = vpop.f32.mrf.mxu0
    %v8668 = vadd.f32 %v8625, %v8667
    %v8669 = vpop.f32.mrf.mxu0
    %v8670 = vadd.f32 %v8627, %v8669
    %v8671 = vpop.f32.mrf.mxu0
    %v8672 = vadd.f32 %v8629, %v8671
    %8673 = vdwg.mxu0
    %8674 = vmatprep.subr.bf16.mxu0 %v8021
    %8675 = vmatpush1.bf16.msra.mxu0 %v8020
    %8676 = vmatprep.subr.bf16.mxu0 %v8017
    %8677 = vmatpush1.bf16.msra.mxu0 %v8016
    %8678 = vmatprep.subr.bf16.mxu0 %v8013
    %8679 = vmatpush1.bf16.msra.mxu0 %v8012
    %8680 = vmatprep.subr.bf16.mxu0 %v8009
    %8681 = vmatpush1.bf16.msra.mxu0 %v8008
    %8682 = vmatprep.subr.bf16.mxu0 %v8005
    %8683 = vmatpush1.bf16.msra.mxu0 %v8004
    %8684 = vmatprep.subr.bf16.mxu0 %v8001
    %8685 = vmatpush1.bf16.msra.mxu0 %v8000
    %8686 = vmatprep.subr.bf16.mxu0 %v7997
    %8687 = vmatpush1.bf16.msra.mxu0 %v7996
    %8688 = vmatprep.subr.bf16.mxu0 %v7993
    %8689 = vmatpush1.bf16.msra.mxu0 %v7992
    %8690 = vmatprep.subr.bf16.mxu0 %v8053
    %8691 = vmatpush2.bf16.msra.mxu0 %v8052
    %8692 = vmatprep.subr.bf16.mxu0 %v8049
    %8693 = vmatpush2.bf16.msra.mxu0 %v8048
    %8694 = vmatprep.subr.bf16.mxu0 %v8045
    %8695 = vmatpush2.bf16.msra.mxu0 %v8044
    %8696 = vmatprep.subr.bf16.mxu0 %v8041
    %8697 = vmatpush2.bf16.msra.mxu0 %v8040
    %8698 = vmatprep.subr.bf16.mxu0 %v8037
    %8699 = vmatpush2.bf16.msra.mxu0 %v8036
    %8700 = vmatprep.subr.bf16.mxu0 %v8033
    %8701 = vmatpush2.bf16.msra.mxu0 %v8032
    %8702 = vmatprep.subr.bf16.mxu0 %v8029
    %8703 = vmatpush2.bf16.msra.mxu0 %v8028
    %8704 = vmatprep.subr.bf16.mxu0 %v8025
    %8705 = vmatpush2.bf16.msra.mxu0 %v8024
    %8706 = vmatprep.mubr.bf16.mxu0 %v6937
    %8707 = vmatmul.mubr.bf16.gmra.mxu0 %v6936
    %v8708 = vpop.f32.mrf.mxu0
    %v8709 = vadd.f32 %v7213, %v8708
    %v8710 = vpop.f32.mrf.mxu0
    %v8711 = vadd.f32 %v7217, %v8710
    %v8712 = vpop.f32.mrf.mxu0
    %v8713 = vadd.f32 %v7213, %v8712
    %v8714 = vpop.f32.mrf.mxu0
    %v8715 = vadd.f32 %v7217, %v8714
    %8716 = vdwg.mxu0
    %8717 = vmatprep.subr.bf16.mxu0 %v8085
    %8718 = vmatpush1.bf16.msra.mxu0 %v8084
    %8719 = vmatprep.subr.bf16.mxu0 %v8081
    %8720 = vmatpush1.bf16.msra.mxu0 %v8080
    %8721 = vmatprep.subr.bf16.mxu0 %v8077
    %8722 = vmatpush1.bf16.msra.mxu0 %v8076
    %8723 = vmatprep.subr.bf16.mxu0 %v8073
    %8724 = vmatpush1.bf16.msra.mxu0 %v8072
    %8725 = vmatprep.subr.bf16.mxu0 %v8069
    %8726 = vmatpush1.bf16.msra.mxu0 %v8068
    %8727 = vmatprep.subr.bf16.mxu0 %v8065
    %8728 = vmatpush1.bf16.msra.mxu0 %v8064
    %8729 = vmatprep.subr.bf16.mxu0 %v8061
    %8730 = vmatpush1.bf16.msra.mxu0 %v8060
    %8731 = vmatprep.subr.bf16.mxu0 %v8057
    %8732 = vmatpush1.bf16.msra.mxu0 %v8056
    %8733 = vmatprep.subr.bf16.mxu0 %v8117
    %8734 = vmatpush2.bf16.msra.mxu0 %v8116
    %8735 = vmatprep.subr.bf16.mxu0 %v8113
    %8736 = vmatpush2.bf16.msra.mxu0 %v8112
    %8737 = vmatprep.subr.bf16.mxu0 %v8109
    %8738 = vmatpush2.bf16.msra.mxu0 %v8108
    %8739 = vmatprep.subr.bf16.mxu0 %v8105
    %8740 = vmatpush2.bf16.msra.mxu0 %v8104
    %8741 = vmatprep.subr.bf16.mxu0 %v8101
    %8742 = vmatpush2.bf16.msra.mxu0 %v8100
    %8743 = vmatprep.subr.bf16.mxu0 %v8097
    %8744 = vmatpush2.bf16.msra.mxu0 %v8096
    %8745 = vmatprep.subr.bf16.mxu0 %v8093
    %8746 = vmatpush2.bf16.msra.mxu0 %v8092
    %8747 = vmatprep.subr.bf16.mxu0 %v8089
    %8748 = vmatpush2.bf16.msra.mxu0 %v8088
    %8749 = vmatprep.mubr.bf16.mxu0 %v6939
    %8750 = vmatmul.mubr.bf16.gmra.mxu0 %v6938
    %v8751 = vpop.f32.mrf.mxu0
    %v8752 = vadd.f32 %v8709, %v8751
    %v8753 = vpop.f32.mrf.mxu0
    %v8754 = vadd.f32 %v8711, %v8753
    %v8755 = vpop.f32.mrf.mxu0
    %v8756 = vadd.f32 %v8713, %v8755
    %v8757 = vpop.f32.mrf.mxu0
    %v8758 = vadd.f32 %v8715, %v8757
    %8759 = vdwg.mxu0
    %8760 = vmatprep.subr.bf16.mxu0 %v8149
    %8761 = vmatpush1.bf16.msra.mxu0 %v8148
    %8762 = vmatprep.subr.bf16.mxu0 %v8145
    %8763 = vmatpush1.bf16.msra.mxu0 %v8144
    %8764 = vmatprep.subr.bf16.mxu0 %v8141
    %8765 = vmatpush1.bf16.msra.mxu0 %v8140
    %8766 = vmatprep.subr.bf16.mxu0 %v8137
    %8767 = vmatpush1.bf16.msra.mxu0 %v8136
    %8768 = vmatprep.subr.bf16.mxu0 %v8133
    %8769 = vmatpush1.bf16.msra.mxu0 %v8132
    %8770 = vmatprep.subr.bf16.mxu0 %v8129
    %8771 = vmatpush1.bf16.msra.mxu0 %v8128
    %8772 = vmatprep.subr.bf16.mxu0 %v8125
    %8773 = vmatpush1.bf16.msra.mxu0 %v8124
    %8774 = vmatprep.subr.bf16.mxu0 %v8121
    %8775 = vmatpush1.bf16.msra.mxu0 %v8120
    %8776 = vmatprep.subr.bf16.mxu0 %v8181
    %8777 = vmatpush2.bf16.msra.mxu0 %v8180
    %8778 = vmatprep.subr.bf16.mxu0 %v8177
    %8779 = vmatpush2.bf16.msra.mxu0 %v8176
    %8780 = vmatprep.subr.bf16.mxu0 %v8173
    %8781 = vmatpush2.bf16.msra.mxu0 %v8172
    %8782 = vmatprep.subr.bf16.mxu0 %v8169
    %8783 = vmatpush2.bf16.msra.mxu0 %v8168
    %8784 = vmatprep.subr.bf16.mxu0 %v8165
    %8785 = vmatpush2.bf16.msra.mxu0 %v8164
    %8786 = vmatprep.subr.bf16.mxu0 %v8161
    %8787 = vmatpush2.bf16.msra.mxu0 %v8160
    %8788 = vmatprep.subr.bf16.mxu0 %v8157
    %8789 = vmatpush2.bf16.msra.mxu0 %v8156
    %8790 = vmatprep.subr.bf16.mxu0 %v8153
    %8791 = vmatpush2.bf16.msra.mxu0 %v8152
    %8792 = vmatprep.mubr.bf16.mxu0 %v6941
    %8793 = vmatmul.mubr.bf16.gmra.mxu0 %v6940
    %v8794 = vpop.f32.mrf.mxu0
    %v8795 = vadd.f32 %v8752, %v8794
    %v8796 = vpop.f32.mrf.mxu0
    %v8797 = vadd.f32 %v8754, %v8796
    %v8798 = vpop.f32.mrf.mxu0
    %v8799 = vadd.f32 %v8756, %v8798
    %v8800 = vpop.f32.mrf.mxu0
    %v8801 = vadd.f32 %v8758, %v8800
    %8802 = vdwg.mxu0
    %8803 = vmatprep.subr.bf16.mxu0 %v8213
    %8804 = vmatpush1.bf16.msra.mxu0 %v8212
    %8805 = vmatprep.subr.bf16.mxu0 %v8209
    %8806 = vmatpush1.bf16.msra.mxu0 %v8208
    %8807 = vmatprep.subr.bf16.mxu0 %v8205
    %8808 = vmatpush1.bf16.msra.mxu0 %v8204
    %8809 = vmatprep.subr.bf16.mxu0 %v8201
    %8810 = vmatpush1.bf16.msra.mxu0 %v8200
    %8811 = vmatprep.subr.bf16.mxu0 %v8197
    %8812 = vmatpush1.bf16.msra.mxu0 %v8196
    %8813 = vmatprep.subr.bf16.mxu0 %v8193
    %8814 = vmatpush1.bf16.msra.mxu0 %v8192
    %8815 = vmatprep.subr.bf16.mxu0 %v8189
    %8816 = vmatpush1.bf16.msra.mxu0 %v8188
    %8817 = vmatprep.subr.bf16.mxu0 %v8185
    %8818 = vmatpush1.bf16.msra.mxu0 %v8184
    %8819 = vmatprep.subr.bf16.mxu0 %v8245
    %8820 = vmatpush2.bf16.msra.mxu0 %v8244
    %8821 = vmatprep.subr.bf16.mxu0 %v8241
    %8822 = vmatpush2.bf16.msra.mxu0 %v8240
    %8823 = vmatprep.subr.bf16.mxu0 %v8237
    %8824 = vmatpush2.bf16.msra.mxu0 %v8236
    %8825 = vmatprep.subr.bf16.mxu0 %v8233
    %8826 = vmatpush2.bf16.msra.mxu0 %v8232
    %8827 = vmatprep.subr.bf16.mxu0 %v8229
    %8828 = vmatpush2.bf16.msra.mxu0 %v8228
    %8829 = vmatprep.subr.bf16.mxu0 %v8225
    %8830 = vmatpush2.bf16.msra.mxu0 %v8224
    %8831 = vmatprep.subr.bf16.mxu0 %v8221
    %8832 = vmatpush2.bf16.msra.mxu0 %v8220
    %8833 = vmatprep.subr.bf16.mxu0 %v8217
    %8834 = vmatpush2.bf16.msra.mxu0 %v8216
    %8835 = vmatprep.mubr.bf16.mxu0 %v6943
    %8836 = vmatmul.mubr.bf16.gmra.mxu0 %v6942
    %v8837 = vpop.f32.mrf.mxu0
    %v8838 = vadd.f32 %v8795, %v8837
    %v8839 = vpop.f32.mrf.mxu0
    %v8840 = vadd.f32 %v8797, %v8839
    %v8841 = vpop.f32.mrf.mxu0
    %v8842 = vadd.f32 %v8799, %v8841
    %v8843 = vpop.f32.mrf.mxu0
    %v8844 = vadd.f32 %v8801, %v8843
    %8845 = vdwg.mxu0
    %v8846 = vmax.f32 %v8666, 0.0
    %v8847 = vmax.f32 %v8668, 0.0
    %v8848 = vmax.f32 %v8838, 0.0
    %v8849 = vmax.f32 %v8840, 0.0
    %v8850 = vmax.f32 %v8670, 0.0
    %v8851 = vmax.f32 %v8672, 0.0
    %v8852 = vmax.f32 %v8842, 0.0
    %v8853 = vmax.f32 %v8844, 0.0
    %v8854 = vpack.c.bf16 %v8850, %v8846
    %v8855 = vpack.c.bf16 %v8851, %v8847
    %v8856 = vpack.c.bf16 %v8852, %v8848
    %v8857 = vpack.c.bf16 %v8853, %v8849
    %v8858 = vld [vmem:[#allocation12] sm:$0xff]
    %v8859 = vld [vmem:[#allocation12 + $0x8] sm:$0xff]
    %v8860 = vld [vmem:[#allocation12 + $0x10] sm:$0xff]
    %v8861 = vld [vmem:[#allocation12 + $0x18] sm:$0xff]
    %v8862 = vld [vmem:[#allocation12 + $0x20] sm:$0xff]
    %v8863 = vld [vmem:[#allocation12 + $0x28] sm:$0xff]
    %v8864 = vld [vmem:[#allocation12 + $0x30] sm:$0xff]
    %v8865 = vld [vmem:[#allocation12 + $0x38] sm:$0xff]
    %v8866 = vld [vmem:[#allocation12 + $0x40] sm:$0xff]
    %v8867 = vld [vmem:[#allocation12 + $0x48] sm:$0xff]
    %v8868 = vld [vmem:[#allocation12 + $0x50] sm:$0xff]
    %v8869 = vld [vmem:[#allocation12 + $0x58] sm:$0xff]
    %v8870 = vld [vmem:[#allocation12 + $0x60] sm:$0xff]
    %v8871 = vld [vmem:[#allocation12 + $0x68] sm:$0xff]
    %v8872 = vld [vmem:[#allocation12 + $0x70] sm:$0xff]
    %v8873 = vld [vmem:[#allocation12 + $0x78] sm:$0xff]
    %v8874 = vld [vmem:[#allocation12 + $0x80] sm:$0xff]
    %v8875 = vld [vmem:[#allocation12 + $0x88] sm:$0xff]
    %v8876 = vld [vmem:[#allocation12 + $0x90] sm:$0xff]
    %v8877 = vld [vmem:[#allocation12 + $0x98] sm:$0xff]
    %v8878 = vld [vmem:[#allocation12 + $0xa0] sm:$0xff]
    %v8879 = vld [vmem:[#allocation12 + $0xa8] sm:$0xff]
    %v8880 = vld [vmem:[#allocation12 + $0xb0] sm:$0xff]
    %v8881 = vld [vmem:[#allocation12 + $0xb8] sm:$0xff]
    %v8882 = vld [vmem:[#allocation12 + $0xc0] sm:$0xff]
    %v8883 = vld [vmem:[#allocation12 + $0xc8] sm:$0xff]
    %v8884 = vld [vmem:[#allocation12 + $0xd0] sm:$0xff]
    %v8885 = vld [vmem:[#allocation12 + $0xd8] sm:$0xff]
    %v8886 = vld [vmem:[#allocation12 + $0xe0] sm:$0xff]
    %v8887 = vld [vmem:[#allocation12 + $0xe8] sm:$0xff]
    %v8888 = vld [vmem:[#allocation12 + $0xf0] sm:$0xff]
    %v8889 = vld [vmem:[#allocation12 + $0xf8] sm:$0xff]
    %v8890 = vld [vmem:[#allocation12 + $0x100] sm:$0xff]
    %v8891 = vld [vmem:[#allocation12 + $0x108] sm:$0xff]
    %v8892 = vld [vmem:[#allocation12 + $0x110] sm:$0xff]
    %v8893 = vld [vmem:[#allocation12 + $0x118] sm:$0xff]
    %v8894 = vld [vmem:[#allocation12 + $0x120] sm:$0xff]
    %v8895 = vld [vmem:[#allocation12 + $0x128] sm:$0xff]
    %v8896 = vld [vmem:[#allocation12 + $0x130] sm:$0xff]
    %v8897 = vld [vmem:[#allocation12 + $0x138] sm:$0xff]
    %v8898 = vld [vmem:[#allocation12 + $0x140] sm:$0xff]
    %v8899 = vld [vmem:[#allocation12 + $0x148] sm:$0xff]
    %v8900 = vld [vmem:[#allocation12 + $0x150] sm:$0xff]
    %v8901 = vld [vmem:[#allocation12 + $0x158] sm:$0xff]
    %v8902 = vld [vmem:[#allocation12 + $0x160] sm:$0xff]
    %v8903 = vld [vmem:[#allocation12 + $0x168] sm:$0xff]
    %v8904 = vld [vmem:[#allocation12 + $0x170] sm:$0xff]
    %v8905 = vld [vmem:[#allocation12 + $0x178] sm:$0xff]
    %v8906 = vld [vmem:[#allocation12 + $0x180] sm:$0xff]
    %v8907 = vld [vmem:[#allocation12 + $0x188] sm:$0xff]
    %v8908 = vld [vmem:[#allocation12 + $0x190] sm:$0xff]
    %v8909 = vld [vmem:[#allocation12 + $0x198] sm:$0xff]
    %v8910 = vld [vmem:[#allocation12 + $0x1a0] sm:$0xff]
    %v8911 = vld [vmem:[#allocation12 + $0x1a8] sm:$0xff]
    %v8912 = vld [vmem:[#allocation12 + $0x1b0] sm:$0xff]
    %v8913 = vld [vmem:[#allocation12 + $0x1b8] sm:$0xff]
    %v8914 = vld [vmem:[#allocation12 + $0x1c0] sm:$0xff]
    %v8915 = vld [vmem:[#allocation12 + $0x1c8] sm:$0xff]
    %v8916 = vld [vmem:[#allocation12 + $0x1d0] sm:$0xff]
    %v8917 = vld [vmem:[#allocation12 + $0x1d8] sm:$0xff]
    %v8918 = vld [vmem:[#allocation12 + $0x1e0] sm:$0xff]
    %v8919 = vld [vmem:[#allocation12 + $0x1e8] sm:$0xff]
    %v8920 = vld [vmem:[#allocation12 + $0x1f0] sm:$0xff]
    %v8921 = vld [vmem:[#allocation12 + $0x1f8] sm:$0xff]
    %v8922 = vld [vmem:[#allocation13] sm:$0x3]
    %v8924 = vlaneseq
    %v8925 = vshrl.u32 %v8924, 7
    %v8926 = vsub.s32 0, %v8925
    %v8927 = vrot.slane %v8922, %v8926
    %v8928 = vlaneseq
    %v8929 = vshrl.u32 %v8928, 7
    %v8930 = vsub.s32 1, %v8929
    %v8931 = vrot.slane %v8922, %v8930
    %v8998 = vunpack.c.l.b16 %v8858
    %v8999 = vunpack.c.h.b16 %v8858
    %v9000 = vunpack.c.l.b16 %v8859
    %v9001 = vunpack.c.h.b16 %v8859
    %v9002 = vunpack.c.l.b16 %v8860
    %v9003 = vunpack.c.h.b16 %v8860
    %v9004 = vunpack.c.l.b16 %v8861
    %v9005 = vunpack.c.h.b16 %v8861
    %v9006 = vunpack.c.l.b16 %v8862
    %v9007 = vunpack.c.h.b16 %v8862
    %v9008 = vunpack.c.l.b16 %v8863
    %v9009 = vunpack.c.h.b16 %v8863
    %v9010 = vunpack.c.l.b16 %v8864
    %v9011 = vunpack.c.h.b16 %v8864
    %v9012 = vunpack.c.l.b16 %v8865
    %v9013 = vunpack.c.h.b16 %v8865
    %v9014 = vunpack.c.l.b16 %v8866
    %v9015 = vunpack.c.h.b16 %v8866
    %v9016 = vunpack.c.l.b16 %v8867
    %v9017 = vunpack.c.h.b16 %v8867
    %v9018 = vunpack.c.l.b16 %v8868
    %v9019 = vunpack.c.h.b16 %v8868
    %v9020 = vunpack.c.l.b16 %v8869
    %v9021 = vunpack.c.h.b16 %v8869
    %v9022 = vunpack.c.l.b16 %v8870
    %v9023 = vunpack.c.h.b16 %v8870
    %v9024 = vunpack.c.l.b16 %v8871
    %v9025 = vunpack.c.h.b16 %v8871
    %v9026 = vunpack.c.l.b16 %v8872
    %v9027 = vunpack.c.h.b16 %v8872
    %v9028 = vunpack.c.l.b16 %v8873
    %v9029 = vunpack.c.h.b16 %v8873
    %v9030 = vunpack.c.l.b16 %v8874
    %v9031 = vunpack.c.h.b16 %v8874
    %v9032 = vunpack.c.l.b16 %v8875
    %v9033 = vunpack.c.h.b16 %v8875
    %v9034 = vunpack.c.l.b16 %v8876
    %v9035 = vunpack.c.h.b16 %v8876
    %v9036 = vunpack.c.l.b16 %v8877
    %v9037 = vunpack.c.h.b16 %v8877
    %v9038 = vunpack.c.l.b16 %v8878
    %v9039 = vunpack.c.h.b16 %v8878
    %v9040 = vunpack.c.l.b16 %v8879
    %v9041 = vunpack.c.h.b16 %v8879
    %v9042 = vunpack.c.l.b16 %v8880
    %v9043 = vunpack.c.h.b16 %v8880
    %v9044 = vunpack.c.l.b16 %v8881
    %v9045 = vunpack.c.h.b16 %v8881
    %v9046 = vunpack.c.l.b16 %v8882
    %v9047 = vunpack.c.h.b16 %v8882
    %v9048 = vunpack.c.l.b16 %v8883
    %v9049 = vunpack.c.h.b16 %v8883
    %v9050 = vunpack.c.l.b16 %v8884
    %v9051 = vunpack.c.h.b16 %v8884
    %v9052 = vunpack.c.l.b16 %v8885
    %v9053 = vunpack.c.h.b16 %v8885
    %v9054 = vunpack.c.l.b16 %v8886
    %v9055 = vunpack.c.h.b16 %v8886
    %v9056 = vunpack.c.l.b16 %v8887
    %v9057 = vunpack.c.h.b16 %v8887
    %v9058 = vunpack.c.l.b16 %v8888
    %v9059 = vunpack.c.h.b16 %v8888
    %v9060 = vunpack.c.l.b16 %v8889
    %v9061 = vunpack.c.h.b16 %v8889
    %v9062 = vunpack.c.l.b16 %v8890
    %v9063 = vunpack.c.h.b16 %v8890
    %v9064 = vunpack.c.l.b16 %v8891
    %v9065 = vunpack.c.h.b16 %v8891
    %v9066 = vunpack.c.l.b16 %v8892
    %v9067 = vunpack.c.h.b16 %v8892
    %v9068 = vunpack.c.l.b16 %v8893
    %v9069 = vunpack.c.h.b16 %v8893
    %v9070 = vunpack.c.l.b16 %v8894
    %v9071 = vunpack.c.h.b16 %v8894
    %v9072 = vunpack.c.l.b16 %v8895
    %v9073 = vunpack.c.h.b16 %v8895
    %v9074 = vunpack.c.l.b16 %v8896
    %v9075 = vunpack.c.h.b16 %v8896
    %v9076 = vunpack.c.l.b16 %v8897
    %v9077 = vunpack.c.h.b16 %v8897
    %v9078 = vunpack.c.l.b16 %v8898
    %v9079 = vunpack.c.h.b16 %v8898
    %v9080 = vunpack.c.l.b16 %v8899
    %v9081 = vunpack.c.h.b16 %v8899
    %v9082 = vunpack.c.l.b16 %v8900
    %v9083 = vunpack.c.h.b16 %v8900
    %v9084 = vunpack.c.l.b16 %v8901
    %v9085 = vunpack.c.h.b16 %v8901
    %v9086 = vunpack.c.l.b16 %v8902
    %v9087 = vunpack.c.h.b16 %v8902
    %v9088 = vunpack.c.l.b16 %v8903
    %v9089 = vunpack.c.h.b16 %v8903
    %v9090 = vunpack.c.l.b16 %v8904
    %v9091 = vunpack.c.h.b16 %v8904
    %v9092 = vunpack.c.l.b16 %v8905
    %v9093 = vunpack.c.h.b16 %v8905
    %v9094 = vunpack.c.l.b16 %v8906
    %v9095 = vunpack.c.h.b16 %v8906
    %v9096 = vunpack.c.l.b16 %v8907
    %v9097 = vunpack.c.h.b16 %v8907
    %v9098 = vunpack.c.l.b16 %v8908
    %v9099 = vunpack.c.h.b16 %v8908
    %v9100 = vunpack.c.l.b16 %v8909
    %v9101 = vunpack.c.h.b16 %v8909
    %v9102 = vunpack.c.l.b16 %v8910
    %v9103 = vunpack.c.h.b16 %v8910
    %v9104 = vunpack.c.l.b16 %v8911
    %v9105 = vunpack.c.h.b16 %v8911
    %v9106 = vunpack.c.l.b16 %v8912
    %v9107 = vunpack.c.h.b16 %v8912
    %v9108 = vunpack.c.l.b16 %v8913
    %v9109 = vunpack.c.h.b16 %v8913
    %v9110 = vunpack.c.l.b16 %v8914
    %v9111 = vunpack.c.h.b16 %v8914
    %v9112 = vunpack.c.l.b16 %v8915
    %v9113 = vunpack.c.h.b16 %v8915
    %v9114 = vunpack.c.l.b16 %v8916
    %v9115 = vunpack.c.h.b16 %v8916
    %v9116 = vunpack.c.l.b16 %v8917
    %v9117 = vunpack.c.h.b16 %v8917
    %v9118 = vunpack.c.l.b16 %v8918
    %v9119 = vunpack.c.h.b16 %v8918
    %v9120 = vunpack.c.l.b16 %v8919
    %v9121 = vunpack.c.h.b16 %v8919
    %v9122 = vunpack.c.l.b16 %v8920
    %v9123 = vunpack.c.h.b16 %v8920
    %v9124 = vunpack.c.l.b16 %v8921
    %v9125 = vunpack.c.h.b16 %v8921
    %v9126 = vpack.c.b16 %v9000, %v8998
    %v9127 = vpack.c.b16 %v9001, %v8999
    %v9128 = vpack.c.b16 %v9004, %v9002
    %v9129 = vpack.c.b16 %v9005, %v9003
    %v9130 = vpack.c.b16 %v9008, %v9006
    %v9131 = vpack.c.b16 %v9009, %v9007
    %v9132 = vpack.c.b16 %v9012, %v9010
    %v9133 = vpack.c.b16 %v9013, %v9011
    %v9134 = vpack.c.b16 %v9016, %v9014
    %v9135 = vpack.c.b16 %v9017, %v9015
    %v9136 = vpack.c.b16 %v9020, %v9018
    %v9137 = vpack.c.b16 %v9021, %v9019
    %v9138 = vpack.c.b16 %v9024, %v9022
    %v9139 = vpack.c.b16 %v9025, %v9023
    %v9140 = vpack.c.b16 %v9028, %v9026
    %v9141 = vpack.c.b16 %v9029, %v9027
    %v9142 = vpack.c.b16 %v9032, %v9030
    %v9143 = vpack.c.b16 %v9033, %v9031
    %v9144 = vpack.c.b16 %v9036, %v9034
    %v9145 = vpack.c.b16 %v9037, %v9035
    %v9146 = vpack.c.b16 %v9040, %v9038
    %v9147 = vpack.c.b16 %v9041, %v9039
    %v9148 = vpack.c.b16 %v9044, %v9042
    %v9149 = vpack.c.b16 %v9045, %v9043
    %v9150 = vpack.c.b16 %v9048, %v9046
    %v9151 = vpack.c.b16 %v9049, %v9047
    %v9152 = vpack.c.b16 %v9052, %v9050
    %v9153 = vpack.c.b16 %v9053, %v9051
    %v9154 = vpack.c.b16 %v9056, %v9054
    %v9155 = vpack.c.b16 %v9057, %v9055
    %v9156 = vpack.c.b16 %v9060, %v9058
    %v9157 = vpack.c.b16 %v9061, %v9059
    %v9158 = vpack.c.b16 %v9064, %v9062
    %v9159 = vpack.c.b16 %v9065, %v9063
    %v9160 = vpack.c.b16 %v9068, %v9066
    %v9161 = vpack.c.b16 %v9069, %v9067
    %v9162 = vpack.c.b16 %v9072, %v9070
    %v9163 = vpack.c.b16 %v9073, %v9071
    %v9164 = vpack.c.b16 %v9076, %v9074
    %v9165 = vpack.c.b16 %v9077, %v9075
    %v9166 = vpack.c.b16 %v9080, %v9078
    %v9167 = vpack.c.b16 %v9081, %v9079
    %v9168 = vpack.c.b16 %v9084, %v9082
    %v9169 = vpack.c.b16 %v9085, %v9083
    %v9170 = vpack.c.b16 %v9088, %v9086
    %v9171 = vpack.c.b16 %v9089, %v9087
    %v9172 = vpack.c.b16 %v9092, %v9090
    %v9173 = vpack.c.b16 %v9093, %v9091
    %v9174 = vpack.c.b16 %v9096, %v9094
    %v9175 = vpack.c.b16 %v9097, %v9095
    %v9176 = vpack.c.b16 %v9100, %v9098
    %v9177 = vpack.c.b16 %v9101, %v9099
    %v9178 = vpack.c.b16 %v9104, %v9102
    %v9179 = vpack.c.b16 %v9105, %v9103
    %v9180 = vpack.c.b16 %v9108, %v9106
    %v9181 = vpack.c.b16 %v9109, %v9107
    %v9182 = vpack.c.b16 %v9112, %v9110
    %v9183 = vpack.c.b16 %v9113, %v9111
    %v9184 = vpack.c.b16 %v9116, %v9114
    %v9185 = vpack.c.b16 %v9117, %v9115
    %v9186 = vpack.c.b16 %v9120, %v9118
    %v9187 = vpack.c.b16 %v9121, %v9119
    %v9188 = vpack.c.b16 %v9124, %v9122
    %v9189 = vpack.c.b16 %v9125, %v9123
    %9254 = vmatprep.subr.bf16.mxu0 %v9141
    %9255 = vmatpush1.bf16.msra.mxu0 %v9140
    %9256 = vmatprep.subr.bf16.mxu0 %v9139
    %9257 = vmatpush1.bf16.msra.mxu0 %v9138
    %9258 = vmatprep.subr.bf16.mxu0 %v9137
    %9259 = vmatpush1.bf16.msra.mxu0 %v9136
    %9260 = vmatprep.subr.bf16.mxu0 %v9135
    %9261 = vmatpush1.bf16.msra.mxu0 %v9134
    %9262 = vmatprep.subr.bf16.mxu0 %v9133
    %9263 = vmatpush1.bf16.msra.mxu0 %v9132
    %9264 = vmatprep.subr.bf16.mxu0 %v9131
    %9265 = vmatpush1.bf16.msra.mxu0 %v9130
    %9266 = vmatprep.subr.bf16.mxu0 %v9129
    %9267 = vmatpush1.bf16.msra.mxu0 %v9128
    %9268 = vmatprep.subr.bf16.mxu0 %v9127
    %9269 = vmatpush1.bf16.msra.mxu0 %v9126
    %9270 = vmatprep.subr.bf16.mxu0 %v9157
    %9271 = vmatpush2.bf16.msra.mxu0 %v9156
    %9272 = vmatprep.subr.bf16.mxu0 %v9155
    %9273 = vmatpush2.bf16.msra.mxu0 %v9154
    %9274 = vmatprep.subr.bf16.mxu0 %v9153
    %9275 = vmatpush2.bf16.msra.mxu0 %v9152
    %9276 = vmatprep.subr.bf16.mxu0 %v9151
    %9277 = vmatpush2.bf16.msra.mxu0 %v9150
    %9278 = vmatprep.subr.bf16.mxu0 %v9149
    %9279 = vmatpush2.bf16.msra.mxu0 %v9148
    %9280 = vmatprep.subr.bf16.mxu0 %v9147
    %9281 = vmatpush2.bf16.msra.mxu0 %v9146
    %9282 = vmatprep.subr.bf16.mxu0 %v9145
    %9283 = vmatpush2.bf16.msra.mxu0 %v9144
    %9284 = vmatprep.subr.bf16.mxu0 %v9143
    %9285 = vmatpush2.bf16.msra.mxu0 %v9142
    %9286 = vmatprep.mubr.bf16.mxu0 %v8855
    %9287 = vmatmul.mubr.bf16.gmra.mxu0 %v8854
    %v9288 = vpop.f32.mrf.mxu0
    %v9289 = vadd.f32 %v8927, %v9288
    %v9290 = vpop.f32.mrf.mxu0
    %v9291 = vadd.f32 %v8931, %v9290
    %v9292 = vpop.f32.mrf.mxu0
    %v9293 = vadd.f32 %v8927, %v9292
    %v9294 = vpop.f32.mrf.mxu0
    %v9295 = vadd.f32 %v8931, %v9294
    %9296 = vdwg.mxu0
    %9297 = vmatprep.subr.bf16.mxu0 %v9173
    %9298 = vmatpush1.bf16.msra.mxu0 %v9172
    %9299 = vmatprep.subr.bf16.mxu0 %v9171
    %9300 = vmatpush1.bf16.msra.mxu0 %v9170
    %9301 = vmatprep.subr.bf16.mxu0 %v9169
    %9302 = vmatpush1.bf16.msra.mxu0 %v9168
    %9303 = vmatprep.subr.bf16.mxu0 %v9167
    %9304 = vmatpush1.bf16.msra.mxu0 %v9166
    %9305 = vmatprep.subr.bf16.mxu0 %v9165
    %9306 = vmatpush1.bf16.msra.mxu0 %v9164
    %9307 = vmatprep.subr.bf16.mxu0 %v9163
    %9308 = vmatpush1.bf16.msra.mxu0 %v9162
    %9309 = vmatprep.subr.bf16.mxu0 %v9161
    %9310 = vmatpush1.bf16.msra.mxu0 %v9160
    %9311 = vmatprep.subr.bf16.mxu0 %v9159
    %9312 = vmatpush1.bf16.msra.mxu0 %v9158
    %9313 = vmatprep.subr.bf16.mxu0 %v9189
    %9314 = vmatpush2.bf16.msra.mxu0 %v9188
    %9315 = vmatprep.subr.bf16.mxu0 %v9187
    %9316 = vmatpush2.bf16.msra.mxu0 %v9186
    %9317 = vmatprep.subr.bf16.mxu0 %v9185
    %9318 = vmatpush2.bf16.msra.mxu0 %v9184
    %9319 = vmatprep.subr.bf16.mxu0 %v9183
    %9320 = vmatpush2.bf16.msra.mxu0 %v9182
    %9321 = vmatprep.subr.bf16.mxu0 %v9181
    %9322 = vmatpush2.bf16.msra.mxu0 %v9180
    %9323 = vmatprep.subr.bf16.mxu0 %v9179
    %9324 = vmatpush2.bf16.msra.mxu0 %v9178
    %9325 = vmatprep.subr.bf16.mxu0 %v9177
    %9326 = vmatpush2.bf16.msra.mxu0 %v9176
    %9327 = vmatprep.subr.bf16.mxu0 %v9175
    %9328 = vmatpush2.bf16.msra.mxu0 %v9174
    %9329 = vmatprep.mubr.bf16.mxu0 %v8857
    %9330 = vmatmul.mubr.bf16.gmra.mxu0 %v8856
    %v9331 = vpop.f32.mrf.mxu0
    %v9332 = vadd.f32 %v9289, %v9331
    %v9333 = vpop.f32.mrf.mxu0
    %v9334 = vadd.f32 %v9291, %v9333
    %v9335 = vpop.f32.mrf.mxu0
    %v9336 = vadd.f32 %v9293, %v9335
    %v9337 = vpop.f32.mrf.mxu0
    %v9338 = vadd.f32 %v9295, %v9337
    %9339 = vdwg.mxu0
    %v9340 = vmax.f32 %v9332, 0.0
    %v9341 = vmax.f32 %v9334, 0.0
    %v9342 = vmax.f32 %v9336, 0.0
    %v9343 = vmax.f32 %v9338, 0.0
    %v9344 = vpack.c.bf16 %v9342, %v9340
    %v9345 = vpack.c.bf16 %v9343, %v9341
    %v9346 = vld [vmem:[#allocation15] sm:$0xf]
    %v9347 = vld [vmem:[#allocation15 + $0x4] sm:$0xf]
    %v9348 = vld [vmem:[#allocation15 + $0x8] sm:$0xf]
    %v9349 = vld [vmem:[#allocation15 + $0xc] sm:$0xf]
    %v9350 = vld [vmem:[#allocation15 + $0x10] sm:$0xf]
    %v9351 = vld [vmem:[#allocation15 + $0x14] sm:$0xf]
    %v9352 = vld [vmem:[#allocation15 + $0x18] sm:$0xf]
    %v9353 = vld [vmem:[#allocation15 + $0x1c] sm:$0xf]
    %v9354 = vld [vmem:[#allocation15 + $0x20] sm:$0xf]
    %v9355 = vld [vmem:[#allocation15 + $0x24] sm:$0xf]
    %v9356 = vld [vmem:[#allocation15 + $0x28] sm:$0xf]
    %v9357 = vld [vmem:[#allocation15 + $0x2c] sm:$0xf]
    %v9358 = vld [vmem:[#allocation15 + $0x30] sm:$0xf]
    %v9359 = vld [vmem:[#allocation15 + $0x34] sm:$0xf]
    %v9360 = vld [vmem:[#allocation15 + $0x38] sm:$0xf]
    %v9361 = vld [vmem:[#allocation15 + $0x3c] sm:$0xf]
    %v9362 = vld [vmem:[#allocation15 + $0x40] sm:$0xf]
    %v9363 = vld [vmem:[#allocation15 + $0x44] sm:$0xf]
    %v9364 = vld [vmem:[#allocation15 + $0x48] sm:$0xf]
    %v9365 = vld [vmem:[#allocation15 + $0x4c] sm:$0xf]
    %v9366 = vld [vmem:[#allocation15 + $0x50] sm:$0xf]
    %v9367 = vld [vmem:[#allocation15 + $0x54] sm:$0xf]
    %v9368 = vld [vmem:[#allocation15 + $0x58] sm:$0xf]
    %v9369 = vld [vmem:[#allocation15 + $0x5c] sm:$0xf]
    %v9370 = vld [vmem:[#allocation15 + $0x60] sm:$0xf]
    %v9371 = vld [vmem:[#allocation15 + $0x64] sm:$0xf]
    %v9372 = vld [vmem:[#allocation15 + $0x68] sm:$0xf]
    %v9373 = vld [vmem:[#allocation15 + $0x6c] sm:$0xf]
    %v9374 = vld [vmem:[#allocation15 + $0x70] sm:$0xf]
    %v9375 = vld [vmem:[#allocation15 + $0x74] sm:$0xf]
    %v9376 = vld [vmem:[#allocation15 + $0x78] sm:$0xf]
    %v9377 = vld [vmem:[#allocation15 + $0x7c] sm:$0xf]
    %v9378 = vld [vmem:[#allocation16] sm:$0x1]
    %v9380 = vlaneseq
    %v9381 = vshrl.u32 %v9380, 7
    %v9382 = vsub.s32 0, %v9381
    %v9383 = vrot.slane %v9378, %v9382
    %v9417 = vunpack.c.l.b16 %v9346
    %v9418 = vunpack.c.l.b16 %v9347
    %v9419 = vunpack.c.l.b16 %v9348
    %v9420 = vunpack.c.l.b16 %v9349
    %v9421 = vunpack.c.l.b16 %v9350
    %v9422 = vunpack.c.l.b16 %v9351
    %v9423 = vunpack.c.l.b16 %v9352
    %v9424 = vunpack.c.l.b16 %v9353
    %v9425 = vunpack.c.l.b16 %v9354
    %v9426 = vunpack.c.l.b16 %v9355
    %v9427 = vunpack.c.l.b16 %v9356
    %v9428 = vunpack.c.l.b16 %v9357
    %v9429 = vunpack.c.l.b16 %v9358
    %v9430 = vunpack.c.l.b16 %v9359
    %v9431 = vunpack.c.l.b16 %v9360
    %v9432 = vunpack.c.l.b16 %v9361
    %v9433 = vunpack.c.l.b16 %v9362
    %v9434 = vunpack.c.l.b16 %v9363
    %v9435 = vunpack.c.l.b16 %v9364
    %v9436 = vunpack.c.l.b16 %v9365
    %v9437 = vunpack.c.l.b16 %v9366
    %v9438 = vunpack.c.l.b16 %v9367
    %v9439 = vunpack.c.l.b16 %v9368
    %v9440 = vunpack.c.l.b16 %v9369
    %v9441 = vunpack.c.l.b16 %v9370
    %v9442 = vunpack.c.l.b16 %v9371
    %v9443 = vunpack.c.l.b16 %v9372
    %v9444 = vunpack.c.l.b16 %v9373
    %v9445 = vunpack.c.l.b16 %v9374
    %v9446 = vunpack.c.l.b16 %v9375
    %v9447 = vunpack.c.l.b16 %v9376
    %v9448 = vunpack.c.l.b16 %v9377
    %v9449 = vpack.c.b16 %v9418, %v9417
    %v9450 = vpack.c.b16 %v9420, %v9419
    %v9451 = vpack.c.b16 %v9422, %v9421
    %v9452 = vpack.c.b16 %v9424, %v9423
    %v9453 = vpack.c.b16 %v9426, %v9425
    %v9454 = vpack.c.b16 %v9428, %v9427
    %v9455 = vpack.c.b16 %v9430, %v9429
    %v9456 = vpack.c.b16 %v9432, %v9431
    %v9457 = vpack.c.b16 %v9434, %v9433
    %v9458 = vpack.c.b16 %v9436, %v9435
    %v9459 = vpack.c.b16 %v9438, %v9437
    %v9460 = vpack.c.b16 %v9440, %v9439
    %v9461 = vpack.c.b16 %v9442, %v9441
    %v9462 = vpack.c.b16 %v9444, %v9443
    %v9463 = vpack.c.b16 %v9446, %v9445
    %v9464 = vpack.c.b16 %v9448, %v9447
    %9481 = vmatprep.subr.bf16.mxu0 0
    %9482 = vmatpush1.bf16.msra.mxu0 %v9456
    %9483 = vmatprep.subr.bf16.mxu0 0
    %9484 = vmatpush1.bf16.msra.mxu0 %v9455
    %9485 = vmatprep.subr.bf16.mxu0 0
    %9486 = vmatpush1.bf16.msra.mxu0 %v9454
    %9487 = vmatprep.subr.bf16.mxu0 0
    %9488 = vmatpush1.bf16.msra.mxu0 %v9453
    %9489 = vmatprep.subr.bf16.mxu0 0
    %9490 = vmatpush1.bf16.msra.mxu0 %v9452
    %9491 = vmatprep.subr.bf16.mxu0 0
    %9492 = vmatpush1.bf16.msra.mxu0 %v9451
    %9493 = vmatprep.subr.bf16.mxu0 0
    %9494 = vmatpush1.bf16.msra.mxu0 %v9450
    %9495 = vmatprep.subr.bf16.mxu0 0
    %9496 = vmatpush1.bf16.msra.mxu0 %v9449
    %9497 = vmatprep.subr.bf16.mxu0 0
    %9498 = vmatpush2.bf16.msra.mxu0 %v9464
    %9499 = vmatprep.subr.bf16.mxu0 0
    %9500 = vmatpush2.bf16.msra.mxu0 %v9463
    %9501 = vmatprep.subr.bf16.mxu0 0
    %9502 = vmatpush2.bf16.msra.mxu0 %v9462
    %9503 = vmatprep.subr.bf16.mxu0 0
    %9504 = vmatpush2.bf16.msra.mxu0 %v9461
    %9505 = vmatprep.subr.bf16.mxu0 0
    %9506 = vmatpush2.bf16.msra.mxu0 %v9460
    %9507 = vmatprep.subr.bf16.mxu0 0
    %9508 = vmatpush2.bf16.msra.mxu0 %v9459
    %9509 = vmatprep.subr.bf16.mxu0 0
    %9510 = vmatpush2.bf16.msra.mxu0 %v9458
    %9511 = vmatprep.subr.bf16.mxu0 0
    %9512 = vmatpush2.bf16.msra.mxu0 %v9457
    %9513 = vmatprep.mubr.bf16.mxu0 %v9345
    %9514 = vmatmul.mubr.bf16.gmra.mxu0 %v9344
    %v9515 = vpop.f32.mrf.mxu0
    %v9516 = vadd.f32 %v9383, %v9515
    %v9517 = vpop.f32.mrf.mxu0
    %v9518 = vpop.f32.mrf.mxu0
    %v9519 = vadd.f32 %v9383, %v9518
    %v9520 = vpop.f32.mrf.mxu0
    %9521 = vdwg.mxu0
    %v9522 = vmax.f32 %v9516, 0.0
    %v9523 = vmax.f32 %v9519, 0.0
    %v9524 = vpack.c.bf16 %v9523, %v9522
    %v9525 = vld [vmem:[#allocation18] sm:$0xf]
    %v9526 = vld [vmem:[#allocation18 + $0x4] sm:$0xf]
    %v9527 = vld [vmem:[#allocation18 + $0x8] sm:$0xf]
    %v9528 = vld [vmem:[#allocation18 + $0xc] sm:$0xf]
    %v9529 = vld [vmem:[#allocation18 + $0x10] sm:$0xf]
    %v9530 = vld [vmem:[#allocation18 + $0x14] sm:$0xf]
    %v9531 = vld [vmem:[#allocation18 + $0x18] sm:$0xf]
    %v9532 = vld [vmem:[#allocation18 + $0x1c] sm:$0xf]
    %v9533 = vld [vmem:[#allocation18 + $0x20] sm:$0xf]
    %v9534 = vld [vmem:[#allocation18 + $0x24] sm:$0xf]
    %v9535 = vld [vmem:[#allocation18 + $0x28] sm:$0xf]
    %v9536 = vld [vmem:[#allocation18 + $0x2c] sm:$0xf]
    %v9537 = vld [vmem:[#allocation18 + $0x30] sm:$0xf]
    %v9538 = vld [vmem:[#allocation18 + $0x34] sm:$0xf]
    %v9539 = vld [vmem:[#allocation18 + $0x38] sm:$0xf]
    %v9540 = vld [vmem:[#allocation18 + $0x3c] sm:$0xf]
    %v9541 = vld [vmem:[#allocation19] sm:$0x1]
    %v9543 = vlaneseq
    %v9544 = vshrl.u32 %v9543, 7
    %v9545 = vsub.s32 0, %v9544
    %v9546 = vrot.slane %v9541, %v9545
    %v9564 = vunpack.c.l.b16 %v9525
    %v9565 = vunpack.c.l.b16 %v9526
    %v9566 = vunpack.c.l.b16 %v9527
    %v9567 = vunpack.c.l.b16 %v9528
    %v9568 = vunpack.c.l.b16 %v9529
    %v9569 = vunpack.c.l.b16 %v9530
    %v9570 = vunpack.c.l.b16 %v9531
    %v9571 = vunpack.c.l.b16 %v9532
    %v9572 = vunpack.c.l.b16 %v9533
    %v9573 = vunpack.c.l.b16 %v9534
    %v9574 = vunpack.c.l.b16 %v9535
    %v9575 = vunpack.c.l.b16 %v9536
    %v9576 = vunpack.c.l.b16 %v9537
    %v9577 = vunpack.c.l.b16 %v9538
    %v9578 = vunpack.c.l.b16 %v9539
    %v9579 = vunpack.c.l.b16 %v9540
    %v9580 = vpack.c.b16 %v9565, %v9564
    %v9581 = vpack.c.b16 %v9567, %v9566
    %v9582 = vpack.c.b16 %v9569, %v9568
    %v9583 = vpack.c.b16 %v9571, %v9570
    %v9584 = vpack.c.b16 %v9573, %v9572
    %v9585 = vpack.c.b16 %v9575, %v9574
    %v9586 = vpack.c.b16 %v9577, %v9576
    %v9587 = vpack.c.b16 %v9579, %v9578
    %9596 = vmatprep.subr.bf16.mxu0 0
    %9597 = vmatpush1.bf16.msra.mxu0 %v9587
    %9598 = vmatprep.subr.bf16.mxu0 0
    %9599 = vmatpush1.bf16.msra.mxu0 %v9586
    %9600 = vmatprep.subr.bf16.mxu0 0
    %9601 = vmatpush1.bf16.msra.mxu0 %v9585
    %9602 = vmatprep.subr.bf16.mxu0 0
    %9603 = vmatpush1.bf16.msra.mxu0 %v9584
    %9604 = vmatprep.subr.bf16.mxu0 0
    %9605 = vmatpush1.bf16.msra.mxu0 %v9583
    %9606 = vmatprep.subr.bf16.mxu0 0
    %9607 = vmatpush1.bf16.msra.mxu0 %v9582
    %9608 = vmatprep.subr.bf16.mxu0 0
    %9609 = vmatpush1.bf16.msra.mxu0 %v9581
    %9610 = vmatprep.subr.bf16.mxu0 0
    %9611 = vmatpush1.bf16.msra.mxu0 %v9580
    %9612 = vmatprep.subr.bf16.mxu0 0
    %9613 = vmatpush2.bf16.msra.mxu0 0
    %9614 = vmatprep.subr.bf16.mxu0 0
    %9615 = vmatpush2.bf16.msra.mxu0 0
    %9616 = vmatprep.subr.bf16.mxu0 0
    %9617 = vmatpush2.bf16.msra.mxu0 0
    %9618 = vmatprep.subr.bf16.mxu0 0
    %9619 = vmatpush2.bf16.msra.mxu0 0
    %9620 = vmatprep.subr.bf16.mxu0 0
    %9621 = vmatpush2.bf16.msra.mxu0 0
    %9622 = vmatprep.subr.bf16.mxu0 0
    %9623 = vmatpush2.bf16.msra.mxu0 0
    %9624 = vmatprep.subr.bf16.mxu0 0
    %9625 = vmatpush2.bf16.msra.mxu0 0
    %9626 = vmatprep.subr.bf16.mxu0 0
    %9627 = vmatpush2.bf16.msra.mxu0 0
    %9628 = vmatprep.mubr.bf16.mxu0 0
    %9629 = vmatmul.mubr.bf16.gmra.mxu0 %v9524
    %v9630 = vpop.f32.mrf.mxu0
    %v9631 = vadd.f32 %v9546, %v9630
    %v9632 = vpop.f32.mrf.mxu0
    %v9633 = vpop.f32.mrf.mxu0
    %v9634 = vadd.f32 %v9546, %v9633
    %v9635 = vpop.f32.mrf.mxu0
    %9636 = vdwg.mxu0
    %v9637 = vmax.f32 %v9631, 0.0
    %v9638 = vmax.f32 %v9634, 0.0
    %9639 = vst [vmem:[%s13] sm:$0xff] %v9637
    %9640 = vst [vmem:[%s13 + $0x8] sm:$0xff] %v9638
    // Predicated region
    $region102: #{_mlps_forward_impl.1} parent=1 // pred_check
      _
    $region103: #{_mlps_forward_impl.1} parent=1 // pred_check_branch
      %9642 = sbr.rel (0) target = $region105
    $region104: #{_mlps_forward_impl.1} parent=1 // pred_region
      _
    $region105: #{_mlps_forward_impl.1} parent=1 // pred_fallthru
      _
    // Predicated region
    $region106: #{_mlps_forward_impl.1} parent=1 // pred_check
      _
    $region107: #{_mlps_forward_impl.1} parent=1 // pred_check_branch
      %9644 = sbr.rel (0) target = $region109
    $region108: #{_mlps_forward_impl.1} parent=1 // pred_region
      _
    $region109: #{_mlps_forward_impl.1} parent=1 // pred_fallthru
      _
    %9645 = vsyncpa [#allocation3], 1
    %9646 = vsyncpa [#allocation5], 1
    %9647 = vsyncpa [#allocation8], 1
    %9648 = vsyncpa [#allocation11], 1
    %9649 = vsyncpa [#allocation14], 1
    %9650 = vsyncpa [#allocation17], 1
    %9651 = vsyncpa [#allocation20], 1

</llo_original>
